<compile_context>
chip_gen: v6e
topology: v6e:2x2x1
jax: 0.10.0
libtpu: 0.0.40
codegen_flags: <defaults>
</compile_context>

<pallas_src>
import functools

import jax
import jax.numpy as jnp
from jax import lax
from jax.experimental import pallas as pl
from jax.experimental.pallas import tpu as pltpu

# ----------------------------- config ---------------------------------------
VOCAB = 64          # embedder vocab size
HIDDEN = 32         # config.hidden_size
OUTPUT = 64         # config.output_size
NUM_HEADS = 4
HEAD_DIM = HIDDEN // NUM_HEADS
FFN = 4 * HIDDEN
NUM_DECODER_LAYERS = 2
JM_LAYERS = 2       # config.jmodule_recurrent_layers
EPS = 1e-5          # config.layer_norm_eps
SEQ = 8
BATCH = 2
SCALE = 1.0 / float(HEAD_DIM) ** 0.5


# --------------------------- kernel helpers ----------------------------------
def _layernorm(x, g, b):
    mu = jnp.mean(x, axis=-1, keepdims=True)
    var = jnp.mean(jnp.square(x - mu), axis=-1, keepdims=True)
    return (x - mu) * lax.rsqrt(var + EPS) * g + b


def _gelu(x):
    # tanh-approximate GELU (EUP-friendly).  PyTorch nn.GELU default is erf GELU.
    return 0.5 * x * (1.0 + jnp.tanh(0.7978845608028654 * (x + 0.044715 * x * x * x)))


def _lstm_cell(gates, c):
    # PyTorch gate order (i, f, g, o); fused bias (b_ih + b_hh).
    i_g = jax.nn.sigmoid(gates[:, 0 * HIDDEN:1 * HIDDEN])
    f_g = jax.nn.sigmoid(gates[:, 1 * HIDDEN:2 * HIDDEN])
    g_g = jnp.tanh(gates[:, 2 * HIDDEN:3 * HIDDEN])
    o_g = jax.nn.sigmoid(gates[:, 3 * HIDDEN:4 * HIDDEN])
    c_new = f_g * c + i_g * g_g
    h_new = o_g * jnp.tanh(c_new)
    return h_new, c_new


# ------------------------- fused forward kernel -------------------------------
def openarc_fused_kernel(
        x_ref, bias_ref,
        d_ln1g, d_ln1b, d_wq, d_bq, d_wk, d_bk, d_wv, d_bv, d_wo, d_bo,
        d_ln2g, d_ln2b, d_w1, d_b1, d_w2, d_b2,
        l_wih, l_whh, l_b,
        fg_ref, fb_ref, lmw_ref, lmb_ref,
        logits_ref, h_last_ref, c_last_ref,
        y_scratch):
    # Activation layout: time-major flattened, row r = t*BATCH + b.
    x = x_ref[...].astype(jnp.float32)                    # (N, H), N = SEQ*BATCH
    n = x.shape[0]
    attn_bias = bias_ref[...]                             # (N, N) additive mask

    # -------------------- decoder layers (pre-LN, causal) --------------------
    for layer in range(NUM_DECODER_LAYERS):
        h_ln = _layernorm(x, d_ln1g[layer], d_ln1b[layer])
        q = jnp.dot(h_ln, d_wq[layer], preferred_element_type=jnp.float32) + d_bq[layer]
        k = jnp.dot(h_ln, d_wk[layer], preferred_element_type=jnp.float32) + d_bk[layer]
        v = jnp.dot(h_ln, d_wv[layer], preferred_element_type=jnp.float32) + d_bv[layer]
        wo = d_wo[layer]

        # Per-head softmax; head output folded directly into the output
        # projection (no concatenate / relayout of head chunks).
        attn = jnp.zeros((n, HIDDEN), jnp.float32)
        for hh in range(NUM_HEADS):
            sl = slice(hh * HEAD_DIM, (hh + 1) * HEAD_DIM)
            s = lax.dot_general(q[:, sl], k[:, sl], (((1,), (1,)), ((), ())),
                                preferred_element_type=jnp.float32) * SCALE
            s = s + attn_bias
            s = s - jnp.max(s, axis=-1, keepdims=True)
            p = jnp.exp(s)
            p = p * pl.reciprocal(jnp.sum(p, axis=-1, keepdims=True), approx=True)
            ctx = jnp.dot(p, v[:, sl], preferred_element_type=jnp.float32)   # (N, HD)
            attn = attn + jnp.dot(ctx, wo[sl, :], preferred_element_type=jnp.float32)
        x = x + attn + d_bo[layer]

        h_ln2 = _layernorm(x, d_ln2g[layer], d_ln2b[layer])
        m = _gelu(jnp.dot(h_ln2, d_w1[layer], preferred_element_type=jnp.float32)
                  + d_b1[layer])
        x = x + jnp.dot(m, d_w2[layer], preferred_element_type=jnp.float32) + d_b2[layer]

    # ---------------- JModule: 2 fused LSTM layers, unrolled over time -------
    # Hoist layer-0 input matmul over the whole sequence.
    gx0 = jnp.dot(x, l_wih[0], preferred_element_type=jnp.float32) + l_b[0]   # (N, 4H)
    wih1 = l_wih[1]
    whh0 = l_whh[0]
    whh1 = l_whh[1]
    b1_l = l_b[1]

    h0 = jnp.zeros((BATCH, HIDDEN), jnp.float32)
    c0 = jnp.zeros((BATCH, HIDDEN), jnp.float32)
    h1 = jnp.zeros((BATCH, HIDDEN), jnp.float32)
    c1 = jnp.zeros((BATCH, HIDDEN), jnp.float32)

    for t in range(SEQ):                                   # static unroll, S = 8
        gx_t = gx0[t * BATCH:(t + 1) * BATCH, :]           # (B, 4H) contiguous rows
        g0 = gx_t + jnp.dot(h0, whh0, preferred_element_type=jnp.float32)
        h0, c0 = _lstm_cell(g0, c0)
        g1 = (jnp.dot(h0, wih1, preferred_element_type=jnp.float32) + b1_l
              + jnp.dot(h1, whh1, preferred_element_type=jnp.float32))
        h1, c1 = _lstm_cell(g1, c1)
        y_scratch[t * BATCH:(t + 1) * BATCH, :] = h1       # store h directly

    h_last_ref[0] = h0.astype(h_last_ref.dtype)
    c_last_ref[0] = c0.astype(c_last_ref.dtype)
    h_last_ref[1] = h1.astype(h_last_ref.dtype)
    c_last_ref[1] = c1.astype(c_last_ref.dtype)

    # ---------------------- final LayerNorm + lm_head ------------------------
    y = y_scratch[...]
    z = _layernorm(y, fg_ref[...], fb_ref[...])
    logits_ref[...] = (jnp.dot(z, lmw_ref[...], preferred_element_type=jnp.float32)
                       + lmb_ref[...]).astype(logits_ref.dtype)


def _full_spec(a):
    nd = a.ndim
    return pl.BlockSpec(a.shape, lambda i, _nd=nd: (0,) * _nd)


# --------------------------- parameter init -----------------------------------
def init_params(key):
    k_iter = iter(jax.random.split(key, 64))

    def nrm(shape, scale=0.02):
        return (scale * jax.random.normal(next(k_iter), shape)).astype(jnp.float32)

    L, R = NUM_DECODER_LAYERS, JM_LAYERS
    params = {
        "embedding": nrm((VOCAB, HIDDEN)),
        "dec": dict(
            ln1_g=jnp.ones((L, 1, HIDDEN), jnp.float32),
            ln1_b=jnp.zeros((L, 1, HIDDEN), jnp.float32),
            wq=nrm((L, HIDDEN, HIDDEN)), bq=jnp.zeros((L, 1, HIDDEN), jnp.float32),
            wk=nrm((L, HIDDEN, HIDDEN)), bk=jnp.zeros((L, 1, HIDDEN), jnp.float32),
            wv=nrm((L, HIDDEN, HIDDEN)), bv=jnp.zeros((L, 1, HIDDEN), jnp.float32),
            wo=nrm((L, HIDDEN, HIDDEN)), bo=jnp.zeros((L, 1, HIDDEN), jnp.float32),
            ln2_g=jnp.ones((L, 1, HIDDEN), jnp.float32),
            ln2_b=jnp.zeros((L, 1, HIDDEN), jnp.float32),
            w1=nrm((L, HIDDEN, FFN)), b1=jnp.zeros((L, 1, FFN), jnp.float32),
            w2=nrm((L, FFN, HIDDEN)), b2=jnp.zeros((L, 1, HIDDEN), jnp.float32),
        ),
        "lstm": dict(
            wih=nrm((R, HIDDEN, 4 * HIDDEN), 0.1),
            whh=nrm((R, HIDDEN, 4 * HIDDEN), 0.1),
            b=jnp.zeros((R, 1, 4 * HIDDEN), jnp.float32),
        ),
        "final_ln_g": jnp.ones((1, HIDDEN), jnp.float32),
        "final_ln_b": jnp.zeros((1, HIDDEN), jnp.float32),
        "lm_w": nrm((HIDDEN, OUTPUT)),
        "lm_b": jnp.zeros((1, OUTPUT), jnp.float32),
    }
    return params


# ----------------------------- forward pass -----------------------------------
@functools.partial(jax.jit, static_argnames=())
def openarc_forward(params, input_ids):
    B, S = input_ids.shape
    N = S * B

    # OpenEmbedder: token embedding lookup (gather stays in plain JAX glue).
    x = jnp.take(params["embedding"], input_ids, axis=0)          # (B, S, H)
    # Time-major flatten: row r = t*B + b (contiguous per-timestep slices for the LSTM).
    x2 = jnp.transpose(x, (1, 0, 2)).reshape(N, HIDDEN)

    # Block-diagonal causal additive mask in the time-major layout (constant-folded).
    r = jnp.arange(N)
    allowed = ((r[:, None] % B) == (r[None, :] % B)) & ((r[None, :] // B) <= (r[:, None] // B))
    attn_bias = jnp.where(allowed, 0.0, -1e30).astype(jnp.float32)

    d = params["dec"]
    lw = params["lstm"]
    inputs = (x2, attn_bias,
              d["ln1_g"], d["ln1_b"], d["wq"], d["bq"], d["wk"], d["bk"],
              d["wv"], d["bv"], d["wo"], d["bo"], d["ln2_g"], d["ln2_b"],
              d["w1"], d["b1"], d["w2"], d["b2"],
              lw["wih"], lw["whh"], lw["b"],
              params["final_ln_g"], params["final_ln_b"],
              params["lm_w"], params["lm_b"])

    logits2, h_last, c_last = pl.pallas_call(
        openarc_fused_kernel,
        out_shape=(jax.ShapeDtypeStruct((N, OUTPUT), jnp.float32),
                   jax.ShapeDtypeStruct((JM_LAYERS, B, HIDDEN), jnp.float32),
                   jax.ShapeDtypeStruct((JM_LAYERS, B, HIDDEN), jnp.float32)),
        grid=(1,),
        in_specs=[_full_spec(a) for a in inputs],
        out_specs=(pl.BlockSpec((N, OUTPUT), lambda i: (0, 0)),
                   pl.BlockSpec((JM_LAYERS, B, HIDDEN), lambda i: (0, 0, 0)),
                   pl.BlockSpec((JM_LAYERS, B, HIDDEN), lambda i: (0, 0, 0))),
        scratch_shapes=[pltpu.VMEM((N, HIDDEN), jnp.float32)],
        compiler_params=pltpu.CompilerParams(
            dimension_semantics=("arbitrary",),
            vmem_limit_bytes=4 * 1024 * 1024),
    )(*inputs)

    # Back to batch-major (B, S, OUTPUT).
    logits = logits2.reshape(S, B, OUTPUT).transpose(1, 0, 2)

    # use_cache=False -> outputs are (logits, last_jmodule_states_list)
    last_states = [(h_last[l], c_last[l]) for l in range(JM_LAYERS)]
    return logits, last_states


# --------------------------------- main ---------------------------------------
if __name__ == "__main__":
    key = jax.random.PRNGKey(0)
    k_param, k_ids = jax.random.split(key)
    params = init_params(k_param)
    input_ids = jax.random.randint(k_ids, (BATCH, SEQ), 0, VOCAB, dtype=jnp.int32)

    logits, jm_states = openarc_forward(params, input_ids)
    jax.block_until_ready(logits)
    for h, c in jm_states:
        jax.block_until_ready(h)
        jax.block_until_ready(c)

    assert logits.shape == (BATCH, SEQ, OUTPUT)
    assert len(jm_states) == JM_LAYERS
    assert jm_states[0][0].shape == (BATCH, HIDDEN)
    assert bool(jnp.all(jnp.isfinite(logits)))
    print("KERNEL_OK")
</pallas_src>

<mosaic_0001>
module attributes {stable_mosaic.version = 11 : i64} {
  func.func @openarc_fused_kernel(%arg0: i32, %arg1: memref<16x32xf32, #tpu.memory_space<vmem>>, %arg2: memref<16x16xf32, #tpu.memory_space<vmem>>, %arg3: memref<2x1x32xf32, #tpu.memory_space<vmem>>, %arg4: memref<2x1x32xf32, #tpu.memory_space<vmem>>, %arg5: memref<2x32x32xf32, #tpu.memory_space<vmem>>, %arg6: memref<2x1x32xf32, #tpu.memory_space<vmem>>, %arg7: memref<2x32x32xf32, #tpu.memory_space<vmem>>, %arg8: memref<2x1x32xf32, #tpu.memory_space<vmem>>, %arg9: memref<2x32x32xf32, #tpu.memory_space<vmem>>, %arg10: memref<2x1x32xf32, #tpu.memory_space<vmem>>, %arg11: memref<2x32x32xf32, #tpu.memory_space<vmem>>, %arg12: memref<2x1x32xf32, #tpu.memory_space<vmem>>, %arg13: memref<2x1x32xf32, #tpu.memory_space<vmem>>, %arg14: memref<2x1x32xf32, #tpu.memory_space<vmem>>, %arg15: memref<2x32x128xf32, #tpu.memory_space<vmem>>, %arg16: memref<2x1x128xf32, #tpu.memory_space<vmem>>, %arg17: memref<2x128x32xf32, #tpu.memory_space<vmem>>, %arg18: memref<2x1x32xf32, #tpu.memory_space<vmem>>, %arg19: memref<2x32x128xf32, #tpu.memory_space<vmem>>, %arg20: memref<2x32x128xf32, #tpu.memory_space<vmem>>, %arg21: memref<2x1x128xf32, #tpu.memory_space<vmem>>, %arg22: memref<1x32xf32, #tpu.memory_space<vmem>>, %arg23: memref<1x32xf32, #tpu.memory_space<vmem>>, %arg24: memref<32x64xf32, #tpu.memory_space<vmem>>, %arg25: memref<1x64xf32, #tpu.memory_space<vmem>>, %arg26: memref<16x64xf32, #tpu.memory_space<vmem>>, %arg27: memref<2x2x32xf32, #tpu.memory_space<vmem>>, %arg28: memref<2x2x32xf32, #tpu.memory_space<vmem>>, %arg29: memref<16x32xf32, #tpu.memory_space<vmem>>) attributes {dimension_semantics = [#tpu.dimension_semantics<arbitrary>], iteration_bounds = array<i64: 1>, scalar_prefetch = 0 : i64, scratch_operands = 1 : i64, tpu.core_type = #tpu.core_type<tc>, window_params = [{pipeline_mode = #tpu.pipeline_mode<synchronous>, transform_indices = @transform_0, window_bounds = array<i64: 16, 32>}, {pipeline_mode = #tpu.pipeline_mode<synchronous>, transform_indices = @transform_1, window_bounds = array<i64: 16, 16>}, {pipeline_mode = #tpu.pipeline_mode<synchronous>, transform_indices = @transform_2, window_bounds = array<i64: 2, 1, 32>}, {pipeline_mode = #tpu.pipeline_mode<synchronous>, transform_indices = @transform_3, window_bounds = array<i64: 2, 1, 32>}, {pipeline_mode = #tpu.pipeline_mode<synchronous>, transform_indices = @transform_4, window_bounds = array<i64: 2, 32, 32>}, {pipeline_mode = #tpu.pipeline_mode<synchronous>, transform_indices = @transform_5, window_bounds = array<i64: 2, 1, 32>}, {pipeline_mode = #tpu.pipeline_mode<synchronous>, transform_indices = @transform_6, window_bounds = array<i64: 2, 32, 32>}, {pipeline_mode = #tpu.pipeline_mode<synchronous>, transform_indices = @transform_7, window_bounds = array<i64: 2, 1, 32>}, {pipeline_mode = #tpu.pipeline_mode<synchronous>, transform_indices = @transform_8, window_bounds = array<i64: 2, 32, 32>}, {pipeline_mode = #tpu.pipeline_mode<synchronous>, transform_indices = @transform_9, window_bounds = array<i64: 2, 1, 32>}, {pipeline_mode = #tpu.pipeline_mode<synchronous>, transform_indices = @transform_10, window_bounds = array<i64: 2, 32, 32>}, {pipeline_mode = #tpu.pipeline_mode<synchronous>, transform_indices = @transform_11, window_bounds = array<i64: 2, 1, 32>}, {pipeline_mode = #tpu.pipeline_mode<synchronous>, transform_indices = @transform_12, window_bounds = array<i64: 2, 1, 32>}, {pipeline_mode = #tpu.pipeline_mode<synchronous>, transform_indices = @transform_13, window_bounds = array<i64: 2, 1, 32>}, {pipeline_mode = #tpu.pipeline_mode<synchronous>, transform_indices = @transform_14, window_bounds = array<i64: 2, 32, 128>}, {pipeline_mode = #tpu.pipeline_mode<synchronous>, transform_indices = @transform_15, window_bounds = array<i64: 2, 1, 128>}, {pipeline_mode = #tpu.pipeline_mode<synchronous>, transform_indices = @transform_16, window_bounds = array<i64: 2, 128, 32>}, {pipeline_mode = #tpu.pipeline_mode<synchronous>, transform_indices = @transform_17, window_bounds = array<i64: 2, 1, 32>}, {pipeline_mode = #tpu.pipeline_mode<synchronous>, transform_indices = @transform_18, window_bounds = array<i64: 2, 32, 128>}, {pipeline_mode = #tpu.pipeline_mode<synchronous>, transform_indices = @transform_19, window_bounds = array<i64: 2, 32, 128>}, {pipeline_mode = #tpu.pipeline_mode<synchronous>, transform_indices = @transform_20, window_bounds = array<i64: 2, 1, 128>}, {pipeline_mode = #tpu.pipeline_mode<synchronous>, transform_indices = @transform_21, window_bounds = array<i64: 1, 32>}, {pipeline_mode = #tpu.pipeline_mode<synchronous>, transform_indices = @transform_22, window_bounds = array<i64: 1, 32>}, {pipeline_mode = #tpu.pipeline_mode<synchronous>, transform_indices = @transform_23, window_bounds = array<i64: 32, 64>}, {pipeline_mode = #tpu.pipeline_mode<synchronous>, transform_indices = @transform_24, window_bounds = array<i64: 1, 64>}, {pipeline_mode = #tpu.pipeline_mode<synchronous>, transform_indices = @transform_25, window_bounds = array<i64: 16, 64>}, {pipeline_mode = #tpu.pipeline_mode<synchronous>, transform_indices = @transform_26, window_bounds = array<i64: 2, 2, 32>}, {pipeline_mode = #tpu.pipeline_mode<synchronous>, transform_indices = @transform_27, window_bounds = array<i64: 2, 2, 32>}]} {
    %c0 = arith.constant 0 : index
    %c0_0 = arith.constant 0 : index
    %0 = vector.load %arg1[%c0, %c0_0] : memref<16x32xf32, #tpu.memory_space<vmem>>, vector<16x32xf32>
    %c0_1 = arith.constant 0 : index
    %c0_2 = arith.constant 0 : index
    %1 = vector.load %arg2[%c0_1, %c0_2] : memref<16x16xf32, #tpu.memory_space<vmem>>, vector<16x16xf32>
    %c0_3 = arith.constant 0 : index
    %c0_4 = arith.constant 0 : index
    %c0_5 = arith.constant 0 : index
    %2 = vector.load %arg3[%c0_3, %c0_4, %c0_5] : memref<2x1x32xf32, #tpu.memory_space<vmem>>, vector<1x1x32xf32>
    %3 = vector.shape_cast %2 : vector<1x1x32xf32> to vector<1x32xf32>
    %c0_6 = arith.constant 0 : index
    %c0_7 = arith.constant 0 : index
    %c0_8 = arith.constant 0 : index
    %4 = vector.load %arg4[%c0_6, %c0_7, %c0_8] : memref<2x1x32xf32, #tpu.memory_space<vmem>>, vector<1x1x32xf32>
    %5 = vector.shape_cast %4 : vector<1x1x32xf32> to vector<1x32xf32>
    %cst = arith.constant dense<0.000000e+00> : vector<16xf32>
    %6 = vector.multi_reduction <add>, %0, %cst [1] : vector<16x32xf32> to vector<16xf32>
    %7 = vector.shape_cast %6 : vector<16xf32> to vector<16x1xf32>
    %cst_9 = arith.constant 3.200000e+01 : f32
    %8 = vector.broadcast %cst_9 : f32 to vector<16x1xf32>
    %9 = arith.divf %7, %8 : vector<16x1xf32>
    %10 = vector.broadcast %9 : vector<16x1xf32> to vector<16x32xf32>
    %11 = arith.subf %0, %10 : vector<16x32xf32>
    %12 = arith.mulf %11, %11 : vector<16x32xf32>
    %cst_10 = arith.constant dense<0.000000e+00> : vector<16xf32>
    %13 = vector.multi_reduction <add>, %12, %cst_10 [1] : vector<16x32xf32> to vector<16xf32>
    %14 = vector.shape_cast %13 : vector<16xf32> to vector<16x1xf32>
    %cst_11 = arith.constant 3.200000e+01 : f32
    %15 = vector.broadcast %cst_11 : f32 to vector<16x1xf32>
    %16 = arith.divf %14, %15 : vector<16x1xf32>
    %17 = vector.broadcast %9 : vector<16x1xf32> to vector<16x32xf32>
    %18 = arith.subf %0, %17 : vector<16x32xf32>
    %cst_12 = arith.constant 9.99999974E-6 : f32
    %19 = vector.broadcast %cst_12 : f32 to vector<16x1xf32>
    %20 = arith.addf %16, %19 : vector<16x1xf32>
    %21 = math.rsqrt %20 : vector<16x1xf32>
    %22 = vector.broadcast %21 : vector<16x1xf32> to vector<16x32xf32>
    %23 = arith.mulf %18, %22 : vector<16x32xf32>
    %24 = vector.broadcast %3 : vector<1x32xf32> to vector<16x32xf32>
    %25 = arith.mulf %23, %24 : vector<16x32xf32>
    %26 = vector.broadcast %5 : vector<1x32xf32> to vector<16x32xf32>
    %27 = arith.addf %25, %26 : vector<16x32xf32>
    %c0_13 = arith.constant 0 : index
    %c0_14 = arith.constant 0 : index
    %c0_15 = arith.constant 0 : index
    %28 = vector.load %arg5[%c0_13, %c0_14, %c0_15] : memref<2x32x32xf32, #tpu.memory_space<vmem>>, vector<1x32x32xf32>
    %29 = vector.shape_cast %28 : vector<1x32x32xf32> to vector<32x32xf32>
    %cst_16 = arith.constant dense<0.000000e+00> : vector<16x32xf32>
    %30 = tpu.matmul %27, %29, %cst_16 {dimension_numbers = #tpu.dot_dimension_numbers<[1], [0], [0], [1], [0, 0, 1, 1], [], []>} : vector<16x32xf32>, vector<32x32xf32>, vector<16x32xf32> -> vector<16x32xf32>
    %c0_17 = arith.constant 0 : index
    %c0_18 = arith.constant 0 : index
    %c0_19 = arith.constant 0 : index
    %31 = vector.load %arg6[%c0_17, %c0_18, %c0_19] : memref<2x1x32xf32, #tpu.memory_space<vmem>>, vector<1x1x32xf32>
    %32 = vector.shape_cast %31 : vector<1x1x32xf32> to vector<1x32xf32>
    %33 = vector.broadcast %32 : vector<1x32xf32> to vector<16x32xf32>
    %34 = arith.addf %30, %33 : vector<16x32xf32>
    %c0_20 = arith.constant 0 : index
    %c0_21 = arith.constant 0 : index
    %c0_22 = arith.constant 0 : index
    %35 = vector.load %arg7[%c0_20, %c0_21, %c0_22] : memref<2x32x32xf32, #tpu.memory_space<vmem>>, vector<1x32x32xf32>
    %36 = vector.shape_cast %35 : vector<1x32x32xf32> to vector<32x32xf32>
    %cst_23 = arith.constant dense<0.000000e+00> : vector<16x32xf32>
    %37 = tpu.matmul %27, %36, %cst_23 {dimension_numbers = #tpu.dot_dimension_numbers<[1], [0], [0], [1], [0, 0, 1, 1], [], []>} : vector<16x32xf32>, vector<32x32xf32>, vector<16x32xf32> -> vector<16x32xf32>
    %c0_24 = arith.constant 0 : index
    %c0_25 = arith.constant 0 : index
    %c0_26 = arith.constant 0 : index
    %38 = vector.load %arg8[%c0_24, %c0_25, %c0_26] : memref<2x1x32xf32, #tpu.memory_space<vmem>>, vector<1x1x32xf32>
    %39 = vector.shape_cast %38 : vector<1x1x32xf32> to vector<1x32xf32>
    %40 = vector.broadcast %39 : vector<1x32xf32> to vector<16x32xf32>
    %41 = arith.addf %37, %40 : vector<16x32xf32>
    %c0_27 = arith.constant 0 : index
    %c0_28 = arith.constant 0 : index
    %c0_29 = arith.constant 0 : index
    %42 = vector.load %arg9[%c0_27, %c0_28, %c0_29] : memref<2x32x32xf32, #tpu.memory_space<vmem>>, vector<1x32x32xf32>
    %43 = vector.shape_cast %42 : vector<1x32x32xf32> to vector<32x32xf32>
    %cst_30 = arith.constant dense<0.000000e+00> : vector<16x32xf32>
    %44 = tpu.matmul %27, %43, %cst_30 {dimension_numbers = #tpu.dot_dimension_numbers<[1], [0], [0], [1], [0, 0, 1, 1], [], []>} : vector<16x32xf32>, vector<32x32xf32>, vector<16x32xf32> -> vector<16x32xf32>
    %c0_31 = arith.constant 0 : index
    %c0_32 = arith.constant 0 : index
    %c0_33 = arith.constant 0 : index
    %45 = vector.load %arg10[%c0_31, %c0_32, %c0_33] : memref<2x1x32xf32, #tpu.memory_space<vmem>>, vector<1x1x32xf32>
    %46 = vector.shape_cast %45 : vector<1x1x32xf32> to vector<1x32xf32>
    %47 = vector.broadcast %46 : vector<1x32xf32> to vector<16x32xf32>
    %48 = arith.addf %44, %47 : vector<16x32xf32>
    %c0_34 = arith.constant 0 : index
    %c0_35 = arith.constant 0 : index
    %c0_36 = arith.constant 0 : index
    %49 = vector.load %arg11[%c0_34, %c0_35, %c0_36] : memref<2x32x32xf32, #tpu.memory_space<vmem>>, vector<1x32x32xf32>
    %50 = vector.shape_cast %49 : vector<1x32x32xf32> to vector<32x32xf32>
    %cst_37 = arith.constant 0.000000e+00 : f32
    %51 = vector.broadcast %cst_37 : f32 to vector<16x32xf32>
    %52 = vector.extract_strided_slice %34 {offsets = [0, 0], sizes = [16, 8], strides = [1, 1]} : vector<16x32xf32> to vector<16x8xf32>
    %53 = vector.extract_strided_slice %41 {offsets = [0, 0], sizes = [16, 8], strides = [1, 1]} : vector<16x32xf32> to vector<16x8xf32>
    %cst_38 = arith.constant dense<0.000000e+00> : vector<16x16xf32>
    %54 = tpu.matmul %52, %53, %cst_38 {dimension_numbers = #tpu.dot_dimension_numbers<[1], [1], [0], [0], [0, 0, 1, 0], [], []>} : vector<16x8xf32>, vector<16x8xf32>, vector<16x16xf32> -> vector<16x16xf32>
    %cst_39 = arith.constant 0.353553385 : f32
    %55 = vector.broadcast %cst_39 : f32 to vector<16x16xf32>
    %56 = arith.mulf %54, %55 : vector<16x16xf32>
    %57 = arith.addf %56, %1 : vector<16x16xf32>
    %cst_40 = arith.constant dense<0xFF800000> : vector<16xf32>
    %58 = vector.multi_reduction <maximumf>, %57, %cst_40 [1] : vector<16x16xf32> to vector<16xf32>
    %59 = vector.shape_cast %58 : vector<16xf32> to vector<16x1xf32>
    %60 = vector.broadcast %59 : vector<16x1xf32> to vector<16x16xf32>
    %61 = arith.subf %57, %60 : vector<16x16xf32>
    %62 = math.exp %61 : vector<16x16xf32>
    %cst_41 = arith.constant dense<0.000000e+00> : vector<16xf32>
    %63 = vector.multi_reduction <add>, %62, %cst_41 [1] : vector<16x16xf32> to vector<16xf32>
    %64 = vector.shape_cast %63 : vector<16xf32> to vector<16x1xf32>
    %65 = tpu.reciprocal %64 {approx = true} : vector<16x1xf32> -> vector<16x1xf32>
    %66 = vector.broadcast %65 : vector<16x1xf32> to vector<16x16xf32>
    %67 = arith.mulf %62, %66 : vector<16x16xf32>
    %68 = vector.extract_strided_slice %48 {offsets = [0, 0], sizes = [16, 8], strides = [1, 1]} : vector<16x32xf32> to vector<16x8xf32>
    %cst_42 = arith.constant dense<0.000000e+00> : vector<16x8xf32>
    %69 = tpu.matmul %67, %68, %cst_42 {dimension_numbers = #tpu.dot_dimension_numbers<[1], [0], [0], [1], [0, 0, 1, 1], [], []>} : vector<16x16xf32>, vector<16x8xf32>, vector<16x8xf32> -> vector<16x8xf32>
    %70 = vector.extract_strided_slice %50 {offsets = [0, 0], sizes = [8, 32], strides = [1, 1]} : vector<32x32xf32> to vector<8x32xf32>
    %cst_43 = arith.constant dense<0.000000e+00> : vector<16x32xf32>
    %71 = tpu.matmul %69, %70, %cst_43 {dimension_numbers = #tpu.dot_dimension_numbers<[1], [0], [0], [1], [0, 0, 1, 1], [], []>} : vector<16x8xf32>, vector<8x32xf32>, vector<16x32xf32> -> vector<16x32xf32>
    %72 = arith.addf %51, %71 : vector<16x32xf32>
    %73 = vector.extract_strided_slice %34 {offsets = [0, 8], sizes = [16, 8], strides = [1, 1]} : vector<16x32xf32> to vector<16x8xf32>
    %74 = vector.extract_strided_slice %41 {offsets = [0, 8], sizes = [16, 8], strides = [1, 1]} : vector<16x32xf32> to vector<16x8xf32>
    %cst_44 = arith.constant dense<0.000000e+00> : vector<16x16xf32>
    %75 = tpu.matmul %73, %74, %cst_44 {dimension_numbers = #tpu.dot_dimension_numbers<[1], [1], [0], [0], [0, 0, 1, 0], [], []>} : vector<16x8xf32>, vector<16x8xf32>, vector<16x16xf32> -> vector<16x16xf32>
    %cst_45 = arith.constant 0.353553385 : f32
    %76 = vector.broadcast %cst_45 : f32 to vector<16x16xf32>
    %77 = arith.mulf %75, %76 : vector<16x16xf32>
    %78 = arith.addf %77, %1 : vector<16x16xf32>
    %cst_46 = arith.constant dense<0xFF800000> : vector<16xf32>
    %79 = vector.multi_reduction <maximumf>, %78, %cst_46 [1] : vector<16x16xf32> to vector<16xf32>
    %80 = vector.shape_cast %79 : vector<16xf32> to vector<16x1xf32>
    %81 = vector.broadcast %80 : vector<16x1xf32> to vector<16x16xf32>
    %82 = arith.subf %78, %81 : vector<16x16xf32>
    %83 = math.exp %82 : vector<16x16xf32>
    %cst_47 = arith.constant dense<0.000000e+00> : vector<16xf32>
    %84 = vector.multi_reduction <add>, %83, %cst_47 [1] : vector<16x16xf32> to vector<16xf32>
    %85 = vector.shape_cast %84 : vector<16xf32> to vector<16x1xf32>
    %86 = tpu.reciprocal %85 {approx = true} : vector<16x1xf32> -> vector<16x1xf32>
    %87 = vector.broadcast %86 : vector<16x1xf32> to vector<16x16xf32>
    %88 = arith.mulf %83, %87 : vector<16x16xf32>
    %89 = vector.extract_strided_slice %48 {offsets = [0, 8], sizes = [16, 8], strides = [1, 1]} : vector<16x32xf32> to vector<16x8xf32>
    %cst_48 = arith.constant dense<0.000000e+00> : vector<16x8xf32>
    %90 = tpu.matmul %88, %89, %cst_48 {dimension_numbers = #tpu.dot_dimension_numbers<[1], [0], [0], [1], [0, 0, 1, 1], [], []>} : vector<16x16xf32>, vector<16x8xf32>, vector<16x8xf32> -> vector<16x8xf32>
    %91 = vector.extract_strided_slice %50 {offsets = [8, 0], sizes = [8, 32], strides = [1, 1]} : vector<32x32xf32> to vector<8x32xf32>
    %cst_49 = arith.constant dense<0.000000e+00> : vector<16x32xf32>
    %92 = tpu.matmul %90, %91, %cst_49 {dimension_numbers = #tpu.dot_dimension_numbers<[1], [0], [0], [1], [0, 0, 1, 1], [], []>} : vector<16x8xf32>, vector<8x32xf32>, vector<16x32xf32> -> vector<16x32xf32>
    %93 = arith.addf %72, %92 : vector<16x32xf32>
    %94 = vector.extract_strided_slice %34 {offsets = [0, 16], sizes = [16, 8], strides = [1, 1]} : vector<16x32xf32> to vector<16x8xf32>
    %95 = vector.extract_strided_slice %41 {offsets = [0, 16], sizes = [16, 8], strides = [1, 1]} : vector<16x32xf32> to vector<16x8xf32>
    %cst_50 = arith.constant dense<0.000000e+00> : vector<16x16xf32>
    %96 = tpu.matmul %94, %95, %cst_50 {dimension_numbers = #tpu.dot_dimension_numbers<[1], [1], [0], [0], [0, 0, 1, 0], [], []>} : vector<16x8xf32>, vector<16x8xf32>, vector<16x16xf32> -> vector<16x16xf32>
    %cst_51 = arith.constant 0.353553385 : f32
    %97 = vector.broadcast %cst_51 : f32 to vector<16x16xf32>
    %98 = arith.mulf %96, %97 : vector<16x16xf32>
    %99 = arith.addf %98, %1 : vector<16x16xf32>
    %cst_52 = arith.constant dense<0xFF800000> : vector<16xf32>
    %100 = vector.multi_reduction <maximumf>, %99, %cst_52 [1] : vector<16x16xf32> to vector<16xf32>
    %101 = vector.shape_cast %100 : vector<16xf32> to vector<16x1xf32>
    %102 = vector.broadcast %101 : vector<16x1xf32> to vector<16x16xf32>
    %103 = arith.subf %99, %102 : vector<16x16xf32>
    %104 = math.exp %103 : vector<16x16xf32>
    %cst_53 = arith.constant dense<0.000000e+00> : vector<16xf32>
    %105 = vector.multi_reduction <add>, %104, %cst_53 [1] : vector<16x16xf32> to vector<16xf32>
    %106 = vector.shape_cast %105 : vector<16xf32> to vector<16x1xf32>
    %107 = tpu.reciprocal %106 {approx = true} : vector<16x1xf32> -> vector<16x1xf32>
    %108 = vector.broadcast %107 : vector<16x1xf32> to vector<16x16xf32>
    %109 = arith.mulf %104, %108 : vector<16x16xf32>
    %110 = vector.extract_strided_slice %48 {offsets = [0, 16], sizes = [16, 8], strides = [1, 1]} : vector<16x32xf32> to vector<16x8xf32>
    %cst_54 = arith.constant dense<0.000000e+00> : vector<16x8xf32>
    %111 = tpu.matmul %109, %110, %cst_54 {dimension_numbers = #tpu.dot_dimension_numbers<[1], [0], [0], [1], [0, 0, 1, 1], [], []>} : vector<16x16xf32>, vector<16x8xf32>, vector<16x8xf32> -> vector<16x8xf32>
    %112 = vector.extract_strided_slice %50 {offsets = [16, 0], sizes = [8, 32], strides = [1, 1]} : vector<32x32xf32> to vector<8x32xf32>
    %cst_55 = arith.constant dense<0.000000e+00> : vector<16x32xf32>
    %113 = tpu.matmul %111, %112, %cst_55 {dimension_numbers = #tpu.dot_dimension_numbers<[1], [0], [0], [1], [0, 0, 1, 1], [], []>} : vector<16x8xf32>, vector<8x32xf32>, vector<16x32xf32> -> vector<16x32xf32>
    %114 = arith.addf %93, %113 : vector<16x32xf32>
    %115 = vector.extract_strided_slice %34 {offsets = [0, 24], sizes = [16, 8], strides = [1, 1]} : vector<16x32xf32> to vector<16x8xf32>
    %116 = vector.extract_strided_slice %41 {offsets = [0, 24], sizes = [16, 8], strides = [1, 1]} : vector<16x32xf32> to vector<16x8xf32>
    %cst_56 = arith.constant dense<0.000000e+00> : vector<16x16xf32>
    %117 = tpu.matmul %115, %116, %cst_56 {dimension_numbers = #tpu.dot_dimension_numbers<[1], [1], [0], [0], [0, 0, 1, 0], [], []>} : vector<16x8xf32>, vector<16x8xf32>, vector<16x16xf32> -> vector<16x16xf32>
    %cst_57 = arith.constant 0.353553385 : f32
    %118 = vector.broadcast %cst_57 : f32 to vector<16x16xf32>
    %119 = arith.mulf %117, %118 : vector<16x16xf32>
    %120 = arith.addf %119, %1 : vector<16x16xf32>
    %cst_58 = arith.constant dense<0xFF800000> : vector<16xf32>
    %121 = vector.multi_reduction <maximumf>, %120, %cst_58 [1] : vector<16x16xf32> to vector<16xf32>
    %122 = vector.shape_cast %121 : vector<16xf32> to vector<16x1xf32>
    %123 = vector.broadcast %122 : vector<16x1xf32> to vector<16x16xf32>
    %124 = arith.subf %120, %123 : vector<16x16xf32>
    %125 = math.exp %124 : vector<16x16xf32>
    %cst_59 = arith.constant dense<0.000000e+00> : vector<16xf32>
    %126 = vector.multi_reduction <add>, %125, %cst_59 [1] : vector<16x16xf32> to vector<16xf32>
    %127 = vector.shape_cast %126 : vector<16xf32> to vector<16x1xf32>
    %128 = tpu.reciprocal %127 {approx = true} : vector<16x1xf32> -> vector<16x1xf32>
    %129 = vector.broadcast %128 : vector<16x1xf32> to vector<16x16xf32>
    %130 = arith.mulf %125, %129 : vector<16x16xf32>
    %131 = vector.extract_strided_slice %48 {offsets = [0, 24], sizes = [16, 8], strides = [1, 1]} : vector<16x32xf32> to vector<16x8xf32>
    %cst_60 = arith.constant dense<0.000000e+00> : vector<16x8xf32>
    %132 = tpu.matmul %130, %131, %cst_60 {dimension_numbers = #tpu.dot_dimension_numbers<[1], [0], [0], [1], [0, 0, 1, 1], [], []>} : vector<16x16xf32>, vector<16x8xf32>, vector<16x8xf32> -> vector<16x8xf32>
    %133 = vector.extract_strided_slice %50 {offsets = [24, 0], sizes = [8, 32], strides = [1, 1]} : vector<32x32xf32> to vector<8x32xf32>
    %cst_61 = arith.constant dense<0.000000e+00> : vector<16x32xf32>
    %134 = tpu.matmul %132, %133, %cst_61 {dimension_numbers = #tpu.dot_dimension_numbers<[1], [0], [0], [1], [0, 0, 1, 1], [], []>} : vector<16x8xf32>, vector<8x32xf32>, vector<16x32xf32> -> vector<16x32xf32>
    %135 = arith.addf %114, %134 : vector<16x32xf32>
    %136 = arith.addf %0, %135 : vector<16x32xf32>
    %c0_62 = arith.constant 0 : index
    %c0_63 = arith.constant 0 : index
    %c0_64 = arith.constant 0 : index
    %137 = vector.load %arg12[%c0_62, %c0_63, %c0_64] : memref<2x1x32xf32, #tpu.memory_space<vmem>>, vector<1x1x32xf32>
    %138 = vector.shape_cast %137 : vector<1x1x32xf32> to vector<1x32xf32>
    %139 = vector.broadcast %138 : vector<1x32xf32> to vector<16x32xf32>
    %140 = arith.addf %136, %139 : vector<16x32xf32>
    %c0_65 = arith.constant 0 : index
    %c0_66 = arith.constant 0 : index
    %c0_67 = arith.constant 0 : index
    %141 = vector.load %arg13[%c0_65, %c0_66, %c0_67] : memref<2x1x32xf32, #tpu.memory_space<vmem>>, vector<1x1x32xf32>
    %142 = vector.shape_cast %141 : vector<1x1x32xf32> to vector<1x32xf32>
    %c0_68 = arith.constant 0 : index
    %c0_69 = arith.constant 0 : index
    %c0_70 = arith.constant 0 : index
    %143 = vector.load %arg14[%c0_68, %c0_69, %c0_70] : memref<2x1x32xf32, #tpu.memory_space<vmem>>, vector<1x1x32xf32>
    %144 = vector.shape_cast %143 : vector<1x1x32xf32> to vector<1x32xf32>
    %cst_71 = arith.constant dense<0.000000e+00> : vector<16xf32>
    %145 = vector.multi_reduction <add>, %140, %cst_71 [1] : vector<16x32xf32> to vector<16xf32>
    %146 = vector.shape_cast %145 : vector<16xf32> to vector<16x1xf32>
    %cst_72 = arith.constant 3.200000e+01 : f32
    %147 = vector.broadcast %cst_72 : f32 to vector<16x1xf32>
    %148 = arith.divf %146, %147 : vector<16x1xf32>
    %149 = vector.broadcast %148 : vector<16x1xf32> to vector<16x32xf32>
    %150 = arith.subf %140, %149 : vector<16x32xf32>
    %151 = arith.mulf %150, %150 : vector<16x32xf32>
    %cst_73 = arith.constant dense<0.000000e+00> : vector<16xf32>
    %152 = vector.multi_reduction <add>, %151, %cst_73 [1] : vector<16x32xf32> to vector<16xf32>
    %153 = vector.shape_cast %152 : vector<16xf32> to vector<16x1xf32>
    %cst_74 = arith.constant 3.200000e+01 : f32
    %154 = vector.broadcast %cst_74 : f32 to vector<16x1xf32>
    %155 = arith.divf %153, %154 : vector<16x1xf32>
    %156 = vector.broadcast %148 : vector<16x1xf32> to vector<16x32xf32>
    %157 = arith.subf %140, %156 : vector<16x32xf32>
    %cst_75 = arith.constant 9.99999974E-6 : f32
    %158 = vector.broadcast %cst_75 : f32 to vector<16x1xf32>
    %159 = arith.addf %155, %158 : vector<16x1xf32>
    %160 = math.rsqrt %159 : vector<16x1xf32>
    %161 = vector.broadcast %160 : vector<16x1xf32> to vector<16x32xf32>
    %162 = arith.mulf %157, %161 : vector<16x32xf32>
    %163 = vector.broadcast %142 : vector<1x32xf32> to vector<16x32xf32>
    %164 = arith.mulf %162, %163 : vector<16x32xf32>
    %165 = vector.broadcast %144 : vector<1x32xf32> to vector<16x32xf32>
    %166 = arith.addf %164, %165 : vector<16x32xf32>
    %c0_76 = arith.constant 0 : index
    %c0_77 = arith.constant 0 : index
    %c0_78 = arith.constant 0 : index
    %167 = vector.load %arg15[%c0_76, %c0_77, %c0_78] : memref<2x32x128xf32, #tpu.memory_space<vmem>>, vector<1x32x128xf32>
    %168 = vector.shape_cast %167 : vector<1x32x128xf32> to vector<32x128xf32>
    %cst_79 = arith.constant dense<0.000000e+00> : vector<16x128xf32>
    %169 = tpu.matmul %166, %168, %cst_79 {dimension_numbers = #tpu.dot_dimension_numbers<[1], [0], [0], [1], [0, 0, 1, 1], [], []>} : vector<16x32xf32>, vector<32x128xf32>, vector<16x128xf32> -> vector<16x128xf32>
    %c0_80 = arith.constant 0 : index
    %c0_81 = arith.constant 0 : index
    %c0_82 = arith.constant 0 : index
    %170 = vector.load %arg16[%c0_80, %c0_81, %c0_82] : memref<2x1x128xf32, #tpu.memory_space<vmem>>, vector<1x1x128xf32>
    %171 = vector.shape_cast %170 : vector<1x1x128xf32> to vector<1x128xf32>
    %172 = vector.broadcast %171 : vector<1x128xf32> to vector<16x128xf32>
    %173 = arith.addf %169, %172 : vector<16x128xf32>
    %cst_83 = arith.constant 5.000000e-01 : f32
    %174 = vector.broadcast %cst_83 : f32 to vector<16x128xf32>
    %175 = arith.mulf %174, %173 : vector<16x128xf32>
    %cst_84 = arith.constant 4.471500e-02 : f32
    %176 = vector.broadcast %cst_84 : f32 to vector<16x128xf32>
    %177 = arith.mulf %176, %173 : vector<16x128xf32>
    %178 = arith.mulf %177, %173 : vector<16x128xf32>
    %179 = arith.mulf %178, %173 : vector<16x128xf32>
    %180 = arith.addf %173, %179 : vector<16x128xf32>
    %cst_85 = arith.constant 0.797884583 : f32
    %181 = vector.broadcast %cst_85 : f32 to vector<16x128xf32>
    %182 = arith.mulf %181, %180 : vector<16x128xf32>
    %183 = math.tanh %182 : vector<16x128xf32>
    %cst_86 = arith.constant 1.000000e+00 : f32
    %184 = vector.broadcast %cst_86 : f32 to vector<16x128xf32>
    %185 = arith.addf %184, %183 : vector<16x128xf32>
    %186 = arith.mulf %175, %185 : vector<16x128xf32>
    %c0_87 = arith.constant 0 : index
    %c0_88 = arith.constant 0 : index
    %c0_89 = arith.constant 0 : index
    %187 = vector.load %arg17[%c0_87, %c0_88, %c0_89] : memref<2x128x32xf32, #tpu.memory_space<vmem>>, vector<1x128x32xf32>
    %188 = vector.shape_cast %187 : vector<1x128x32xf32> to vector<128x32xf32>
    %cst_90 = arith.constant dense<0.000000e+00> : vector<16x32xf32>
    %189 = tpu.matmul %186, %188, %cst_90 {dimension_numbers = #tpu.dot_dimension_numbers<[1], [0], [0], [1], [0, 0, 1, 1], [], []>} : vector<16x128xf32>, vector<128x32xf32>, vector<16x32xf32> -> vector<16x32xf32>
    %190 = arith.addf %140, %189 : vector<16x32xf32>
    %c0_91 = arith.constant 0 : index
    %c0_92 = arith.constant 0 : index
    %c0_93 = arith.constant 0 : index
    %191 = vector.load %arg18[%c0_91, %c0_92, %c0_93] : memref<2x1x32xf32, #tpu.memory_space<vmem>>, vector<1x1x32xf32>
    %192 = vector.shape_cast %191 : vector<1x1x32xf32> to vector<1x32xf32>
    %193 = vector.broadcast %192 : vector<1x32xf32> to vector<16x32xf32>
    %194 = arith.addf %190, %193 : vector<16x32xf32>
    %c1 = arith.constant 1 : index
    %c0_94 = arith.constant 0 : index
    %c0_95 = arith.constant 0 : index
    %195 = vector.load %arg3[%c1, %c0_94, %c0_95] : memref<2x1x32xf32, #tpu.memory_space<vmem>>, vector<1x1x32xf32>
    %196 = vector.shape_cast %195 : vector<1x1x32xf32> to vector<1x32xf32>
    %c1_96 = arith.constant 1 : index
    %c0_97 = arith.constant 0 : index
    %c0_98 = arith.constant 0 : index
    %197 = vector.load %arg4[%c1_96, %c0_97, %c0_98] : memref<2x1x32xf32, #tpu.memory_space<vmem>>, vector<1x1x32xf32>
    %198 = vector.shape_cast %197 : vector<1x1x32xf32> to vector<1x32xf32>
    %cst_99 = arith.constant dense<0.000000e+00> : vector<16xf32>
    %199 = vector.multi_reduction <add>, %194, %cst_99 [1] : vector<16x32xf32> to vector<16xf32>
    %200 = vector.shape_cast %199 : vector<16xf32> to vector<16x1xf32>
    %cst_100 = arith.constant 3.200000e+01 : f32
    %201 = vector.broadcast %cst_100 : f32 to vector<16x1xf32>
    %202 = arith.divf %200, %201 : vector<16x1xf32>
    %203 = vector.broadcast %202 : vector<16x1xf32> to vector<16x32xf32>
    %204 = arith.subf %194, %203 : vector<16x32xf32>
    %205 = arith.mulf %204, %204 : vector<16x32xf32>
    %cst_101 = arith.constant dense<0.000000e+00> : vector<16xf32>
    %206 = vector.multi_reduction <add>, %205, %cst_101 [1] : vector<16x32xf32> to vector<16xf32>
    %207 = vector.shape_cast %206 : vector<16xf32> to vector<16x1xf32>
    %cst_102 = arith.constant 3.200000e+01 : f32
    %208 = vector.broadcast %cst_102 : f32 to vector<16x1xf32>
    %209 = arith.divf %207, %208 : vector<16x1xf32>
    %210 = vector.broadcast %202 : vector<16x1xf32> to vector<16x32xf32>
    %211 = arith.subf %194, %210 : vector<16x32xf32>
    %cst_103 = arith.constant 9.99999974E-6 : f32
    %212 = vector.broadcast %cst_103 : f32 to vector<16x1xf32>
    %213 = arith.addf %209, %212 : vector<16x1xf32>
    %214 = math.rsqrt %213 : vector<16x1xf32>
    %215 = vector.broadcast %214 : vector<16x1xf32> to vector<16x32xf32>
    %216 = arith.mulf %211, %215 : vector<16x32xf32>
    %217 = vector.broadcast %196 : vector<1x32xf32> to vector<16x32xf32>
    %218 = arith.mulf %216, %217 : vector<16x32xf32>
    %219 = vector.broadcast %198 : vector<1x32xf32> to vector<16x32xf32>
    %220 = arith.addf %218, %219 : vector<16x32xf32>
    %c1_104 = arith.constant 1 : index
    %c0_105 = arith.constant 0 : index
    %c0_106 = arith.constant 0 : index
    %221 = vector.load %arg5[%c1_104, %c0_105, %c0_106] : memref<2x32x32xf32, #tpu.memory_space<vmem>>, vector<1x32x32xf32>
    %222 = vector.shape_cast %221 : vector<1x32x32xf32> to vector<32x32xf32>
    %cst_107 = arith.constant dense<0.000000e+00> : vector<16x32xf32>
    %223 = tpu.matmul %220, %222, %cst_107 {dimension_numbers = #tpu.dot_dimension_numbers<[1], [0], [0], [1], [0, 0, 1, 1], [], []>} : vector<16x32xf32>, vector<32x32xf32>, vector<16x32xf32> -> vector<16x32xf32>
    %c1_108 = arith.constant 1 : index
    %c0_109 = arith.constant 0 : index
    %c0_110 = arith.constant 0 : index
    %224 = vector.load %arg6[%c1_108, %c0_109, %c0_110] : memref<2x1x32xf32, #tpu.memory_space<vmem>>, vector<1x1x32xf32>
    %225 = vector.shape_cast %224 : vector<1x1x32xf32> to vector<1x32xf32>
    %226 = vector.broadcast %225 : vector<1x32xf32> to vector<16x32xf32>
    %227 = arith.addf %223, %226 : vector<16x32xf32>
    %c1_111 = arith.constant 1 : index
    %c0_112 = arith.constant 0 : index
    %c0_113 = arith.constant 0 : index
    %228 = vector.load %arg7[%c1_111, %c0_112, %c0_113] : memref<2x32x32xf32, #tpu.memory_space<vmem>>, vector<1x32x32xf32>
    %229 = vector.shape_cast %228 : vector<1x32x32xf32> to vector<32x32xf32>
    %cst_114 = arith.constant dense<0.000000e+00> : vector<16x32xf32>
    %230 = tpu.matmul %220, %229, %cst_114 {dimension_numbers = #tpu.dot_dimension_numbers<[1], [0], [0], [1], [0, 0, 1, 1], [], []>} : vector<16x32xf32>, vector<32x32xf32>, vector<16x32xf32> -> vector<16x32xf32>
    %c1_115 = arith.constant 1 : index
    %c0_116 = arith.constant 0 : index
    %c0_117 = arith.constant 0 : index
    %231 = vector.load %arg8[%c1_115, %c0_116, %c0_117] : memref<2x1x32xf32, #tpu.memory_space<vmem>>, vector<1x1x32xf32>
    %232 = vector.shape_cast %231 : vector<1x1x32xf32> to vector<1x32xf32>
    %233 = vector.broadcast %232 : vector<1x32xf32> to vector<16x32xf32>
    %234 = arith.addf %230, %233 : vector<16x32xf32>
    %c1_118 = arith.constant 1 : index
    %c0_119 = arith.constant 0 : index
    %c0_120 = arith.constant 0 : index
    %235 = vector.load %arg9[%c1_118, %c0_119, %c0_120] : memref<2x32x32xf32, #tpu.memory_space<vmem>>, vector<1x32x32xf32>
    %236 = vector.shape_cast %235 : vector<1x32x32xf32> to vector<32x32xf32>
    %cst_121 = arith.constant dense<0.000000e+00> : vector<16x32xf32>
    %237 = tpu.matmul %220, %236, %cst_121 {dimension_numbers = #tpu.dot_dimension_numbers<[1], [0], [0], [1], [0, 0, 1, 1], [], []>} : vector<16x32xf32>, vector<32x32xf32>, vector<16x32xf32> -> vector<16x32xf32>
    %c1_122 = arith.constant 1 : index
    %c0_123 = arith.constant 0 : index
    %c0_124 = arith.constant 0 : index
    %238 = vector.load %arg10[%c1_122, %c0_123, %c0_124] : memref<2x1x32xf32, #tpu.memory_space<vmem>>, vector<1x1x32xf32>
    %239 = vector.shape_cast %238 : vector<1x1x32xf32> to vector<1x32xf32>
    %240 = vector.broadcast %239 : vector<1x32xf32> to vector<16x32xf32>
    %241 = arith.addf %237, %240 : vector<16x32xf32>
    %c1_125 = arith.constant 1 : index
    %c0_126 = arith.constant 0 : index
    %c0_127 = arith.constant 0 : index
    %242 = vector.load %arg11[%c1_125, %c0_126, %c0_127] : memref<2x32x32xf32, #tpu.memory_space<vmem>>, vector<1x32x32xf32>
    %243 = vector.shape_cast %242 : vector<1x32x32xf32> to vector<32x32xf32>
    %cst_128 = arith.constant 0.000000e+00 : f32
    %244 = vector.broadcast %cst_128 : f32 to vector<16x32xf32>
    %245 = vector.extract_strided_slice %227 {offsets = [0, 0], sizes = [16, 8], strides = [1, 1]} : vector<16x32xf32> to vector<16x8xf32>
    %246 = vector.extract_strided_slice %234 {offsets = [0, 0], sizes = [16, 8], strides = [1, 1]} : vector<16x32xf32> to vector<16x8xf32>
    %cst_129 = arith.constant dense<0.000000e+00> : vector<16x16xf32>
    %247 = tpu.matmul %245, %246, %cst_129 {dimension_numbers = #tpu.dot_dimension_numbers<[1], [1], [0], [0], [0, 0, 1, 0], [], []>} : vector<16x8xf32>, vector<16x8xf32>, vector<16x16xf32> -> vector<16x16xf32>
    %cst_130 = arith.constant 0.353553385 : f32
    %248 = vector.broadcast %cst_130 : f32 to vector<16x16xf32>
    %249 = arith.mulf %247, %248 : vector<16x16xf32>
    %250 = arith.addf %249, %1 : vector<16x16xf32>
    %cst_131 = arith.constant dense<0xFF800000> : vector<16xf32>
    %251 = vector.multi_reduction <maximumf>, %250, %cst_131 [1] : vector<16x16xf32> to vector<16xf32>
    %252 = vector.shape_cast %251 : vector<16xf32> to vector<16x1xf32>
    %253 = vector.broadcast %252 : vector<16x1xf32> to vector<16x16xf32>
    %254 = arith.subf %250, %253 : vector<16x16xf32>
    %255 = math.exp %254 : vector<16x16xf32>
    %cst_132 = arith.constant dense<0.000000e+00> : vector<16xf32>
    %256 = vector.multi_reduction <add>, %255, %cst_132 [1] : vector<16x16xf32> to vector<16xf32>
    %257 = vector.shape_cast %256 : vector<16xf32> to vector<16x1xf32>
    %258 = tpu.reciprocal %257 {approx = true} : vector<16x1xf32> -> vector<16x1xf32>
    %259 = vector.broadcast %258 : vector<16x1xf32> to vector<16x16xf32>
    %260 = arith.mulf %255, %259 : vector<16x16xf32>
    %261 = vector.extract_strided_slice %241 {offsets = [0, 0], sizes = [16, 8], strides = [1, 1]} : vector<16x32xf32> to vector<16x8xf32>
    %cst_133 = arith.constant dense<0.000000e+00> : vector<16x8xf32>
    %262 = tpu.matmul %260, %261, %cst_133 {dimension_numbers = #tpu.dot_dimension_numbers<[1], [0], [0], [1], [0, 0, 1, 1], [], []>} : vector<16x16xf32>, vector<16x8xf32>, vector<16x8xf32> -> vector<16x8xf32>
    %263 = vector.extract_strided_slice %243 {offsets = [0, 0], sizes = [8, 32], strides = [1, 1]} : vector<32x32xf32> to vector<8x32xf32>
    %cst_134 = arith.constant dense<0.000000e+00> : vector<16x32xf32>
    %264 = tpu.matmul %262, %263, %cst_134 {dimension_numbers = #tpu.dot_dimension_numbers<[1], [0], [0], [1], [0, 0, 1, 1], [], []>} : vector<16x8xf32>, vector<8x32xf32>, vector<16x32xf32> -> vector<16x32xf32>
    %265 = arith.addf %244, %264 : vector<16x32xf32>
    %266 = vector.extract_strided_slice %227 {offsets = [0, 8], sizes = [16, 8], strides = [1, 1]} : vector<16x32xf32> to vector<16x8xf32>
    %267 = vector.extract_strided_slice %234 {offsets = [0, 8], sizes = [16, 8], strides = [1, 1]} : vector<16x32xf32> to vector<16x8xf32>
    %cst_135 = arith.constant dense<0.000000e+00> : vector<16x16xf32>
    %268 = tpu.matmul %266, %267, %cst_135 {dimension_numbers = #tpu.dot_dimension_numbers<[1], [1], [0], [0], [0, 0, 1, 0], [], []>} : vector<16x8xf32>, vector<16x8xf32>, vector<16x16xf32> -> vector<16x16xf32>
    %cst_136 = arith.constant 0.353553385 : f32
    %269 = vector.broadcast %cst_136 : f32 to vector<16x16xf32>
    %270 = arith.mulf %268, %269 : vector<16x16xf32>
    %271 = arith.addf %270, %1 : vector<16x16xf32>
    %cst_137 = arith.constant dense<0xFF800000> : vector<16xf32>
    %272 = vector.multi_reduction <maximumf>, %271, %cst_137 [1] : vector<16x16xf32> to vector<16xf32>
    %273 = vector.shape_cast %272 : vector<16xf32> to vector<16x1xf32>
    %274 = vector.broadcast %273 : vector<16x1xf32> to vector<16x16xf32>
    %275 = arith.subf %271, %274 : vector<16x16xf32>
    %276 = math.exp %275 : vector<16x16xf32>
    %cst_138 = arith.constant dense<0.000000e+00> : vector<16xf32>
    %277 = vector.multi_reduction <add>, %276, %cst_138 [1] : vector<16x16xf32> to vector<16xf32>
    %278 = vector.shape_cast %277 : vector<16xf32> to vector<16x1xf32>
    %279 = tpu.reciprocal %278 {approx = true} : vector<16x1xf32> -> vector<16x1xf32>
    %280 = vector.broadcast %279 : vector<16x1xf32> to vector<16x16xf32>
    %281 = arith.mulf %276, %280 : vector<16x16xf32>
    %282 = vector.extract_strided_slice %241 {offsets = [0, 8], sizes = [16, 8], strides = [1, 1]} : vector<16x32xf32> to vector<16x8xf32>
    %cst_139 = arith.constant dense<0.000000e+00> : vector<16x8xf32>
    %283 = tpu.matmul %281, %282, %cst_139 {dimension_numbers = #tpu.dot_dimension_numbers<[1], [0], [0], [1], [0, 0, 1, 1], [], []>} : vector<16x16xf32>, vector<16x8xf32>, vector<16x8xf32> -> vector<16x8xf32>
    %284 = vector.extract_strided_slice %243 {offsets = [8, 0], sizes = [8, 32], strides = [1, 1]} : vector<32x32xf32> to vector<8x32xf32>
    %cst_140 = arith.constant dense<0.000000e+00> : vector<16x32xf32>
    %285 = tpu.matmul %283, %284, %cst_140 {dimension_numbers = #tpu.dot_dimension_numbers<[1], [0], [0], [1], [0, 0, 1, 1], [], []>} : vector<16x8xf32>, vector<8x32xf32>, vector<16x32xf32> -> vector<16x32xf32>
    %286 = arith.addf %265, %285 : vector<16x32xf32>
    %287 = vector.extract_strided_slice %227 {offsets = [0, 16], sizes = [16, 8], strides = [1, 1]} : vector<16x32xf32> to vector<16x8xf32>
    %288 = vector.extract_strided_slice %234 {offsets = [0, 16], sizes = [16, 8], strides = [1, 1]} : vector<16x32xf32> to vector<16x8xf32>
    %cst_141 = arith.constant dense<0.000000e+00> : vector<16x16xf32>
    %289 = tpu.matmul %287, %288, %cst_141 {dimension_numbers = #tpu.dot_dimension_numbers<[1], [1], [0], [0], [0, 0, 1, 0], [], []>} : vector<16x8xf32>, vector<16x8xf32>, vector<16x16xf32> -> vector<16x16xf32>
    %cst_142 = arith.constant 0.353553385 : f32
    %290 = vector.broadcast %cst_142 : f32 to vector<16x16xf32>
    %291 = arith.mulf %289, %290 : vector<16x16xf32>
    %292 = arith.addf %291, %1 : vector<16x16xf32>
    %cst_143 = arith.constant dense<0xFF800000> : vector<16xf32>
    %293 = vector.multi_reduction <maximumf>, %292, %cst_143 [1] : vector<16x16xf32> to vector<16xf32>
    %294 = vector.shape_cast %293 : vector<16xf32> to vector<16x1xf32>
    %295 = vector.broadcast %294 : vector<16x1xf32> to vector<16x16xf32>
    %296 = arith.subf %292, %295 : vector<16x16xf32>
    %297 = math.exp %296 : vector<16x16xf32>
    %cst_144 = arith.constant dense<0.000000e+00> : vector<16xf32>
    %298 = vector.multi_reduction <add>, %297, %cst_144 [1] : vector<16x16xf32> to vector<16xf32>
    %299 = vector.shape_cast %298 : vector<16xf32> to vector<16x1xf32>
    %300 = tpu.reciprocal %299 {approx = true} : vector<16x1xf32> -> vector<16x1xf32>
    %301 = vector.broadcast %300 : vector<16x1xf32> to vector<16x16xf32>
    %302 = arith.mulf %297, %301 : vector<16x16xf32>
    %303 = vector.extract_strided_slice %241 {offsets = [0, 16], sizes = [16, 8], strides = [1, 1]} : vector<16x32xf32> to vector<16x8xf32>
    %cst_145 = arith.constant dense<0.000000e+00> : vector<16x8xf32>
    %304 = tpu.matmul %302, %303, %cst_145 {dimension_numbers = #tpu.dot_dimension_numbers<[1], [0], [0], [1], [0, 0, 1, 1], [], []>} : vector<16x16xf32>, vector<16x8xf32>, vector<16x8xf32> -> vector<16x8xf32>
    %305 = vector.extract_strided_slice %243 {offsets = [16, 0], sizes = [8, 32], strides = [1, 1]} : vector<32x32xf32> to vector<8x32xf32>
    %cst_146 = arith.constant dense<0.000000e+00> : vector<16x32xf32>
    %306 = tpu.matmul %304, %305, %cst_146 {dimension_numbers = #tpu.dot_dimension_numbers<[1], [0], [0], [1], [0, 0, 1, 1], [], []>} : vector<16x8xf32>, vector<8x32xf32>, vector<16x32xf32> -> vector<16x32xf32>
    %307 = arith.addf %286, %306 : vector<16x32xf32>
    %308 = vector.extract_strided_slice %227 {offsets = [0, 24], sizes = [16, 8], strides = [1, 1]} : vector<16x32xf32> to vector<16x8xf32>
    %309 = vector.extract_strided_slice %234 {offsets = [0, 24], sizes = [16, 8], strides = [1, 1]} : vector<16x32xf32> to vector<16x8xf32>
    %cst_147 = arith.constant dense<0.000000e+00> : vector<16x16xf32>
    %310 = tpu.matmul %308, %309, %cst_147 {dimension_numbers = #tpu.dot_dimension_numbers<[1], [1], [0], [0], [0, 0, 1, 0], [], []>} : vector<16x8xf32>, vector<16x8xf32>, vector<16x16xf32> -> vector<16x16xf32>
    %cst_148 = arith.constant 0.353553385 : f32
    %311 = vector.broadcast %cst_148 : f32 to vector<16x16xf32>
    %312 = arith.mulf %310, %311 : vector<16x16xf32>
    %313 = arith.addf %312, %1 : vector<16x16xf32>
    %cst_149 = arith.constant dense<0xFF800000> : vector<16xf32>
    %314 = vector.multi_reduction <maximumf>, %313, %cst_149 [1] : vector<16x16xf32> to vector<16xf32>
    %315 = vector.shape_cast %314 : vector<16xf32> to vector<16x1xf32>
    %316 = vector.broadcast %315 : vector<16x1xf32> to vector<16x16xf32>
    %317 = arith.subf %313, %316 : vector<16x16xf32>
    %318 = math.exp %317 : vector<16x16xf32>
    %cst_150 = arith.constant dense<0.000000e+00> : vector<16xf32>
    %319 = vector.multi_reduction <add>, %318, %cst_150 [1] : vector<16x16xf32> to vector<16xf32>
    %320 = vector.shape_cast %319 : vector<16xf32> to vector<16x1xf32>
    %321 = tpu.reciprocal %320 {approx = true} : vector<16x1xf32> -> vector<16x1xf32>
    %322 = vector.broadcast %321 : vector<16x1xf32> to vector<16x16xf32>
    %323 = arith.mulf %318, %322 : vector<16x16xf32>
    %324 = vector.extract_strided_slice %241 {offsets = [0, 24], sizes = [16, 8], strides = [1, 1]} : vector<16x32xf32> to vector<16x8xf32>
    %cst_151 = arith.constant dense<0.000000e+00> : vector<16x8xf32>
    %325 = tpu.matmul %323, %324, %cst_151 {dimension_numbers = #tpu.dot_dimension_numbers<[1], [0], [0], [1], [0, 0, 1, 1], [], []>} : vector<16x16xf32>, vector<16x8xf32>, vector<16x8xf32> -> vector<16x8xf32>
    %326 = vector.extract_strided_slice %243 {offsets = [24, 0], sizes = [8, 32], strides = [1, 1]} : vector<32x32xf32> to vector<8x32xf32>
    %cst_152 = arith.constant dense<0.000000e+00> : vector<16x32xf32>
    %327 = tpu.matmul %325, %326, %cst_152 {dimension_numbers = #tpu.dot_dimension_numbers<[1], [0], [0], [1], [0, 0, 1, 1], [], []>} : vector<16x8xf32>, vector<8x32xf32>, vector<16x32xf32> -> vector<16x32xf32>
    %328 = arith.addf %307, %327 : vector<16x32xf32>
    %329 = arith.addf %194, %328 : vector<16x32xf32>
    %c1_153 = arith.constant 1 : index
    %c0_154 = arith.constant 0 : index
    %c0_155 = arith.constant 0 : index
    %330 = vector.load %arg12[%c1_153, %c0_154, %c0_155] : memref<2x1x32xf32, #tpu.memory_space<vmem>>, vector<1x1x32xf32>
    %331 = vector.shape_cast %330 : vector<1x1x32xf32> to vector<1x32xf32>
    %332 = vector.broadcast %331 : vector<1x32xf32> to vector<16x32xf32>
    %333 = arith.addf %329, %332 : vector<16x32xf32>
    %c1_156 = arith.constant 1 : index
    %c0_157 = arith.constant 0 : index
    %c0_158 = arith.constant 0 : index
    %334 = vector.load %arg13[%c1_156, %c0_157, %c0_158] : memref<2x1x32xf32, #tpu.memory_space<vmem>>, vector<1x1x32xf32>
    %335 = vector.shape_cast %334 : vector<1x1x32xf32> to vector<1x32xf32>
    %c1_159 = arith.constant 1 : index
    %c0_160 = arith.constant 0 : index
    %c0_161 = arith.constant 0 : index
    %336 = vector.load %arg14[%c1_159, %c0_160, %c0_161] : memref<2x1x32xf32, #tpu.memory_space<vmem>>, vector<1x1x32xf32>
    %337 = vector.shape_cast %336 : vector<1x1x32xf32> to vector<1x32xf32>
    %cst_162 = arith.constant dense<0.000000e+00> : vector<16xf32>
    %338 = vector.multi_reduction <add>, %333, %cst_162 [1] : vector<16x32xf32> to vector<16xf32>
    %339 = vector.shape_cast %338 : vector<16xf32> to vector<16x1xf32>
    %cst_163 = arith.constant 3.200000e+01 : f32
    %340 = vector.broadcast %cst_163 : f32 to vector<16x1xf32>
    %341 = arith.divf %339, %340 : vector<16x1xf32>
    %342 = vector.broadcast %341 : vector<16x1xf32> to vector<16x32xf32>
    %343 = arith.subf %333, %342 : vector<16x32xf32>
    %344 = arith.mulf %343, %343 : vector<16x32xf32>
    %cst_164 = arith.constant dense<0.000000e+00> : vector<16xf32>
    %345 = vector.multi_reduction <add>, %344, %cst_164 [1] : vector<16x32xf32> to vector<16xf32>
    %346 = vector.shape_cast %345 : vector<16xf32> to vector<16x1xf32>
    %cst_165 = arith.constant 3.200000e+01 : f32
    %347 = vector.broadcast %cst_165 : f32 to vector<16x1xf32>
    %348 = arith.divf %346, %347 : vector<16x1xf32>
    %349 = vector.broadcast %341 : vector<16x1xf32> to vector<16x32xf32>
    %350 = arith.subf %333, %349 : vector<16x32xf32>
    %cst_166 = arith.constant 9.99999974E-6 : f32
    %351 = vector.broadcast %cst_166 : f32 to vector<16x1xf32>
    %352 = arith.addf %348, %351 : vector<16x1xf32>
    %353 = math.rsqrt %352 : vector<16x1xf32>
    %354 = vector.broadcast %353 : vector<16x1xf32> to vector<16x32xf32>
    %355 = arith.mulf %350, %354 : vector<16x32xf32>
    %356 = vector.broadcast %335 : vector<1x32xf32> to vector<16x32xf32>
    %357 = arith.mulf %355, %356 : vector<16x32xf32>
    %358 = vector.broadcast %337 : vector<1x32xf32> to vector<16x32xf32>
    %359 = arith.addf %357, %358 : vector<16x32xf32>
    %c1_167 = arith.constant 1 : index
    %c0_168 = arith.constant 0 : index
    %c0_169 = arith.constant 0 : index
    %360 = vector.load %arg15[%c1_167, %c0_168, %c0_169] : memref<2x32x128xf32, #tpu.memory_space<vmem>>, vector<1x32x128xf32>
    %361 = vector.shape_cast %360 : vector<1x32x128xf32> to vector<32x128xf32>
    %cst_170 = arith.constant dense<0.000000e+00> : vector<16x128xf32>
    %362 = tpu.matmul %359, %361, %cst_170 {dimension_numbers = #tpu.dot_dimension_numbers<[1], [0], [0], [1], [0, 0, 1, 1], [], []>} : vector<16x32xf32>, vector<32x128xf32>, vector<16x128xf32> -> vector<16x128xf32>
    %c1_171 = arith.constant 1 : index
    %c0_172 = arith.constant 0 : index
    %c0_173 = arith.constant 0 : index
    %363 = vector.load %arg16[%c1_171, %c0_172, %c0_173] : memref<2x1x128xf32, #tpu.memory_space<vmem>>, vector<1x1x128xf32>
    %364 = vector.shape_cast %363 : vector<1x1x128xf32> to vector<1x128xf32>
    %365 = vector.broadcast %364 : vector<1x128xf32> to vector<16x128xf32>
    %366 = arith.addf %362, %365 : vector<16x128xf32>
    %cst_174 = arith.constant 5.000000e-01 : f32
    %367 = vector.broadcast %cst_174 : f32 to vector<16x128xf32>
    %368 = arith.mulf %367, %366 : vector<16x128xf32>
    %cst_175 = arith.constant 4.471500e-02 : f32
    %369 = vector.broadcast %cst_175 : f32 to vector<16x128xf32>
    %370 = arith.mulf %369, %366 : vector<16x128xf32>
    %371 = arith.mulf %370, %366 : vector<16x128xf32>
    %372 = arith.mulf %371, %366 : vector<16x128xf32>
    %373 = arith.addf %366, %372 : vector<16x128xf32>
    %cst_176 = arith.constant 0.797884583 : f32
    %374 = vector.broadcast %cst_176 : f32 to vector<16x128xf32>
    %375 = arith.mulf %374, %373 : vector<16x128xf32>
    %376 = math.tanh %375 : vector<16x128xf32>
    %cst_177 = arith.constant 1.000000e+00 : f32
    %377 = vector.broadcast %cst_177 : f32 to vector<16x128xf32>
    %378 = arith.addf %377, %376 : vector<16x128xf32>
    %379 = arith.mulf %368, %378 : vector<16x128xf32>
    %c1_178 = arith.constant 1 : index
    %c0_179 = arith.constant 0 : index
    %c0_180 = arith.constant 0 : index
    %380 = vector.load %arg17[%c1_178, %c0_179, %c0_180] : memref<2x128x32xf32, #tpu.memory_space<vmem>>, vector<1x128x32xf32>
    %381 = vector.shape_cast %380 : vector<1x128x32xf32> to vector<128x32xf32>
    %cst_181 = arith.constant dense<0.000000e+00> : vector<16x32xf32>
    %382 = tpu.matmul %379, %381, %cst_181 {dimension_numbers = #tpu.dot_dimension_numbers<[1], [0], [0], [1], [0, 0, 1, 1], [], []>} : vector<16x128xf32>, vector<128x32xf32>, vector<16x32xf32> -> vector<16x32xf32>
    %383 = arith.addf %333, %382 : vector<16x32xf32>
    %c1_182 = arith.constant 1 : index
    %c0_183 = arith.constant 0 : index
    %c0_184 = arith.constant 0 : index
    %384 = vector.load %arg18[%c1_182, %c0_183, %c0_184] : memref<2x1x32xf32, #tpu.memory_space<vmem>>, vector<1x1x32xf32>
    %385 = vector.shape_cast %384 : vector<1x1x32xf32> to vector<1x32xf32>
    %386 = vector.broadcast %385 : vector<1x32xf32> to vector<16x32xf32>
    %387 = arith.addf %383, %386 : vector<16x32xf32>
    %c0_185 = arith.constant 0 : index
    %c0_186 = arith.constant 0 : index
    %c0_187 = arith.constant 0 : index
    %388 = vector.load %arg19[%c0_185, %c0_186, %c0_187] : memref<2x32x128xf32, #tpu.memory_space<vmem>>, vector<1x32x128xf32>
    %389 = vector.shape_cast %388 : vector<1x32x128xf32> to vector<32x128xf32>
    %cst_188 = arith.constant dense<0.000000e+00> : vector<16x128xf32>
    %390 = tpu.matmul %387, %389, %cst_188 {dimension_numbers = #tpu.dot_dimension_numbers<[1], [0], [0], [1], [0, 0, 1, 1], [], []>} : vector<16x32xf32>, vector<32x128xf32>, vector<16x128xf32> -> vector<16x128xf32>
    %c0_189 = arith.constant 0 : index
    %c0_190 = arith.constant 0 : index
    %c0_191 = arith.constant 0 : index
    %391 = vector.load %arg21[%c0_189, %c0_190, %c0_191] : memref<2x1x128xf32, #tpu.memory_space<vmem>>, vector<1x1x128xf32>
    %392 = vector.shape_cast %391 : vector<1x1x128xf32> to vector<1x128xf32>
    %393 = vector.broadcast %392 : vector<1x128xf32> to vector<16x128xf32>
    %394 = arith.addf %390, %393 : vector<16x128xf32>
    %c1_192 = arith.constant 1 : index
    %c0_193 = arith.constant 0 : index
    %c0_194 = arith.constant 0 : index
    %395 = vector.load %arg19[%c1_192, %c0_193, %c0_194] : memref<2x32x128xf32, #tpu.memory_space<vmem>>, vector<1x32x128xf32>
    %396 = vector.shape_cast %395 : vector<1x32x128xf32> to vector<32x128xf32>
    %c0_195 = arith.constant 0 : index
    %c0_196 = arith.constant 0 : index
    %c0_197 = arith.constant 0 : index
    %397 = vector.load %arg20[%c0_195, %c0_196, %c0_197] : memref<2x32x128xf32, #tpu.memory_space<vmem>>, vector<1x32x128xf32>
    %398 = vector.shape_cast %397 : vector<1x32x128xf32> to vector<32x128xf32>
    %c1_198 = arith.constant 1 : index
    %c0_199 = arith.constant 0 : index
    %c0_200 = arith.constant 0 : index
    %399 = vector.load %arg20[%c1_198, %c0_199, %c0_200] : memref<2x32x128xf32, #tpu.memory_space<vmem>>, vector<1x32x128xf32>
    %400 = vector.shape_cast %399 : vector<1x32x128xf32> to vector<32x128xf32>
    %c1_201 = arith.constant 1 : index
    %c0_202 = arith.constant 0 : index
    %c0_203 = arith.constant 0 : index
    %401 = vector.load %arg21[%c1_201, %c0_202, %c0_203] : memref<2x1x128xf32, #tpu.memory_space<vmem>>, vector<1x1x128xf32>
    %402 = vector.shape_cast %401 : vector<1x1x128xf32> to vector<1x128xf32>
    %cst_204 = arith.constant 0.000000e+00 : f32
    %403 = vector.broadcast %cst_204 : f32 to vector<2x32xf32>
    %cst_205 = arith.constant 0.000000e+00 : f32
    %404 = vector.broadcast %cst_205 : f32 to vector<2x32xf32>
    %cst_206 = arith.constant 0.000000e+00 : f32
    %405 = vector.broadcast %cst_206 : f32 to vector<2x32xf32>
    %cst_207 = arith.constant 0.000000e+00 : f32
    %406 = vector.broadcast %cst_207 : f32 to vector<2x32xf32>
    %407 = vector.extract_strided_slice %394 {offsets = [0, 0], sizes = [2, 128], strides = [1, 1]} : vector<16x128xf32> to vector<2x128xf32>
    %cst_208 = arith.constant dense<0.000000e+00> : vector<2x128xf32>
    %408 = tpu.matmul %403, %398, %cst_208 {dimension_numbers = #tpu.dot_dimension_numbers<[1], [0], [0], [1], [0, 0, 1, 1], [], []>} : vector<2x32xf32>, vector<32x128xf32>, vector<2x128xf32> -> vector<2x128xf32>
    %409 = arith.addf %407, %408 : vector<2x128xf32>
    %410 = vector.extract_strided_slice %409 {offsets = [0, 0], sizes = [2, 32], strides = [1, 1]} : vector<2x128xf32> to vector<2x32xf32>
    %411 = arith.negf %410 : vector<2x32xf32>
    %412 = math.exp %411 : vector<2x32xf32>
    %cst_209 = arith.constant 1.000000e+00 : f32
    %413 = vector.broadcast %cst_209 : f32 to vector<2x32xf32>
    %414 = arith.addf %413, %412 : vector<2x32xf32>
    %415 = arith.divf %413, %414 : vector<2x32xf32>
    %416 = vector.extract_strided_slice %409 {offsets = [0, 32], sizes = [2, 32], strides = [1, 1]} : vector<2x128xf32> to vector<2x32xf32>
    %417 = arith.negf %416 : vector<2x32xf32>
    %418 = math.exp %417 : vector<2x32xf32>
    %cst_210 = arith.constant 1.000000e+00 : f32
    %419 = vector.broadcast %cst_210 : f32 to vector<2x32xf32>
    %420 = arith.addf %419, %418 : vector<2x32xf32>
    %421 = arith.divf %419, %420 : vector<2x32xf32>
    %422 = vector.extract_strided_slice %409 {offsets = [0, 64], sizes = [2, 32], strides = [1, 1]} : vector<2x128xf32> to vector<2x32xf32>
    %423 = math.tanh %422 : vector<2x32xf32>
    %424 = vector.extract_strided_slice %409 {offsets = [0, 96], sizes = [2, 32], strides = [1, 1]} : vector<2x128xf32> to vector<2x32xf32>
    %425 = arith.negf %424 : vector<2x32xf32>
    %426 = math.exp %425 : vector<2x32xf32>
    %cst_211 = arith.constant 1.000000e+00 : f32
    %427 = vector.broadcast %cst_211 : f32 to vector<2x32xf32>
    %428 = arith.addf %427, %426 : vector<2x32xf32>
    %429 = arith.divf %427, %428 : vector<2x32xf32>
    %430 = arith.mulf %421, %404 : vector<2x32xf32>
    %431 = arith.mulf %415, %423 : vector<2x32xf32>
    %432 = arith.addf %430, %431 : vector<2x32xf32>
    %433 = math.tanh %432 : vector<2x32xf32>
    %434 = arith.mulf %429, %433 : vector<2x32xf32>
    %cst_212 = arith.constant dense<0.000000e+00> : vector<2x128xf32>
    %435 = tpu.matmul %434, %396, %cst_212 {dimension_numbers = #tpu.dot_dimension_numbers<[1], [0], [0], [1], [0, 0, 1, 1], [], []>} : vector<2x32xf32>, vector<32x128xf32>, vector<2x128xf32> -> vector<2x128xf32>
    %436 = vector.broadcast %402 : vector<1x128xf32> to vector<2x128xf32>
    %437 = arith.addf %435, %436 : vector<2x128xf32>
    %cst_213 = arith.constant dense<0.000000e+00> : vector<2x128xf32>
    %438 = tpu.matmul %405, %400, %cst_213 {dimension_numbers = #tpu.dot_dimension_numbers<[1], [0], [0], [1], [0, 0, 1, 1], [], []>} : vector<2x32xf32>, vector<32x128xf32>, vector<2x128xf32> -> vector<2x128xf32>
    %439 = arith.addf %437, %438 : vector<2x128xf32>
    %440 = vector.extract_strided_slice %439 {offsets = [0, 0], sizes = [2, 32], strides = [1, 1]} : vector<2x128xf32> to vector<2x32xf32>
    %441 = arith.negf %440 : vector<2x32xf32>
    %442 = math.exp %441 : vector<2x32xf32>
    %cst_214 = arith.constant 1.000000e+00 : f32
    %443 = vector.broadcast %cst_214 : f32 to vector<2x32xf32>
    %444 = arith.addf %443, %442 : vector<2x32xf32>
    %445 = arith.divf %443, %444 : vector<2x32xf32>
    %446 = vector.extract_strided_slice %439 {offsets = [0, 32], sizes = [2, 32], strides = [1, 1]} : vector<2x128xf32> to vector<2x32xf32>
    %447 = arith.negf %446 : vector<2x32xf32>
    %448 = math.exp %447 : vector<2x32xf32>
    %cst_215 = arith.constant 1.000000e+00 : f32
    %449 = vector.broadcast %cst_215 : f32 to vector<2x32xf32>
    %450 = arith.addf %449, %448 : vector<2x32xf32>
    %451 = arith.divf %449, %450 : vector<2x32xf32>
    %452 = vector.extract_strided_slice %439 {offsets = [0, 64], sizes = [2, 32], strides = [1, 1]} : vector<2x128xf32> to vector<2x32xf32>
    %453 = math.tanh %452 : vector<2x32xf32>
    %454 = vector.extract_strided_slice %439 {offsets = [0, 96], sizes = [2, 32], strides = [1, 1]} : vector<2x128xf32> to vector<2x32xf32>
    %455 = arith.negf %454 : vector<2x32xf32>
    %456 = math.exp %455 : vector<2x32xf32>
    %cst_216 = arith.constant 1.000000e+00 : f32
    %457 = vector.broadcast %cst_216 : f32 to vector<2x32xf32>
    %458 = arith.addf %457, %456 : vector<2x32xf32>
    %459 = arith.divf %457, %458 : vector<2x32xf32>
    %460 = arith.mulf %451, %406 : vector<2x32xf32>
    %461 = arith.mulf %445, %453 : vector<2x32xf32>
    %462 = arith.addf %460, %461 : vector<2x32xf32>
    %463 = math.tanh %462 : vector<2x32xf32>
    %464 = arith.mulf %459, %463 : vector<2x32xf32>
    %c0_217 = arith.constant 0 : index
    %c0_218 = arith.constant 0 : index
    %465 = vector.load %arg29[%c0_217, %c0_218] : memref<16x32xf32, #tpu.memory_space<vmem>>, vector<2x32xf32>
    tpu.vector_store %arg29[%c0_217, %c0_218], %464 {strides = array<i32>} : memref<16x32xf32, #tpu.memory_space<vmem>>, vector<2x32xf32>,
    %466 = vector.extract_strided_slice %394 {offsets = [2, 0], sizes = [2, 128], strides = [1, 1]} : vector<16x128xf32> to vector<2x128xf32>
    %cst_219 = arith.constant dense<0.000000e+00> : vector<2x128xf32>
    %467 = tpu.matmul %434, %398, %cst_219 {dimension_numbers = #tpu.dot_dimension_numbers<[1], [0], [0], [1], [0, 0, 1, 1], [], []>} : vector<2x32xf32>, vector<32x128xf32>, vector<2x128xf32> -> vector<2x128xf32>
    %468 = arith.addf %466, %467 : vector<2x128xf32>
    %469 = vector.extract_strided_slice %468 {offsets = [0, 0], sizes = [2, 32], strides = [1, 1]} : vector<2x128xf32> to vector<2x32xf32>
    %470 = arith.negf %469 : vector<2x32xf32>
    %471 = math.exp %470 : vector<2x32xf32>
    %cst_220 = arith.constant 1.000000e+00 : f32
    %472 = vector.broadcast %cst_220 : f32 to vector<2x32xf32>
    %473 = arith.addf %472, %471 : vector<2x32xf32>
    %474 = arith.divf %472, %473 : vector<2x32xf32>
    %475 = vector.extract_strided_slice %468 {offsets = [0, 32], sizes = [2, 32], strides = [1, 1]} : vector<2x128xf32> to vector<2x32xf32>
    %476 = arith.negf %475 : vector<2x32xf32>
    %477 = math.exp %476 : vector<2x32xf32>
    %cst_221 = arith.constant 1.000000e+00 : f32
    %478 = vector.broadcast %cst_221 : f32 to vector<2x32xf32>
    %479 = arith.addf %478, %477 : vector<2x32xf32>
    %480 = arith.divf %478, %479 : vector<2x32xf32>
    %481 = vector.extract_strided_slice %468 {offsets = [0, 64], sizes = [2, 32], strides = [1, 1]} : vector<2x128xf32> to vector<2x32xf32>
    %482 = math.tanh %481 : vector<2x32xf32>
    %483 = vector.extract_strided_slice %468 {offsets = [0, 96], sizes = [2, 32], strides = [1, 1]} : vector<2x128xf32> to vector<2x32xf32>
    %484 = arith.negf %483 : vector<2x32xf32>
    %485 = math.exp %484 : vector<2x32xf32>
    %cst_222 = arith.constant 1.000000e+00 : f32
    %486 = vector.broadcast %cst_222 : f32 to vector<2x32xf32>
    %487 = arith.addf %486, %485 : vector<2x32xf32>
    %488 = arith.divf %486, %487 : vector<2x32xf32>
    %489 = arith.mulf %480, %432 : vector<2x32xf32>
    %490 = arith.mulf %474, %482 : vector<2x32xf32>
    %491 = arith.addf %489, %490 : vector<2x32xf32>
    %492 = math.tanh %491 : vector<2x32xf32>
    %493 = arith.mulf %488, %492 : vector<2x32xf32>
    %cst_223 = arith.constant dense<0.000000e+00> : vector<2x128xf32>
    %494 = tpu.matmul %493, %396, %cst_223 {dimension_numbers = #tpu.dot_dimension_numbers<[1], [0], [0], [1], [0, 0, 1, 1], [], []>} : vector<2x32xf32>, vector<32x128xf32>, vector<2x128xf32> -> vector<2x128xf32>
    %495 = vector.broadcast %402 : vector<1x128xf32> to vector<2x128xf32>
    %496 = arith.addf %494, %495 : vector<2x128xf32>
    %cst_224 = arith.constant dense<0.000000e+00> : vector<2x128xf32>
    %497 = tpu.matmul %464, %400, %cst_224 {dimension_numbers = #tpu.dot_dimension_numbers<[1], [0], [0], [1], [0, 0, 1, 1], [], []>} : vector<2x32xf32>, vector<32x128xf32>, vector<2x128xf32> -> vector<2x128xf32>
    %498 = arith.addf %496, %497 : vector<2x128xf32>
    %499 = vector.extract_strided_slice %498 {offsets = [0, 0], sizes = [2, 32], strides = [1, 1]} : vector<2x128xf32> to vector<2x32xf32>
    %500 = arith.negf %499 : vector<2x32xf32>
    %501 = math.exp %500 : vector<2x32xf32>
    %cst_225 = arith.constant 1.000000e+00 : f32
    %502 = vector.broadcast %cst_225 : f32 to vector<2x32xf32>
    %503 = arith.addf %502, %501 : vector<2x32xf32>
    %504 = arith.divf %502, %503 : vector<2x32xf32>
    %505 = vector.extract_strided_slice %498 {offsets = [0, 32], sizes = [2, 32], strides = [1, 1]} : vector<2x128xf32> to vector<2x32xf32>
    %506 = arith.negf %505 : vector<2x32xf32>
    %507 = math.exp %506 : vector<2x32xf32>
    %cst_226 = arith.constant 1.000000e+00 : f32
    %508 = vector.broadcast %cst_226 : f32 to vector<2x32xf32>
    %509 = arith.addf %508, %507 : vector<2x32xf32>
    %510 = arith.divf %508, %509 : vector<2x32xf32>
    %511 = vector.extract_strided_slice %498 {offsets = [0, 64], sizes = [2, 32], strides = [1, 1]} : vector<2x128xf32> to vector<2x32xf32>
    %512 = math.tanh %511 : vector<2x32xf32>
    %513 = vector.extract_strided_slice %498 {offsets = [0, 96], sizes = [2, 32], strides = [1, 1]} : vector<2x128xf32> to vector<2x32xf32>
    %514 = arith.negf %513 : vector<2x32xf32>
    %515 = math.exp %514 : vector<2x32xf32>
    %cst_227 = arith.constant 1.000000e+00 : f32
    %516 = vector.broadcast %cst_227 : f32 to vector<2x32xf32>
    %517 = arith.addf %516, %515 : vector<2x32xf32>
    %518 = arith.divf %516, %517 : vector<2x32xf32>
    %519 = arith.mulf %510, %462 : vector<2x32xf32>
    %520 = arith.mulf %504, %512 : vector<2x32xf32>
    %521 = arith.addf %519, %520 : vector<2x32xf32>
    %522 = math.tanh %521 : vector<2x32xf32>
    %523 = arith.mulf %518, %522 : vector<2x32xf32>
    %c2 = arith.constant 2 : index
    %c0_228 = arith.constant 0 : index
    %524 = vector.load %arg29[%c2, %c0_228] : memref<16x32xf32, #tpu.memory_space<vmem>>, vector<2x32xf32>
    tpu.vector_store %arg29[%c2, %c0_228], %523 {strides = array<i32>} : memref<16x32xf32, #tpu.memory_space<vmem>>, vector<2x32xf32>,
    %525 = vector.extract_strided_slice %394 {offsets = [4, 0], sizes = [2, 128], strides = [1, 1]} : vector<16x128xf32> to vector<2x128xf32>
    %cst_229 = arith.constant dense<0.000000e+00> : vector<2x128xf32>
    %526 = tpu.matmul %493, %398, %cst_229 {dimension_numbers = #tpu.dot_dimension_numbers<[1], [0], [0], [1], [0, 0, 1, 1], [], []>} : vector<2x32xf32>, vector<32x128xf32>, vector<2x128xf32> -> vector<2x128xf32>
    %527 = arith.addf %525, %526 : vector<2x128xf32>
    %528 = vector.extract_strided_slice %527 {offsets = [0, 0], sizes = [2, 32], strides = [1, 1]} : vector<2x128xf32> to vector<2x32xf32>
    %529 = arith.negf %528 : vector<2x32xf32>
    %530 = math.exp %529 : vector<2x32xf32>
    %cst_230 = arith.constant 1.000000e+00 : f32
    %531 = vector.broadcast %cst_230 : f32 to vector<2x32xf32>
    %532 = arith.addf %531, %530 : vector<2x32xf32>
    %533 = arith.divf %531, %532 : vector<2x32xf32>
    %534 = vector.extract_strided_slice %527 {offsets = [0, 32], sizes = [2, 32], strides = [1, 1]} : vector<2x128xf32> to vector<2x32xf32>
    %535 = arith.negf %534 : vector<2x32xf32>
    %536 = math.exp %535 : vector<2x32xf32>
    %cst_231 = arith.constant 1.000000e+00 : f32
    %537 = vector.broadcast %cst_231 : f32 to vector<2x32xf32>
    %538 = arith.addf %537, %536 : vector<2x32xf32>
    %539 = arith.divf %537, %538 : vector<2x32xf32>
    %540 = vector.extract_strided_slice %527 {offsets = [0, 64], sizes = [2, 32], strides = [1, 1]} : vector<2x128xf32> to vector<2x32xf32>
    %541 = math.tanh %540 : vector<2x32xf32>
    %542 = vector.extract_strided_slice %527 {offsets = [0, 96], sizes = [2, 32], strides = [1, 1]} : vector<2x128xf32> to vector<2x32xf32>
    %543 = arith.negf %542 : vector<2x32xf32>
    %544 = math.exp %543 : vector<2x32xf32>
    %cst_232 = arith.constant 1.000000e+00 : f32
    %545 = vector.broadcast %cst_232 : f32 to vector<2x32xf32>
    %546 = arith.addf %545, %544 : vector<2x32xf32>
    %547 = arith.divf %545, %546 : vector<2x32xf32>
    %548 = arith.mulf %539, %491 : vector<2x32xf32>
    %549 = arith.mulf %533, %541 : vector<2x32xf32>
    %550 = arith.addf %548, %549 : vector<2x32xf32>
    %551 = math.tanh %550 : vector<2x32xf32>
    %552 = arith.mulf %547, %551 : vector<2x32xf32>
    %cst_233 = arith.constant dense<0.000000e+00> : vector<2x128xf32>
    %553 = tpu.matmul %552, %396, %cst_233 {dimension_numbers = #tpu.dot_dimension_numbers<[1], [0], [0], [1], [0, 0, 1, 1], [], []>} : vector<2x32xf32>, vector<32x128xf32>, vector<2x128xf32> -> vector<2x128xf32>
    %554 = vector.broadcast %402 : vector<1x128xf32> to vector<2x128xf32>
    %555 = arith.addf %553, %554 : vector<2x128xf32>
    %cst_234 = arith.constant dense<0.000000e+00> : vector<2x128xf32>
    %556 = tpu.matmul %523, %400, %cst_234 {dimension_numbers = #tpu.dot_dimension_numbers<[1], [0], [0], [1], [0, 0, 1, 1], [], []>} : vector<2x32xf32>, vector<32x128xf32>, vector<2x128xf32> -> vector<2x128xf32>
    %557 = arith.addf %555, %556 : vector<2x128xf32>
    %558 = vector.extract_strided_slice %557 {offsets = [0, 0], sizes = [2, 32], strides = [1, 1]} : vector<2x128xf32> to vector<2x32xf32>
    %559 = arith.negf %558 : vector<2x32xf32>
    %560 = math.exp %559 : vector<2x32xf32>
    %cst_235 = arith.constant 1.000000e+00 : f32
    %561 = vector.broadcast %cst_235 : f32 to vector<2x32xf32>
    %562 = arith.addf %561, %560 : vector<2x32xf32>
    %563 = arith.divf %561, %562 : vector<2x32xf32>
    %564 = vector.extract_strided_slice %557 {offsets = [0, 32], sizes = [2, 32], strides = [1, 1]} : vector<2x128xf32> to vector<2x32xf32>
    %565 = arith.negf %564 : vector<2x32xf32>
    %566 = math.exp %565 : vector<2x32xf32>
    %cst_236 = arith.constant 1.000000e+00 : f32
    %567 = vector.broadcast %cst_236 : f32 to vector<2x32xf32>
    %568 = arith.addf %567, %566 : vector<2x32xf32>
    %569 = arith.divf %567, %568 : vector<2x32xf32>
    %570 = vector.extract_strided_slice %557 {offsets = [0, 64], sizes = [2, 32], strides = [1, 1]} : vector<2x128xf32> to vector<2x32xf32>
    %571 = math.tanh %570 : vector<2x32xf32>
    %572 = vector.extract_strided_slice %557 {offsets = [0, 96], sizes = [2, 32], strides = [1, 1]} : vector<2x128xf32> to vector<2x32xf32>
    %573 = arith.negf %572 : vector<2x32xf32>
    %574 = math.exp %573 : vector<2x32xf32>
    %cst_237 = arith.constant 1.000000e+00 : f32
    %575 = vector.broadcast %cst_237 : f32 to vector<2x32xf32>
    %576 = arith.addf %575, %574 : vector<2x32xf32>
    %577 = arith.divf %575, %576 : vector<2x32xf32>
    %578 = arith.mulf %569, %521 : vector<2x32xf32>
    %579 = arith.mulf %563, %571 : vector<2x32xf32>
    %580 = arith.addf %578, %579 : vector<2x32xf32>
    %581 = math.tanh %580 : vector<2x32xf32>
    %582 = arith.mulf %577, %581 : vector<2x32xf32>
    %c4 = arith.constant 4 : index
    %c0_238 = arith.constant 0 : index
    %583 = vector.load %arg29[%c4, %c0_238] : memref<16x32xf32, #tpu.memory_space<vmem>>, vector<2x32xf32>
    tpu.vector_store %arg29[%c4, %c0_238], %582 {strides = array<i32>} : memref<16x32xf32, #tpu.memory_space<vmem>>, vector<2x32xf32>,
    %584 = vector.extract_strided_slice %394 {offsets = [6, 0], sizes = [2, 128], strides = [1, 1]} : vector<16x128xf32> to vector<2x128xf32>
    %cst_239 = arith.constant dense<0.000000e+00> : vector<2x128xf32>
    %585 = tpu.matmul %552, %398, %cst_239 {dimension_numbers = #tpu.dot_dimension_numbers<[1], [0], [0], [1], [0, 0, 1, 1], [], []>} : vector<2x32xf32>, vector<32x128xf32>, vector<2x128xf32> -> vector<2x128xf32>
    %586 = arith.addf %584, %585 : vector<2x128xf32>
    %587 = vector.extract_strided_slice %586 {offsets = [0, 0], sizes = [2, 32], strides = [1, 1]} : vector<2x128xf32> to vector<2x32xf32>
    %588 = arith.negf %587 : vector<2x32xf32>
    %589 = math.exp %588 : vector<2x32xf32>
    %cst_240 = arith.constant 1.000000e+00 : f32
    %590 = vector.broadcast %cst_240 : f32 to vector<2x32xf32>
    %591 = arith.addf %590, %589 : vector<2x32xf32>
    %592 = arith.divf %590, %591 : vector<2x32xf32>
    %593 = vector.extract_strided_slice %586 {offsets = [0, 32], sizes = [2, 32], strides = [1, 1]} : vector<2x128xf32> to vector<2x32xf32>
    %594 = arith.negf %593 : vector<2x32xf32>
    %595 = math.exp %594 : vector<2x32xf32>
    %cst_241 = arith.constant 1.000000e+00 : f32
    %596 = vector.broadcast %cst_241 : f32 to vector<2x32xf32>
    %597 = arith.addf %596, %595 : vector<2x32xf32>
    %598 = arith.divf %596, %597 : vector<2x32xf32>
    %599 = vector.extract_strided_slice %586 {offsets = [0, 64], sizes = [2, 32], strides = [1, 1]} : vector<2x128xf32> to vector<2x32xf32>
    %600 = math.tanh %599 : vector<2x32xf32>
    %601 = vector.extract_strided_slice %586 {offsets = [0, 96], sizes = [2, 32], strides = [1, 1]} : vector<2x128xf32> to vector<2x32xf32>
    %602 = arith.negf %601 : vector<2x32xf32>
    %603 = math.exp %602 : vector<2x32xf32>
    %cst_242 = arith.constant 1.000000e+00 : f32
    %604 = vector.broadcast %cst_242 : f32 to vector<2x32xf32>
    %605 = arith.addf %604, %603 : vector<2x32xf32>
    %606 = arith.divf %604, %605 : vector<2x32xf32>
    %607 = arith.mulf %598, %550 : vector<2x32xf32>
    %608 = arith.mulf %592, %600 : vector<2x32xf32>
    %609 = arith.addf %607, %608 : vector<2x32xf32>
    %610 = math.tanh %609 : vector<2x32xf32>
    %611 = arith.mulf %606, %610 : vector<2x32xf32>
    %cst_243 = arith.constant dense<0.000000e+00> : vector<2x128xf32>
    %612 = tpu.matmul %611, %396, %cst_243 {dimension_numbers = #tpu.dot_dimension_numbers<[1], [0], [0], [1], [0, 0, 1, 1], [], []>} : vector<2x32xf32>, vector<32x128xf32>, vector<2x128xf32> -> vector<2x128xf32>
    %613 = vector.broadcast %402 : vector<1x128xf32> to vector<2x128xf32>
    %614 = arith.addf %612, %613 : vector<2x128xf32>
    %cst_244 = arith.constant dense<0.000000e+00> : vector<2x128xf32>
    %615 = tpu.matmul %582, %400, %cst_244 {dimension_numbers = #tpu.dot_dimension_numbers<[1], [0], [0], [1], [0, 0, 1, 1], [], []>} : vector<2x32xf32>, vector<32x128xf32>, vector<2x128xf32> -> vector<2x128xf32>
    %616 = arith.addf %614, %615 : vector<2x128xf32>
    %617 = vector.extract_strided_slice %616 {offsets = [0, 0], sizes = [2, 32], strides = [1, 1]} : vector<2x128xf32> to vector<2x32xf32>
    %618 = arith.negf %617 : vector<2x32xf32>
    %619 = math.exp %618 : vector<2x32xf32>
    %cst_245 = arith.constant 1.000000e+00 : f32
    %620 = vector.broadcast %cst_245 : f32 to vector<2x32xf32>
    %621 = arith.addf %620, %619 : vector<2x32xf32>
    %622 = arith.divf %620, %621 : vector<2x32xf32>
    %623 = vector.extract_strided_slice %616 {offsets = [0, 32], sizes = [2, 32], strides = [1, 1]} : vector<2x128xf32> to vector<2x32xf32>
    %624 = arith.negf %623 : vector<2x32xf32>
    %625 = math.exp %624 : vector<2x32xf32>
    %cst_246 = arith.constant 1.000000e+00 : f32
    %626 = vector.broadcast %cst_246 : f32 to vector<2x32xf32>
    %627 = arith.addf %626, %625 : vector<2x32xf32>
    %628 = arith.divf %626, %627 : vector<2x32xf32>
    %629 = vector.extract_strided_slice %616 {offsets = [0, 64], sizes = [2, 32], strides = [1, 1]} : vector<2x128xf32> to vector<2x32xf32>
    %630 = math.tanh %629 : vector<2x32xf32>
    %631 = vector.extract_strided_slice %616 {offsets = [0, 96], sizes = [2, 32], strides = [1, 1]} : vector<2x128xf32> to vector<2x32xf32>
    %632 = arith.negf %631 : vector<2x32xf32>
    %633 = math.exp %632 : vector<2x32xf32>
    %cst_247 = arith.constant 1.000000e+00 : f32
    %634 = vector.broadcast %cst_247 : f32 to vector<2x32xf32>
    %635 = arith.addf %634, %633 : vector<2x32xf32>
    %636 = arith.divf %634, %635 : vector<2x32xf32>
    %637 = arith.mulf %628, %580 : vector<2x32xf32>
    %638 = arith.mulf %622, %630 : vector<2x32xf32>
    %639 = arith.addf %637, %638 : vector<2x32xf32>
    %640 = math.tanh %639 : vector<2x32xf32>
    %641 = arith.mulf %636, %640 : vector<2x32xf32>
    %c6 = arith.constant 6 : index
    %c0_248 = arith.constant 0 : index
    %642 = vector.load %arg29[%c6, %c0_248] : memref<16x32xf32, #tpu.memory_space<vmem>>, vector<2x32xf32>
    tpu.vector_store %arg29[%c6, %c0_248], %641 {strides = array<i32>} : memref<16x32xf32, #tpu.memory_space<vmem>>, vector<2x32xf32>,
    %643 = vector.extract_strided_slice %394 {offsets = [8, 0], sizes = [2, 128], strides = [1, 1]} : vector<16x128xf32> to vector<2x128xf32>
    %cst_249 = arith.constant dense<0.000000e+00> : vector<2x128xf32>
    %644 = tpu.matmul %611, %398, %cst_249 {dimension_numbers = #tpu.dot_dimension_numbers<[1], [0], [0], [1], [0, 0, 1, 1], [], []>} : vector<2x32xf32>, vector<32x128xf32>, vector<2x128xf32> -> vector<2x128xf32>
    %645 = arith.addf %643, %644 : vector<2x128xf32>
    %646 = vector.extract_strided_slice %645 {offsets = [0, 0], sizes = [2, 32], strides = [1, 1]} : vector<2x128xf32> to vector<2x32xf32>
    %647 = arith.negf %646 : vector<2x32xf32>
    %648 = math.exp %647 : vector<2x32xf32>
    %cst_250 = arith.constant 1.000000e+00 : f32
    %649 = vector.broadcast %cst_250 : f32 to vector<2x32xf32>
    %650 = arith.addf %649, %648 : vector<2x32xf32>
    %651 = arith.divf %649, %650 : vector<2x32xf32>
    %652 = vector.extract_strided_slice %645 {offsets = [0, 32], sizes = [2, 32], strides = [1, 1]} : vector<2x128xf32> to vector<2x32xf32>
    %653 = arith.negf %652 : vector<2x32xf32>
    %654 = math.exp %653 : vector<2x32xf32>
    %cst_251 = arith.constant 1.000000e+00 : f32
    %655 = vector.broadcast %cst_251 : f32 to vector<2x32xf32>
    %656 = arith.addf %655, %654 : vector<2x32xf32>
    %657 = arith.divf %655, %656 : vector<2x32xf32>
    %658 = vector.extract_strided_slice %645 {offsets = [0, 64], sizes = [2, 32], strides = [1, 1]} : vector<2x128xf32> to vector<2x32xf32>
    %659 = math.tanh %658 : vector<2x32xf32>
    %660 = vector.extract_strided_slice %645 {offsets = [0, 96], sizes = [2, 32], strides = [1, 1]} : vector<2x128xf32> to vector<2x32xf32>
    %661 = arith.negf %660 : vector<2x32xf32>
    %662 = math.exp %661 : vector<2x32xf32>
    %cst_252 = arith.constant 1.000000e+00 : f32
    %663 = vector.broadcast %cst_252 : f32 to vector<2x32xf32>
    %664 = arith.addf %663, %662 : vector<2x32xf32>
    %665 = arith.divf %663, %664 : vector<2x32xf32>
    %666 = arith.mulf %657, %609 : vector<2x32xf32>
    %667 = arith.mulf %651, %659 : vector<2x32xf32>
    %668 = arith.addf %666, %667 : vector<2x32xf32>
    %669 = math.tanh %668 : vector<2x32xf32>
    %670 = arith.mulf %665, %669 : vector<2x32xf32>
    %cst_253 = arith.constant dense<0.000000e+00> : vector<2x128xf32>
    %671 = tpu.matmul %670, %396, %cst_253 {dimension_numbers = #tpu.dot_dimension_numbers<[1], [0], [0], [1], [0, 0, 1, 1], [], []>} : vector<2x32xf32>, vector<32x128xf32>, vector<2x128xf32> -> vector<2x128xf32>
    %672 = vector.broadcast %402 : vector<1x128xf32> to vector<2x128xf32>
    %673 = arith.addf %671, %672 : vector<2x128xf32>
    %cst_254 = arith.constant dense<0.000000e+00> : vector<2x128xf32>
    %674 = tpu.matmul %641, %400, %cst_254 {dimension_numbers = #tpu.dot_dimension_numbers<[1], [0], [0], [1], [0, 0, 1, 1], [], []>} : vector<2x32xf32>, vector<32x128xf32>, vector<2x128xf32> -> vector<2x128xf32>
    %675 = arith.addf %673, %674 : vector<2x128xf32>
    %676 = vector.extract_strided_slice %675 {offsets = [0, 0], sizes = [2, 32], strides = [1, 1]} : vector<2x128xf32> to vector<2x32xf32>
    %677 = arith.negf %676 : vector<2x32xf32>
    %678 = math.exp %677 : vector<2x32xf32>
    %cst_255 = arith.constant 1.000000e+00 : f32
    %679 = vector.broadcast %cst_255 : f32 to vector<2x32xf32>
    %680 = arith.addf %679, %678 : vector<2x32xf32>
    %681 = arith.divf %679, %680 : vector<2x32xf32>
    %682 = vector.extract_strided_slice %675 {offsets = [0, 32], sizes = [2, 32], strides = [1, 1]} : vector<2x128xf32> to vector<2x32xf32>
    %683 = arith.negf %682 : vector<2x32xf32>
    %684 = math.exp %683 : vector<2x32xf32>
    %cst_256 = arith.constant 1.000000e+00 : f32
    %685 = vector.broadcast %cst_256 : f32 to vector<2x32xf32>
    %686 = arith.addf %685, %684 : vector<2x32xf32>
    %687 = arith.divf %685, %686 : vector<2x32xf32>
    %688 = vector.extract_strided_slice %675 {offsets = [0, 64], sizes = [2, 32], strides = [1, 1]} : vector<2x128xf32> to vector<2x32xf32>
    %689 = math.tanh %688 : vector<2x32xf32>
    %690 = vector.extract_strided_slice %675 {offsets = [0, 96], sizes = [2, 32], strides = [1, 1]} : vector<2x128xf32> to vector<2x32xf32>
    %691 = arith.negf %690 : vector<2x32xf32>
    %692 = math.exp %691 : vector<2x32xf32>
    %cst_257 = arith.constant 1.000000e+00 : f32
    %693 = vector.broadcast %cst_257 : f32 to vector<2x32xf32>
    %694 = arith.addf %693, %692 : vector<2x32xf32>
    %695 = arith.divf %693, %694 : vector<2x32xf32>
    %696 = arith.mulf %687, %639 : vector<2x32xf32>
    %697 = arith.mulf %681, %689 : vector<2x32xf32>
    %698 = arith.addf %696, %697 : vector<2x32xf32>
    %699 = math.tanh %698 : vector<2x32xf32>
    %700 = arith.mulf %695, %699 : vector<2x32xf32>
    %c8 = arith.constant 8 : index
    %c0_258 = arith.constant 0 : index
    %701 = vector.load %arg29[%c8, %c0_258] : memref<16x32xf32, #tpu.memory_space<vmem>>, vector<2x32xf32>
    tpu.vector_store %arg29[%c8, %c0_258], %700 {strides = array<i32>} : memref<16x32xf32, #tpu.memory_space<vmem>>, vector<2x32xf32>,
    %702 = vector.extract_strided_slice %394 {offsets = [10, 0], sizes = [2, 128], strides = [1, 1]} : vector<16x128xf32> to vector<2x128xf32>
    %cst_259 = arith.constant dense<0.000000e+00> : vector<2x128xf32>
    %703 = tpu.matmul %670, %398, %cst_259 {dimension_numbers = #tpu.dot_dimension_numbers<[1], [0], [0], [1], [0, 0, 1, 1], [], []>} : vector<2x32xf32>, vector<32x128xf32>, vector<2x128xf32> -> vector<2x128xf32>
    %704 = arith.addf %702, %703 : vector<2x128xf32>
    %705 = vector.extract_strided_slice %704 {offsets = [0, 0], sizes = [2, 32], strides = [1, 1]} : vector<2x128xf32> to vector<2x32xf32>
    %706 = arith.negf %705 : vector<2x32xf32>
    %707 = math.exp %706 : vector<2x32xf32>
    %cst_260 = arith.constant 1.000000e+00 : f32
    %708 = vector.broadcast %cst_260 : f32 to vector<2x32xf32>
    %709 = arith.addf %708, %707 : vector<2x32xf32>
    %710 = arith.divf %708, %709 : vector<2x32xf32>
    %711 = vector.extract_strided_slice %704 {offsets = [0, 32], sizes = [2, 32], strides = [1, 1]} : vector<2x128xf32> to vector<2x32xf32>
    %712 = arith.negf %711 : vector<2x32xf32>
    %713 = math.exp %712 : vector<2x32xf32>
    %cst_261 = arith.constant 1.000000e+00 : f32
    %714 = vector.broadcast %cst_261 : f32 to vector<2x32xf32>
    %715 = arith.addf %714, %713 : vector<2x32xf32>
    %716 = arith.divf %714, %715 : vector<2x32xf32>
    %717 = vector.extract_strided_slice %704 {offsets = [0, 64], sizes = [2, 32], strides = [1, 1]} : vector<2x128xf32> to vector<2x32xf32>
    %718 = math.tanh %717 : vector<2x32xf32>
    %719 = vector.extract_strided_slice %704 {offsets = [0, 96], sizes = [2, 32], strides = [1, 1]} : vector<2x128xf32> to vector<2x32xf32>
    %720 = arith.negf %719 : vector<2x32xf32>
    %721 = math.exp %720 : vector<2x32xf32>
    %cst_262 = arith.constant 1.000000e+00 : f32
    %722 = vector.broadcast %cst_262 : f32 to vector<2x32xf32>
    %723 = arith.addf %722, %721 : vector<2x32xf32>
    %724 = arith.divf %722, %723 : vector<2x32xf32>
    %725 = arith.mulf %716, %668 : vector<2x32xf32>
    %726 = arith.mulf %710, %718 : vector<2x32xf32>
    %727 = arith.addf %725, %726 : vector<2x32xf32>
    %728 = math.tanh %727 : vector<2x32xf32>
    %729 = arith.mulf %724, %728 : vector<2x32xf32>
    %cst_263 = arith.constant dense<0.000000e+00> : vector<2x128xf32>
    %730 = tpu.matmul %729, %396, %cst_263 {dimension_numbers = #tpu.dot_dimension_numbers<[1], [0], [0], [1], [0, 0, 1, 1], [], []>} : vector<2x32xf32>, vector<32x128xf32>, vector<2x128xf32> -> vector<2x128xf32>
    %731 = vector.broadcast %402 : vector<1x128xf32> to vector<2x128xf32>
    %732 = arith.addf %730, %731 : vector<2x128xf32>
    %cst_264 = arith.constant dense<0.000000e+00> : vector<2x128xf32>
    %733 = tpu.matmul %700, %400, %cst_264 {dimension_numbers = #tpu.dot_dimension_numbers<[1], [0], [0], [1], [0, 0, 1, 1], [], []>} : vector<2x32xf32>, vector<32x128xf32>, vector<2x128xf32> -> vector<2x128xf32>
    %734 = arith.addf %732, %733 : vector<2x128xf32>
    %735 = vector.extract_strided_slice %734 {offsets = [0, 0], sizes = [2, 32], strides = [1, 1]} : vector<2x128xf32> to vector<2x32xf32>
    %736 = arith.negf %735 : vector<2x32xf32>
    %737 = math.exp %736 : vector<2x32xf32>
    %cst_265 = arith.constant 1.000000e+00 : f32
    %738 = vector.broadcast %cst_265 : f32 to vector<2x32xf32>
    %739 = arith.addf %738, %737 : vector<2x32xf32>
    %740 = arith.divf %738, %739 : vector<2x32xf32>
    %741 = vector.extract_strided_slice %734 {offsets = [0, 32], sizes = [2, 32], strides = [1, 1]} : vector<2x128xf32> to vector<2x32xf32>
    %742 = arith.negf %741 : vector<2x32xf32>
    %743 = math.exp %742 : vector<2x32xf32>
    %cst_266 = arith.constant 1.000000e+00 : f32
    %744 = vector.broadcast %cst_266 : f32 to vector<2x32xf32>
    %745 = arith.addf %744, %743 : vector<2x32xf32>
    %746 = arith.divf %744, %745 : vector<2x32xf32>
    %747 = vector.extract_strided_slice %734 {offsets = [0, 64], sizes = [2, 32], strides = [1, 1]} : vector<2x128xf32> to vector<2x32xf32>
    %748 = math.tanh %747 : vector<2x32xf32>
    %749 = vector.extract_strided_slice %734 {offsets = [0, 96], sizes = [2, 32], strides = [1, 1]} : vector<2x128xf32> to vector<2x32xf32>
    %750 = arith.negf %749 : vector<2x32xf32>
    %751 = math.exp %750 : vector<2x32xf32>
    %cst_267 = arith.constant 1.000000e+00 : f32
    %752 = vector.broadcast %cst_267 : f32 to vector<2x32xf32>
    %753 = arith.addf %752, %751 : vector<2x32xf32>
    %754 = arith.divf %752, %753 : vector<2x32xf32>
    %755 = arith.mulf %746, %698 : vector<2x32xf32>
    %756 = arith.mulf %740, %748 : vector<2x32xf32>
    %757 = arith.addf %755, %756 : vector<2x32xf32>
    %758 = math.tanh %757 : vector<2x32xf32>
    %759 = arith.mulf %754, %758 : vector<2x32xf32>
    %c10 = arith.constant 10 : index
    %c0_268 = arith.constant 0 : index
    %760 = vector.load %arg29[%c10, %c0_268] : memref<16x32xf32, #tpu.memory_space<vmem>>, vector<2x32xf32>
    tpu.vector_store %arg29[%c10, %c0_268], %759 {strides = array<i32>} : memref<16x32xf32, #tpu.memory_space<vmem>>, vector<2x32xf32>,
    %761 = vector.extract_strided_slice %394 {offsets = [12, 0], sizes = [2, 128], strides = [1, 1]} : vector<16x128xf32> to vector<2x128xf32>
    %cst_269 = arith.constant dense<0.000000e+00> : vector<2x128xf32>
    %762 = tpu.matmul %729, %398, %cst_269 {dimension_numbers = #tpu.dot_dimension_numbers<[1], [0], [0], [1], [0, 0, 1, 1], [], []>} : vector<2x32xf32>, vector<32x128xf32>, vector<2x128xf32> -> vector<2x128xf32>
    %763 = arith.addf %761, %762 : vector<2x128xf32>
    %764 = vector.extract_strided_slice %763 {offsets = [0, 0], sizes = [2, 32], strides = [1, 1]} : vector<2x128xf32> to vector<2x32xf32>
    %765 = arith.negf %764 : vector<2x32xf32>
    %766 = math.exp %765 : vector<2x32xf32>
    %cst_270 = arith.constant 1.000000e+00 : f32
    %767 = vector.broadcast %cst_270 : f32 to vector<2x32xf32>
    %768 = arith.addf %767, %766 : vector<2x32xf32>
    %769 = arith.divf %767, %768 : vector<2x32xf32>
    %770 = vector.extract_strided_slice %763 {offsets = [0, 32], sizes = [2, 32], strides = [1, 1]} : vector<2x128xf32> to vector<2x32xf32>
    %771 = arith.negf %770 : vector<2x32xf32>
    %772 = math.exp %771 : vector<2x32xf32>
    %cst_271 = arith.constant 1.000000e+00 : f32
    %773 = vector.broadcast %cst_271 : f32 to vector<2x32xf32>
    %774 = arith.addf %773, %772 : vector<2x32xf32>
    %775 = arith.divf %773, %774 : vector<2x32xf32>
    %776 = vector.extract_strided_slice %763 {offsets = [0, 64], sizes = [2, 32], strides = [1, 1]} : vector<2x128xf32> to vector<2x32xf32>
    %777 = math.tanh %776 : vector<2x32xf32>
    %778 = vector.extract_strided_slice %763 {offsets = [0, 96], sizes = [2, 32], strides = [1, 1]} : vector<2x128xf32> to vector<2x32xf32>
    %779 = arith.negf %778 : vector<2x32xf32>
    %780 = math.exp %779 : vector<2x32xf32>
    %cst_272 = arith.constant 1.000000e+00 : f32
    %781 = vector.broadcast %cst_272 : f32 to vector<2x32xf32>
    %782 = arith.addf %781, %780 : vector<2x32xf32>
    %783 = arith.divf %781, %782 : vector<2x32xf32>
    %784 = arith.mulf %775, %727 : vector<2x32xf32>
    %785 = arith.mulf %769, %777 : vector<2x32xf32>
    %786 = arith.addf %784, %785 : vector<2x32xf32>
    %787 = math.tanh %786 : vector<2x32xf32>
    %788 = arith.mulf %783, %787 : vector<2x32xf32>
    %cst_273 = arith.constant dense<0.000000e+00> : vector<2x128xf32>
    %789 = tpu.matmul %788, %396, %cst_273 {dimension_numbers = #tpu.dot_dimension_numbers<[1], [0], [0], [1], [0, 0, 1, 1], [], []>} : vector<2x32xf32>, vector<32x128xf32>, vector<2x128xf32> -> vector<2x128xf32>
    %790 = vector.broadcast %402 : vector<1x128xf32> to vector<2x128xf32>
    %791 = arith.addf %789, %790 : vector<2x128xf32>
    %cst_274 = arith.constant dense<0.000000e+00> : vector<2x128xf32>
    %792 = tpu.matmul %759, %400, %cst_274 {dimension_numbers = #tpu.dot_dimension_numbers<[1], [0], [0], [1], [0, 0, 1, 1], [], []>} : vector<2x32xf32>, vector<32x128xf32>, vector<2x128xf32> -> vector<2x128xf32>
    %793 = arith.addf %791, %792 : vector<2x128xf32>
    %794 = vector.extract_strided_slice %793 {offsets = [0, 0], sizes = [2, 32], strides = [1, 1]} : vector<2x128xf32> to vector<2x32xf32>
    %795 = arith.negf %794 : vector<2x32xf32>
    %796 = math.exp %795 : vector<2x32xf32>
    %cst_275 = arith.constant 1.000000e+00 : f32
    %797 = vector.broadcast %cst_275 : f32 to vector<2x32xf32>
    %798 = arith.addf %797, %796 : vector<2x32xf32>
    %799 = arith.divf %797, %798 : vector<2x32xf32>
    %800 = vector.extract_strided_slice %793 {offsets = [0, 32], sizes = [2, 32], strides = [1, 1]} : vector<2x128xf32> to vector<2x32xf32>
    %801 = arith.negf %800 : vector<2x32xf32>
    %802 = math.exp %801 : vector<2x32xf32>
    %cst_276 = arith.constant 1.000000e+00 : f32
    %803 = vector.broadcast %cst_276 : f32 to vector<2x32xf32>
    %804 = arith.addf %803, %802 : vector<2x32xf32>
    %805 = arith.divf %803, %804 : vector<2x32xf32>
    %806 = vector.extract_strided_slice %793 {offsets = [0, 64], sizes = [2, 32], strides = [1, 1]} : vector<2x128xf32> to vector<2x32xf32>
    %807 = math.tanh %806 : vector<2x32xf32>
    %808 = vector.extract_strided_slice %793 {offsets = [0, 96], sizes = [2, 32], strides = [1, 1]} : vector<2x128xf32> to vector<2x32xf32>
    %809 = arith.negf %808 : vector<2x32xf32>
    %810 = math.exp %809 : vector<2x32xf32>
    %cst_277 = arith.constant 1.000000e+00 : f32
    %811 = vector.broadcast %cst_277 : f32 to vector<2x32xf32>
    %812 = arith.addf %811, %810 : vector<2x32xf32>
    %813 = arith.divf %811, %812 : vector<2x32xf32>
    %814 = arith.mulf %805, %757 : vector<2x32xf32>
    %815 = arith.mulf %799, %807 : vector<2x32xf32>
    %816 = arith.addf %814, %815 : vector<2x32xf32>
    %817 = math.tanh %816 : vector<2x32xf32>
    %818 = arith.mulf %813, %817 : vector<2x32xf32>
    %c12 = arith.constant 12 : index
    %c0_278 = arith.constant 0 : index
    %819 = vector.load %arg29[%c12, %c0_278] : memref<16x32xf32, #tpu.memory_space<vmem>>, vector<2x32xf32>
    tpu.vector_store %arg29[%c12, %c0_278], %818 {strides = array<i32>} : memref<16x32xf32, #tpu.memory_space<vmem>>, vector<2x32xf32>,
    %820 = vector.extract_strided_slice %394 {offsets = [14, 0], sizes = [2, 128], strides = [1, 1]} : vector<16x128xf32> to vector<2x128xf32>
    %cst_279 = arith.constant dense<0.000000e+00> : vector<2x128xf32>
    %821 = tpu.matmul %788, %398, %cst_279 {dimension_numbers = #tpu.dot_dimension_numbers<[1], [0], [0], [1], [0, 0, 1, 1], [], []>} : vector<2x32xf32>, vector<32x128xf32>, vector<2x128xf32> -> vector<2x128xf32>
    %822 = arith.addf %820, %821 : vector<2x128xf32>
    %823 = vector.extract_strided_slice %822 {offsets = [0, 0], sizes = [2, 32], strides = [1, 1]} : vector<2x128xf32> to vector<2x32xf32>
    %824 = arith.negf %823 : vector<2x32xf32>
    %825 = math.exp %824 : vector<2x32xf32>
    %cst_280 = arith.constant 1.000000e+00 : f32
    %826 = vector.broadcast %cst_280 : f32 to vector<2x32xf32>
    %827 = arith.addf %826, %825 : vector<2x32xf32>
    %828 = arith.divf %826, %827 : vector<2x32xf32>
    %829 = vector.extract_strided_slice %822 {offsets = [0, 32], sizes = [2, 32], strides = [1, 1]} : vector<2x128xf32> to vector<2x32xf32>
    %830 = arith.negf %829 : vector<2x32xf32>
    %831 = math.exp %830 : vector<2x32xf32>
    %cst_281 = arith.constant 1.000000e+00 : f32
    %832 = vector.broadcast %cst_281 : f32 to vector<2x32xf32>
    %833 = arith.addf %832, %831 : vector<2x32xf32>
    %834 = arith.divf %832, %833 : vector<2x32xf32>
    %835 = vector.extract_strided_slice %822 {offsets = [0, 64], sizes = [2, 32], strides = [1, 1]} : vector<2x128xf32> to vector<2x32xf32>
    %836 = math.tanh %835 : vector<2x32xf32>
    %837 = vector.extract_strided_slice %822 {offsets = [0, 96], sizes = [2, 32], strides = [1, 1]} : vector<2x128xf32> to vector<2x32xf32>
    %838 = arith.negf %837 : vector<2x32xf32>
    %839 = math.exp %838 : vector<2x32xf32>
    %cst_282 = arith.constant 1.000000e+00 : f32
    %840 = vector.broadcast %cst_282 : f32 to vector<2x32xf32>
    %841 = arith.addf %840, %839 : vector<2x32xf32>
    %842 = arith.divf %840, %841 : vector<2x32xf32>
    %843 = arith.mulf %834, %786 : vector<2x32xf32>
    %844 = arith.mulf %828, %836 : vector<2x32xf32>
    %845 = arith.addf %843, %844 : vector<2x32xf32>
    %846 = math.tanh %845 : vector<2x32xf32>
    %847 = arith.mulf %842, %846 : vector<2x32xf32>
    %cst_283 = arith.constant dense<0.000000e+00> : vector<2x128xf32>
    %848 = tpu.matmul %847, %396, %cst_283 {dimension_numbers = #tpu.dot_dimension_numbers<[1], [0], [0], [1], [0, 0, 1, 1], [], []>} : vector<2x32xf32>, vector<32x128xf32>, vector<2x128xf32> -> vector<2x128xf32>
    %849 = vector.broadcast %402 : vector<1x128xf32> to vector<2x128xf32>
    %850 = arith.addf %848, %849 : vector<2x128xf32>
    %cst_284 = arith.constant dense<0.000000e+00> : vector<2x128xf32>
    %851 = tpu.matmul %818, %400, %cst_284 {dimension_numbers = #tpu.dot_dimension_numbers<[1], [0], [0], [1], [0, 0, 1, 1], [], []>} : vector<2x32xf32>, vector<32x128xf32>, vector<2x128xf32> -> vector<2x128xf32>
    %852 = arith.addf %850, %851 : vector<2x128xf32>
    %853 = vector.extract_strided_slice %852 {offsets = [0, 0], sizes = [2, 32], strides = [1, 1]} : vector<2x128xf32> to vector<2x32xf32>
    %854 = arith.negf %853 : vector<2x32xf32>
    %855 = math.exp %854 : vector<2x32xf32>
    %cst_285 = arith.constant 1.000000e+00 : f32
    %856 = vector.broadcast %cst_285 : f32 to vector<2x32xf32>
    %857 = arith.addf %856, %855 : vector<2x32xf32>
    %858 = arith.divf %856, %857 : vector<2x32xf32>
    %859 = vector.extract_strided_slice %852 {offsets = [0, 32], sizes = [2, 32], strides = [1, 1]} : vector<2x128xf32> to vector<2x32xf32>
    %860 = arith.negf %859 : vector<2x32xf32>
    %861 = math.exp %860 : vector<2x32xf32>
    %cst_286 = arith.constant 1.000000e+00 : f32
    %862 = vector.broadcast %cst_286 : f32 to vector<2x32xf32>
    %863 = arith.addf %862, %861 : vector<2x32xf32>
    %864 = arith.divf %862, %863 : vector<2x32xf32>
    %865 = vector.extract_strided_slice %852 {offsets = [0, 64], sizes = [2, 32], strides = [1, 1]} : vector<2x128xf32> to vector<2x32xf32>
    %866 = math.tanh %865 : vector<2x32xf32>
    %867 = vector.extract_strided_slice %852 {offsets = [0, 96], sizes = [2, 32], strides = [1, 1]} : vector<2x128xf32> to vector<2x32xf32>
    %868 = arith.negf %867 : vector<2x32xf32>
    %869 = math.exp %868 : vector<2x32xf32>
    %cst_287 = arith.constant 1.000000e+00 : f32
    %870 = vector.broadcast %cst_287 : f32 to vector<2x32xf32>
    %871 = arith.addf %870, %869 : vector<2x32xf32>
    %872 = arith.divf %870, %871 : vector<2x32xf32>
    %873 = arith.mulf %864, %816 : vector<2x32xf32>
    %874 = arith.mulf %858, %866 : vector<2x32xf32>
    %875 = arith.addf %873, %874 : vector<2x32xf32>
    %876 = math.tanh %875 : vector<2x32xf32>
    %877 = arith.mulf %872, %876 : vector<2x32xf32>
    %c14 = arith.constant 14 : index
    %c0_288 = arith.constant 0 : index
    %878 = vector.load %arg29[%c14, %c0_288] : memref<16x32xf32, #tpu.memory_space<vmem>>, vector<2x32xf32>
    tpu.vector_store %arg29[%c14, %c0_288], %877 {strides = array<i32>} : memref<16x32xf32, #tpu.memory_space<vmem>>, vector<2x32xf32>,
    %c0_289 = arith.constant 0 : index
    %c0_290 = arith.constant 0 : index
    %c0_291 = arith.constant 0 : index
    %879 = vector.load %arg27[%c0_289, %c0_290, %c0_291] : memref<2x2x32xf32, #tpu.memory_space<vmem>>, vector<1x2x32xf32>
    %880 = vector.shape_cast %879 : vector<1x2x32xf32> to vector<2x32xf32>
    %881 = vector.shape_cast %847 : vector<2x32xf32> to vector<1x2x32xf32>
    tpu.vector_store %arg27[%c0_289, %c0_290, %c0_291], %881 {strides = array<i32>} : memref<2x2x32xf32, #tpu.memory_space<vmem>>, vector<1x2x32xf32>,
    %c0_292 = arith.constant 0 : index
    %c0_293 = arith.constant 0 : index
    %c0_294 = arith.constant 0 : index
    %882 = vector.load %arg28[%c0_292, %c0_293, %c0_294] : memref<2x2x32xf32, #tpu.memory_space<vmem>>, vector<1x2x32xf32>
    %883 = vector.shape_cast %882 : vector<1x2x32xf32> to vector<2x32xf32>
    %884 = vector.shape_cast %845 : vector<2x32xf32> to vector<1x2x32xf32>
    tpu.vector_store %arg28[%c0_292, %c0_293, %c0_294], %884 {strides = array<i32>} : memref<2x2x32xf32, #tpu.memory_space<vmem>>, vector<1x2x32xf32>,
    %c1_295 = arith.constant 1 : index
    %c0_296 = arith.constant 0 : index
    %c0_297 = arith.constant 0 : index
    %885 = vector.load %arg27[%c1_295, %c0_296, %c0_297] : memref<2x2x32xf32, #tpu.memory_space<vmem>>, vector<1x2x32xf32>
    %886 = vector.shape_cast %885 : vector<1x2x32xf32> to vector<2x32xf32>
    %887 = vector.shape_cast %877 : vector<2x32xf32> to vector<1x2x32xf32>
    tpu.vector_store %arg27[%c1_295, %c0_296, %c0_297], %887 {strides = array<i32>} : memref<2x2x32xf32, #tpu.memory_space<vmem>>, vector<1x2x32xf32>,
    %c1_298 = arith.constant 1 : index
    %c0_299 = arith.constant 0 : index
    %c0_300 = arith.constant 0 : index
    %888 = vector.load %arg28[%c1_298, %c0_299, %c0_300] : memref<2x2x32xf32, #tpu.memory_space<vmem>>, vector<1x2x32xf32>
    %889 = vector.shape_cast %888 : vector<1x2x32xf32> to vector<2x32xf32>
    %890 = vector.shape_cast %875 : vector<2x32xf32> to vector<1x2x32xf32>
    tpu.vector_store %arg28[%c1_298, %c0_299, %c0_300], %890 {strides = array<i32>} : memref<2x2x32xf32, #tpu.memory_space<vmem>>, vector<1x2x32xf32>,
    %c0_301 = arith.constant 0 : index
    %c0_302 = arith.constant 0 : index
    %891 = vector.load %arg29[%c0_301, %c0_302] : memref<16x32xf32, #tpu.memory_space<vmem>>, vector<16x32xf32>
    %c0_303 = arith.constant 0 : index
    %c0_304 = arith.constant 0 : index
    %892 = vector.load %arg22[%c0_303, %c0_304] : memref<1x32xf32, #tpu.memory_space<vmem>>, vector<1x32xf32>
    %c0_305 = arith.constant 0 : index
    %c0_306 = arith.constant 0 : index
    %893 = vector.load %arg23[%c0_305, %c0_306] : memref<1x32xf32, #tpu.memory_space<vmem>>, vector<1x32xf32>
    %cst_307 = arith.constant dense<0.000000e+00> : vector<16xf32>
    %894 = vector.multi_reduction <add>, %891, %cst_307 [1] : vector<16x32xf32> to vector<16xf32>
    %895 = vector.shape_cast %894 : vector<16xf32> to vector<16x1xf32>
    %cst_308 = arith.constant 3.200000e+01 : f32
    %896 = vector.broadcast %cst_308 : f32 to vector<16x1xf32>
    %897 = arith.divf %895, %896 : vector<16x1xf32>
    %898 = vector.broadcast %897 : vector<16x1xf32> to vector<16x32xf32>
    %899 = arith.subf %891, %898 : vector<16x32xf32>
    %900 = arith.mulf %899, %899 : vector<16x32xf32>
    %cst_309 = arith.constant dense<0.000000e+00> : vector<16xf32>
    %901 = vector.multi_reduction <add>, %900, %cst_309 [1] : vector<16x32xf32> to vector<16xf32>
    %902 = vector.shape_cast %901 : vector<16xf32> to vector<16x1xf32>
    %cst_310 = arith.constant 3.200000e+01 : f32
    %903 = vector.broadcast %cst_310 : f32 to vector<16x1xf32>
    %904 = arith.divf %902, %903 : vector<16x1xf32>
    %905 = vector.broadcast %897 : vector<16x1xf32> to vector<16x32xf32>
    %906 = arith.subf %891, %905 : vector<16x32xf32>
    %cst_311 = arith.constant 9.99999974E-6 : f32
    %907 = vector.broadcast %cst_311 : f32 to vector<16x1xf32>
    %908 = arith.addf %904, %907 : vector<16x1xf32>
    %909 = math.rsqrt %908 : vector<16x1xf32>
    %910 = vector.broadcast %909 : vector<16x1xf32> to vector<16x32xf32>
    %911 = arith.mulf %906, %910 : vector<16x32xf32>
    %912 = vector.broadcast %892 : vector<1x32xf32> to vector<16x32xf32>
    %913 = arith.mulf %911, %912 : vector<16x32xf32>
    %914 = vector.broadcast %893 : vector<1x32xf32> to vector<16x32xf32>
    %915 = arith.addf %913, %914 : vector<16x32xf32>
    %c0_312 = arith.constant 0 : index
    %c0_313 = arith.constant 0 : index
    %916 = vector.load %arg24[%c0_312, %c0_313] : memref<32x64xf32, #tpu.memory_space<vmem>>, vector<32x64xf32>
    %cst_314 = arith.constant dense<0.000000e+00> : vector<16x64xf32>
    %917 = tpu.matmul %915, %916, %cst_314 {dimension_numbers = #tpu.dot_dimension_numbers<[1], [0], [0], [1], [0, 0, 1, 1], [], []>} : vector<16x32xf32>, vector<32x64xf32>, vector<16x64xf32> -> vector<16x64xf32>
    %c0_315 = arith.constant 0 : index
    %c0_316 = arith.constant 0 : index
    %918 = vector.load %arg25[%c0_315, %c0_316] : memref<1x64xf32, #tpu.memory_space<vmem>>, vector<1x64xf32>
    %919 = vector.broadcast %918 : vector<1x64xf32> to vector<16x64xf32>
    %920 = arith.addf %917, %919 : vector<16x64xf32>
    %c0_317 = arith.constant 0 : index
    %c0_318 = arith.constant 0 : index
    %921 = vector.load %arg26[%c0_317, %c0_318] : memref<16x64xf32, #tpu.memory_space<vmem>>, vector<16x64xf32>
    tpu.vector_store %arg26[%c0_317, %c0_318], %920 {strides = array<i32>} : memref<16x64xf32, #tpu.memory_space<vmem>>, vector<16x64xf32>,
    return
  }
  func.func @transform_0(%arg0: i32) -> (i32, i32) {
    %c0_i32 = arith.constant 0 : i32
    %c0_i32_0 = arith.constant 0 : i32
    %c0_i32_1 = arith.constant 0 : i32
    return %c0_i32, %c0_i32_0 : i32, i32
  }
  func.func @transform_1(%arg0: i32) -> (i32, i32) {
    %c0_i32 = arith.constant 0 : i32
    %c0_i32_0 = arith.constant 0 : i32
    %c0_i32_1 = arith.constant 0 : i32
    return %c0_i32, %c0_i32_0 : i32, i32
  }
  func.func @transform_2(%arg0: i32) -> (i32, i32, i32) {
    %c0_i32 = arith.constant 0 : i32
    %c0_i32_0 = arith.constant 0 : i32
    %c0_i32_1 = arith.constant 0 : i32
    %c0_i32_2 = arith.constant 0 : i32
    return %c0_i32, %c0_i32_0, %c0_i32_1 : i32, i32, i32
  }
  func.func @transform_3(%arg0: i32) -> (i32, i32, i32) {
    %c0_i32 = arith.constant 0 : i32
    %c0_i32_0 = arith.constant 0 : i32
    %c0_i32_1 = arith.constant 0 : i32
    %c0_i32_2 = arith.constant 0 : i32
    return %c0_i32, %c0_i32_0, %c0_i32_1 : i32, i32, i32
  }
  func.func @transform_4(%arg0: i32) -> (i32, i32, i32) {
    %c0_i32 = arith.constant 0 : i32
    %c0_i32_0 = arith.constant 0 : i32
    %c0_i32_1 = arith.constant 0 : i32
    %c0_i32_2 = arith.constant 0 : i32
    return %c0_i32, %c0_i32_0, %c0_i32_1 : i32, i32, i32
  }
  func.func @transform_5(%arg0: i32) -> (i32, i32, i32) {
    %c0_i32 = arith.constant 0 : i32
    %c0_i32_0 = arith.constant 0 : i32
    %c0_i32_1 = arith.constant 0 : i32
    %c0_i32_2 = arith.constant 0 : i32
    return %c0_i32, %c0_i32_0, %c0_i32_1 : i32, i32, i32
  }
  func.func @transform_6(%arg0: i32) -> (i32, i32, i32) {
    %c0_i32 = arith.constant 0 : i32
    %c0_i32_0 = arith.constant 0 : i32
    %c0_i32_1 = arith.constant 0 : i32
    %c0_i32_2 = arith.constant 0 : i32
    return %c0_i32, %c0_i32_0, %c0_i32_1 : i32, i32, i32
  }
  func.func @transform_7(%arg0: i32) -> (i32, i32, i32) {
    %c0_i32 = arith.constant 0 : i32
    %c0_i32_0 = arith.constant 0 : i32
    %c0_i32_1 = arith.constant 0 : i32
    %c0_i32_2 = arith.constant 0 : i32
    return %c0_i32, %c0_i32_0, %c0_i32_1 : i32, i32, i32
  }
  func.func @transform_8(%arg0: i32) -> (i32, i32, i32) {
    %c0_i32 = arith.constant 0 : i32
    %c0_i32_0 = arith.constant 0 : i32
    %c0_i32_1 = arith.constant 0 : i32
    %c0_i32_2 = arith.constant 0 : i32
    return %c0_i32, %c0_i32_0, %c0_i32_1 : i32, i32, i32
  }
  func.func @transform_9(%arg0: i32) -> (i32, i32, i32) {
    %c0_i32 = arith.constant 0 : i32
    %c0_i32_0 = arith.constant 0 : i32
    %c0_i32_1 = arith.constant 0 : i32
    %c0_i32_2 = arith.constant 0 : i32
    return %c0_i32, %c0_i32_0, %c0_i32_1 : i32, i32, i32
  }
  func.func @transform_10(%arg0: i32) -> (i32, i32, i32) {
    %c0_i32 = arith.constant 0 : i32
    %c0_i32_0 = arith.constant 0 : i32
    %c0_i32_1 = arith.constant 0 : i32
    %c0_i32_2 = arith.constant 0 : i32
    return %c0_i32, %c0_i32_0, %c0_i32_1 : i32, i32, i32
  }
  func.func @transform_11(%arg0: i32) -> (i32, i32, i32) {
    %c0_i32 = arith.constant 0 : i32
    %c0_i32_0 = arith.constant 0 : i32
    %c0_i32_1 = arith.constant 0 : i32
    %c0_i32_2 = arith.constant 0 : i32
    return %c0_i32, %c0_i32_0, %c0_i32_1 : i32, i32, i32
  }
  func.func @transform_12(%arg0: i32) -> (i32, i32, i32) {
    %c0_i32 = arith.constant 0 : i32
    %c0_i32_0 = arith.constant 0 : i32
    %c0_i32_1 = arith.constant 0 : i32
    %c0_i32_2 = arith.constant 0 : i32
    return %c0_i32, %c0_i32_0, %c0_i32_1 : i32, i32, i32
  }
  func.func @transform_13(%arg0: i32) -> (i32, i32, i32) {
    %c0_i32 = arith.constant 0 : i32
    %c0_i32_0 = arith.constant 0 : i32
    %c0_i32_1 = arith.constant 0 : i32
    %c0_i32_2 = arith.constant 0 : i32
    return %c0_i32, %c0_i32_0, %c0_i32_1 : i32, i32, i32
  }
  func.func @transform_14(%arg0: i32) -> (i32, i32, i32) {
    %c0_i32 = arith.constant 0 : i32
    %c0_i32_0 = arith.constant 0 : i32
    %c0_i32_1 = arith.constant 0 : i32
    %c0_i32_2 = arith.constant 0 : i32
    return %c0_i32, %c0_i32_0, %c0_i32_1 : i32, i32, i32
  }
  func.func @transform_15(%arg0: i32) -> (i32, i32, i32) {
    %c0_i32 = arith.constant 0 : i32
    %c0_i32_0 = arith.constant 0 : i32
    %c0_i32_1 = arith.constant 0 : i32
    %c0_i32_2 = arith.constant 0 : i32
    return %c0_i32, %c0_i32_0, %c0_i32_1 : i32, i32, i32
  }
  func.func @transform_16(%arg0: i32) -> (i32, i32, i32) {
    %c0_i32 = arith.constant 0 : i32
    %c0_i32_0 = arith.constant 0 : i32
    %c0_i32_1 = arith.constant 0 : i32
    %c0_i32_2 = arith.constant 0 : i32
    return %c0_i32, %c0_i32_0, %c0_i32_1 : i32, i32, i32
  }
  func.func @transform_17(%arg0: i32) -> (i32, i32, i32) {
    %c0_i32 = arith.constant 0 : i32
    %c0_i32_0 = arith.constant 0 : i32
    %c0_i32_1 = arith.constant 0 : i32
    %c0_i32_2 = arith.constant 0 : i32
    return %c0_i32, %c0_i32_0, %c0_i32_1 : i32, i32, i32
  }
  func.func @transform_18(%arg0: i32) -> (i32, i32, i32) {
    %c0_i32 = arith.constant 0 : i32
    %c0_i32_0 = arith.constant 0 : i32
    %c0_i32_1 = arith.constant 0 : i32
    %c0_i32_2 = arith.constant 0 : i32
    return %c0_i32, %c0_i32_0, %c0_i32_1 : i32, i32, i32
  }
  func.func @transform_19(%arg0: i32) -> (i32, i32, i32) {
    %c0_i32 = arith.constant 0 : i32
    %c0_i32_0 = arith.constant 0 : i32
    %c0_i32_1 = arith.constant 0 : i32
    %c0_i32_2 = arith.constant 0 : i32
    return %c0_i32, %c0_i32_0, %c0_i32_1 : i32, i32, i32
  }
  func.func @transform_20(%arg0: i32) -> (i32, i32, i32) {
    %c0_i32 = arith.constant 0 : i32
    %c0_i32_0 = arith.constant 0 : i32
    %c0_i32_1 = arith.constant 0 : i32
    %c0_i32_2 = arith.constant 0 : i32
    return %c0_i32, %c0_i32_0, %c0_i32_1 : i32, i32, i32
  }
  func.func @transform_21(%arg0: i32) -> (i32, i32) {
    %c0_i32 = arith.constant 0 : i32
    %c0_i32_0 = arith.constant 0 : i32
    %c0_i32_1 = arith.constant 0 : i32
    return %c0_i32, %c0_i32_0 : i32, i32
  }
  func.func @transform_22(%arg0: i32) -> (i32, i32) {
    %c0_i32 = arith.constant 0 : i32
    %c0_i32_0 = arith.constant 0 : i32
    %c0_i32_1 = arith.constant 0 : i32
    return %c0_i32, %c0_i32_0 : i32, i32
  }
  func.func @transform_23(%arg0: i32) -> (i32, i32) {
    %c0_i32 = arith.constant 0 : i32
    %c0_i32_0 = arith.constant 0 : i32
    %c0_i32_1 = arith.constant 0 : i32
    return %c0_i32, %c0_i32_0 : i32, i32
  }
  func.func @transform_24(%arg0: i32) -> (i32, i32) {
    %c0_i32 = arith.constant 0 : i32
    %c0_i32_0 = arith.constant 0 : i32
    %c0_i32_1 = arith.constant 0 : i32
    return %c0_i32, %c0_i32_0 : i32, i32
  }
  func.func @transform_25(%arg0: i32) -> (i32, i32) {
    %c0_i32 = arith.constant 0 : i32
    %c0_i32_0 = arith.constant 0 : i32
    %c0_i32_1 = arith.constant 0 : i32
    return %c0_i32, %c0_i32_0 : i32, i32
  }
  func.func @transform_26(%arg0: i32) -> (i32, i32, i32) {
    %c0_i32 = arith.constant 0 : i32
    %c0_i32_0 = arith.constant 0 : i32
    %c0_i32_1 = arith.constant 0 : i32
    %c0_i32_2 = arith.constant 0 : i32
    return %c0_i32, %c0_i32_0, %c0_i32_1 : i32, i32, i32
  }
  func.func @transform_27(%arg0: i32) -> (i32, i32, i32) {
    %c0_i32 = arith.constant 0 : i32
    %c0_i32_0 = arith.constant 0 : i32
    %c0_i32_1 = arith.constant 0 : i32
    %c0_i32_2 = arith.constant 0 : i32
    return %c0_i32, %c0_i32_0, %c0_i32_1 : i32, i32, i32
  }
}

</mosaic_0001>

<llo_original>
// kernel: openarc_forward.1
$region0: #{openarc_forward.1}
  #allocation0 [shape = 'u32[]', space=smem, size = 0x4, offset = 0x4, fixed_abs, tag = 'smem constant byte address 0x4 - core index']
  #allocation1 [shape = 'u32[144,128]{1,0:T(1,128)}', space=vmem, size = 0x12000, scoped, tag = 'internal scratch']
  #allocation2 [shape = 'f32[16,32]{1,0:T(8,128)}', space=vmem, size = 0x2000, scoped, tag = 'scratch operand']
  %s0 = inlined_call_operand.vmem [shape: f32[16,32], index: 0, kind: input, shape index: {}]
  %s1 = inlined_call_operand.vmem [shape: f32[16,16], index: 1, kind: input, shape index: {}]
  %s2 = inlined_call_operand.vmem [shape: f32[2,1,32], index: 2, kind: input, shape index: {}]
  %s3 = inlined_call_operand.vmem [shape: f32[2,1,32], index: 3, kind: input, shape index: {}]
  %s4 = inlined_call_operand.vmem [shape: f32[2,32,32], index: 4, kind: input, shape index: {}]
  %s5 = inlined_call_operand.vmem [shape: f32[2,1,32], index: 5, kind: input, shape index: {}]
  %s6 = inlined_call_operand.vmem [shape: f32[2,32,32], index: 6, kind: input, shape index: {}]
  %s7 = inlined_call_operand.vmem [shape: f32[2,1,32], index: 7, kind: input, shape index: {}]
  %s8 = inlined_call_operand.vmem [shape: f32[2,32,32], index: 8, kind: input, shape index: {}]
  %s9 = inlined_call_operand.vmem [shape: f32[2,1,32], index: 9, kind: input, shape index: {}]
  %s10 = inlined_call_operand.vmem [shape: f32[2,32,32], index: 10, kind: input, shape index: {}]
  %s11 = inlined_call_operand.vmem [shape: f32[2,1,32], index: 11, kind: input, shape index: {}]
  %s12 = inlined_call_operand.vmem [shape: f32[2,1,32], index: 12, kind: input, shape index: {}]
  %s13 = inlined_call_operand.vmem [shape: f32[2,1,32], index: 13, kind: input, shape index: {}]
  %s14 = inlined_call_operand.vmem [shape: f32[2,32,128], index: 14, kind: input, shape index: {}]
  %s15 = inlined_call_operand.vmem [shape: f32[2,1,128], index: 15, kind: input, shape index: {}]
  %s16 = inlined_call_operand.vmem [shape: f32[2,128,32], index: 16, kind: input, shape index: {}]
  %s17 = inlined_call_operand.vmem [shape: f32[2,1,32], index: 17, kind: input, shape index: {}]
  %s18 = inlined_call_operand.vmem [shape: f32[2,32,128], index: 18, kind: input, shape index: {}]
  %s19 = inlined_call_operand.vmem [shape: f32[2,32,128], index: 19, kind: input, shape index: {}]
  %s20 = inlined_call_operand.vmem [shape: f32[2,1,128], index: 20, kind: input, shape index: {}]
  %s21 = inlined_call_operand.vmem [shape: f32[1,32], index: 21, kind: input, shape index: {}]
  %s22 = inlined_call_operand.vmem [shape: f32[1,32], index: 22, kind: input, shape index: {}]
  %s23 = inlined_call_operand.vmem [shape: f32[32,64], index: 23, kind: input, shape index: {}]
  %s24 = inlined_call_operand.vmem [shape: f32[1,64], index: 24, kind: input, shape index: {}]
  %s25 = inlined_call_operand.vmem [shape: f32[16,64], index: 25, kind: output, shape index: {0}]
  %s26 = inlined_call_operand.vmem [shape: f32[2,2,32], index: 26, kind: output, shape index: {1}]
  %s27 = inlined_call_operand.vmem [shape: f32[2,2,32], index: 27, kind: output, shape index: {2}]
  %28 = xla_tuple %s25, %s26, %s27
  %s29 = sld [smem:[#allocation0]]
  $region126: #{openarc_forward.1} parent=0
    _
  %s31 = ssub.s32 1, %s29
  %s32 = scalar_select 0, %s31, %s29
  // Predicated region
  $region2: #{openarc_forward.1} parent=0 // pred_check
    _
  $region3: #{openarc_forward.1} parent=0 // pred_check_branch
    %34 = sbr.rel (0) target = $region5
  $region4: #{openarc_forward.1} parent=0 // pred_region
    _
  $region5: #{openarc_forward.1} parent=0 // pred_fallthru
    _
  // Predicated region
  $region6: #{openarc_forward.1} parent=0 // pred_check
    _
  $region7: #{openarc_forward.1} parent=0 // pred_check_branch
    %36 = sbr.rel (0) target = $region9
  $region8: #{openarc_forward.1} parent=0 // pred_region
    _
  $region9: #{openarc_forward.1} parent=0 // pred_fallthru
    _
  // Predicated region
  $region10: #{openarc_forward.1} parent=0 // pred_check
    _
  $region11: #{openarc_forward.1} parent=0 // pred_check_branch
    %38 = sbr.rel (0) target = $region13
  $region12: #{openarc_forward.1} parent=0 // pred_region
    _
  $region13: #{openarc_forward.1} parent=0 // pred_fallthru
    _
  // Predicated region
  $region14: #{openarc_forward.1} parent=0 // pred_check
    _
  $region15: #{openarc_forward.1} parent=0 // pred_check_branch
    %40 = sbr.rel (0) target = $region17
  $region16: #{openarc_forward.1} parent=0 // pred_region
    _
  $region17: #{openarc_forward.1} parent=0 // pred_fallthru
    _
  // Predicated region
  $region18: #{openarc_forward.1} parent=0 // pred_check
    _
  $region19: #{openarc_forward.1} parent=0 // pred_check_branch
    %42 = sbr.rel (0) target = $region21
  $region20: #{openarc_forward.1} parent=0 // pred_region
    _
  $region21: #{openarc_forward.1} parent=0 // pred_fallthru
    _
  // Predicated region
  $region22: #{openarc_forward.1} parent=0 // pred_check
    _
  $region23: #{openarc_forward.1} parent=0 // pred_check_branch
    %44 = sbr.rel (0) target = $region25
  $region24: #{openarc_forward.1} parent=0 // pred_region
    _
  $region25: #{openarc_forward.1} parent=0 // pred_fallthru
    _
  // Predicated region
  $region26: #{openarc_forward.1} parent=0 // pred_check
    _
  $region27: #{openarc_forward.1} parent=0 // pred_check_branch
    %46 = sbr.rel (0) target = $region29
  $region28: #{openarc_forward.1} parent=0 // pred_region
    _
  $region29: #{openarc_forward.1} parent=0 // pred_fallthru
    _
  // Predicated region
  $region30: #{openarc_forward.1} parent=0 // pred_check
    _
  $region31: #{openarc_forward.1} parent=0 // pred_check_branch
    %48 = sbr.rel (0) target = $region33
  $region32: #{openarc_forward.1} parent=0 // pred_region
    _
  $region33: #{openarc_forward.1} parent=0 // pred_fallthru
    _
  // Predicated region
  $region34: #{openarc_forward.1} parent=0 // pred_check
    _
  $region35: #{openarc_forward.1} parent=0 // pred_check_branch
    %50 = sbr.rel (0) target = $region37
  $region36: #{openarc_forward.1} parent=0 // pred_region
    _
  $region37: #{openarc_forward.1} parent=0 // pred_fallthru
    _
  // Predicated region
  $region38: #{openarc_forward.1} parent=0 // pred_check
    _
  $region39: #{openarc_forward.1} parent=0 // pred_check_branch
    %52 = sbr.rel (0) target = $region41
  $region40: #{openarc_forward.1} parent=0 // pred_region
    _
  $region41: #{openarc_forward.1} parent=0 // pred_fallthru
    _
  // Predicated region
  $region42: #{openarc_forward.1} parent=0 // pred_check
    _
  $region43: #{openarc_forward.1} parent=0 // pred_check_branch
    %54 = sbr.rel (0) target = $region45
  $region44: #{openarc_forward.1} parent=0 // pred_region
    _
  $region45: #{openarc_forward.1} parent=0 // pred_fallthru
    _
  // Predicated region
  $region46: #{openarc_forward.1} parent=0 // pred_check
    _
  $region47: #{openarc_forward.1} parent=0 // pred_check_branch
    %56 = sbr.rel (0) target = $region49
  $region48: #{openarc_forward.1} parent=0 // pred_region
    _
  $region49: #{openarc_forward.1} parent=0 // pred_fallthru
    _
  // Predicated region
  $region50: #{openarc_forward.1} parent=0 // pred_check
    _
  $region51: #{openarc_forward.1} parent=0 // pred_check_branch
    %58 = sbr.rel (0) target = $region53
  $region52: #{openarc_forward.1} parent=0 // pred_region
    _
  $region53: #{openarc_forward.1} parent=0 // pred_fallthru
    _
  // Predicated region
  $region54: #{openarc_forward.1} parent=0 // pred_check
    _
  $region55: #{openarc_forward.1} parent=0 // pred_check_branch
    %60 = sbr.rel (0) target = $region57
  $region56: #{openarc_forward.1} parent=0 // pred_region
    _
  $region57: #{openarc_forward.1} parent=0 // pred_fallthru
    _
  // Predicated region
  $region58: #{openarc_forward.1} parent=0 // pred_check
    _
  $region59: #{openarc_forward.1} parent=0 // pred_check_branch
    %62 = sbr.rel (0) target = $region61
  $region60: #{openarc_forward.1} parent=0 // pred_region
    _
  $region61: #{openarc_forward.1} parent=0 // pred_fallthru
    _
  // Predicated region
  $region62: #{openarc_forward.1} parent=0 // pred_check
    _
  $region63: #{openarc_forward.1} parent=0 // pred_check_branch
    %64 = sbr.rel (0) target = $region65
  $region64: #{openarc_forward.1} parent=0 // pred_region
    _
  $region65: #{openarc_forward.1} parent=0 // pred_fallthru
    _
  // Predicated region
  $region66: #{openarc_forward.1} parent=0 // pred_check
    _
  $region67: #{openarc_forward.1} parent=0 // pred_check_branch
    %66 = sbr.rel (0) target = $region69
  $region68: #{openarc_forward.1} parent=0 // pred_region
    _
  $region69: #{openarc_forward.1} parent=0 // pred_fallthru
    _
  // Predicated region
  $region70: #{openarc_forward.1} parent=0 // pred_check
    _
  $region71: #{openarc_forward.1} parent=0 // pred_check_branch
    %68 = sbr.rel (0) target = $region73
  $region72: #{openarc_forward.1} parent=0 // pred_region
    _
  $region73: #{openarc_forward.1} parent=0 // pred_fallthru
    _
  // Predicated region
  $region74: #{openarc_forward.1} parent=0 // pred_check
    _
  $region75: #{openarc_forward.1} parent=0 // pred_check_branch
    %70 = sbr.rel (0) target = $region77
  $region76: #{openarc_forward.1} parent=0 // pred_region
    _
  $region77: #{openarc_forward.1} parent=0 // pred_fallthru
    _
  // Predicated region
  $region78: #{openarc_forward.1} parent=0 // pred_check
    _
  $region79: #{openarc_forward.1} parent=0 // pred_check_branch
    %72 = sbr.rel (0) target = $region81
  $region80: #{openarc_forward.1} parent=0 // pred_region
    _
  $region81: #{openarc_forward.1} parent=0 // pred_fallthru
    _
  // Predicated region
  $region82: #{openarc_forward.1} parent=0 // pred_check
    _
  $region83: #{openarc_forward.1} parent=0 // pred_check_branch
    %74 = sbr.rel (0) target = $region85
  $region84: #{openarc_forward.1} parent=0 // pred_region
    _
  $region85: #{openarc_forward.1} parent=0 // pred_fallthru
    _
  // Predicated region
  $region86: #{openarc_forward.1} parent=0 // pred_check
    _
  $region87: #{openarc_forward.1} parent=0 // pred_check_branch
    %76 = sbr.rel (0) target = $region89
  $region88: #{openarc_forward.1} parent=0 // pred_region
    _
  $region89: #{openarc_forward.1} parent=0 // pred_fallthru
    _
  // Predicated region
  $region90: #{openarc_forward.1} parent=0 // pred_check
    _
  $region91: #{openarc_forward.1} parent=0 // pred_check_branch
    %78 = sbr.rel (0) target = $region93
  $region92: #{openarc_forward.1} parent=0 // pred_region
    _
  $region93: #{openarc_forward.1} parent=0 // pred_fallthru
    _
  // Predicated region
  $region94: #{openarc_forward.1} parent=0 // pred_check
    _
  $region95: #{openarc_forward.1} parent=0 // pred_check_branch
    %80 = sbr.rel (0) target = $region97
  $region96: #{openarc_forward.1} parent=0 // pred_region
    _
  $region97: #{openarc_forward.1} parent=0 // pred_fallthru
    _
  // Predicated region
  $region98: #{openarc_forward.1} parent=0 // pred_check
    _
  $region99: #{openarc_forward.1} parent=0 // pred_check_branch
    %82 = sbr.rel (0) target = $region101
  $region100: #{openarc_forward.1} parent=0 // pred_region
    _
  $region101: #{openarc_forward.1} parent=0 // pred_fallthru
    _
  %v83 = vld [vmem:[%s0] sm:$0xff]
  %v84 = vld [vmem:[%s0 + $0x8] sm:$0xff]
  %v85 = vld [vmem:[%s1] sm:$0xff]
  %v86 = vld [vmem:[%s1 + $0x8] sm:$0xff]
  %v87 = vld [vmem:[%s2] sm:$0x1]
  %v88 = vld [vmem:[%s3] sm:$0x1]
  %vm89 = vcmask 261120
  %v90 = vsel %vm89, %v83, 0.0
  %91 = vadd.xlane.f32.xlu0 %v90
  %v92 = vpop.xlane.xlu0 %91
  %v93 = vsel %vm89, %v84, 0.0
  %94 = vadd.xlane.f32.xlu0 %v93
  %v95 = vpop.xlane.xlu0 %94
  %v96 = vrcp.pop 32.0
  %v97 = vmul.f32 %v92, %v96
  %v98 = vmul.f32 %v95, %v96
  %v99 = vsub.f32 %v83, %v97
  %v100 = vsub.f32 %v84, %v98
  %v101 = vmul.f32 %v99, %v99
  %v102 = vmul.f32 %v100, %v100
  %v103 = vsel %vm89, %v101, 0.0
  %104 = vadd.xlane.f32.xlu0 %v103
  %v105 = vpop.xlane.xlu0 %104
  %v106 = vsel %vm89, %v102, 0.0
  %107 = vadd.xlane.f32.xlu0 %v106
  %v108 = vpop.xlane.xlu0 %107
  %v109 = vmul.f32 %v105, %v96
  %v110 = vmul.f32 %v108, %v96
  %v111 = vadd.f32 %v109, 1e-05
  %v112 = vadd.f32 %v110, 1e-05
  %v113 = vrsqrt.pop %v111
  %v114 = vrsqrt.pop %v112
  %v115 = vmul.f32 %v99, %v113
  %v116 = vmul.f32 %v100, %v114
  %v118 = vlaneseq
  %v119 = vshrl.u32 %v118, 7
  %v120 = vsub.s32 0, %v119
  %v121 = vrot.slane %v87, %v120
  %v123 = vmul.f32 %v115, %v121
  %v124 = vmul.f32 %v116, %v121
  %v126 = vlaneseq
  %v127 = vshrl.u32 %v126, 7
  %v128 = vsub.s32 0, %v127
  %v129 = vrot.slane %v88, %v128
  %v131 = vadd.f32 %v123, %v129
  %v132 = vadd.f32 %v124, %v129
  %v133 = vld [vmem:[%s4] sm:$0xff]
  %v134 = vld [vmem:[%s4 + $0x8] sm:$0xff]
  %v135 = vld [vmem:[%s4 + $0x10] sm:$0xff]
  %v136 = vld [vmem:[%s4 + $0x18] sm:$0xff]
  %v137 = vld [vmem:[%s5] sm:$0x1]
  %v139 = vlaneseq
  %v140 = vshrl.u32 %v139, 7
  %v141 = vsub.s32 0, %v140
  %v142 = vrot.slane %v137, %v141
  %v145 = vsel %vm89, %v131, 0
  %v148 = vsel %vm89, %v132, 0
  %150 = vmatprep.subr.mxu0 0.0
  %151 = vmatpush1.msra.mxu0 0.0
  %152 = vmatprep.subr.mxu0 0.0
  %153 = vmatpush1.msra.mxu0 0.0
  %154 = vmatprep.subr.mxu0 0.0
  %155 = vmatpush1.msra.mxu0 0.0
  %156 = vmatprep.subr.mxu0 0.0
  %157 = vmatpush1.msra.mxu0 0.0
  %158 = vmatprep.subr.mxu0 0.0
  %159 = vmatpush1.msra.mxu0 0.0
  %160 = vmatprep.subr.mxu0 0.0
  %161 = vmatpush1.msra.mxu0 0.0
  %162 = vmatprep.subr.mxu0 0.0
  %163 = vmatpush1.msra.mxu0 0.0
  %164 = vmatprep.subr.mxu0 0.0
  %165 = vmatpush1.msra.mxu0 0.0
  %166 = vmatprep.subr.mxu0 0.0
  %167 = vmatpush1.msra.mxu0 0.0
  %168 = vmatprep.subr.mxu0 0.0
  %169 = vmatpush1.msra.mxu0 0.0
  %170 = vmatprep.subr.mxu0 0.0
  %171 = vmatpush1.msra.mxu0 0.0
  %172 = vmatprep.subr.mxu0 0.0
  %173 = vmatpush1.msra.mxu0 0.0
  %174 = vmatprep.subr.mxu0 0.0
  %175 = vmatpush1.msra.mxu0 %v136
  %176 = vmatprep.subr.mxu0 0.0
  %177 = vmatpush1.msra.mxu0 %v135
  %178 = vmatprep.subr.mxu0 0.0
  %179 = vmatpush1.msra.mxu0 %v134
  %180 = vmatprep.subr.mxu0 0.0
  %181 = vmatpush1.msra.mxu0 %v133
  %182 = vmatprep.subr.mxu0 0.0
  %183 = vmatpush2.msra.mxu0 0.0
  %184 = vmatprep.subr.mxu0 0.0
  %185 = vmatpush2.msra.mxu0 0.0
  %186 = vmatprep.subr.mxu0 0.0
  %187 = vmatpush2.msra.mxu0 0.0
  %188 = vmatprep.subr.mxu0 0.0
  %189 = vmatpush2.msra.mxu0 0.0
  %190 = vmatprep.subr.mxu0 0.0
  %191 = vmatpush2.msra.mxu0 0.0
  %192 = vmatprep.subr.mxu0 0.0
  %193 = vmatpush2.msra.mxu0 0.0
  %194 = vmatprep.subr.mxu0 0.0
  %195 = vmatpush2.msra.mxu0 0.0
  %196 = vmatprep.subr.mxu0 0.0
  %197 = vmatpush2.msra.mxu0 0.0
  %198 = vmatprep.subr.mxu0 0.0
  %199 = vmatpush2.msra.mxu0 0.0
  %200 = vmatprep.subr.mxu0 0.0
  %201 = vmatpush2.msra.mxu0 0.0
  %202 = vmatprep.subr.mxu0 0.0
  %203 = vmatpush2.msra.mxu0 0.0
  %204 = vmatprep.subr.mxu0 0.0
  %205 = vmatpush2.msra.mxu0 0.0
  %206 = vmatprep.subr.mxu0 0.0
  %207 = vmatpush2.msra.mxu0 0.0
  %208 = vmatprep.subr.mxu0 0.0
  %209 = vmatpush2.msra.mxu0 0.0
  %210 = vmatprep.subr.mxu0 0.0
  %211 = vmatpush2.msra.mxu0 0.0
  %212 = vmatprep.subr.mxu0 0.0
  %213 = vmatpush2.msra.mxu0 0.0
  %214 = vmatprep.mubr.f32.mxu0 0.0
  %215 = vmatmul.mubr.f32.gmra.mxu0 %v145
  %v216 = vpop.f32.mrf.mxu0
  %v217 = vadd.f32 %v142, %v216
  %v218 = vpop.f32.mrf.mxu0
  %219 = vmatprep.mubr.f32.mxu0 0.0
  %220 = vmatmul.mubr.f32.gmra.mxu0 %v148
  %v221 = vpop.f32.mrf.mxu0
  %v222 = vadd.f32 %v142, %v221
  %v223 = vpop.f32.mrf.mxu0
  %224 = vdwg.mxu0
  %v225 = vld [vmem:[%s6] sm:$0xff]
  %v226 = vld [vmem:[%s6 + $0x8] sm:$0xff]
  %v227 = vld [vmem:[%s6 + $0x10] sm:$0xff]
  %v228 = vld [vmem:[%s6 + $0x18] sm:$0xff]
  %v229 = vld [vmem:[%s7] sm:$0x1]
  %v231 = vlaneseq
  %v232 = vshrl.u32 %v231, 7
  %v233 = vsub.s32 0, %v232
  %v234 = vrot.slane %v229, %v233
  %236 = vmatprep.subr.mxu0 0.0
  %237 = vmatpush1.msra.mxu0 0.0
  %238 = vmatprep.subr.mxu0 0.0
  %239 = vmatpush1.msra.mxu0 0.0
  %240 = vmatprep.subr.mxu0 0.0
  %241 = vmatpush1.msra.mxu0 0.0
  %242 = vmatprep.subr.mxu0 0.0
  %243 = vmatpush1.msra.mxu0 0.0
  %244 = vmatprep.subr.mxu0 0.0
  %245 = vmatpush1.msra.mxu0 0.0
  %246 = vmatprep.subr.mxu0 0.0
  %247 = vmatpush1.msra.mxu0 0.0
  %248 = vmatprep.subr.mxu0 0.0
  %249 = vmatpush1.msra.mxu0 0.0
  %250 = vmatprep.subr.mxu0 0.0
  %251 = vmatpush1.msra.mxu0 0.0
  %252 = vmatprep.subr.mxu0 0.0
  %253 = vmatpush1.msra.mxu0 0.0
  %254 = vmatprep.subr.mxu0 0.0
  %255 = vmatpush1.msra.mxu0 0.0
  %256 = vmatprep.subr.mxu0 0.0
  %257 = vmatpush1.msra.mxu0 0.0
  %258 = vmatprep.subr.mxu0 0.0
  %259 = vmatpush1.msra.mxu0 0.0
  %260 = vmatprep.subr.mxu0 0.0
  %261 = vmatpush1.msra.mxu0 %v228
  %262 = vmatprep.subr.mxu0 0.0
  %263 = vmatpush1.msra.mxu0 %v227
  %264 = vmatprep.subr.mxu0 0.0
  %265 = vmatpush1.msra.mxu0 %v226
  %266 = vmatprep.subr.mxu0 0.0
  %267 = vmatpush1.msra.mxu0 %v225
  %268 = vmatprep.subr.mxu0 0.0
  %269 = vmatpush2.msra.mxu0 0.0
  %270 = vmatprep.subr.mxu0 0.0
  %271 = vmatpush2.msra.mxu0 0.0
  %272 = vmatprep.subr.mxu0 0.0
  %273 = vmatpush2.msra.mxu0 0.0
  %274 = vmatprep.subr.mxu0 0.0
  %275 = vmatpush2.msra.mxu0 0.0
  %276 = vmatprep.subr.mxu0 0.0
  %277 = vmatpush2.msra.mxu0 0.0
  %278 = vmatprep.subr.mxu0 0.0
  %279 = vmatpush2.msra.mxu0 0.0
  %280 = vmatprep.subr.mxu0 0.0
  %281 = vmatpush2.msra.mxu0 0.0
  %282 = vmatprep.subr.mxu0 0.0
  %283 = vmatpush2.msra.mxu0 0.0
  %284 = vmatprep.subr.mxu0 0.0
  %285 = vmatpush2.msra.mxu0 0.0
  %286 = vmatprep.subr.mxu0 0.0
  %287 = vmatpush2.msra.mxu0 0.0
  %288 = vmatprep.subr.mxu0 0.0
  %289 = vmatpush2.msra.mxu0 0.0
  %290 = vmatprep.subr.mxu0 0.0
  %291 = vmatpush2.msra.mxu0 0.0
  %292 = vmatprep.subr.mxu0 0.0
  %293 = vmatpush2.msra.mxu0 0.0
  %294 = vmatprep.subr.mxu0 0.0
  %295 = vmatpush2.msra.mxu0 0.0
  %296 = vmatprep.subr.mxu0 0.0
  %297 = vmatpush2.msra.mxu0 0.0
  %298 = vmatprep.subr.mxu0 0.0
  %299 = vmatpush2.msra.mxu0 0.0
  %300 = vmatprep.mubr.f32.mxu0 0.0
  %301 = vmatmul.mubr.f32.gmra.mxu0 %v145
  %v302 = vpop.f32.mrf.mxu0
  %v303 = vadd.f32 %v234, %v302
  %v304 = vpop.f32.mrf.mxu0
  %305 = vmatprep.mubr.f32.mxu0 0.0
  %306 = vmatmul.mubr.f32.gmra.mxu0 %v148
  %v307 = vpop.f32.mrf.mxu0
  %v308 = vadd.f32 %v234, %v307
  %v309 = vpop.f32.mrf.mxu0
  %310 = vdwg.mxu0
  %v311 = vld [vmem:[%s8] sm:$0xff]
  %v312 = vld [vmem:[%s8 + $0x8] sm:$0xff]
  %v313 = vld [vmem:[%s8 + $0x10] sm:$0xff]
  %v314 = vld [vmem:[%s8 + $0x18] sm:$0xff]
  %v315 = vld [vmem:[%s9] sm:$0x1]
  %v317 = vlaneseq
  %v318 = vshrl.u32 %v317, 7
  %v319 = vsub.s32 0, %v318
  %v320 = vrot.slane %v315, %v319
  %322 = vmatprep.subr.mxu0 0.0
  %323 = vmatpush1.msra.mxu0 0.0
  %324 = vmatprep.subr.mxu0 0.0
  %325 = vmatpush1.msra.mxu0 0.0
  %326 = vmatprep.subr.mxu0 0.0
  %327 = vmatpush1.msra.mxu0 0.0
  %328 = vmatprep.subr.mxu0 0.0
  %329 = vmatpush1.msra.mxu0 0.0
  %330 = vmatprep.subr.mxu0 0.0
  %331 = vmatpush1.msra.mxu0 0.0
  %332 = vmatprep.subr.mxu0 0.0
  %333 = vmatpush1.msra.mxu0 0.0
  %334 = vmatprep.subr.mxu0 0.0
  %335 = vmatpush1.msra.mxu0 0.0
  %336 = vmatprep.subr.mxu0 0.0
  %337 = vmatpush1.msra.mxu0 0.0
  %338 = vmatprep.subr.mxu0 0.0
  %339 = vmatpush1.msra.mxu0 0.0
  %340 = vmatprep.subr.mxu0 0.0
  %341 = vmatpush1.msra.mxu0 0.0
  %342 = vmatprep.subr.mxu0 0.0
  %343 = vmatpush1.msra.mxu0 0.0
  %344 = vmatprep.subr.mxu0 0.0
  %345 = vmatpush1.msra.mxu0 0.0
  %346 = vmatprep.subr.mxu0 0.0
  %347 = vmatpush1.msra.mxu0 %v314
  %348 = vmatprep.subr.mxu0 0.0
  %349 = vmatpush1.msra.mxu0 %v313
  %350 = vmatprep.subr.mxu0 0.0
  %351 = vmatpush1.msra.mxu0 %v312
  %352 = vmatprep.subr.mxu0 0.0
  %353 = vmatpush1.msra.mxu0 %v311
  %354 = vmatprep.subr.mxu0 0.0
  %355 = vmatpush2.msra.mxu0 0.0
  %356 = vmatprep.subr.mxu0 0.0
  %357 = vmatpush2.msra.mxu0 0.0
  %358 = vmatprep.subr.mxu0 0.0
  %359 = vmatpush2.msra.mxu0 0.0
  %360 = vmatprep.subr.mxu0 0.0
  %361 = vmatpush2.msra.mxu0 0.0
  %362 = vmatprep.subr.mxu0 0.0
  %363 = vmatpush2.msra.mxu0 0.0
  %364 = vmatprep.subr.mxu0 0.0
  %365 = vmatpush2.msra.mxu0 0.0
  %366 = vmatprep.subr.mxu0 0.0
  %367 = vmatpush2.msra.mxu0 0.0
  %368 = vmatprep.subr.mxu0 0.0
  %369 = vmatpush2.msra.mxu0 0.0
  %370 = vmatprep.subr.mxu0 0.0
  %371 = vmatpush2.msra.mxu0 0.0
  %372 = vmatprep.subr.mxu0 0.0
  %373 = vmatpush2.msra.mxu0 0.0
  %374 = vmatprep.subr.mxu0 0.0
  %375 = vmatpush2.msra.mxu0 0.0
  %376 = vmatprep.subr.mxu0 0.0
  %377 = vmatpush2.msra.mxu0 0.0
  %378 = vmatprep.subr.mxu0 0.0
  %379 = vmatpush2.msra.mxu0 0.0
  %380 = vmatprep.subr.mxu0 0.0
  %381 = vmatpush2.msra.mxu0 0.0
  %382 = vmatprep.subr.mxu0 0.0
  %383 = vmatpush2.msra.mxu0 0.0
  %384 = vmatprep.subr.mxu0 0.0
  %385 = vmatpush2.msra.mxu0 0.0
  %386 = vmatprep.mubr.f32.mxu0 0.0
  %387 = vmatmul.mubr.f32.gmra.mxu0 %v145
  %v388 = vpop.f32.mrf.mxu0
  %v389 = vadd.f32 %v320, %v388
  %v390 = vpop.f32.mrf.mxu0
  %391 = vmatprep.mubr.f32.mxu0 0.0
  %392 = vmatmul.mubr.f32.gmra.mxu0 %v148
  %v393 = vpop.f32.mrf.mxu0
  %v394 = vadd.f32 %v320, %v393
  %v395 = vpop.f32.mrf.mxu0
  %396 = vdwg.mxu0
  %v397 = vld [vmem:[%s10] sm:$0xff]
  %v398 = vld [vmem:[%s10 + $0x8] sm:$0xff]
  %v399 = vld [vmem:[%s10 + $0x10] sm:$0xff]
  %v400 = vld [vmem:[%s10 + $0x18] sm:$0xff]
  %vm401 = vcmask 64512
  %v403 = vsel %vm401, %v217, 0
  %v406 = vsel %vm401, %v222, 0
  %v409 = vsel %vm401, %v303, 0
  %v412 = vsel %vm401, %v308, 0
  %414 = vmatprep.subr.mxu0 0.0
  %415 = vmatpush1.xpose.msra.mxu0 0.0
  %416 = vmatprep.subr.mxu0 0.0
  %417 = vmatpush1.xpose.msra.mxu0 0.0
  %418 = vmatprep.subr.mxu0 0.0
  %419 = vmatpush1.xpose.msra.mxu0 0.0
  %420 = vmatprep.subr.mxu0 0.0
  %421 = vmatpush1.xpose.msra.mxu0 0.0
  %422 = vmatprep.subr.mxu0 0.0
  %423 = vmatpush1.xpose.msra.mxu0 0.0
  %424 = vmatprep.subr.mxu0 0.0
  %425 = vmatpush1.xpose.msra.mxu0 0.0
  %426 = vmatprep.subr.mxu0 0.0
  %427 = vmatpush1.xpose.msra.mxu0 0.0
  %428 = vmatprep.subr.mxu0 0.0
  %429 = vmatpush1.xpose.msra.mxu0 0.0
  %430 = vmatprep.subr.mxu0 0.0
  %431 = vmatpush1.xpose.msra.mxu0 0.0
  %432 = vmatprep.subr.mxu0 0.0
  %433 = vmatpush1.xpose.msra.mxu0 0.0
  %434 = vmatprep.subr.mxu0 0.0
  %435 = vmatpush1.xpose.msra.mxu0 0.0
  %436 = vmatprep.subr.mxu0 0.0
  %437 = vmatpush1.xpose.msra.mxu0 0.0
  %438 = vmatprep.subr.mxu0 0.0
  %439 = vmatpush1.xpose.msra.mxu0 0.0
  %440 = vmatprep.subr.mxu0 0.0
  %441 = vmatpush1.xpose.msra.mxu0 0.0
  %442 = vmatprep.subr.mxu0 0.0
  %443 = vmatpush1.xpose.msra.mxu0 %v412
  %444 = vmatprep.subr.mxu0 0.0
  %445 = vmatpush1.xpose.msra.mxu0 %v409
  %446 = vmatprep.subr.mxu0 0.0
  %447 = vmatpush2.xpose.msra.mxu0 0.0
  %448 = vmatprep.subr.mxu0 0.0
  %449 = vmatpush2.xpose.msra.mxu0 0.0
  %450 = vmatprep.subr.mxu0 0.0
  %451 = vmatpush2.xpose.msra.mxu0 0.0
  %452 = vmatprep.subr.mxu0 0.0
  %453 = vmatpush2.xpose.msra.mxu0 0.0
  %454 = vmatprep.subr.mxu0 0.0
  %455 = vmatpush2.xpose.msra.mxu0 0.0
  %456 = vmatprep.subr.mxu0 0.0
  %457 = vmatpush2.xpose.msra.mxu0 0.0
  %458 = vmatprep.subr.mxu0 0.0
  %459 = vmatpush2.xpose.msra.mxu0 0.0
  %460 = vmatprep.subr.mxu0 0.0
  %461 = vmatpush2.xpose.msra.mxu0 0.0
  %462 = vmatprep.subr.mxu0 0.0
  %463 = vmatpush2.xpose.msra.mxu0 0.0
  %464 = vmatprep.subr.mxu0 0.0
  %465 = vmatpush2.xpose.msra.mxu0 0.0
  %466 = vmatprep.subr.mxu0 0.0
  %467 = vmatpush2.xpose.msra.mxu0 0.0
  %468 = vmatprep.subr.mxu0 0.0
  %469 = vmatpush2.xpose.msra.mxu0 0.0
  %470 = vmatprep.subr.mxu0 0.0
  %471 = vmatpush2.xpose.msra.mxu0 0.0
  %472 = vmatprep.subr.mxu0 0.0
  %473 = vmatpush2.xpose.msra.mxu0 0.0
  %474 = vmatprep.subr.mxu0 0.0
  %475 = vmatpush2.xpose.msra.mxu0 0.0
  %476 = vmatprep.subr.mxu0 0.0
  %477 = vmatpush2.xpose.msra.mxu0 0.0
  %478 = vmatprep.mubr.f32.mxu0 0.0
  %479 = vmatmul.mubr.f32.gmra.mxu0 %v403
  %v480 = vpop.f32.mrf.mxu0
  %v481 = vadd.f32 0.0, %v480
  %v482 = vpop.f32.mrf.mxu0
  %483 = vmatprep.mubr.f32.mxu0 0.0
  %484 = vmatmul.mubr.f32.gmra.mxu0 %v406
  %v485 = vpop.f32.mrf.mxu0
  %v486 = vadd.f32 0.0, %v485
  %v487 = vpop.f32.mrf.mxu0
  %488 = vdwg.mxu0
  %v489 = vmul.f32 %v481, 0.35355338
  %v490 = vmul.f32 %v486, 0.35355338
  %v491 = vadd.f32 %v489, %v85
  %v492 = vadd.f32 %v490, %v86
  %vm493 = vcmask 130048
  %v494 = vsel %vm493, %v491, -inf
  %495 = vmax.xlane.f32.xlu0 %v494
  %v496 = vpop.xlane.xlu0 %495
  %v497 = vsel %vm493, %v492, -inf
  %498 = vmax.xlane.f32.xlu0 %v497
  %v499 = vpop.xlane.xlu0 %498
  %v500 = vsub.f32 %v491, %v496
  %v501 = vsub.f32 %v492, %v499
  %v502 = vmul.f32 %v500, 1.442695
  %v503 = vpow.pop %v502
  %v504 = vmul.f32 %v501, 1.442695
  %v505 = vpow.pop %v504
  %v506 = vsel %vm493, %v503, 0.0
  %507 = vadd.xlane.f32.xlu0 %v506
  %v508 = vpop.xlane.xlu0 %507
  %v509 = vsel %vm493, %v505, 0.0
  %510 = vadd.xlane.f32.xlu0 %v509
  %v511 = vpop.xlane.xlu0 %510
  %v512 = vrcp.pop %v508
  %v513 = vrcp.pop %v511
  %v514 = vmul.f32 %v503, %v512
  %v515 = vmul.f32 %v505, %v513
  %v517 = vsel %vm493, %v514, 0
  %v520 = vsel %vm493, %v515, 0
  %522 = vmatprep.subr.mxu0 0.0
  %523 = vmatpush1.msra.mxu0 0.0
  %524 = vmatprep.subr.mxu0 0.0
  %525 = vmatpush1.msra.mxu0 0.0
  %526 = vmatprep.subr.mxu0 0.0
  %527 = vmatpush1.msra.mxu0 0.0
  %528 = vmatprep.subr.mxu0 0.0
  %529 = vmatpush1.msra.mxu0 0.0
  %530 = vmatprep.subr.mxu0 0.0
  %531 = vmatpush1.msra.mxu0 0.0
  %532 = vmatprep.subr.mxu0 0.0
  %533 = vmatpush1.msra.mxu0 0.0
  %534 = vmatprep.subr.mxu0 0.0
  %535 = vmatpush1.msra.mxu0 0.0
  %536 = vmatprep.subr.mxu0 0.0
  %537 = vmatpush1.msra.mxu0 0.0
  %538 = vmatprep.subr.mxu0 0.0
  %539 = vmatpush1.msra.mxu0 0.0
  %540 = vmatprep.subr.mxu0 0.0
  %541 = vmatpush1.msra.mxu0 0.0
  %542 = vmatprep.subr.mxu0 0.0
  %543 = vmatpush1.msra.mxu0 0.0
  %544 = vmatprep.subr.mxu0 0.0
  %545 = vmatpush1.msra.mxu0 0.0
  %546 = vmatprep.subr.mxu0 0.0
  %547 = vmatpush1.msra.mxu0 0.0
  %548 = vmatprep.subr.mxu0 0.0
  %549 = vmatpush1.msra.mxu0 0.0
  %550 = vmatprep.subr.mxu0 0.0
  %551 = vmatpush1.msra.mxu0 %v394
  %552 = vmatprep.subr.mxu0 0.0
  %553 = vmatpush1.msra.mxu0 %v389
  %554 = vmatprep.subr.mxu0 0.0
  %555 = vmatpush2.msra.mxu0 0.0
  %556 = vmatprep.subr.mxu0 0.0
  %557 = vmatpush2.msra.mxu0 0.0
  %558 = vmatprep.subr.mxu0 0.0
  %559 = vmatpush2.msra.mxu0 0.0
  %560 = vmatprep.subr.mxu0 0.0
  %561 = vmatpush2.msra.mxu0 0.0
  %562 = vmatprep.subr.mxu0 0.0
  %563 = vmatpush2.msra.mxu0 0.0
  %564 = vmatprep.subr.mxu0 0.0
  %565 = vmatpush2.msra.mxu0 0.0
  %566 = vmatprep.subr.mxu0 0.0
  %567 = vmatpush2.msra.mxu0 0.0
  %568 = vmatprep.subr.mxu0 0.0
  %569 = vmatpush2.msra.mxu0 0.0
  %570 = vmatprep.subr.mxu0 0.0
  %571 = vmatpush2.msra.mxu0 0.0
  %572 = vmatprep.subr.mxu0 0.0
  %573 = vmatpush2.msra.mxu0 0.0
  %574 = vmatprep.subr.mxu0 0.0
  %575 = vmatpush2.msra.mxu0 0.0
  %576 = vmatprep.subr.mxu0 0.0
  %577 = vmatpush2.msra.mxu0 0.0
  %578 = vmatprep.subr.mxu0 0.0
  %579 = vmatpush2.msra.mxu0 0.0
  %580 = vmatprep.subr.mxu0 0.0
  %581 = vmatpush2.msra.mxu0 0.0
  %582 = vmatprep.subr.mxu0 0.0
  %583 = vmatpush2.msra.mxu0 0.0
  %584 = vmatprep.subr.mxu0 0.0
  %585 = vmatpush2.msra.mxu0 0.0
  %586 = vmatprep.mubr.f32.mxu0 0.0
  %587 = vmatmul.mubr.f32.gmra.mxu0 %v517
  %v588 = vpop.f32.mrf.mxu0
  %v589 = vadd.f32 0.0, %v588
  %v590 = vpop.f32.mrf.mxu0
  %591 = vmatprep.mubr.f32.mxu0 0.0
  %592 = vmatmul.mubr.f32.gmra.mxu0 %v520
  %v593 = vpop.f32.mrf.mxu0
  %v594 = vadd.f32 0.0, %v593
  %v595 = vpop.f32.mrf.mxu0
  %596 = vdwg.mxu0
  %597 = vrot.lane.b32.xlu0 %v217, 120
  %v598 = vpop.permute.xlu0 %597
  %599 = vrot.lane.b32.xlu0 %v222, 120
  %v600 = vpop.permute.xlu0 %599
  %601 = vrot.lane.b32.xlu0 %v303, 120
  %v602 = vpop.permute.xlu0 %601
  %603 = vrot.lane.b32.xlu0 %v308, 120
  %v604 = vpop.permute.xlu0 %603
  %v605 = vsel %vm401, %v598, 0
  %v607 = vsel %vm401, %v600, 0
  %v609 = vsel %vm401, %v602, 0
  %v611 = vsel %vm401, %v604, 0
  %613 = vmatprep.subr.mxu0 0.0
  %614 = vmatpush1.xpose.msra.mxu0 0.0
  %615 = vmatprep.subr.mxu0 0.0
  %616 = vmatpush1.xpose.msra.mxu0 0.0
  %617 = vmatprep.subr.mxu0 0.0
  %618 = vmatpush1.xpose.msra.mxu0 0.0
  %619 = vmatprep.subr.mxu0 0.0
  %620 = vmatpush1.xpose.msra.mxu0 0.0
  %621 = vmatprep.subr.mxu0 0.0
  %622 = vmatpush1.xpose.msra.mxu0 0.0
  %623 = vmatprep.subr.mxu0 0.0
  %624 = vmatpush1.xpose.msra.mxu0 0.0
  %625 = vmatprep.subr.mxu0 0.0
  %626 = vmatpush1.xpose.msra.mxu0 0.0
  %627 = vmatprep.subr.mxu0 0.0
  %628 = vmatpush1.xpose.msra.mxu0 0.0
  %629 = vmatprep.subr.mxu0 0.0
  %630 = vmatpush1.xpose.msra.mxu0 0.0
  %631 = vmatprep.subr.mxu0 0.0
  %632 = vmatpush1.xpose.msra.mxu0 0.0
  %633 = vmatprep.subr.mxu0 0.0
  %634 = vmatpush1.xpose.msra.mxu0 0.0
  %635 = vmatprep.subr.mxu0 0.0
  %636 = vmatpush1.xpose.msra.mxu0 0.0
  %637 = vmatprep.subr.mxu0 0.0
  %638 = vmatpush1.xpose.msra.mxu0 0.0
  %639 = vmatprep.subr.mxu0 0.0
  %640 = vmatpush1.xpose.msra.mxu0 0.0
  %641 = vmatprep.subr.mxu0 0.0
  %642 = vmatpush1.xpose.msra.mxu0 %v611
  %643 = vmatprep.subr.mxu0 0.0
  %644 = vmatpush1.xpose.msra.mxu0 %v609
  %645 = vmatprep.subr.mxu0 0.0
  %646 = vmatpush2.xpose.msra.mxu0 0.0
  %647 = vmatprep.subr.mxu0 0.0
  %648 = vmatpush2.xpose.msra.mxu0 0.0
  %649 = vmatprep.subr.mxu0 0.0
  %650 = vmatpush2.xpose.msra.mxu0 0.0
  %651 = vmatprep.subr.mxu0 0.0
  %652 = vmatpush2.xpose.msra.mxu0 0.0
  %653 = vmatprep.subr.mxu0 0.0
  %654 = vmatpush2.xpose.msra.mxu0 0.0
  %655 = vmatprep.subr.mxu0 0.0
  %656 = vmatpush2.xpose.msra.mxu0 0.0
  %657 = vmatprep.subr.mxu0 0.0
  %658 = vmatpush2.xpose.msra.mxu0 0.0
  %659 = vmatprep.subr.mxu0 0.0
  %660 = vmatpush2.xpose.msra.mxu0 0.0
  %661 = vmatprep.subr.mxu0 0.0
  %662 = vmatpush2.xpose.msra.mxu0 0.0
  %663 = vmatprep.subr.mxu0 0.0
  %664 = vmatpush2.xpose.msra.mxu0 0.0
  %665 = vmatprep.subr.mxu0 0.0
  %666 = vmatpush2.xpose.msra.mxu0 0.0
  %667 = vmatprep.subr.mxu0 0.0
  %668 = vmatpush2.xpose.msra.mxu0 0.0
  %669 = vmatprep.subr.mxu0 0.0
  %670 = vmatpush2.xpose.msra.mxu0 0.0
  %671 = vmatprep.subr.mxu0 0.0
  %672 = vmatpush2.xpose.msra.mxu0 0.0
  %673 = vmatprep.subr.mxu0 0.0
  %674 = vmatpush2.xpose.msra.mxu0 0.0
  %675 = vmatprep.subr.mxu0 0.0
  %676 = vmatpush2.xpose.msra.mxu0 0.0
  %677 = vmatprep.mubr.f32.mxu0 0.0
  %678 = vmatmul.mubr.f32.gmra.mxu0 %v605
  %v679 = vpop.f32.mrf.mxu0
  %v680 = vadd.f32 0.0, %v679
  %v681 = vpop.f32.mrf.mxu0
  %682 = vmatprep.mubr.f32.mxu0 0.0
  %683 = vmatmul.mubr.f32.gmra.mxu0 %v607
  %v684 = vpop.f32.mrf.mxu0
  %v685 = vadd.f32 0.0, %v684
  %v686 = vpop.f32.mrf.mxu0
  %687 = vdwg.mxu0
  %v688 = vmul.f32 %v680, 0.35355338
  %v689 = vmul.f32 %v685, 0.35355338
  %v690 = vadd.f32 %v688, %v85
  %v691 = vadd.f32 %v689, %v86
  %v692 = vsel %vm493, %v690, -inf
  %693 = vmax.xlane.f32.xlu0 %v692
  %v694 = vpop.xlane.xlu0 %693
  %v695 = vsel %vm493, %v691, -inf
  %696 = vmax.xlane.f32.xlu0 %v695
  %v697 = vpop.xlane.xlu0 %696
  %v698 = vsub.f32 %v690, %v694
  %v699 = vsub.f32 %v691, %v697
  %v700 = vmul.f32 %v698, 1.442695
  %v701 = vpow.pop %v700
  %v702 = vmul.f32 %v699, 1.442695
  %v703 = vpow.pop %v702
  %v704 = vsel %vm493, %v701, 0.0
  %705 = vadd.xlane.f32.xlu0 %v704
  %v706 = vpop.xlane.xlu0 %705
  %v707 = vsel %vm493, %v703, 0.0
  %708 = vadd.xlane.f32.xlu0 %v707
  %v709 = vpop.xlane.xlu0 %708
  %v710 = vrcp.pop %v706
  %v711 = vrcp.pop %v709
  %v712 = vmul.f32 %v701, %v710
  %v713 = vmul.f32 %v703, %v711
  %716 = vrot.lane.b32.xlu0 %v389, 120
  %v717 = vpop.permute.xlu0 %716
  %718 = vrot.lane.b32.xlu0 %v394, 120
  %v719 = vpop.permute.xlu0 %718
  %v723 = vsel %vm493, %v712, 0
  %v726 = vsel %vm493, %v713, 0
  %728 = vmatprep.subr.mxu0 0.0
  %729 = vmatpush1.msra.mxu0 0.0
  %730 = vmatprep.subr.mxu0 0.0
  %731 = vmatpush1.msra.mxu0 0.0
  %732 = vmatprep.subr.mxu0 0.0
  %733 = vmatpush1.msra.mxu0 0.0
  %734 = vmatprep.subr.mxu0 0.0
  %735 = vmatpush1.msra.mxu0 0.0
  %736 = vmatprep.subr.mxu0 0.0
  %737 = vmatpush1.msra.mxu0 0.0
  %738 = vmatprep.subr.mxu0 0.0
  %739 = vmatpush1.msra.mxu0 0.0
  %740 = vmatprep.subr.mxu0 0.0
  %741 = vmatpush1.msra.mxu0 0.0
  %742 = vmatprep.subr.mxu0 0.0
  %743 = vmatpush1.msra.mxu0 0.0
  %744 = vmatprep.subr.mxu0 0.0
  %745 = vmatpush1.msra.mxu0 0.0
  %746 = vmatprep.subr.mxu0 0.0
  %747 = vmatpush1.msra.mxu0 0.0
  %748 = vmatprep.subr.mxu0 0.0
  %749 = vmatpush1.msra.mxu0 0.0
  %750 = vmatprep.subr.mxu0 0.0
  %751 = vmatpush1.msra.mxu0 0.0
  %752 = vmatprep.subr.mxu0 0.0
  %753 = vmatpush1.msra.mxu0 0.0
  %754 = vmatprep.subr.mxu0 0.0
  %755 = vmatpush1.msra.mxu0 0.0
  %756 = vmatprep.subr.mxu0 0.0
  %757 = vmatpush1.msra.mxu0 %v719
  %758 = vmatprep.subr.mxu0 0.0
  %759 = vmatpush1.msra.mxu0 %v717
  %760 = vmatprep.subr.mxu0 0.0
  %761 = vmatpush2.msra.mxu0 0.0
  %762 = vmatprep.subr.mxu0 0.0
  %763 = vmatpush2.msra.mxu0 0.0
  %764 = vmatprep.subr.mxu0 0.0
  %765 = vmatpush2.msra.mxu0 0.0
  %766 = vmatprep.subr.mxu0 0.0
  %767 = vmatpush2.msra.mxu0 0.0
  %768 = vmatprep.subr.mxu0 0.0
  %769 = vmatpush2.msra.mxu0 0.0
  %770 = vmatprep.subr.mxu0 0.0
  %771 = vmatpush2.msra.mxu0 0.0
  %772 = vmatprep.subr.mxu0 0.0
  %773 = vmatpush2.msra.mxu0 0.0
  %774 = vmatprep.subr.mxu0 0.0
  %775 = vmatpush2.msra.mxu0 0.0
  %776 = vmatprep.subr.mxu0 0.0
  %777 = vmatpush2.msra.mxu0 0.0
  %778 = vmatprep.subr.mxu0 0.0
  %779 = vmatpush2.msra.mxu0 0.0
  %780 = vmatprep.subr.mxu0 0.0
  %781 = vmatpush2.msra.mxu0 0.0
  %782 = vmatprep.subr.mxu0 0.0
  %783 = vmatpush2.msra.mxu0 0.0
  %784 = vmatprep.subr.mxu0 0.0
  %785 = vmatpush2.msra.mxu0 0.0
  %786 = vmatprep.subr.mxu0 0.0
  %787 = vmatpush2.msra.mxu0 0.0
  %788 = vmatprep.subr.mxu0 0.0
  %789 = vmatpush2.msra.mxu0 0.0
  %790 = vmatprep.subr.mxu0 0.0
  %791 = vmatpush2.msra.mxu0 0.0
  %792 = vmatprep.mubr.f32.mxu0 0.0
  %793 = vmatmul.mubr.f32.gmra.mxu0 %v723
  %v794 = vpop.f32.mrf.mxu0
  %v795 = vadd.f32 0.0, %v794
  %v796 = vpop.f32.mrf.mxu0
  %797 = vmatprep.mubr.f32.mxu0 0.0
  %798 = vmatmul.mubr.f32.gmra.mxu0 %v726
  %v799 = vpop.f32.mrf.mxu0
  %v800 = vadd.f32 0.0, %v799
  %v801 = vpop.f32.mrf.mxu0
  %802 = vdwg.mxu0
  %v804 = vsel %vm401, %v795, 0
  %v807 = vsel %vm401, %v800, 0
  %809 = vmatprep.subr.mxu0 0.0
  %810 = vmatpush1.msra.mxu0 0.0
  %811 = vmatprep.subr.mxu0 0.0
  %812 = vmatpush1.msra.mxu0 0.0
  %813 = vmatprep.subr.mxu0 0.0
  %814 = vmatpush1.msra.mxu0 0.0
  %815 = vmatprep.subr.mxu0 0.0
  %816 = vmatpush1.msra.mxu0 0.0
  %817 = vmatprep.subr.mxu0 0.0
  %818 = vmatpush1.msra.mxu0 0.0
  %819 = vmatprep.subr.mxu0 0.0
  %820 = vmatpush1.msra.mxu0 0.0
  %821 = vmatprep.subr.mxu0 0.0
  %822 = vmatpush1.msra.mxu0 0.0
  %823 = vmatprep.subr.mxu0 0.0
  %824 = vmatpush1.msra.mxu0 0.0
  %825 = vmatprep.subr.mxu0 0.0
  %826 = vmatpush1.msra.mxu0 0.0
  %827 = vmatprep.subr.mxu0 0.0
  %828 = vmatpush1.msra.mxu0 0.0
  %829 = vmatprep.subr.mxu0 0.0
  %830 = vmatpush1.msra.mxu0 0.0
  %831 = vmatprep.subr.mxu0 0.0
  %832 = vmatpush1.msra.mxu0 0.0
  %833 = vmatprep.subr.mxu0 0.0
  %834 = vmatpush1.msra.mxu0 0.0
  %835 = vmatprep.subr.mxu0 0.0
  %836 = vmatpush1.msra.mxu0 0.0
  %837 = vmatprep.subr.mxu0 0.0
  %838 = vmatpush1.msra.mxu0 0.0
  %839 = vmatprep.subr.mxu0 0.0
  %840 = vmatpush1.msra.mxu0 %v398
  %841 = vmatprep.subr.mxu0 0.0
  %842 = vmatpush2.msra.mxu0 0.0
  %843 = vmatprep.subr.mxu0 0.0
  %844 = vmatpush2.msra.mxu0 0.0
  %845 = vmatprep.subr.mxu0 0.0
  %846 = vmatpush2.msra.mxu0 0.0
  %847 = vmatprep.subr.mxu0 0.0
  %848 = vmatpush2.msra.mxu0 0.0
  %849 = vmatprep.subr.mxu0 0.0
  %850 = vmatpush2.msra.mxu0 0.0
  %851 = vmatprep.subr.mxu0 0.0
  %852 = vmatpush2.msra.mxu0 0.0
  %853 = vmatprep.subr.mxu0 0.0
  %854 = vmatpush2.msra.mxu0 0.0
  %855 = vmatprep.subr.mxu0 0.0
  %856 = vmatpush2.msra.mxu0 0.0
  %857 = vmatprep.subr.mxu0 0.0
  %858 = vmatpush2.msra.mxu0 0.0
  %859 = vmatprep.subr.mxu0 0.0
  %860 = vmatpush2.msra.mxu0 0.0
  %861 = vmatprep.subr.mxu0 0.0
  %862 = vmatpush2.msra.mxu0 0.0
  %863 = vmatprep.subr.mxu0 0.0
  %864 = vmatpush2.msra.mxu0 0.0
  %865 = vmatprep.subr.mxu0 0.0
  %866 = vmatpush2.msra.mxu0 0.0
  %867 = vmatprep.subr.mxu0 0.0
  %868 = vmatpush2.msra.mxu0 0.0
  %869 = vmatprep.subr.mxu0 0.0
  %870 = vmatpush2.msra.mxu0 0.0
  %871 = vmatprep.subr.mxu0 0.0
  %872 = vmatpush2.msra.mxu0 0.0
  %873 = vmatprep.mubr.f32.mxu0 0.0
  %874 = vmatmul.mubr.f32.gmra.mxu0 %v804
  %v875 = vpop.f32.mrf.mxu0
  %v876 = vadd.f32 0.0, %v875
  %v877 = vpop.f32.mrf.mxu0
  %878 = vmatprep.mubr.f32.mxu0 0.0
  %879 = vmatmul.mubr.f32.gmra.mxu0 %v807
  %v880 = vpop.f32.mrf.mxu0
  %v881 = vadd.f32 0.0, %v880
  %v882 = vpop.f32.mrf.mxu0
  %883 = vdwg.mxu0
  %v885 = vsel %vm401, %v589, 0
  %v888 = vsel %vm401, %v594, 0
  %890 = vmatprep.subr.mxu0 0.0
  %891 = vmatpush1.msra.mxu0 0.0
  %892 = vmatprep.subr.mxu0 0.0
  %893 = vmatpush1.msra.mxu0 0.0
  %894 = vmatprep.subr.mxu0 0.0
  %895 = vmatpush1.msra.mxu0 0.0
  %896 = vmatprep.subr.mxu0 0.0
  %897 = vmatpush1.msra.mxu0 0.0
  %898 = vmatprep.subr.mxu0 0.0
  %899 = vmatpush1.msra.mxu0 0.0
  %900 = vmatprep.subr.mxu0 0.0
  %901 = vmatpush1.msra.mxu0 0.0
  %902 = vmatprep.subr.mxu0 0.0
  %903 = vmatpush1.msra.mxu0 0.0
  %904 = vmatprep.subr.mxu0 0.0
  %905 = vmatpush1.msra.mxu0 0.0
  %906 = vmatprep.subr.mxu0 0.0
  %907 = vmatpush1.msra.mxu0 0.0
  %908 = vmatprep.subr.mxu0 0.0
  %909 = vmatpush1.msra.mxu0 0.0
  %910 = vmatprep.subr.mxu0 0.0
  %911 = vmatpush1.msra.mxu0 0.0
  %912 = vmatprep.subr.mxu0 0.0
  %913 = vmatpush1.msra.mxu0 0.0
  %914 = vmatprep.subr.mxu0 0.0
  %915 = vmatpush1.msra.mxu0 0.0
  %916 = vmatprep.subr.mxu0 0.0
  %917 = vmatpush1.msra.mxu0 0.0
  %918 = vmatprep.subr.mxu0 0.0
  %919 = vmatpush1.msra.mxu0 0.0
  %920 = vmatprep.subr.mxu0 0.0
  %921 = vmatpush1.msra.mxu0 %v397
  %922 = vmatprep.subr.mxu0 0.0
  %923 = vmatpush2.msra.mxu0 0.0
  %924 = vmatprep.subr.mxu0 0.0
  %925 = vmatpush2.msra.mxu0 0.0
  %926 = vmatprep.subr.mxu0 0.0
  %927 = vmatpush2.msra.mxu0 0.0
  %928 = vmatprep.subr.mxu0 0.0
  %929 = vmatpush2.msra.mxu0 0.0
  %930 = vmatprep.subr.mxu0 0.0
  %931 = vmatpush2.msra.mxu0 0.0
  %932 = vmatprep.subr.mxu0 0.0
  %933 = vmatpush2.msra.mxu0 0.0
  %934 = vmatprep.subr.mxu0 0.0
  %935 = vmatpush2.msra.mxu0 0.0
  %936 = vmatprep.subr.mxu0 0.0
  %937 = vmatpush2.msra.mxu0 0.0
  %938 = vmatprep.subr.mxu0 0.0
  %939 = vmatpush2.msra.mxu0 0.0
  %940 = vmatprep.subr.mxu0 0.0
  %941 = vmatpush2.msra.mxu0 0.0
  %942 = vmatprep.subr.mxu0 0.0
  %943 = vmatpush2.msra.mxu0 0.0
  %944 = vmatprep.subr.mxu0 0.0
  %945 = vmatpush2.msra.mxu0 0.0
  %946 = vmatprep.subr.mxu0 0.0
  %947 = vmatpush2.msra.mxu0 0.0
  %948 = vmatprep.subr.mxu0 0.0
  %949 = vmatpush2.msra.mxu0 0.0
  %950 = vmatprep.subr.mxu0 0.0
  %951 = vmatpush2.msra.mxu0 0.0
  %952 = vmatprep.subr.mxu0 0.0
  %953 = vmatpush2.msra.mxu0 0.0
  %954 = vmatprep.mubr.f32.mxu0 0.0
  %955 = vmatmul.mubr.f32.gmra.mxu0 %v885
  %v956 = vpop.f32.mrf.mxu0
  %v957 = vadd.f32 %v876, %v956
  %v958 = vpop.f32.mrf.mxu0
  %959 = vmatprep.mubr.f32.mxu0 0.0
  %960 = vmatmul.mubr.f32.gmra.mxu0 %v888
  %v961 = vpop.f32.mrf.mxu0
  %v962 = vadd.f32 %v881, %v961
  %v963 = vpop.f32.mrf.mxu0
  %964 = vdwg.mxu0
  %965 = vrot.lane.b32.xlu0 %v217, 112
  %v966 = vpop.permute.xlu0 %965
  %967 = vrot.lane.b32.xlu0 %v222, 112
  %v968 = vpop.permute.xlu0 %967
  %969 = vrot.lane.b32.xlu0 %v303, 112
  %v970 = vpop.permute.xlu0 %969
  %971 = vrot.lane.b32.xlu0 %v308, 112
  %v972 = vpop.permute.xlu0 %971
  %v973 = vsel %vm401, %v966, 0
  %v975 = vsel %vm401, %v968, 0
  %v977 = vsel %vm401, %v970, 0
  %v979 = vsel %vm401, %v972, 0
  %981 = vmatprep.subr.mxu0 0.0
  %982 = vmatpush1.xpose.msra.mxu0 0.0
  %983 = vmatprep.subr.mxu0 0.0
  %984 = vmatpush1.xpose.msra.mxu0 0.0
  %985 = vmatprep.subr.mxu0 0.0
  %986 = vmatpush1.xpose.msra.mxu0 0.0
  %987 = vmatprep.subr.mxu0 0.0
  %988 = vmatpush1.xpose.msra.mxu0 0.0
  %989 = vmatprep.subr.mxu0 0.0
  %990 = vmatpush1.xpose.msra.mxu0 0.0
  %991 = vmatprep.subr.mxu0 0.0
  %992 = vmatpush1.xpose.msra.mxu0 0.0
  %993 = vmatprep.subr.mxu0 0.0
  %994 = vmatpush1.xpose.msra.mxu0 0.0
  %995 = vmatprep.subr.mxu0 0.0
  %996 = vmatpush1.xpose.msra.mxu0 0.0
  %997 = vmatprep.subr.mxu0 0.0
  %998 = vmatpush1.xpose.msra.mxu0 0.0
  %999 = vmatprep.subr.mxu0 0.0
  %1000 = vmatpush1.xpose.msra.mxu0 0.0
  %1001 = vmatprep.subr.mxu0 0.0
  %1002 = vmatpush1.xpose.msra.mxu0 0.0
  %1003 = vmatprep.subr.mxu0 0.0
  %1004 = vmatpush1.xpose.msra.mxu0 0.0
  %1005 = vmatprep.subr.mxu0 0.0
  %1006 = vmatpush1.xpose.msra.mxu0 0.0
  %1007 = vmatprep.subr.mxu0 0.0
  %1008 = vmatpush1.xpose.msra.mxu0 0.0
  %1009 = vmatprep.subr.mxu0 0.0
  %1010 = vmatpush1.xpose.msra.mxu0 %v979
  %1011 = vmatprep.subr.mxu0 0.0
  %1012 = vmatpush1.xpose.msra.mxu0 %v977
  %1013 = vmatprep.subr.mxu0 0.0
  %1014 = vmatpush2.xpose.msra.mxu0 0.0
  %1015 = vmatprep.subr.mxu0 0.0
  %1016 = vmatpush2.xpose.msra.mxu0 0.0
  %1017 = vmatprep.subr.mxu0 0.0
  %1018 = vmatpush2.xpose.msra.mxu0 0.0
  %1019 = vmatprep.subr.mxu0 0.0
  %1020 = vmatpush2.xpose.msra.mxu0 0.0
  %1021 = vmatprep.subr.mxu0 0.0
  %1022 = vmatpush2.xpose.msra.mxu0 0.0
  %1023 = vmatprep.subr.mxu0 0.0
  %1024 = vmatpush2.xpose.msra.mxu0 0.0
  %1025 = vmatprep.subr.mxu0 0.0
  %1026 = vmatpush2.xpose.msra.mxu0 0.0
  %1027 = vmatprep.subr.mxu0 0.0
  %1028 = vmatpush2.xpose.msra.mxu0 0.0
  %1029 = vmatprep.subr.mxu0 0.0
  %1030 = vmatpush2.xpose.msra.mxu0 0.0
  %1031 = vmatprep.subr.mxu0 0.0
  %1032 = vmatpush2.xpose.msra.mxu0 0.0
  %1033 = vmatprep.subr.mxu0 0.0
  %1034 = vmatpush2.xpose.msra.mxu0 0.0
  %1035 = vmatprep.subr.mxu0 0.0
  %1036 = vmatpush2.xpose.msra.mxu0 0.0
  %1037 = vmatprep.subr.mxu0 0.0
  %1038 = vmatpush2.xpose.msra.mxu0 0.0
  %1039 = vmatprep.subr.mxu0 0.0
  %1040 = vmatpush2.xpose.msra.mxu0 0.0
  %1041 = vmatprep.subr.mxu0 0.0
  %1042 = vmatpush2.xpose.msra.mxu0 0.0
  %1043 = vmatprep.subr.mxu0 0.0
  %1044 = vmatpush2.xpose.msra.mxu0 0.0
  %1045 = vmatprep.mubr.f32.mxu0 0.0
  %1046 = vmatmul.mubr.f32.gmra.mxu0 %v973
  %v1047 = vpop.f32.mrf.mxu0
  %v1048 = vadd.f32 0.0, %v1047
  %v1049 = vpop.f32.mrf.mxu0
  %1050 = vmatprep.mubr.f32.mxu0 0.0
  %1051 = vmatmul.mubr.f32.gmra.mxu0 %v975
  %v1052 = vpop.f32.mrf.mxu0
  %v1053 = vadd.f32 0.0, %v1052
  %v1054 = vpop.f32.mrf.mxu0
  %1055 = vdwg.mxu0
  %v1056 = vmul.f32 %v1048, 0.35355338
  %v1057 = vmul.f32 %v1053, 0.35355338
  %v1058 = vadd.f32 %v1056, %v85
  %v1059 = vadd.f32 %v1057, %v86
  %v1060 = vsel %vm493, %v1058, -inf
  %1061 = vmax.xlane.f32.xlu0 %v1060
  %v1062 = vpop.xlane.xlu0 %1061
  %v1063 = vsel %vm493, %v1059, -inf
  %1064 = vmax.xlane.f32.xlu0 %v1063
  %v1065 = vpop.xlane.xlu0 %1064
  %v1066 = vsub.f32 %v1058, %v1062
  %v1067 = vsub.f32 %v1059, %v1065
  %v1068 = vmul.f32 %v1066, 1.442695
  %v1069 = vpow.pop %v1068
  %v1070 = vmul.f32 %v1067, 1.442695
  %v1071 = vpow.pop %v1070
  %v1072 = vsel %vm493, %v1069, 0.0
  %1073 = vadd.xlane.f32.xlu0 %v1072
  %v1074 = vpop.xlane.xlu0 %1073
  %v1075 = vsel %vm493, %v1071, 0.0
  %1076 = vadd.xlane.f32.xlu0 %v1075
  %v1077 = vpop.xlane.xlu0 %1076
  %v1078 = vrcp.pop %v1074
  %v1079 = vrcp.pop %v1077
  %v1080 = vmul.f32 %v1069, %v1078
  %v1081 = vmul.f32 %v1071, %v1079
  %1082 = vrot.lane.b32.xlu0 %v389, 112
  %v1083 = vpop.permute.xlu0 %1082
  %1084 = vrot.lane.b32.xlu0 %v394, 112
  %v1085 = vpop.permute.xlu0 %1084
  %v1089 = vsel %vm493, %v1080, 0
  %v1092 = vsel %vm493, %v1081, 0
  %1094 = vmatprep.subr.mxu0 0.0
  %1095 = vmatpush1.msra.mxu0 0.0
  %1096 = vmatprep.subr.mxu0 0.0
  %1097 = vmatpush1.msra.mxu0 0.0
  %1098 = vmatprep.subr.mxu0 0.0
  %1099 = vmatpush1.msra.mxu0 0.0
  %1100 = vmatprep.subr.mxu0 0.0
  %1101 = vmatpush1.msra.mxu0 0.0
  %1102 = vmatprep.subr.mxu0 0.0
  %1103 = vmatpush1.msra.mxu0 0.0
  %1104 = vmatprep.subr.mxu0 0.0
  %1105 = vmatpush1.msra.mxu0 0.0
  %1106 = vmatprep.subr.mxu0 0.0
  %1107 = vmatpush1.msra.mxu0 0.0
  %1108 = vmatprep.subr.mxu0 0.0
  %1109 = vmatpush1.msra.mxu0 0.0
  %1110 = vmatprep.subr.mxu0 0.0
  %1111 = vmatpush1.msra.mxu0 0.0
  %1112 = vmatprep.subr.mxu0 0.0
  %1113 = vmatpush1.msra.mxu0 0.0
  %1114 = vmatprep.subr.mxu0 0.0
  %1115 = vmatpush1.msra.mxu0 0.0
  %1116 = vmatprep.subr.mxu0 0.0
  %1117 = vmatpush1.msra.mxu0 0.0
  %1118 = vmatprep.subr.mxu0 0.0
  %1119 = vmatpush1.msra.mxu0 0.0
  %1120 = vmatprep.subr.mxu0 0.0
  %1121 = vmatpush1.msra.mxu0 0.0
  %1122 = vmatprep.subr.mxu0 0.0
  %1123 = vmatpush1.msra.mxu0 %v1085
  %1124 = vmatprep.subr.mxu0 0.0
  %1125 = vmatpush1.msra.mxu0 %v1083
  %1126 = vmatprep.subr.mxu0 0.0
  %1127 = vmatpush2.msra.mxu0 0.0
  %1128 = vmatprep.subr.mxu0 0.0
  %1129 = vmatpush2.msra.mxu0 0.0
  %1130 = vmatprep.subr.mxu0 0.0
  %1131 = vmatpush2.msra.mxu0 0.0
  %1132 = vmatprep.subr.mxu0 0.0
  %1133 = vmatpush2.msra.mxu0 0.0
  %1134 = vmatprep.subr.mxu0 0.0
  %1135 = vmatpush2.msra.mxu0 0.0
  %1136 = vmatprep.subr.mxu0 0.0
  %1137 = vmatpush2.msra.mxu0 0.0
  %1138 = vmatprep.subr.mxu0 0.0
  %1139 = vmatpush2.msra.mxu0 0.0
  %1140 = vmatprep.subr.mxu0 0.0
  %1141 = vmatpush2.msra.mxu0 0.0
  %1142 = vmatprep.subr.mxu0 0.0
  %1143 = vmatpush2.msra.mxu0 0.0
  %1144 = vmatprep.subr.mxu0 0.0
  %1145 = vmatpush2.msra.mxu0 0.0
  %1146 = vmatprep.subr.mxu0 0.0
  %1147 = vmatpush2.msra.mxu0 0.0
  %1148 = vmatprep.subr.mxu0 0.0
  %1149 = vmatpush2.msra.mxu0 0.0
  %1150 = vmatprep.subr.mxu0 0.0
  %1151 = vmatpush2.msra.mxu0 0.0
  %1152 = vmatprep.subr.mxu0 0.0
  %1153 = vmatpush2.msra.mxu0 0.0
  %1154 = vmatprep.subr.mxu0 0.0
  %1155 = vmatpush2.msra.mxu0 0.0
  %1156 = vmatprep.subr.mxu0 0.0
  %1157 = vmatpush2.msra.mxu0 0.0
  %1158 = vmatprep.mubr.f32.mxu0 0.0
  %1159 = vmatmul.mubr.f32.gmra.mxu0 %v1089
  %v1160 = vpop.f32.mrf.mxu0
  %v1161 = vadd.f32 0.0, %v1160
  %v1162 = vpop.f32.mrf.mxu0
  %1163 = vmatprep.mubr.f32.mxu0 0.0
  %1164 = vmatmul.mubr.f32.gmra.mxu0 %v1092
  %v1165 = vpop.f32.mrf.mxu0
  %v1166 = vadd.f32 0.0, %v1165
  %v1167 = vpop.f32.mrf.mxu0
  %1168 = vdwg.mxu0
  %v1170 = vsel %vm401, %v1161, 0
  %v1173 = vsel %vm401, %v1166, 0
  %1175 = vmatprep.subr.mxu0 0.0
  %1176 = vmatpush1.msra.mxu0 0.0
  %1177 = vmatprep.subr.mxu0 0.0
  %1178 = vmatpush1.msra.mxu0 0.0
  %1179 = vmatprep.subr.mxu0 0.0
  %1180 = vmatpush1.msra.mxu0 0.0
  %1181 = vmatprep.subr.mxu0 0.0
  %1182 = vmatpush1.msra.mxu0 0.0
  %1183 = vmatprep.subr.mxu0 0.0
  %1184 = vmatpush1.msra.mxu0 0.0
  %1185 = vmatprep.subr.mxu0 0.0
  %1186 = vmatpush1.msra.mxu0 0.0
  %1187 = vmatprep.subr.mxu0 0.0
  %1188 = vmatpush1.msra.mxu0 0.0
  %1189 = vmatprep.subr.mxu0 0.0
  %1190 = vmatpush1.msra.mxu0 0.0
  %1191 = vmatprep.subr.mxu0 0.0
  %1192 = vmatpush1.msra.mxu0 0.0
  %1193 = vmatprep.subr.mxu0 0.0
  %1194 = vmatpush1.msra.mxu0 0.0
  %1195 = vmatprep.subr.mxu0 0.0
  %1196 = vmatpush1.msra.mxu0 0.0
  %1197 = vmatprep.subr.mxu0 0.0
  %1198 = vmatpush1.msra.mxu0 0.0
  %1199 = vmatprep.subr.mxu0 0.0
  %1200 = vmatpush1.msra.mxu0 0.0
  %1201 = vmatprep.subr.mxu0 0.0
  %1202 = vmatpush1.msra.mxu0 0.0
  %1203 = vmatprep.subr.mxu0 0.0
  %1204 = vmatpush1.msra.mxu0 0.0
  %1205 = vmatprep.subr.mxu0 0.0
  %1206 = vmatpush1.msra.mxu0 %v399
  %1207 = vmatprep.subr.mxu0 0.0
  %1208 = vmatpush2.msra.mxu0 0.0
  %1209 = vmatprep.subr.mxu0 0.0
  %1210 = vmatpush2.msra.mxu0 0.0
  %1211 = vmatprep.subr.mxu0 0.0
  %1212 = vmatpush2.msra.mxu0 0.0
  %1213 = vmatprep.subr.mxu0 0.0
  %1214 = vmatpush2.msra.mxu0 0.0
  %1215 = vmatprep.subr.mxu0 0.0
  %1216 = vmatpush2.msra.mxu0 0.0
  %1217 = vmatprep.subr.mxu0 0.0
  %1218 = vmatpush2.msra.mxu0 0.0
  %1219 = vmatprep.subr.mxu0 0.0
  %1220 = vmatpush2.msra.mxu0 0.0
  %1221 = vmatprep.subr.mxu0 0.0
  %1222 = vmatpush2.msra.mxu0 0.0
  %1223 = vmatprep.subr.mxu0 0.0
  %1224 = vmatpush2.msra.mxu0 0.0
  %1225 = vmatprep.subr.mxu0 0.0
  %1226 = vmatpush2.msra.mxu0 0.0
  %1227 = vmatprep.subr.mxu0 0.0
  %1228 = vmatpush2.msra.mxu0 0.0
  %1229 = vmatprep.subr.mxu0 0.0
  %1230 = vmatpush2.msra.mxu0 0.0
  %1231 = vmatprep.subr.mxu0 0.0
  %1232 = vmatpush2.msra.mxu0 0.0
  %1233 = vmatprep.subr.mxu0 0.0
  %1234 = vmatpush2.msra.mxu0 0.0
  %1235 = vmatprep.subr.mxu0 0.0
  %1236 = vmatpush2.msra.mxu0 0.0
  %1237 = vmatprep.subr.mxu0 0.0
  %1238 = vmatpush2.msra.mxu0 0.0
  %1239 = vmatprep.mubr.f32.mxu0 0.0
  %1240 = vmatmul.mubr.f32.gmra.mxu0 %v1170
  %v1241 = vpop.f32.mrf.mxu0
  %v1242 = vadd.f32 0.0, %v1241
  %v1243 = vpop.f32.mrf.mxu0
  %1244 = vmatprep.mubr.f32.mxu0 0.0
  %1245 = vmatmul.mubr.f32.gmra.mxu0 %v1173
  %v1246 = vpop.f32.mrf.mxu0
  %v1247 = vadd.f32 0.0, %v1246
  %v1248 = vpop.f32.mrf.mxu0
  %1249 = vdwg.mxu0
  %v1250 = vadd.f32 %v957, %v1242
  %v1251 = vadd.f32 %v962, %v1247
  %1252 = vrot.lane.b32.xlu0 %v217, 104
  %v1253 = vpop.permute.xlu0 %1252
  %1254 = vrot.lane.b32.xlu0 %v222, 104
  %v1255 = vpop.permute.xlu0 %1254
  %1256 = vrot.lane.b32.xlu0 %v303, 104
  %v1257 = vpop.permute.xlu0 %1256
  %1258 = vrot.lane.b32.xlu0 %v308, 104
  %v1259 = vpop.permute.xlu0 %1258
  %v1260 = vsel %vm401, %v1253, 0
  %v1262 = vsel %vm401, %v1255, 0
  %v1264 = vsel %vm401, %v1257, 0
  %v1266 = vsel %vm401, %v1259, 0
  %1268 = vmatprep.subr.mxu0 0.0
  %1269 = vmatpush1.xpose.msra.mxu0 0.0
  %1270 = vmatprep.subr.mxu0 0.0
  %1271 = vmatpush1.xpose.msra.mxu0 0.0
  %1272 = vmatprep.subr.mxu0 0.0
  %1273 = vmatpush1.xpose.msra.mxu0 0.0
  %1274 = vmatprep.subr.mxu0 0.0
  %1275 = vmatpush1.xpose.msra.mxu0 0.0
  %1276 = vmatprep.subr.mxu0 0.0
  %1277 = vmatpush1.xpose.msra.mxu0 0.0
  %1278 = vmatprep.subr.mxu0 0.0
  %1279 = vmatpush1.xpose.msra.mxu0 0.0
  %1280 = vmatprep.subr.mxu0 0.0
  %1281 = vmatpush1.xpose.msra.mxu0 0.0
  %1282 = vmatprep.subr.mxu0 0.0
  %1283 = vmatpush1.xpose.msra.mxu0 0.0
  %1284 = vmatprep.subr.mxu0 0.0
  %1285 = vmatpush1.xpose.msra.mxu0 0.0
  %1286 = vmatprep.subr.mxu0 0.0
  %1287 = vmatpush1.xpose.msra.mxu0 0.0
  %1288 = vmatprep.subr.mxu0 0.0
  %1289 = vmatpush1.xpose.msra.mxu0 0.0
  %1290 = vmatprep.subr.mxu0 0.0
  %1291 = vmatpush1.xpose.msra.mxu0 0.0
  %1292 = vmatprep.subr.mxu0 0.0
  %1293 = vmatpush1.xpose.msra.mxu0 0.0
  %1294 = vmatprep.subr.mxu0 0.0
  %1295 = vmatpush1.xpose.msra.mxu0 0.0
  %1296 = vmatprep.subr.mxu0 0.0
  %1297 = vmatpush1.xpose.msra.mxu0 %v1266
  %1298 = vmatprep.subr.mxu0 0.0
  %1299 = vmatpush1.xpose.msra.mxu0 %v1264
  %1300 = vmatprep.subr.mxu0 0.0
  %1301 = vmatpush2.xpose.msra.mxu0 0.0
  %1302 = vmatprep.subr.mxu0 0.0
  %1303 = vmatpush2.xpose.msra.mxu0 0.0
  %1304 = vmatprep.subr.mxu0 0.0
  %1305 = vmatpush2.xpose.msra.mxu0 0.0
  %1306 = vmatprep.subr.mxu0 0.0
  %1307 = vmatpush2.xpose.msra.mxu0 0.0
  %1308 = vmatprep.subr.mxu0 0.0
  %1309 = vmatpush2.xpose.msra.mxu0 0.0
  %1310 = vmatprep.subr.mxu0 0.0
  %1311 = vmatpush2.xpose.msra.mxu0 0.0
  %1312 = vmatprep.subr.mxu0 0.0
  %1313 = vmatpush2.xpose.msra.mxu0 0.0
  %1314 = vmatprep.subr.mxu0 0.0
  %1315 = vmatpush2.xpose.msra.mxu0 0.0
  %1316 = vmatprep.subr.mxu0 0.0
  %1317 = vmatpush2.xpose.msra.mxu0 0.0
  %1318 = vmatprep.subr.mxu0 0.0
  %1319 = vmatpush2.xpose.msra.mxu0 0.0
  %1320 = vmatprep.subr.mxu0 0.0
  %1321 = vmatpush2.xpose.msra.mxu0 0.0
  %1322 = vmatprep.subr.mxu0 0.0
  %1323 = vmatpush2.xpose.msra.mxu0 0.0
  %1324 = vmatprep.subr.mxu0 0.0
  %1325 = vmatpush2.xpose.msra.mxu0 0.0
  %1326 = vmatprep.subr.mxu0 0.0
  %1327 = vmatpush2.xpose.msra.mxu0 0.0
  %1328 = vmatprep.subr.mxu0 0.0
  %1329 = vmatpush2.xpose.msra.mxu0 0.0
  %1330 = vmatprep.subr.mxu0 0.0
  %1331 = vmatpush2.xpose.msra.mxu0 0.0
  %1332 = vmatprep.mubr.f32.mxu0 0.0
  %1333 = vmatmul.mubr.f32.gmra.mxu0 %v1260
  %v1334 = vpop.f32.mrf.mxu0
  %v1335 = vadd.f32 0.0, %v1334
  %v1336 = vpop.f32.mrf.mxu0
  %1337 = vmatprep.mubr.f32.mxu0 0.0
  %1338 = vmatmul.mubr.f32.gmra.mxu0 %v1262
  %v1339 = vpop.f32.mrf.mxu0
  %v1340 = vadd.f32 0.0, %v1339
  %v1341 = vpop.f32.mrf.mxu0
  %1342 = vdwg.mxu0
  %v1343 = vmul.f32 %v1335, 0.35355338
  %v1344 = vmul.f32 %v1340, 0.35355338
  %v1345 = vadd.f32 %v1343, %v85
  %v1346 = vadd.f32 %v1344, %v86
  %v1347 = vsel %vm493, %v1345, -inf
  %1348 = vmax.xlane.f32.xlu0 %v1347
  %v1349 = vpop.xlane.xlu0 %1348
  %v1350 = vsel %vm493, %v1346, -inf
  %1351 = vmax.xlane.f32.xlu0 %v1350
  %v1352 = vpop.xlane.xlu0 %1351
  %v1353 = vsub.f32 %v1345, %v1349
  %v1354 = vsub.f32 %v1346, %v1352
  %v1355 = vmul.f32 %v1353, 1.442695
  %v1356 = vpow.pop %v1355
  %v1357 = vmul.f32 %v1354, 1.442695
  %v1358 = vpow.pop %v1357
  %v1359 = vsel %vm493, %v1356, 0.0
  %1360 = vadd.xlane.f32.xlu0 %v1359
  %v1361 = vpop.xlane.xlu0 %1360
  %v1362 = vsel %vm493, %v1358, 0.0
  %1363 = vadd.xlane.f32.xlu0 %v1362
  %v1364 = vpop.xlane.xlu0 %1363
  %v1365 = vrcp.pop %v1361
  %v1366 = vrcp.pop %v1364
  %v1367 = vmul.f32 %v1356, %v1365
  %v1368 = vmul.f32 %v1358, %v1366
  %1369 = vrot.lane.b32.xlu0 %v389, 104
  %v1370 = vpop.permute.xlu0 %1369
  %1371 = vrot.lane.b32.xlu0 %v394, 104
  %v1372 = vpop.permute.xlu0 %1371
  %v1376 = vsel %vm493, %v1367, 0
  %v1379 = vsel %vm493, %v1368, 0
  %1381 = vmatprep.subr.mxu0 0.0
  %1382 = vmatpush1.msra.mxu0 0.0
  %1383 = vmatprep.subr.mxu0 0.0
  %1384 = vmatpush1.msra.mxu0 0.0
  %1385 = vmatprep.subr.mxu0 0.0
  %1386 = vmatpush1.msra.mxu0 0.0
  %1387 = vmatprep.subr.mxu0 0.0
  %1388 = vmatpush1.msra.mxu0 0.0
  %1389 = vmatprep.subr.mxu0 0.0
  %1390 = vmatpush1.msra.mxu0 0.0
  %1391 = vmatprep.subr.mxu0 0.0
  %1392 = vmatpush1.msra.mxu0 0.0
  %1393 = vmatprep.subr.mxu0 0.0
  %1394 = vmatpush1.msra.mxu0 0.0
  %1395 = vmatprep.subr.mxu0 0.0
  %1396 = vmatpush1.msra.mxu0 0.0
  %1397 = vmatprep.subr.mxu0 0.0
  %1398 = vmatpush1.msra.mxu0 0.0
  %1399 = vmatprep.subr.mxu0 0.0
  %1400 = vmatpush1.msra.mxu0 0.0
  %1401 = vmatprep.subr.mxu0 0.0
  %1402 = vmatpush1.msra.mxu0 0.0
  %1403 = vmatprep.subr.mxu0 0.0
  %1404 = vmatpush1.msra.mxu0 0.0
  %1405 = vmatprep.subr.mxu0 0.0
  %1406 = vmatpush1.msra.mxu0 0.0
  %1407 = vmatprep.subr.mxu0 0.0
  %1408 = vmatpush1.msra.mxu0 0.0
  %1409 = vmatprep.subr.mxu0 0.0
  %1410 = vmatpush1.msra.mxu0 %v1372
  %1411 = vmatprep.subr.mxu0 0.0
  %1412 = vmatpush1.msra.mxu0 %v1370
  %1413 = vmatprep.subr.mxu0 0.0
  %1414 = vmatpush2.msra.mxu0 0.0
  %1415 = vmatprep.subr.mxu0 0.0
  %1416 = vmatpush2.msra.mxu0 0.0
  %1417 = vmatprep.subr.mxu0 0.0
  %1418 = vmatpush2.msra.mxu0 0.0
  %1419 = vmatprep.subr.mxu0 0.0
  %1420 = vmatpush2.msra.mxu0 0.0
  %1421 = vmatprep.subr.mxu0 0.0
  %1422 = vmatpush2.msra.mxu0 0.0
  %1423 = vmatprep.subr.mxu0 0.0
  %1424 = vmatpush2.msra.mxu0 0.0
  %1425 = vmatprep.subr.mxu0 0.0
  %1426 = vmatpush2.msra.mxu0 0.0
  %1427 = vmatprep.subr.mxu0 0.0
  %1428 = vmatpush2.msra.mxu0 0.0
  %1429 = vmatprep.subr.mxu0 0.0
  %1430 = vmatpush2.msra.mxu0 0.0
  %1431 = vmatprep.subr.mxu0 0.0
  %1432 = vmatpush2.msra.mxu0 0.0
  %1433 = vmatprep.subr.mxu0 0.0
  %1434 = vmatpush2.msra.mxu0 0.0
  %1435 = vmatprep.subr.mxu0 0.0
  %1436 = vmatpush2.msra.mxu0 0.0
  %1437 = vmatprep.subr.mxu0 0.0
  %1438 = vmatpush2.msra.mxu0 0.0
  %1439 = vmatprep.subr.mxu0 0.0
  %1440 = vmatpush2.msra.mxu0 0.0
  %1441 = vmatprep.subr.mxu0 0.0
  %1442 = vmatpush2.msra.mxu0 0.0
  %1443 = vmatprep.subr.mxu0 0.0
  %1444 = vmatpush2.msra.mxu0 0.0
  %1445 = vmatprep.mubr.f32.mxu0 0.0
  %1446 = vmatmul.mubr.f32.gmra.mxu0 %v1376
  %v1447 = vpop.f32.mrf.mxu0
  %v1448 = vadd.f32 0.0, %v1447
  %v1449 = vpop.f32.mrf.mxu0
  %1450 = vmatprep.mubr.f32.mxu0 0.0
  %1451 = vmatmul.mubr.f32.gmra.mxu0 %v1379
  %v1452 = vpop.f32.mrf.mxu0
  %v1453 = vadd.f32 0.0, %v1452
  %v1454 = vpop.f32.mrf.mxu0
  %1455 = vdwg.mxu0
  %v1457 = vsel %vm401, %v1448, 0
  %v1460 = vsel %vm401, %v1453, 0
  %1462 = vmatprep.subr.mxu0 0.0
  %1463 = vmatpush1.msra.mxu0 0.0
  %1464 = vmatprep.subr.mxu0 0.0
  %1465 = vmatpush1.msra.mxu0 0.0
  %1466 = vmatprep.subr.mxu0 0.0
  %1467 = vmatpush1.msra.mxu0 0.0
  %1468 = vmatprep.subr.mxu0 0.0
  %1469 = vmatpush1.msra.mxu0 0.0
  %1470 = vmatprep.subr.mxu0 0.0
  %1471 = vmatpush1.msra.mxu0 0.0
  %1472 = vmatprep.subr.mxu0 0.0
  %1473 = vmatpush1.msra.mxu0 0.0
  %1474 = vmatprep.subr.mxu0 0.0
  %1475 = vmatpush1.msra.mxu0 0.0
  %1476 = vmatprep.subr.mxu0 0.0
  %1477 = vmatpush1.msra.mxu0 0.0
  %1478 = vmatprep.subr.mxu0 0.0
  %1479 = vmatpush1.msra.mxu0 0.0
  %1480 = vmatprep.subr.mxu0 0.0
  %1481 = vmatpush1.msra.mxu0 0.0
  %1482 = vmatprep.subr.mxu0 0.0
  %1483 = vmatpush1.msra.mxu0 0.0
  %1484 = vmatprep.subr.mxu0 0.0
  %1485 = vmatpush1.msra.mxu0 0.0
  %1486 = vmatprep.subr.mxu0 0.0
  %1487 = vmatpush1.msra.mxu0 0.0
  %1488 = vmatprep.subr.mxu0 0.0
  %1489 = vmatpush1.msra.mxu0 0.0
  %1490 = vmatprep.subr.mxu0 0.0
  %1491 = vmatpush1.msra.mxu0 0.0
  %1492 = vmatprep.subr.mxu0 0.0
  %1493 = vmatpush1.msra.mxu0 %v400
  %1494 = vmatprep.subr.mxu0 0.0
  %1495 = vmatpush2.msra.mxu0 0.0
  %1496 = vmatprep.subr.mxu0 0.0
  %1497 = vmatpush2.msra.mxu0 0.0
  %1498 = vmatprep.subr.mxu0 0.0
  %1499 = vmatpush2.msra.mxu0 0.0
  %1500 = vmatprep.subr.mxu0 0.0
  %1501 = vmatpush2.msra.mxu0 0.0
  %1502 = vmatprep.subr.mxu0 0.0
  %1503 = vmatpush2.msra.mxu0 0.0
  %1504 = vmatprep.subr.mxu0 0.0
  %1505 = vmatpush2.msra.mxu0 0.0
  %1506 = vmatprep.subr.mxu0 0.0
  %1507 = vmatpush2.msra.mxu0 0.0
  %1508 = vmatprep.subr.mxu0 0.0
  %1509 = vmatpush2.msra.mxu0 0.0
  %1510 = vmatprep.subr.mxu0 0.0
  %1511 = vmatpush2.msra.mxu0 0.0
  %1512 = vmatprep.subr.mxu0 0.0
  %1513 = vmatpush2.msra.mxu0 0.0
  %1514 = vmatprep.subr.mxu0 0.0
  %1515 = vmatpush2.msra.mxu0 0.0
  %1516 = vmatprep.subr.mxu0 0.0
  %1517 = vmatpush2.msra.mxu0 0.0
  %1518 = vmatprep.subr.mxu0 0.0
  %1519 = vmatpush2.msra.mxu0 0.0
  %1520 = vmatprep.subr.mxu0 0.0
  %1521 = vmatpush2.msra.mxu0 0.0
  %1522 = vmatprep.subr.mxu0 0.0
  %1523 = vmatpush2.msra.mxu0 0.0
  %1524 = vmatprep.subr.mxu0 0.0
  %1525 = vmatpush2.msra.mxu0 0.0
  %1526 = vmatprep.mubr.f32.mxu0 0.0
  %1527 = vmatmul.mubr.f32.gmra.mxu0 %v1457
  %v1528 = vpop.f32.mrf.mxu0
  %v1529 = vadd.f32 0.0, %v1528
  %v1530 = vpop.f32.mrf.mxu0
  %1531 = vmatprep.mubr.f32.mxu0 0.0
  %1532 = vmatmul.mubr.f32.gmra.mxu0 %v1460
  %v1533 = vpop.f32.mrf.mxu0
  %v1534 = vadd.f32 0.0, %v1533
  %v1535 = vpop.f32.mrf.mxu0
  %1536 = vdwg.mxu0
  %v1537 = vadd.f32 %v1250, %v1529
  %v1538 = vadd.f32 %v1251, %v1534
  %v1539 = vadd.f32 %v83, %v1537
  %v1540 = vadd.f32 %v84, %v1538
  %v1541 = vld [vmem:[%s11] sm:$0x1]
  %v1543 = vlaneseq
  %v1544 = vshrl.u32 %v1543, 7
  %v1545 = vsub.s32 0, %v1544
  %v1546 = vrot.slane %v1541, %v1545
  %v1548 = vadd.f32 %v1539, %v1546
  %v1549 = vadd.f32 %v1540, %v1546
  %v1550 = vld [vmem:[%s12] sm:$0x1]
  %v1551 = vld [vmem:[%s13] sm:$0x1]
  %v1552 = vsel %vm89, %v1548, 0.0
  %1553 = vadd.xlane.f32.xlu0 %v1552
  %v1554 = vpop.xlane.xlu0 %1553
  %v1555 = vsel %vm89, %v1549, 0.0
  %1556 = vadd.xlane.f32.xlu0 %v1555
  %v1557 = vpop.xlane.xlu0 %1556
  %v1558 = vmul.f32 %v1554, %v96
  %v1559 = vmul.f32 %v1557, %v96
  %v1560 = vsub.f32 %v1548, %v1558
  %v1561 = vsub.f32 %v1549, %v1559
  %v1562 = vmul.f32 %v1560, %v1560
  %v1563 = vmul.f32 %v1561, %v1561
  %v1564 = vsel %vm89, %v1562, 0.0
  %1565 = vadd.xlane.f32.xlu0 %v1564
  %v1566 = vpop.xlane.xlu0 %1565
  %v1567 = vsel %vm89, %v1563, 0.0
  %1568 = vadd.xlane.f32.xlu0 %v1567
  %v1569 = vpop.xlane.xlu0 %1568
  %v1570 = vmul.f32 %v1566, %v96
  %v1571 = vmul.f32 %v1569, %v96
  %v1572 = vadd.f32 %v1570, 1e-05
  %v1573 = vadd.f32 %v1571, 1e-05
  %v1574 = vrsqrt.pop %v1572
  %v1575 = vrsqrt.pop %v1573
  %v1576 = vmul.f32 %v1560, %v1574
  %v1577 = vmul.f32 %v1561, %v1575
  %v1579 = vlaneseq
  %v1580 = vshrl.u32 %v1579, 7
  %v1581 = vsub.s32 0, %v1580
  %v1582 = vrot.slane %v1550, %v1581
  %v1584 = vmul.f32 %v1576, %v1582
  %v1585 = vmul.f32 %v1577, %v1582
  %v1587 = vlaneseq
  %v1588 = vshrl.u32 %v1587, 7
  %v1589 = vsub.s32 0, %v1588
  %v1590 = vrot.slane %v1551, %v1589
  %v1592 = vadd.f32 %v1584, %v1590
  %v1593 = vadd.f32 %v1585, %v1590
  %v1594 = vld [vmem:[%s14] sm:$0xff]
  %v1595 = vld [vmem:[%s14 + $0x8] sm:$0xff]
  %v1596 = vld [vmem:[%s14 + $0x10] sm:$0xff]
  %v1597 = vld [vmem:[%s14 + $0x18] sm:$0xff]
  %v1598 = vld [vmem:[%s15] sm:$0x1]
  %v1600 = vlaneseq
  %v1601 = vshrl.u32 %v1600, 7
  %v1602 = vsub.s32 0, %v1601
  %v1603 = vrot.slane %v1598, %v1602
  %v1606 = vsel %vm89, %v1592, 0
  %v1609 = vsel %vm89, %v1593, 0
  %1611 = vmatprep.subr.mxu0 0.0
  %1612 = vmatpush1.msra.mxu0 0.0
  %1613 = vmatprep.subr.mxu0 0.0
  %1614 = vmatpush1.msra.mxu0 0.0
  %1615 = vmatprep.subr.mxu0 0.0
  %1616 = vmatpush1.msra.mxu0 0.0
  %1617 = vmatprep.subr.mxu0 0.0
  %1618 = vmatpush1.msra.mxu0 0.0
  %1619 = vmatprep.subr.mxu0 0.0
  %1620 = vmatpush1.msra.mxu0 0.0
  %1621 = vmatprep.subr.mxu0 0.0
  %1622 = vmatpush1.msra.mxu0 0.0
  %1623 = vmatprep.subr.mxu0 0.0
  %1624 = vmatpush1.msra.mxu0 0.0
  %1625 = vmatprep.subr.mxu0 0.0
  %1626 = vmatpush1.msra.mxu0 0.0
  %1627 = vmatprep.subr.mxu0 0.0
  %1628 = vmatpush1.msra.mxu0 0.0
  %1629 = vmatprep.subr.mxu0 0.0
  %1630 = vmatpush1.msra.mxu0 0.0
  %1631 = vmatprep.subr.mxu0 0.0
  %1632 = vmatpush1.msra.mxu0 0.0
  %1633 = vmatprep.subr.mxu0 0.0
  %1634 = vmatpush1.msra.mxu0 0.0
  %1635 = vmatprep.subr.mxu0 0.0
  %1636 = vmatpush1.msra.mxu0 %v1597
  %1637 = vmatprep.subr.mxu0 0.0
  %1638 = vmatpush1.msra.mxu0 %v1596
  %1639 = vmatprep.subr.mxu0 0.0
  %1640 = vmatpush1.msra.mxu0 %v1595
  %1641 = vmatprep.subr.mxu0 0.0
  %1642 = vmatpush1.msra.mxu0 %v1594
  %1643 = vmatprep.subr.mxu0 0.0
  %1644 = vmatpush2.msra.mxu0 0.0
  %1645 = vmatprep.subr.mxu0 0.0
  %1646 = vmatpush2.msra.mxu0 0.0
  %1647 = vmatprep.subr.mxu0 0.0
  %1648 = vmatpush2.msra.mxu0 0.0
  %1649 = vmatprep.subr.mxu0 0.0
  %1650 = vmatpush2.msra.mxu0 0.0
  %1651 = vmatprep.subr.mxu0 0.0
  %1652 = vmatpush2.msra.mxu0 0.0
  %1653 = vmatprep.subr.mxu0 0.0
  %1654 = vmatpush2.msra.mxu0 0.0
  %1655 = vmatprep.subr.mxu0 0.0
  %1656 = vmatpush2.msra.mxu0 0.0
  %1657 = vmatprep.subr.mxu0 0.0
  %1658 = vmatpush2.msra.mxu0 0.0
  %1659 = vmatprep.subr.mxu0 0.0
  %1660 = vmatpush2.msra.mxu0 0.0
  %1661 = vmatprep.subr.mxu0 0.0
  %1662 = vmatpush2.msra.mxu0 0.0
  %1663 = vmatprep.subr.mxu0 0.0
  %1664 = vmatpush2.msra.mxu0 0.0
  %1665 = vmatprep.subr.mxu0 0.0
  %1666 = vmatpush2.msra.mxu0 0.0
  %1667 = vmatprep.subr.mxu0 0.0
  %1668 = vmatpush2.msra.mxu0 0.0
  %1669 = vmatprep.subr.mxu0 0.0
  %1670 = vmatpush2.msra.mxu0 0.0
  %1671 = vmatprep.subr.mxu0 0.0
  %1672 = vmatpush2.msra.mxu0 0.0
  %1673 = vmatprep.subr.mxu0 0.0
  %1674 = vmatpush2.msra.mxu0 0.0
  %1675 = vmatprep.mubr.f32.mxu0 0.0
  %1676 = vmatmul.mubr.f32.gmra.mxu0 %v1606
  %v1677 = vpop.f32.mrf.mxu0
  %v1678 = vadd.f32 %v1603, %v1677
  %v1679 = vpop.f32.mrf.mxu0
  %1680 = vmatprep.mubr.f32.mxu0 0.0
  %1681 = vmatmul.mubr.f32.gmra.mxu0 %v1609
  %v1682 = vpop.f32.mrf.mxu0
  %v1683 = vadd.f32 %v1603, %v1682
  %v1684 = vpop.f32.mrf.mxu0
  %1685 = vdwg.mxu0
  %v1686 = vmul.f32 %v1678, 0.5
  %v1687 = vmul.f32 %v1683, 0.5
  %v1688 = vmul.f32 %v1678, 0.044715
  %v1689 = vmul.f32 %v1683, 0.044715
  %v1690 = vmul.f32 %v1688, %v1678
  %v1691 = vmul.f32 %v1689, %v1683
  %v1692 = vmul.f32 %v1690, %v1678
  %v1693 = vmul.f32 %v1691, %v1683
  %v1694 = vadd.f32 %v1678, %v1692
  %v1695 = vadd.f32 %v1683, %v1693
  %v1696 = vmul.f32 %v1694, 0.7978846
  %v1697 = vmul.f32 %v1695, 0.7978846
  %v1698 = vtanh.pop %v1696
  %v1699 = vtanh.pop %v1697
  %v1700 = vadd.f32 %v1698, 1.0
  %v1701 = vadd.f32 %v1699, 1.0
  %v1702 = vmul.f32 %v1686, %v1700
  %v1703 = vmul.f32 %v1687, %v1701
  %v1704 = vld [vmem:[%s16] sm:$0xff]
  %v1705 = vld [vmem:[%s16 + $0x8] sm:$0xff]
  %v1706 = vld [vmem:[%s16 + $0x10] sm:$0xff]
  %v1707 = vld [vmem:[%s16 + $0x18] sm:$0xff]
  %v1708 = vld [vmem:[%s16 + $0x20] sm:$0xff]
  %v1709 = vld [vmem:[%s16 + $0x28] sm:$0xff]
  %v1710 = vld [vmem:[%s16 + $0x30] sm:$0xff]
  %v1711 = vld [vmem:[%s16 + $0x38] sm:$0xff]
  %v1712 = vld [vmem:[%s16 + $0x40] sm:$0xff]
  %v1713 = vld [vmem:[%s16 + $0x48] sm:$0xff]
  %v1714 = vld [vmem:[%s16 + $0x50] sm:$0xff]
  %v1715 = vld [vmem:[%s16 + $0x58] sm:$0xff]
  %v1716 = vld [vmem:[%s16 + $0x60] sm:$0xff]
  %v1717 = vld [vmem:[%s16 + $0x68] sm:$0xff]
  %v1718 = vld [vmem:[%s16 + $0x70] sm:$0xff]
  %v1719 = vld [vmem:[%s16 + $0x78] sm:$0xff]
  %1720 = vmatprep.subr.mxu0 0.0
  %1721 = vmatpush1.msra.mxu0 %v1719
  %1722 = vmatprep.subr.mxu0 0.0
  %1723 = vmatpush1.msra.mxu0 %v1718
  %1724 = vmatprep.subr.mxu0 0.0
  %1725 = vmatpush1.msra.mxu0 %v1717
  %1726 = vmatprep.subr.mxu0 0.0
  %1727 = vmatpush1.msra.mxu0 %v1716
  %1728 = vmatprep.subr.mxu0 0.0
  %1729 = vmatpush1.msra.mxu0 %v1715
  %1730 = vmatprep.subr.mxu0 0.0
  %1731 = vmatpush1.msra.mxu0 %v1714
  %1732 = vmatprep.subr.mxu0 0.0
  %1733 = vmatpush1.msra.mxu0 %v1713
  %1734 = vmatprep.subr.mxu0 0.0
  %1735 = vmatpush1.msra.mxu0 %v1712
  %1736 = vmatprep.subr.mxu0 0.0
  %1737 = vmatpush1.msra.mxu0 %v1711
  %1738 = vmatprep.subr.mxu0 0.0
  %1739 = vmatpush1.msra.mxu0 %v1710
  %1740 = vmatprep.subr.mxu0 0.0
  %1741 = vmatpush1.msra.mxu0 %v1709
  %1742 = vmatprep.subr.mxu0 0.0
  %1743 = vmatpush1.msra.mxu0 %v1708
  %1744 = vmatprep.subr.mxu0 0.0
  %1745 = vmatpush1.msra.mxu0 %v1707
  %1746 = vmatprep.subr.mxu0 0.0
  %1747 = vmatpush1.msra.mxu0 %v1706
  %1748 = vmatprep.subr.mxu0 0.0
  %1749 = vmatpush1.msra.mxu0 %v1705
  %1750 = vmatprep.subr.mxu0 0.0
  %1751 = vmatpush1.msra.mxu0 %v1704
  %1752 = vmatprep.subr.mxu0 0.0
  %1753 = vmatpush2.msra.mxu0 0.0
  %1754 = vmatprep.subr.mxu0 0.0
  %1755 = vmatpush2.msra.mxu0 0.0
  %1756 = vmatprep.subr.mxu0 0.0
  %1757 = vmatpush2.msra.mxu0 0.0
  %1758 = vmatprep.subr.mxu0 0.0
  %1759 = vmatpush2.msra.mxu0 0.0
  %1760 = vmatprep.subr.mxu0 0.0
  %1761 = vmatpush2.msra.mxu0 0.0
  %1762 = vmatprep.subr.mxu0 0.0
  %1763 = vmatpush2.msra.mxu0 0.0
  %1764 = vmatprep.subr.mxu0 0.0
  %1765 = vmatpush2.msra.mxu0 0.0
  %1766 = vmatprep.subr.mxu0 0.0
  %1767 = vmatpush2.msra.mxu0 0.0
  %1768 = vmatprep.subr.mxu0 0.0
  %1769 = vmatpush2.msra.mxu0 0.0
  %1770 = vmatprep.subr.mxu0 0.0
  %1771 = vmatpush2.msra.mxu0 0.0
  %1772 = vmatprep.subr.mxu0 0.0
  %1773 = vmatpush2.msra.mxu0 0.0
  %1774 = vmatprep.subr.mxu0 0.0
  %1775 = vmatpush2.msra.mxu0 0.0
  %1776 = vmatprep.subr.mxu0 0.0
  %1777 = vmatpush2.msra.mxu0 0.0
  %1778 = vmatprep.subr.mxu0 0.0
  %1779 = vmatpush2.msra.mxu0 0.0
  %1780 = vmatprep.subr.mxu0 0.0
  %1781 = vmatpush2.msra.mxu0 0.0
  %1782 = vmatprep.subr.mxu0 0.0
  %1783 = vmatpush2.msra.mxu0 0.0
  %1784 = vmatprep.mubr.f32.mxu0 0.0
  %1785 = vmatmul.mubr.f32.gmra.mxu0 %v1702
  %v1786 = vpop.f32.mrf.mxu0
  %v1787 = vadd.f32 0.0, %v1786
  %v1788 = vpop.f32.mrf.mxu0
  %1789 = vmatprep.mubr.f32.mxu0 0.0
  %1790 = vmatmul.mubr.f32.gmra.mxu0 %v1703
  %v1791 = vpop.f32.mrf.mxu0
  %v1792 = vadd.f32 0.0, %v1791
  %v1793 = vpop.f32.mrf.mxu0
  %1794 = vdwg.mxu0
  %v1795 = vadd.f32 %v1548, %v1787
  %v1796 = vadd.f32 %v1549, %v1792
  %v1797 = vld [vmem:[%s17] sm:$0x1]
  %v1799 = vlaneseq
  %v1800 = vshrl.u32 %v1799, 7
  %v1801 = vsub.s32 0, %v1800
  %v1802 = vrot.slane %v1797, %v1801
  %v1804 = vadd.f32 %v1795, %v1802
  %v1805 = vadd.f32 %v1796, %v1802
  %s1806 = scalar_lea.vmem %s2, 1
  %v1807 = vld [vmem:[%s1806] sm:$0x1]
  %s1808 = scalar_lea.vmem %s3, 1
  %v1809 = vld [vmem:[%s1808] sm:$0x1]
  %v1810 = vsel %vm89, %v1804, 0.0
  %1811 = vadd.xlane.f32.xlu0 %v1810
  %v1812 = vpop.xlane.xlu0 %1811
  %v1813 = vsel %vm89, %v1805, 0.0
  %1814 = vadd.xlane.f32.xlu0 %v1813
  %v1815 = vpop.xlane.xlu0 %1814
  %v1816 = vmul.f32 %v1812, %v96
  %v1817 = vmul.f32 %v1815, %v96
  %v1818 = vsub.f32 %v1804, %v1816
  %v1819 = vsub.f32 %v1805, %v1817
  %v1820 = vmul.f32 %v1818, %v1818
  %v1821 = vmul.f32 %v1819, %v1819
  %v1822 = vsel %vm89, %v1820, 0.0
  %1823 = vadd.xlane.f32.xlu0 %v1822
  %v1824 = vpop.xlane.xlu0 %1823
  %v1825 = vsel %vm89, %v1821, 0.0
  %1826 = vadd.xlane.f32.xlu0 %v1825
  %v1827 = vpop.xlane.xlu0 %1826
  %v1828 = vmul.f32 %v1824, %v96
  %v1829 = vmul.f32 %v1827, %v96
  %v1830 = vadd.f32 %v1828, 1e-05
  %v1831 = vadd.f32 %v1829, 1e-05
  %v1832 = vrsqrt.pop %v1830
  %v1833 = vrsqrt.pop %v1831
  %v1834 = vmul.f32 %v1818, %v1832
  %v1835 = vmul.f32 %v1819, %v1833
  %v1837 = vlaneseq
  %v1838 = vshrl.u32 %v1837, 7
  %v1839 = vsub.s32 0, %v1838
  %v1840 = vrot.slane %v1807, %v1839
  %v1842 = vmul.f32 %v1834, %v1840
  %v1843 = vmul.f32 %v1835, %v1840
  %v1845 = vlaneseq
  %v1846 = vshrl.u32 %v1845, 7
  %v1847 = vsub.s32 0, %v1846
  %v1848 = vrot.slane %v1809, %v1847
  %v1850 = vadd.f32 %v1842, %v1848
  %v1851 = vadd.f32 %v1843, %v1848
  %s1852 = scalar_lea.vmem %s4, 32
  %v1853 = vld [vmem:[%s1852] sm:$0xff]
  %v1854 = vld [vmem:[%s1852 + $0x8] sm:$0xff]
  %v1855 = vld [vmem:[%s1852 + $0x10] sm:$0xff]
  %v1856 = vld [vmem:[%s1852 + $0x18] sm:$0xff]
  %s1857 = scalar_lea.vmem %s5, 1
  %v1858 = vld [vmem:[%s1857] sm:$0x1]
  %v1860 = vlaneseq
  %v1861 = vshrl.u32 %v1860, 7
  %v1862 = vsub.s32 0, %v1861
  %v1863 = vrot.slane %v1858, %v1862
  %v1866 = vsel %vm89, %v1850, 0
  %v1869 = vsel %vm89, %v1851, 0
  %1871 = vmatprep.subr.mxu0 0.0
  %1872 = vmatpush1.msra.mxu0 0.0
  %1873 = vmatprep.subr.mxu0 0.0
  %1874 = vmatpush1.msra.mxu0 0.0
  %1875 = vmatprep.subr.mxu0 0.0
  %1876 = vmatpush1.msra.mxu0 0.0
  %1877 = vmatprep.subr.mxu0 0.0
  %1878 = vmatpush1.msra.mxu0 0.0
  %1879 = vmatprep.subr.mxu0 0.0
  %1880 = vmatpush1.msra.mxu0 0.0
  %1881 = vmatprep.subr.mxu0 0.0
  %1882 = vmatpush1.msra.mxu0 0.0
  %1883 = vmatprep.subr.mxu0 0.0
  %1884 = vmatpush1.msra.mxu0 0.0
  %1885 = vmatprep.subr.mxu0 0.0
  %1886 = vmatpush1.msra.mxu0 0.0
  %1887 = vmatprep.subr.mxu0 0.0
  %1888 = vmatpush1.msra.mxu0 0.0
  %1889 = vmatprep.subr.mxu0 0.0
  %1890 = vmatpush1.msra.mxu0 0.0
  %1891 = vmatprep.subr.mxu0 0.0
  %1892 = vmatpush1.msra.mxu0 0.0
  %1893 = vmatprep.subr.mxu0 0.0
  %1894 = vmatpush1.msra.mxu0 0.0
  %1895 = vmatprep.subr.mxu0 0.0
  %1896 = vmatpush1.msra.mxu0 %v1856
  %1897 = vmatprep.subr.mxu0 0.0
  %1898 = vmatpush1.msra.mxu0 %v1855
  %1899 = vmatprep.subr.mxu0 0.0
  %1900 = vmatpush1.msra.mxu0 %v1854
  %1901 = vmatprep.subr.mxu0 0.0
  %1902 = vmatpush1.msra.mxu0 %v1853
  %1903 = vmatprep.subr.mxu0 0.0
  %1904 = vmatpush2.msra.mxu0 0.0
  %1905 = vmatprep.subr.mxu0 0.0
  %1906 = vmatpush2.msra.mxu0 0.0
  %1907 = vmatprep.subr.mxu0 0.0
  %1908 = vmatpush2.msra.mxu0 0.0
  %1909 = vmatprep.subr.mxu0 0.0
  %1910 = vmatpush2.msra.mxu0 0.0
  %1911 = vmatprep.subr.mxu0 0.0
  %1912 = vmatpush2.msra.mxu0 0.0
  %1913 = vmatprep.subr.mxu0 0.0
  %1914 = vmatpush2.msra.mxu0 0.0
  %1915 = vmatprep.subr.mxu0 0.0
  %1916 = vmatpush2.msra.mxu0 0.0
  %1917 = vmatprep.subr.mxu0 0.0
  %1918 = vmatpush2.msra.mxu0 0.0
  %1919 = vmatprep.subr.mxu0 0.0
  %1920 = vmatpush2.msra.mxu0 0.0
  %1921 = vmatprep.subr.mxu0 0.0
  %1922 = vmatpush2.msra.mxu0 0.0
  %1923 = vmatprep.subr.mxu0 0.0
  %1924 = vmatpush2.msra.mxu0 0.0
  %1925 = vmatprep.subr.mxu0 0.0
  %1926 = vmatpush2.msra.mxu0 0.0
  %1927 = vmatprep.subr.mxu0 0.0
  %1928 = vmatpush2.msra.mxu0 0.0
  %1929 = vmatprep.subr.mxu0 0.0
  %1930 = vmatpush2.msra.mxu0 0.0
  %1931 = vmatprep.subr.mxu0 0.0
  %1932 = vmatpush2.msra.mxu0 0.0
  %1933 = vmatprep.subr.mxu0 0.0
  %1934 = vmatpush2.msra.mxu0 0.0
  %1935 = vmatprep.mubr.f32.mxu0 0.0
  %1936 = vmatmul.mubr.f32.gmra.mxu0 %v1866
  %v1937 = vpop.f32.mrf.mxu0
  %v1938 = vadd.f32 %v1863, %v1937
  %v1939 = vpop.f32.mrf.mxu0
  %1940 = vmatprep.mubr.f32.mxu0 0.0
  %1941 = vmatmul.mubr.f32.gmra.mxu0 %v1869
  %v1942 = vpop.f32.mrf.mxu0
  %v1943 = vadd.f32 %v1863, %v1942
  %v1944 = vpop.f32.mrf.mxu0
  %1945 = vdwg.mxu0
  %s1946 = scalar_lea.vmem %s6, 32
  %v1947 = vld [vmem:[%s1946] sm:$0xff]
  %v1948 = vld [vmem:[%s1946 + $0x8] sm:$0xff]
  %v1949 = vld [vmem:[%s1946 + $0x10] sm:$0xff]
  %v1950 = vld [vmem:[%s1946 + $0x18] sm:$0xff]
  %s1951 = scalar_lea.vmem %s7, 1
  %v1952 = vld [vmem:[%s1951] sm:$0x1]
  %v1954 = vlaneseq
  %v1955 = vshrl.u32 %v1954, 7
  %v1956 = vsub.s32 0, %v1955
  %v1957 = vrot.slane %v1952, %v1956
  %1959 = vmatprep.subr.mxu0 0.0
  %1960 = vmatpush1.msra.mxu0 0.0
  %1961 = vmatprep.subr.mxu0 0.0
  %1962 = vmatpush1.msra.mxu0 0.0
  %1963 = vmatprep.subr.mxu0 0.0
  %1964 = vmatpush1.msra.mxu0 0.0
  %1965 = vmatprep.subr.mxu0 0.0
  %1966 = vmatpush1.msra.mxu0 0.0
  %1967 = vmatprep.subr.mxu0 0.0
  %1968 = vmatpush1.msra.mxu0 0.0
  %1969 = vmatprep.subr.mxu0 0.0
  %1970 = vmatpush1.msra.mxu0 0.0
  %1971 = vmatprep.subr.mxu0 0.0
  %1972 = vmatpush1.msra.mxu0 0.0
  %1973 = vmatprep.subr.mxu0 0.0
  %1974 = vmatpush1.msra.mxu0 0.0
  %1975 = vmatprep.subr.mxu0 0.0
  %1976 = vmatpush1.msra.mxu0 0.0
  %1977 = vmatprep.subr.mxu0 0.0
  %1978 = vmatpush1.msra.mxu0 0.0
  %1979 = vmatprep.subr.mxu0 0.0
  %1980 = vmatpush1.msra.mxu0 0.0
  %1981 = vmatprep.subr.mxu0 0.0
  %1982 = vmatpush1.msra.mxu0 0.0
  %1983 = vmatprep.subr.mxu0 0.0
  %1984 = vmatpush1.msra.mxu0 %v1950
  %1985 = vmatprep.subr.mxu0 0.0
  %1986 = vmatpush1.msra.mxu0 %v1949
  %1987 = vmatprep.subr.mxu0 0.0
  %1988 = vmatpush1.msra.mxu0 %v1948
  %1989 = vmatprep.subr.mxu0 0.0
  %1990 = vmatpush1.msra.mxu0 %v1947
  %1991 = vmatprep.subr.mxu0 0.0
  %1992 = vmatpush2.msra.mxu0 0.0
  %1993 = vmatprep.subr.mxu0 0.0
  %1994 = vmatpush2.msra.mxu0 0.0
  %1995 = vmatprep.subr.mxu0 0.0
  %1996 = vmatpush2.msra.mxu0 0.0
  %1997 = vmatprep.subr.mxu0 0.0
  %1998 = vmatpush2.msra.mxu0 0.0
  %1999 = vmatprep.subr.mxu0 0.0
  %2000 = vmatpush2.msra.mxu0 0.0
  %2001 = vmatprep.subr.mxu0 0.0
  %2002 = vmatpush2.msra.mxu0 0.0
  %2003 = vmatprep.subr.mxu0 0.0
  %2004 = vmatpush2.msra.mxu0 0.0
  %2005 = vmatprep.subr.mxu0 0.0
  %2006 = vmatpush2.msra.mxu0 0.0
  %2007 = vmatprep.subr.mxu0 0.0
  %2008 = vmatpush2.msra.mxu0 0.0
  %2009 = vmatprep.subr.mxu0 0.0
  %2010 = vmatpush2.msra.mxu0 0.0
  %2011 = vmatprep.subr.mxu0 0.0
  %2012 = vmatpush2.msra.mxu0 0.0
  %2013 = vmatprep.subr.mxu0 0.0
  %2014 = vmatpush2.msra.mxu0 0.0
  %2015 = vmatprep.subr.mxu0 0.0
  %2016 = vmatpush2.msra.mxu0 0.0
  %2017 = vmatprep.subr.mxu0 0.0
  %2018 = vmatpush2.msra.mxu0 0.0
  %2019 = vmatprep.subr.mxu0 0.0
  %2020 = vmatpush2.msra.mxu0 0.0
  %2021 = vmatprep.subr.mxu0 0.0
  %2022 = vmatpush2.msra.mxu0 0.0
  %2023 = vmatprep.mubr.f32.mxu0 0.0
  %2024 = vmatmul.mubr.f32.gmra.mxu0 %v1866
  %v2025 = vpop.f32.mrf.mxu0
  %v2026 = vadd.f32 %v1957, %v2025
  %v2027 = vpop.f32.mrf.mxu0
  %2028 = vmatprep.mubr.f32.mxu0 0.0
  %2029 = vmatmul.mubr.f32.gmra.mxu0 %v1869
  %v2030 = vpop.f32.mrf.mxu0
  %v2031 = vadd.f32 %v1957, %v2030
  %v2032 = vpop.f32.mrf.mxu0
  %2033 = vdwg.mxu0
  %s2034 = scalar_lea.vmem %s8, 32
  %v2035 = vld [vmem:[%s2034] sm:$0xff]
  %v2036 = vld [vmem:[%s2034 + $0x8] sm:$0xff]
  %v2037 = vld [vmem:[%s2034 + $0x10] sm:$0xff]
  %v2038 = vld [vmem:[%s2034 + $0x18] sm:$0xff]
  %s2039 = scalar_lea.vmem %s9, 1
  %v2040 = vld [vmem:[%s2039] sm:$0x1]
  %v2042 = vlaneseq
  %v2043 = vshrl.u32 %v2042, 7
  %v2044 = vsub.s32 0, %v2043
  %v2045 = vrot.slane %v2040, %v2044
  %2047 = vmatprep.subr.mxu0 0.0
  %2048 = vmatpush1.msra.mxu0 0.0
  %2049 = vmatprep.subr.mxu0 0.0
  %2050 = vmatpush1.msra.mxu0 0.0
  %2051 = vmatprep.subr.mxu0 0.0
  %2052 = vmatpush1.msra.mxu0 0.0
  %2053 = vmatprep.subr.mxu0 0.0
  %2054 = vmatpush1.msra.mxu0 0.0
  %2055 = vmatprep.subr.mxu0 0.0
  %2056 = vmatpush1.msra.mxu0 0.0
  %2057 = vmatprep.subr.mxu0 0.0
  %2058 = vmatpush1.msra.mxu0 0.0
  %2059 = vmatprep.subr.mxu0 0.0
  %2060 = vmatpush1.msra.mxu0 0.0
  %2061 = vmatprep.subr.mxu0 0.0
  %2062 = vmatpush1.msra.mxu0 0.0
  %2063 = vmatprep.subr.mxu0 0.0
  %2064 = vmatpush1.msra.mxu0 0.0
  %2065 = vmatprep.subr.mxu0 0.0
  %2066 = vmatpush1.msra.mxu0 0.0
  %2067 = vmatprep.subr.mxu0 0.0
  %2068 = vmatpush1.msra.mxu0 0.0
  %2069 = vmatprep.subr.mxu0 0.0
  %2070 = vmatpush1.msra.mxu0 0.0
  %2071 = vmatprep.subr.mxu0 0.0
  %2072 = vmatpush1.msra.mxu0 %v2038
  %2073 = vmatprep.subr.mxu0 0.0
  %2074 = vmatpush1.msra.mxu0 %v2037
  %2075 = vmatprep.subr.mxu0 0.0
  %2076 = vmatpush1.msra.mxu0 %v2036
  %2077 = vmatprep.subr.mxu0 0.0
  %2078 = vmatpush1.msra.mxu0 %v2035
  %2079 = vmatprep.subr.mxu0 0.0
  %2080 = vmatpush2.msra.mxu0 0.0
  %2081 = vmatprep.subr.mxu0 0.0
  %2082 = vmatpush2.msra.mxu0 0.0
  %2083 = vmatprep.subr.mxu0 0.0
  %2084 = vmatpush2.msra.mxu0 0.0
  %2085 = vmatprep.subr.mxu0 0.0
  %2086 = vmatpush2.msra.mxu0 0.0
  %2087 = vmatprep.subr.mxu0 0.0
  %2088 = vmatpush2.msra.mxu0 0.0
  %2089 = vmatprep.subr.mxu0 0.0
  %2090 = vmatpush2.msra.mxu0 0.0
  %2091 = vmatprep.subr.mxu0 0.0
  %2092 = vmatpush2.msra.mxu0 0.0
  %2093 = vmatprep.subr.mxu0 0.0
  %2094 = vmatpush2.msra.mxu0 0.0
  %2095 = vmatprep.subr.mxu0 0.0
  %2096 = vmatpush2.msra.mxu0 0.0
  %2097 = vmatprep.subr.mxu0 0.0
  %2098 = vmatpush2.msra.mxu0 0.0
  %2099 = vmatprep.subr.mxu0 0.0
  %2100 = vmatpush2.msra.mxu0 0.0
  %2101 = vmatprep.subr.mxu0 0.0
  %2102 = vmatpush2.msra.mxu0 0.0
  %2103 = vmatprep.subr.mxu0 0.0
  %2104 = vmatpush2.msra.mxu0 0.0
  %2105 = vmatprep.subr.mxu0 0.0
  %2106 = vmatpush2.msra.mxu0 0.0
  %2107 = vmatprep.subr.mxu0 0.0
  %2108 = vmatpush2.msra.mxu0 0.0
  %2109 = vmatprep.subr.mxu0 0.0
  %2110 = vmatpush2.msra.mxu0 0.0
  %2111 = vmatprep.mubr.f32.mxu0 0.0
  %2112 = vmatmul.mubr.f32.gmra.mxu0 %v1866
  %v2113 = vpop.f32.mrf.mxu0
  %v2114 = vadd.f32 %v2045, %v2113
  %v2115 = vpop.f32.mrf.mxu0
  %2116 = vmatprep.mubr.f32.mxu0 0.0
  %2117 = vmatmul.mubr.f32.gmra.mxu0 %v1869
  %v2118 = vpop.f32.mrf.mxu0
  %v2119 = vadd.f32 %v2045, %v2118
  %v2120 = vpop.f32.mrf.mxu0
  %2121 = vdwg.mxu0
  %s2122 = scalar_lea.vmem %s10, 32
  %v2123 = vld [vmem:[%s2122] sm:$0xff]
  %v2124 = vld [vmem:[%s2122 + $0x8] sm:$0xff]
  %v2125 = vld [vmem:[%s2122 + $0x10] sm:$0xff]
  %v2126 = vld [vmem:[%s2122 + $0x18] sm:$0xff]
  %v2128 = vsel %vm401, %v1938, 0
  %v2131 = vsel %vm401, %v1943, 0
  %v2134 = vsel %vm401, %v2026, 0
  %v2137 = vsel %vm401, %v2031, 0
  %2139 = vmatprep.subr.mxu0 0.0
  %2140 = vmatpush1.xpose.msra.mxu0 0.0
  %2141 = vmatprep.subr.mxu0 0.0
  %2142 = vmatpush1.xpose.msra.mxu0 0.0
  %2143 = vmatprep.subr.mxu0 0.0
  %2144 = vmatpush1.xpose.msra.mxu0 0.0
  %2145 = vmatprep.subr.mxu0 0.0
  %2146 = vmatpush1.xpose.msra.mxu0 0.0
  %2147 = vmatprep.subr.mxu0 0.0
  %2148 = vmatpush1.xpose.msra.mxu0 0.0
  %2149 = vmatprep.subr.mxu0 0.0
  %2150 = vmatpush1.xpose.msra.mxu0 0.0
  %2151 = vmatprep.subr.mxu0 0.0
  %2152 = vmatpush1.xpose.msra.mxu0 0.0
  %2153 = vmatprep.subr.mxu0 0.0
  %2154 = vmatpush1.xpose.msra.mxu0 0.0
  %2155 = vmatprep.subr.mxu0 0.0
  %2156 = vmatpush1.xpose.msra.mxu0 0.0
  %2157 = vmatprep.subr.mxu0 0.0
  %2158 = vmatpush1.xpose.msra.mxu0 0.0
  %2159 = vmatprep.subr.mxu0 0.0
  %2160 = vmatpush1.xpose.msra.mxu0 0.0
  %2161 = vmatprep.subr.mxu0 0.0
  %2162 = vmatpush1.xpose.msra.mxu0 0.0
  %2163 = vmatprep.subr.mxu0 0.0
  %2164 = vmatpush1.xpose.msra.mxu0 0.0
  %2165 = vmatprep.subr.mxu0 0.0
  %2166 = vmatpush1.xpose.msra.mxu0 0.0
  %2167 = vmatprep.subr.mxu0 0.0
  %2168 = vmatpush1.xpose.msra.mxu0 %v2137
  %2169 = vmatprep.subr.mxu0 0.0
  %2170 = vmatpush1.xpose.msra.mxu0 %v2134
  %2171 = vmatprep.subr.mxu0 0.0
  %2172 = vmatpush2.xpose.msra.mxu0 0.0
  %2173 = vmatprep.subr.mxu0 0.0
  %2174 = vmatpush2.xpose.msra.mxu0 0.0
  %2175 = vmatprep.subr.mxu0 0.0
  %2176 = vmatpush2.xpose.msra.mxu0 0.0
  %2177 = vmatprep.subr.mxu0 0.0
  %2178 = vmatpush2.xpose.msra.mxu0 0.0
  %2179 = vmatprep.subr.mxu0 0.0
  %2180 = vmatpush2.xpose.msra.mxu0 0.0
  %2181 = vmatprep.subr.mxu0 0.0
  %2182 = vmatpush2.xpose.msra.mxu0 0.0
  %2183 = vmatprep.subr.mxu0 0.0
  %2184 = vmatpush2.xpose.msra.mxu0 0.0
  %2185 = vmatprep.subr.mxu0 0.0
  %2186 = vmatpush2.xpose.msra.mxu0 0.0
  %2187 = vmatprep.subr.mxu0 0.0
  %2188 = vmatpush2.xpose.msra.mxu0 0.0
  %2189 = vmatprep.subr.mxu0 0.0
  %2190 = vmatpush2.xpose.msra.mxu0 0.0
  %2191 = vmatprep.subr.mxu0 0.0
  %2192 = vmatpush2.xpose.msra.mxu0 0.0
  %2193 = vmatprep.subr.mxu0 0.0
  %2194 = vmatpush2.xpose.msra.mxu0 0.0
  %2195 = vmatprep.subr.mxu0 0.0
  %2196 = vmatpush2.xpose.msra.mxu0 0.0
  %2197 = vmatprep.subr.mxu0 0.0
  %2198 = vmatpush2.xpose.msra.mxu0 0.0
  %2199 = vmatprep.subr.mxu0 0.0
  %2200 = vmatpush2.xpose.msra.mxu0 0.0
  %2201 = vmatprep.subr.mxu0 0.0
  %2202 = vmatpush2.xpose.msra.mxu0 0.0
  %2203 = vmatprep.mubr.f32.mxu0 0.0
  %2204 = vmatmul.mubr.f32.gmra.mxu0 %v2128
  %v2205 = vpop.f32.mrf.mxu0
  %v2206 = vadd.f32 0.0, %v2205
  %v2207 = vpop.f32.mrf.mxu0
  %2208 = vmatprep.mubr.f32.mxu0 0.0
  %2209 = vmatmul.mubr.f32.gmra.mxu0 %v2131
  %v2210 = vpop.f32.mrf.mxu0
  %v2211 = vadd.f32 0.0, %v2210
  %v2212 = vpop.f32.mrf.mxu0
  %2213 = vdwg.mxu0
  %v2214 = vmul.f32 %v2206, 0.35355338
  %v2215 = vmul.f32 %v2211, 0.35355338
  %v2216 = vadd.f32 %v2214, %v85
  %v2217 = vadd.f32 %v2215, %v86
  %v2218 = vsel %vm493, %v2216, -inf
  %2219 = vmax.xlane.f32.xlu0 %v2218
  %v2220 = vpop.xlane.xlu0 %2219
  %v2221 = vsel %vm493, %v2217, -inf
  %2222 = vmax.xlane.f32.xlu0 %v2221
  %v2223 = vpop.xlane.xlu0 %2222
  %v2224 = vsub.f32 %v2216, %v2220
  %v2225 = vsub.f32 %v2217, %v2223
  %v2226 = vmul.f32 %v2224, 1.442695
  %v2227 = vpow.pop %v2226
  %v2228 = vmul.f32 %v2225, 1.442695
  %v2229 = vpow.pop %v2228
  %v2230 = vsel %vm493, %v2227, 0.0
  %2231 = vadd.xlane.f32.xlu0 %v2230
  %v2232 = vpop.xlane.xlu0 %2231
  %v2233 = vsel %vm493, %v2229, 0.0
  %2234 = vadd.xlane.f32.xlu0 %v2233
  %v2235 = vpop.xlane.xlu0 %2234
  %v2236 = vrcp.pop %v2232
  %v2237 = vrcp.pop %v2235
  %v2238 = vmul.f32 %v2227, %v2236
  %v2239 = vmul.f32 %v2229, %v2237
  %v2241 = vsel %vm493, %v2238, 0
  %v2244 = vsel %vm493, %v2239, 0
  %2246 = vmatprep.subr.mxu0 0.0
  %2247 = vmatpush1.msra.mxu0 0.0
  %2248 = vmatprep.subr.mxu0 0.0
  %2249 = vmatpush1.msra.mxu0 0.0
  %2250 = vmatprep.subr.mxu0 0.0
  %2251 = vmatpush1.msra.mxu0 0.0
  %2252 = vmatprep.subr.mxu0 0.0
  %2253 = vmatpush1.msra.mxu0 0.0
  %2254 = vmatprep.subr.mxu0 0.0
  %2255 = vmatpush1.msra.mxu0 0.0
  %2256 = vmatprep.subr.mxu0 0.0
  %2257 = vmatpush1.msra.mxu0 0.0
  %2258 = vmatprep.subr.mxu0 0.0
  %2259 = vmatpush1.msra.mxu0 0.0
  %2260 = vmatprep.subr.mxu0 0.0
  %2261 = vmatpush1.msra.mxu0 0.0
  %2262 = vmatprep.subr.mxu0 0.0
  %2263 = vmatpush1.msra.mxu0 0.0
  %2264 = vmatprep.subr.mxu0 0.0
  %2265 = vmatpush1.msra.mxu0 0.0
  %2266 = vmatprep.subr.mxu0 0.0
  %2267 = vmatpush1.msra.mxu0 0.0
  %2268 = vmatprep.subr.mxu0 0.0
  %2269 = vmatpush1.msra.mxu0 0.0
  %2270 = vmatprep.subr.mxu0 0.0
  %2271 = vmatpush1.msra.mxu0 0.0
  %2272 = vmatprep.subr.mxu0 0.0
  %2273 = vmatpush1.msra.mxu0 0.0
  %2274 = vmatprep.subr.mxu0 0.0
  %2275 = vmatpush1.msra.mxu0 %v2119
  %2276 = vmatprep.subr.mxu0 0.0
  %2277 = vmatpush1.msra.mxu0 %v2114
  %2278 = vmatprep.subr.mxu0 0.0
  %2279 = vmatpush2.msra.mxu0 0.0
  %2280 = vmatprep.subr.mxu0 0.0
  %2281 = vmatpush2.msra.mxu0 0.0
  %2282 = vmatprep.subr.mxu0 0.0
  %2283 = vmatpush2.msra.mxu0 0.0
  %2284 = vmatprep.subr.mxu0 0.0
  %2285 = vmatpush2.msra.mxu0 0.0
  %2286 = vmatprep.subr.mxu0 0.0
  %2287 = vmatpush2.msra.mxu0 0.0
  %2288 = vmatprep.subr.mxu0 0.0
  %2289 = vmatpush2.msra.mxu0 0.0
  %2290 = vmatprep.subr.mxu0 0.0
  %2291 = vmatpush2.msra.mxu0 0.0
  %2292 = vmatprep.subr.mxu0 0.0
  %2293 = vmatpush2.msra.mxu0 0.0
  %2294 = vmatprep.subr.mxu0 0.0
  %2295 = vmatpush2.msra.mxu0 0.0
  %2296 = vmatprep.subr.mxu0 0.0
  %2297 = vmatpush2.msra.mxu0 0.0
  %2298 = vmatprep.subr.mxu0 0.0
  %2299 = vmatpush2.msra.mxu0 0.0
  %2300 = vmatprep.subr.mxu0 0.0
  %2301 = vmatpush2.msra.mxu0 0.0
  %2302 = vmatprep.subr.mxu0 0.0
  %2303 = vmatpush2.msra.mxu0 0.0
  %2304 = vmatprep.subr.mxu0 0.0
  %2305 = vmatpush2.msra.mxu0 0.0
  %2306 = vmatprep.subr.mxu0 0.0
  %2307 = vmatpush2.msra.mxu0 0.0
  %2308 = vmatprep.subr.mxu0 0.0
  %2309 = vmatpush2.msra.mxu0 0.0
  %2310 = vmatprep.mubr.f32.mxu0 0.0
  %2311 = vmatmul.mubr.f32.gmra.mxu0 %v2241
  %v2312 = vpop.f32.mrf.mxu0
  %v2313 = vadd.f32 0.0, %v2312
  %v2314 = vpop.f32.mrf.mxu0
  %2315 = vmatprep.mubr.f32.mxu0 0.0
  %2316 = vmatmul.mubr.f32.gmra.mxu0 %v2244
  %v2317 = vpop.f32.mrf.mxu0
  %v2318 = vadd.f32 0.0, %v2317
  %v2319 = vpop.f32.mrf.mxu0
  %2320 = vdwg.mxu0
  %2321 = vrot.lane.b32.xlu0 %v1938, 120
  %v2322 = vpop.permute.xlu0 %2321
  %2323 = vrot.lane.b32.xlu0 %v1943, 120
  %v2324 = vpop.permute.xlu0 %2323
  %2325 = vrot.lane.b32.xlu0 %v2026, 120
  %v2326 = vpop.permute.xlu0 %2325
  %2327 = vrot.lane.b32.xlu0 %v2031, 120
  %v2328 = vpop.permute.xlu0 %2327
  %v2329 = vsel %vm401, %v2322, 0
  %v2331 = vsel %vm401, %v2324, 0
  %v2333 = vsel %vm401, %v2326, 0
  %v2335 = vsel %vm401, %v2328, 0
  %2337 = vmatprep.subr.mxu0 0.0
  %2338 = vmatpush1.xpose.msra.mxu0 0.0
  %2339 = vmatprep.subr.mxu0 0.0
  %2340 = vmatpush1.xpose.msra.mxu0 0.0
  %2341 = vmatprep.subr.mxu0 0.0
  %2342 = vmatpush1.xpose.msra.mxu0 0.0
  %2343 = vmatprep.subr.mxu0 0.0
  %2344 = vmatpush1.xpose.msra.mxu0 0.0
  %2345 = vmatprep.subr.mxu0 0.0
  %2346 = vmatpush1.xpose.msra.mxu0 0.0
  %2347 = vmatprep.subr.mxu0 0.0
  %2348 = vmatpush1.xpose.msra.mxu0 0.0
  %2349 = vmatprep.subr.mxu0 0.0
  %2350 = vmatpush1.xpose.msra.mxu0 0.0
  %2351 = vmatprep.subr.mxu0 0.0
  %2352 = vmatpush1.xpose.msra.mxu0 0.0
  %2353 = vmatprep.subr.mxu0 0.0
  %2354 = vmatpush1.xpose.msra.mxu0 0.0
  %2355 = vmatprep.subr.mxu0 0.0
  %2356 = vmatpush1.xpose.msra.mxu0 0.0
  %2357 = vmatprep.subr.mxu0 0.0
  %2358 = vmatpush1.xpose.msra.mxu0 0.0
  %2359 = vmatprep.subr.mxu0 0.0
  %2360 = vmatpush1.xpose.msra.mxu0 0.0
  %2361 = vmatprep.subr.mxu0 0.0
  %2362 = vmatpush1.xpose.msra.mxu0 0.0
  %2363 = vmatprep.subr.mxu0 0.0
  %2364 = vmatpush1.xpose.msra.mxu0 0.0
  %2365 = vmatprep.subr.mxu0 0.0
  %2366 = vmatpush1.xpose.msra.mxu0 %v2335
  %2367 = vmatprep.subr.mxu0 0.0
  %2368 = vmatpush1.xpose.msra.mxu0 %v2333
  %2369 = vmatprep.subr.mxu0 0.0
  %2370 = vmatpush2.xpose.msra.mxu0 0.0
  %2371 = vmatprep.subr.mxu0 0.0
  %2372 = vmatpush2.xpose.msra.mxu0 0.0
  %2373 = vmatprep.subr.mxu0 0.0
  %2374 = vmatpush2.xpose.msra.mxu0 0.0
  %2375 = vmatprep.subr.mxu0 0.0
  %2376 = vmatpush2.xpose.msra.mxu0 0.0
  %2377 = vmatprep.subr.mxu0 0.0
  %2378 = vmatpush2.xpose.msra.mxu0 0.0
  %2379 = vmatprep.subr.mxu0 0.0
  %2380 = vmatpush2.xpose.msra.mxu0 0.0
  %2381 = vmatprep.subr.mxu0 0.0
  %2382 = vmatpush2.xpose.msra.mxu0 0.0
  %2383 = vmatprep.subr.mxu0 0.0
  %2384 = vmatpush2.xpose.msra.mxu0 0.0
  %2385 = vmatprep.subr.mxu0 0.0
  %2386 = vmatpush2.xpose.msra.mxu0 0.0
  %2387 = vmatprep.subr.mxu0 0.0
  %2388 = vmatpush2.xpose.msra.mxu0 0.0
  %2389 = vmatprep.subr.mxu0 0.0
  %2390 = vmatpush2.xpose.msra.mxu0 0.0
  %2391 = vmatprep.subr.mxu0 0.0
  %2392 = vmatpush2.xpose.msra.mxu0 0.0
  %2393 = vmatprep.subr.mxu0 0.0
  %2394 = vmatpush2.xpose.msra.mxu0 0.0
  %2395 = vmatprep.subr.mxu0 0.0
  %2396 = vmatpush2.xpose.msra.mxu0 0.0
  %2397 = vmatprep.subr.mxu0 0.0
  %2398 = vmatpush2.xpose.msra.mxu0 0.0
  %2399 = vmatprep.subr.mxu0 0.0
  %2400 = vmatpush2.xpose.msra.mxu0 0.0
  %2401 = vmatprep.mubr.f32.mxu0 0.0
  %2402 = vmatmul.mubr.f32.gmra.mxu0 %v2329
  %v2403 = vpop.f32.mrf.mxu0
  %v2404 = vadd.f32 0.0, %v2403
  %v2405 = vpop.f32.mrf.mxu0
  %2406 = vmatprep.mubr.f32.mxu0 0.0
  %2407 = vmatmul.mubr.f32.gmra.mxu0 %v2331
  %v2408 = vpop.f32.mrf.mxu0
  %v2409 = vadd.f32 0.0, %v2408
  %v2410 = vpop.f32.mrf.mxu0
  %2411 = vdwg.mxu0
  %v2412 = vmul.f32 %v2404, 0.35355338
  %v2413 = vmul.f32 %v2409, 0.35355338
  %v2414 = vadd.f32 %v2412, %v85
  %v2415 = vadd.f32 %v2413, %v86
  %v2416 = vsel %vm493, %v2414, -inf
  %2417 = vmax.xlane.f32.xlu0 %v2416
  %v2418 = vpop.xlane.xlu0 %2417
  %v2419 = vsel %vm493, %v2415, -inf
  %2420 = vmax.xlane.f32.xlu0 %v2419
  %v2421 = vpop.xlane.xlu0 %2420
  %v2422 = vsub.f32 %v2414, %v2418
  %v2423 = vsub.f32 %v2415, %v2421
  %v2424 = vmul.f32 %v2422, 1.442695
  %v2425 = vpow.pop %v2424
  %v2426 = vmul.f32 %v2423, 1.442695
  %v2427 = vpow.pop %v2426
  %v2428 = vsel %vm493, %v2425, 0.0
  %2429 = vadd.xlane.f32.xlu0 %v2428
  %v2430 = vpop.xlane.xlu0 %2429
  %v2431 = vsel %vm493, %v2427, 0.0
  %2432 = vadd.xlane.f32.xlu0 %v2431
  %v2433 = vpop.xlane.xlu0 %2432
  %v2434 = vrcp.pop %v2430
  %v2435 = vrcp.pop %v2433
  %v2436 = vmul.f32 %v2425, %v2434
  %v2437 = vmul.f32 %v2427, %v2435
  %2440 = vrot.lane.b32.xlu0 %v2114, 120
  %v2441 = vpop.permute.xlu0 %2440
  %2442 = vrot.lane.b32.xlu0 %v2119, 120
  %v2443 = vpop.permute.xlu0 %2442
  %v2447 = vsel %vm493, %v2436, 0
  %v2450 = vsel %vm493, %v2437, 0
  %2452 = vmatprep.subr.mxu0 0.0
  %2453 = vmatpush1.msra.mxu0 0.0
  %2454 = vmatprep.subr.mxu0 0.0
  %2455 = vmatpush1.msra.mxu0 0.0
  %2456 = vmatprep.subr.mxu0 0.0
  %2457 = vmatpush1.msra.mxu0 0.0
  %2458 = vmatprep.subr.mxu0 0.0
  %2459 = vmatpush1.msra.mxu0 0.0
  %2460 = vmatprep.subr.mxu0 0.0
  %2461 = vmatpush1.msra.mxu0 0.0
  %2462 = vmatprep.subr.mxu0 0.0
  %2463 = vmatpush1.msra.mxu0 0.0
  %2464 = vmatprep.subr.mxu0 0.0
  %2465 = vmatpush1.msra.mxu0 0.0
  %2466 = vmatprep.subr.mxu0 0.0
  %2467 = vmatpush1.msra.mxu0 0.0
  %2468 = vmatprep.subr.mxu0 0.0
  %2469 = vmatpush1.msra.mxu0 0.0
  %2470 = vmatprep.subr.mxu0 0.0
  %2471 = vmatpush1.msra.mxu0 0.0
  %2472 = vmatprep.subr.mxu0 0.0
  %2473 = vmatpush1.msra.mxu0 0.0
  %2474 = vmatprep.subr.mxu0 0.0
  %2475 = vmatpush1.msra.mxu0 0.0
  %2476 = vmatprep.subr.mxu0 0.0
  %2477 = vmatpush1.msra.mxu0 0.0
  %2478 = vmatprep.subr.mxu0 0.0
  %2479 = vmatpush1.msra.mxu0 0.0
  %2480 = vmatprep.subr.mxu0 0.0
  %2481 = vmatpush1.msra.mxu0 %v2443
  %2482 = vmatprep.subr.mxu0 0.0
  %2483 = vmatpush1.msra.mxu0 %v2441
  %2484 = vmatprep.subr.mxu0 0.0
  %2485 = vmatpush2.msra.mxu0 0.0
  %2486 = vmatprep.subr.mxu0 0.0
  %2487 = vmatpush2.msra.mxu0 0.0
  %2488 = vmatprep.subr.mxu0 0.0
  %2489 = vmatpush2.msra.mxu0 0.0
  %2490 = vmatprep.subr.mxu0 0.0
  %2491 = vmatpush2.msra.mxu0 0.0
  %2492 = vmatprep.subr.mxu0 0.0
  %2493 = vmatpush2.msra.mxu0 0.0
  %2494 = vmatprep.subr.mxu0 0.0
  %2495 = vmatpush2.msra.mxu0 0.0
  %2496 = vmatprep.subr.mxu0 0.0
  %2497 = vmatpush2.msra.mxu0 0.0
  %2498 = vmatprep.subr.mxu0 0.0
  %2499 = vmatpush2.msra.mxu0 0.0
  %2500 = vmatprep.subr.mxu0 0.0
  %2501 = vmatpush2.msra.mxu0 0.0
  %2502 = vmatprep.subr.mxu0 0.0
  %2503 = vmatpush2.msra.mxu0 0.0
  %2504 = vmatprep.subr.mxu0 0.0
  %2505 = vmatpush2.msra.mxu0 0.0
  %2506 = vmatprep.subr.mxu0 0.0
  %2507 = vmatpush2.msra.mxu0 0.0
  %2508 = vmatprep.subr.mxu0 0.0
  %2509 = vmatpush2.msra.mxu0 0.0
  %2510 = vmatprep.subr.mxu0 0.0
  %2511 = vmatpush2.msra.mxu0 0.0
  %2512 = vmatprep.subr.mxu0 0.0
  %2513 = vmatpush2.msra.mxu0 0.0
  %2514 = vmatprep.subr.mxu0 0.0
  %2515 = vmatpush2.msra.mxu0 0.0
  %2516 = vmatprep.mubr.f32.mxu0 0.0
  %2517 = vmatmul.mubr.f32.gmra.mxu0 %v2447
  %v2518 = vpop.f32.mrf.mxu0
  %v2519 = vadd.f32 0.0, %v2518
  %v2520 = vpop.f32.mrf.mxu0
  %2521 = vmatprep.mubr.f32.mxu0 0.0
  %2522 = vmatmul.mubr.f32.gmra.mxu0 %v2450
  %v2523 = vpop.f32.mrf.mxu0
  %v2524 = vadd.f32 0.0, %v2523
  %v2525 = vpop.f32.mrf.mxu0
  %2526 = vdwg.mxu0
  %v2528 = vsel %vm401, %v2519, 0
  %v2531 = vsel %vm401, %v2524, 0
  %2533 = vmatprep.subr.mxu0 0.0
  %2534 = vmatpush1.msra.mxu0 0.0
  %2535 = vmatprep.subr.mxu0 0.0
  %2536 = vmatpush1.msra.mxu0 0.0
  %2537 = vmatprep.subr.mxu0 0.0
  %2538 = vmatpush1.msra.mxu0 0.0
  %2539 = vmatprep.subr.mxu0 0.0
  %2540 = vmatpush1.msra.mxu0 0.0
  %2541 = vmatprep.subr.mxu0 0.0
  %2542 = vmatpush1.msra.mxu0 0.0
  %2543 = vmatprep.subr.mxu0 0.0
  %2544 = vmatpush1.msra.mxu0 0.0
  %2545 = vmatprep.subr.mxu0 0.0
  %2546 = vmatpush1.msra.mxu0 0.0
  %2547 = vmatprep.subr.mxu0 0.0
  %2548 = vmatpush1.msra.mxu0 0.0
  %2549 = vmatprep.subr.mxu0 0.0
  %2550 = vmatpush1.msra.mxu0 0.0
  %2551 = vmatprep.subr.mxu0 0.0
  %2552 = vmatpush1.msra.mxu0 0.0
  %2553 = vmatprep.subr.mxu0 0.0
  %2554 = vmatpush1.msra.mxu0 0.0
  %2555 = vmatprep.subr.mxu0 0.0
  %2556 = vmatpush1.msra.mxu0 0.0
  %2557 = vmatprep.subr.mxu0 0.0
  %2558 = vmatpush1.msra.mxu0 0.0
  %2559 = vmatprep.subr.mxu0 0.0
  %2560 = vmatpush1.msra.mxu0 0.0
  %2561 = vmatprep.subr.mxu0 0.0
  %2562 = vmatpush1.msra.mxu0 0.0
  %2563 = vmatprep.subr.mxu0 0.0
  %2564 = vmatpush1.msra.mxu0 %v2124
  %2565 = vmatprep.subr.mxu0 0.0
  %2566 = vmatpush2.msra.mxu0 0.0
  %2567 = vmatprep.subr.mxu0 0.0
  %2568 = vmatpush2.msra.mxu0 0.0
  %2569 = vmatprep.subr.mxu0 0.0
  %2570 = vmatpush2.msra.mxu0 0.0
  %2571 = vmatprep.subr.mxu0 0.0
  %2572 = vmatpush2.msra.mxu0 0.0
  %2573 = vmatprep.subr.mxu0 0.0
  %2574 = vmatpush2.msra.mxu0 0.0
  %2575 = vmatprep.subr.mxu0 0.0
  %2576 = vmatpush2.msra.mxu0 0.0
  %2577 = vmatprep.subr.mxu0 0.0
  %2578 = vmatpush2.msra.mxu0 0.0
  %2579 = vmatprep.subr.mxu0 0.0
  %2580 = vmatpush2.msra.mxu0 0.0
  %2581 = vmatprep.subr.mxu0 0.0
  %2582 = vmatpush2.msra.mxu0 0.0
  %2583 = vmatprep.subr.mxu0 0.0
  %2584 = vmatpush2.msra.mxu0 0.0
  %2585 = vmatprep.subr.mxu0 0.0
  %2586 = vmatpush2.msra.mxu0 0.0
  %2587 = vmatprep.subr.mxu0 0.0
  %2588 = vmatpush2.msra.mxu0 0.0
  %2589 = vmatprep.subr.mxu0 0.0
  %2590 = vmatpush2.msra.mxu0 0.0
  %2591 = vmatprep.subr.mxu0 0.0
  %2592 = vmatpush2.msra.mxu0 0.0
  %2593 = vmatprep.subr.mxu0 0.0
  %2594 = vmatpush2.msra.mxu0 0.0
  %2595 = vmatprep.subr.mxu0 0.0
  %2596 = vmatpush2.msra.mxu0 0.0
  %2597 = vmatprep.mubr.f32.mxu0 0.0
  %2598 = vmatmul.mubr.f32.gmra.mxu0 %v2528
  %v2599 = vpop.f32.mrf.mxu0
  %v2600 = vadd.f32 0.0, %v2599
  %v2601 = vpop.f32.mrf.mxu0
  %2602 = vmatprep.mubr.f32.mxu0 0.0
  %2603 = vmatmul.mubr.f32.gmra.mxu0 %v2531
  %v2604 = vpop.f32.mrf.mxu0
  %v2605 = vadd.f32 0.0, %v2604
  %v2606 = vpop.f32.mrf.mxu0
  %2607 = vdwg.mxu0
  %v2609 = vsel %vm401, %v2313, 0
  %v2612 = vsel %vm401, %v2318, 0
  %2614 = vmatprep.subr.mxu0 0.0
  %2615 = vmatpush1.msra.mxu0 0.0
  %2616 = vmatprep.subr.mxu0 0.0
  %2617 = vmatpush1.msra.mxu0 0.0
  %2618 = vmatprep.subr.mxu0 0.0
  %2619 = vmatpush1.msra.mxu0 0.0
  %2620 = vmatprep.subr.mxu0 0.0
  %2621 = vmatpush1.msra.mxu0 0.0
  %2622 = vmatprep.subr.mxu0 0.0
  %2623 = vmatpush1.msra.mxu0 0.0
  %2624 = vmatprep.subr.mxu0 0.0
  %2625 = vmatpush1.msra.mxu0 0.0
  %2626 = vmatprep.subr.mxu0 0.0
  %2627 = vmatpush1.msra.mxu0 0.0
  %2628 = vmatprep.subr.mxu0 0.0
  %2629 = vmatpush1.msra.mxu0 0.0
  %2630 = vmatprep.subr.mxu0 0.0
  %2631 = vmatpush1.msra.mxu0 0.0
  %2632 = vmatprep.subr.mxu0 0.0
  %2633 = vmatpush1.msra.mxu0 0.0
  %2634 = vmatprep.subr.mxu0 0.0
  %2635 = vmatpush1.msra.mxu0 0.0
  %2636 = vmatprep.subr.mxu0 0.0
  %2637 = vmatpush1.msra.mxu0 0.0
  %2638 = vmatprep.subr.mxu0 0.0
  %2639 = vmatpush1.msra.mxu0 0.0
  %2640 = vmatprep.subr.mxu0 0.0
  %2641 = vmatpush1.msra.mxu0 0.0
  %2642 = vmatprep.subr.mxu0 0.0
  %2643 = vmatpush1.msra.mxu0 0.0
  %2644 = vmatprep.subr.mxu0 0.0
  %2645 = vmatpush1.msra.mxu0 %v2123
  %2646 = vmatprep.subr.mxu0 0.0
  %2647 = vmatpush2.msra.mxu0 0.0
  %2648 = vmatprep.subr.mxu0 0.0
  %2649 = vmatpush2.msra.mxu0 0.0
  %2650 = vmatprep.subr.mxu0 0.0
  %2651 = vmatpush2.msra.mxu0 0.0
  %2652 = vmatprep.subr.mxu0 0.0
  %2653 = vmatpush2.msra.mxu0 0.0
  %2654 = vmatprep.subr.mxu0 0.0
  %2655 = vmatpush2.msra.mxu0 0.0
  %2656 = vmatprep.subr.mxu0 0.0
  %2657 = vmatpush2.msra.mxu0 0.0
  %2658 = vmatprep.subr.mxu0 0.0
  %2659 = vmatpush2.msra.mxu0 0.0
  %2660 = vmatprep.subr.mxu0 0.0
  %2661 = vmatpush2.msra.mxu0 0.0
  %2662 = vmatprep.subr.mxu0 0.0
  %2663 = vmatpush2.msra.mxu0 0.0
  %2664 = vmatprep.subr.mxu0 0.0
  %2665 = vmatpush2.msra.mxu0 0.0
  %2666 = vmatprep.subr.mxu0 0.0
  %2667 = vmatpush2.msra.mxu0 0.0
  %2668 = vmatprep.subr.mxu0 0.0
  %2669 = vmatpush2.msra.mxu0 0.0
  %2670 = vmatprep.subr.mxu0 0.0
  %2671 = vmatpush2.msra.mxu0 0.0
  %2672 = vmatprep.subr.mxu0 0.0
  %2673 = vmatpush2.msra.mxu0 0.0
  %2674 = vmatprep.subr.mxu0 0.0
  %2675 = vmatpush2.msra.mxu0 0.0
  %2676 = vmatprep.subr.mxu0 0.0
  %2677 = vmatpush2.msra.mxu0 0.0
  %2678 = vmatprep.mubr.f32.mxu0 0.0
  %2679 = vmatmul.mubr.f32.gmra.mxu0 %v2609
  %v2680 = vpop.f32.mrf.mxu0
  %v2681 = vadd.f32 %v2600, %v2680
  %v2682 = vpop.f32.mrf.mxu0
  %2683 = vmatprep.mubr.f32.mxu0 0.0
  %2684 = vmatmul.mubr.f32.gmra.mxu0 %v2612
  %v2685 = vpop.f32.mrf.mxu0
  %v2686 = vadd.f32 %v2605, %v2685
  %v2687 = vpop.f32.mrf.mxu0
  %2688 = vdwg.mxu0
  %2689 = vrot.lane.b32.xlu0 %v1938, 112
  %v2690 = vpop.permute.xlu0 %2689
  %2691 = vrot.lane.b32.xlu0 %v1943, 112
  %v2692 = vpop.permute.xlu0 %2691
  %2693 = vrot.lane.b32.xlu0 %v2026, 112
  %v2694 = vpop.permute.xlu0 %2693
  %2695 = vrot.lane.b32.xlu0 %v2031, 112
  %v2696 = vpop.permute.xlu0 %2695
  %v2697 = vsel %vm401, %v2690, 0
  %v2699 = vsel %vm401, %v2692, 0
  %v2701 = vsel %vm401, %v2694, 0
  %v2703 = vsel %vm401, %v2696, 0
  %2705 = vmatprep.subr.mxu0 0.0
  %2706 = vmatpush1.xpose.msra.mxu0 0.0
  %2707 = vmatprep.subr.mxu0 0.0
  %2708 = vmatpush1.xpose.msra.mxu0 0.0
  %2709 = vmatprep.subr.mxu0 0.0
  %2710 = vmatpush1.xpose.msra.mxu0 0.0
  %2711 = vmatprep.subr.mxu0 0.0
  %2712 = vmatpush1.xpose.msra.mxu0 0.0
  %2713 = vmatprep.subr.mxu0 0.0
  %2714 = vmatpush1.xpose.msra.mxu0 0.0
  %2715 = vmatprep.subr.mxu0 0.0
  %2716 = vmatpush1.xpose.msra.mxu0 0.0
  %2717 = vmatprep.subr.mxu0 0.0
  %2718 = vmatpush1.xpose.msra.mxu0 0.0
  %2719 = vmatprep.subr.mxu0 0.0
  %2720 = vmatpush1.xpose.msra.mxu0 0.0
  %2721 = vmatprep.subr.mxu0 0.0
  %2722 = vmatpush1.xpose.msra.mxu0 0.0
  %2723 = vmatprep.subr.mxu0 0.0
  %2724 = vmatpush1.xpose.msra.mxu0 0.0
  %2725 = vmatprep.subr.mxu0 0.0
  %2726 = vmatpush1.xpose.msra.mxu0 0.0
  %2727 = vmatprep.subr.mxu0 0.0
  %2728 = vmatpush1.xpose.msra.mxu0 0.0
  %2729 = vmatprep.subr.mxu0 0.0
  %2730 = vmatpush1.xpose.msra.mxu0 0.0
  %2731 = vmatprep.subr.mxu0 0.0
  %2732 = vmatpush1.xpose.msra.mxu0 0.0
  %2733 = vmatprep.subr.mxu0 0.0
  %2734 = vmatpush1.xpose.msra.mxu0 %v2703
  %2735 = vmatprep.subr.mxu0 0.0
  %2736 = vmatpush1.xpose.msra.mxu0 %v2701
  %2737 = vmatprep.subr.mxu0 0.0
  %2738 = vmatpush2.xpose.msra.mxu0 0.0
  %2739 = vmatprep.subr.mxu0 0.0
  %2740 = vmatpush2.xpose.msra.mxu0 0.0
  %2741 = vmatprep.subr.mxu0 0.0
  %2742 = vmatpush2.xpose.msra.mxu0 0.0
  %2743 = vmatprep.subr.mxu0 0.0
  %2744 = vmatpush2.xpose.msra.mxu0 0.0
  %2745 = vmatprep.subr.mxu0 0.0
  %2746 = vmatpush2.xpose.msra.mxu0 0.0
  %2747 = vmatprep.subr.mxu0 0.0
  %2748 = vmatpush2.xpose.msra.mxu0 0.0
  %2749 = vmatprep.subr.mxu0 0.0
  %2750 = vmatpush2.xpose.msra.mxu0 0.0
  %2751 = vmatprep.subr.mxu0 0.0
  %2752 = vmatpush2.xpose.msra.mxu0 0.0
  %2753 = vmatprep.subr.mxu0 0.0
  %2754 = vmatpush2.xpose.msra.mxu0 0.0
  %2755 = vmatprep.subr.mxu0 0.0
  %2756 = vmatpush2.xpose.msra.mxu0 0.0
  %2757 = vmatprep.subr.mxu0 0.0
  %2758 = vmatpush2.xpose.msra.mxu0 0.0
  %2759 = vmatprep.subr.mxu0 0.0
  %2760 = vmatpush2.xpose.msra.mxu0 0.0
  %2761 = vmatprep.subr.mxu0 0.0
  %2762 = vmatpush2.xpose.msra.mxu0 0.0
  %2763 = vmatprep.subr.mxu0 0.0
  %2764 = vmatpush2.xpose.msra.mxu0 0.0
  %2765 = vmatprep.subr.mxu0 0.0
  %2766 = vmatpush2.xpose.msra.mxu0 0.0
  %2767 = vmatprep.subr.mxu0 0.0
  %2768 = vmatpush2.xpose.msra.mxu0 0.0
  %2769 = vmatprep.mubr.f32.mxu0 0.0
  %2770 = vmatmul.mubr.f32.gmra.mxu0 %v2697
  %v2771 = vpop.f32.mrf.mxu0
  %v2772 = vadd.f32 0.0, %v2771
  %v2773 = vpop.f32.mrf.mxu0
  %2774 = vmatprep.mubr.f32.mxu0 0.0
  %2775 = vmatmul.mubr.f32.gmra.mxu0 %v2699
  %v2776 = vpop.f32.mrf.mxu0
  %v2777 = vadd.f32 0.0, %v2776
  %v2778 = vpop.f32.mrf.mxu0
  %2779 = vdwg.mxu0
  %v2780 = vmul.f32 %v2772, 0.35355338
  %v2781 = vmul.f32 %v2777, 0.35355338
  %v2782 = vadd.f32 %v2780, %v85
  %v2783 = vadd.f32 %v2781, %v86
  %v2784 = vsel %vm493, %v2782, -inf
  %2785 = vmax.xlane.f32.xlu0 %v2784
  %v2786 = vpop.xlane.xlu0 %2785
  %v2787 = vsel %vm493, %v2783, -inf
  %2788 = vmax.xlane.f32.xlu0 %v2787
  %v2789 = vpop.xlane.xlu0 %2788
  %v2790 = vsub.f32 %v2782, %v2786
  %v2791 = vsub.f32 %v2783, %v2789
  %v2792 = vmul.f32 %v2790, 1.442695
  %v2793 = vpow.pop %v2792
  %v2794 = vmul.f32 %v2791, 1.442695
  %v2795 = vpow.pop %v2794
  %v2796 = vsel %vm493, %v2793, 0.0
  %2797 = vadd.xlane.f32.xlu0 %v2796
  %v2798 = vpop.xlane.xlu0 %2797
  %v2799 = vsel %vm493, %v2795, 0.0
  %2800 = vadd.xlane.f32.xlu0 %v2799
  %v2801 = vpop.xlane.xlu0 %2800
  %v2802 = vrcp.pop %v2798
  %v2803 = vrcp.pop %v2801
  %v2804 = vmul.f32 %v2793, %v2802
  %v2805 = vmul.f32 %v2795, %v2803
  %2806 = vrot.lane.b32.xlu0 %v2114, 112
  %v2807 = vpop.permute.xlu0 %2806
  %2808 = vrot.lane.b32.xlu0 %v2119, 112
  %v2809 = vpop.permute.xlu0 %2808
  %v2813 = vsel %vm493, %v2804, 0
  %v2816 = vsel %vm493, %v2805, 0
  %2818 = vmatprep.subr.mxu0 0.0
  %2819 = vmatpush1.msra.mxu0 0.0
  %2820 = vmatprep.subr.mxu0 0.0
  %2821 = vmatpush1.msra.mxu0 0.0
  %2822 = vmatprep.subr.mxu0 0.0
  %2823 = vmatpush1.msra.mxu0 0.0
  %2824 = vmatprep.subr.mxu0 0.0
  %2825 = vmatpush1.msra.mxu0 0.0
  %2826 = vmatprep.subr.mxu0 0.0
  %2827 = vmatpush1.msra.mxu0 0.0
  %2828 = vmatprep.subr.mxu0 0.0
  %2829 = vmatpush1.msra.mxu0 0.0
  %2830 = vmatprep.subr.mxu0 0.0
  %2831 = vmatpush1.msra.mxu0 0.0
  %2832 = vmatprep.subr.mxu0 0.0
  %2833 = vmatpush1.msra.mxu0 0.0
  %2834 = vmatprep.subr.mxu0 0.0
  %2835 = vmatpush1.msra.mxu0 0.0
  %2836 = vmatprep.subr.mxu0 0.0
  %2837 = vmatpush1.msra.mxu0 0.0
  %2838 = vmatprep.subr.mxu0 0.0
  %2839 = vmatpush1.msra.mxu0 0.0
  %2840 = vmatprep.subr.mxu0 0.0
  %2841 = vmatpush1.msra.mxu0 0.0
  %2842 = vmatprep.subr.mxu0 0.0
  %2843 = vmatpush1.msra.mxu0 0.0
  %2844 = vmatprep.subr.mxu0 0.0
  %2845 = vmatpush1.msra.mxu0 0.0
  %2846 = vmatprep.subr.mxu0 0.0
  %2847 = vmatpush1.msra.mxu0 %v2809
  %2848 = vmatprep.subr.mxu0 0.0
  %2849 = vmatpush1.msra.mxu0 %v2807
  %2850 = vmatprep.subr.mxu0 0.0
  %2851 = vmatpush2.msra.mxu0 0.0
  %2852 = vmatprep.subr.mxu0 0.0
  %2853 = vmatpush2.msra.mxu0 0.0
  %2854 = vmatprep.subr.mxu0 0.0
  %2855 = vmatpush2.msra.mxu0 0.0
  %2856 = vmatprep.subr.mxu0 0.0
  %2857 = vmatpush2.msra.mxu0 0.0
  %2858 = vmatprep.subr.mxu0 0.0
  %2859 = vmatpush2.msra.mxu0 0.0
  %2860 = vmatprep.subr.mxu0 0.0
  %2861 = vmatpush2.msra.mxu0 0.0
  %2862 = vmatprep.subr.mxu0 0.0
  %2863 = vmatpush2.msra.mxu0 0.0
  %2864 = vmatprep.subr.mxu0 0.0
  %2865 = vmatpush2.msra.mxu0 0.0
  %2866 = vmatprep.subr.mxu0 0.0
  %2867 = vmatpush2.msra.mxu0 0.0
  %2868 = vmatprep.subr.mxu0 0.0
  %2869 = vmatpush2.msra.mxu0 0.0
  %2870 = vmatprep.subr.mxu0 0.0
  %2871 = vmatpush2.msra.mxu0 0.0
  %2872 = vmatprep.subr.mxu0 0.0
  %2873 = vmatpush2.msra.mxu0 0.0
  %2874 = vmatprep.subr.mxu0 0.0
  %2875 = vmatpush2.msra.mxu0 0.0
  %2876 = vmatprep.subr.mxu0 0.0
  %2877 = vmatpush2.msra.mxu0 0.0
  %2878 = vmatprep.subr.mxu0 0.0
  %2879 = vmatpush2.msra.mxu0 0.0
  %2880 = vmatprep.subr.mxu0 0.0
  %2881 = vmatpush2.msra.mxu0 0.0
  %2882 = vmatprep.mubr.f32.mxu0 0.0
  %2883 = vmatmul.mubr.f32.gmra.mxu0 %v2813
  %v2884 = vpop.f32.mrf.mxu0
  %v2885 = vadd.f32 0.0, %v2884
  %v2886 = vpop.f32.mrf.mxu0
  %2887 = vmatprep.mubr.f32.mxu0 0.0
  %2888 = vmatmul.mubr.f32.gmra.mxu0 %v2816
  %v2889 = vpop.f32.mrf.mxu0
  %v2890 = vadd.f32 0.0, %v2889
  %v2891 = vpop.f32.mrf.mxu0
  %2892 = vdwg.mxu0
  %v2894 = vsel %vm401, %v2885, 0
  %v2897 = vsel %vm401, %v2890, 0
  %2899 = vmatprep.subr.mxu0 0.0
  %2900 = vmatpush1.msra.mxu0 0.0
  %2901 = vmatprep.subr.mxu0 0.0
  %2902 = vmatpush1.msra.mxu0 0.0
  %2903 = vmatprep.subr.mxu0 0.0
  %2904 = vmatpush1.msra.mxu0 0.0
  %2905 = vmatprep.subr.mxu0 0.0
  %2906 = vmatpush1.msra.mxu0 0.0
  %2907 = vmatprep.subr.mxu0 0.0
  %2908 = vmatpush1.msra.mxu0 0.0
  %2909 = vmatprep.subr.mxu0 0.0
  %2910 = vmatpush1.msra.mxu0 0.0
  %2911 = vmatprep.subr.mxu0 0.0
  %2912 = vmatpush1.msra.mxu0 0.0
  %2913 = vmatprep.subr.mxu0 0.0
  %2914 = vmatpush1.msra.mxu0 0.0
  %2915 = vmatprep.subr.mxu0 0.0
  %2916 = vmatpush1.msra.mxu0 0.0
  %2917 = vmatprep.subr.mxu0 0.0
  %2918 = vmatpush1.msra.mxu0 0.0
  %2919 = vmatprep.subr.mxu0 0.0
  %2920 = vmatpush1.msra.mxu0 0.0
  %2921 = vmatprep.subr.mxu0 0.0
  %2922 = vmatpush1.msra.mxu0 0.0
  %2923 = vmatprep.subr.mxu0 0.0
  %2924 = vmatpush1.msra.mxu0 0.0
  %2925 = vmatprep.subr.mxu0 0.0
  %2926 = vmatpush1.msra.mxu0 0.0
  %2927 = vmatprep.subr.mxu0 0.0
  %2928 = vmatpush1.msra.mxu0 0.0
  %2929 = vmatprep.subr.mxu0 0.0
  %2930 = vmatpush1.msra.mxu0 %v2125
  %2931 = vmatprep.subr.mxu0 0.0
  %2932 = vmatpush2.msra.mxu0 0.0
  %2933 = vmatprep.subr.mxu0 0.0
  %2934 = vmatpush2.msra.mxu0 0.0
  %2935 = vmatprep.subr.mxu0 0.0
  %2936 = vmatpush2.msra.mxu0 0.0
  %2937 = vmatprep.subr.mxu0 0.0
  %2938 = vmatpush2.msra.mxu0 0.0
  %2939 = vmatprep.subr.mxu0 0.0
  %2940 = vmatpush2.msra.mxu0 0.0
  %2941 = vmatprep.subr.mxu0 0.0
  %2942 = vmatpush2.msra.mxu0 0.0
  %2943 = vmatprep.subr.mxu0 0.0
  %2944 = vmatpush2.msra.mxu0 0.0
  %2945 = vmatprep.subr.mxu0 0.0
  %2946 = vmatpush2.msra.mxu0 0.0
  %2947 = vmatprep.subr.mxu0 0.0
  %2948 = vmatpush2.msra.mxu0 0.0
  %2949 = vmatprep.subr.mxu0 0.0
  %2950 = vmatpush2.msra.mxu0 0.0
  %2951 = vmatprep.subr.mxu0 0.0
  %2952 = vmatpush2.msra.mxu0 0.0
  %2953 = vmatprep.subr.mxu0 0.0
  %2954 = vmatpush2.msra.mxu0 0.0
  %2955 = vmatprep.subr.mxu0 0.0
  %2956 = vmatpush2.msra.mxu0 0.0
  %2957 = vmatprep.subr.mxu0 0.0
  %2958 = vmatpush2.msra.mxu0 0.0
  %2959 = vmatprep.subr.mxu0 0.0
  %2960 = vmatpush2.msra.mxu0 0.0
  %2961 = vmatprep.subr.mxu0 0.0
  %2962 = vmatpush2.msra.mxu0 0.0
  %2963 = vmatprep.mubr.f32.mxu0 0.0
  %2964 = vmatmul.mubr.f32.gmra.mxu0 %v2894
  %v2965 = vpop.f32.mrf.mxu0
  %v2966 = vadd.f32 0.0, %v2965
  %v2967 = vpop.f32.mrf.mxu0
  %2968 = vmatprep.mubr.f32.mxu0 0.0
  %2969 = vmatmul.mubr.f32.gmra.mxu0 %v2897
  %v2970 = vpop.f32.mrf.mxu0
  %v2971 = vadd.f32 0.0, %v2970
  %v2972 = vpop.f32.mrf.mxu0
  %2973 = vdwg.mxu0
  %v2974 = vadd.f32 %v2681, %v2966
  %v2975 = vadd.f32 %v2686, %v2971
  %2976 = vrot.lane.b32.xlu0 %v1938, 104
  %v2977 = vpop.permute.xlu0 %2976
  %2978 = vrot.lane.b32.xlu0 %v1943, 104
  %v2979 = vpop.permute.xlu0 %2978
  %2980 = vrot.lane.b32.xlu0 %v2026, 104
  %v2981 = vpop.permute.xlu0 %2980
  %2982 = vrot.lane.b32.xlu0 %v2031, 104
  %v2983 = vpop.permute.xlu0 %2982
  %v2984 = vsel %vm401, %v2977, 0
  %v2986 = vsel %vm401, %v2979, 0
  %v2988 = vsel %vm401, %v2981, 0
  %v2990 = vsel %vm401, %v2983, 0
  %2992 = vmatprep.subr.mxu0 0.0
  %2993 = vmatpush1.xpose.msra.mxu0 0.0
  %2994 = vmatprep.subr.mxu0 0.0
  %2995 = vmatpush1.xpose.msra.mxu0 0.0
  %2996 = vmatprep.subr.mxu0 0.0
  %2997 = vmatpush1.xpose.msra.mxu0 0.0
  %2998 = vmatprep.subr.mxu0 0.0
  %2999 = vmatpush1.xpose.msra.mxu0 0.0
  %3000 = vmatprep.subr.mxu0 0.0
  %3001 = vmatpush1.xpose.msra.mxu0 0.0
  %3002 = vmatprep.subr.mxu0 0.0
  %3003 = vmatpush1.xpose.msra.mxu0 0.0
  %3004 = vmatprep.subr.mxu0 0.0
  %3005 = vmatpush1.xpose.msra.mxu0 0.0
  %3006 = vmatprep.subr.mxu0 0.0
  %3007 = vmatpush1.xpose.msra.mxu0 0.0
  %3008 = vmatprep.subr.mxu0 0.0
  %3009 = vmatpush1.xpose.msra.mxu0 0.0
  %3010 = vmatprep.subr.mxu0 0.0
  %3011 = vmatpush1.xpose.msra.mxu0 0.0
  %3012 = vmatprep.subr.mxu0 0.0
  %3013 = vmatpush1.xpose.msra.mxu0 0.0
  %3014 = vmatprep.subr.mxu0 0.0
  %3015 = vmatpush1.xpose.msra.mxu0 0.0
  %3016 = vmatprep.subr.mxu0 0.0
  %3017 = vmatpush1.xpose.msra.mxu0 0.0
  %3018 = vmatprep.subr.mxu0 0.0
  %3019 = vmatpush1.xpose.msra.mxu0 0.0
  %3020 = vmatprep.subr.mxu0 0.0
  %3021 = vmatpush1.xpose.msra.mxu0 %v2990
  %3022 = vmatprep.subr.mxu0 0.0
  %3023 = vmatpush1.xpose.msra.mxu0 %v2988
  %3024 = vmatprep.subr.mxu0 0.0
  %3025 = vmatpush2.xpose.msra.mxu0 0.0
  %3026 = vmatprep.subr.mxu0 0.0
  %3027 = vmatpush2.xpose.msra.mxu0 0.0
  %3028 = vmatprep.subr.mxu0 0.0
  %3029 = vmatpush2.xpose.msra.mxu0 0.0
  %3030 = vmatprep.subr.mxu0 0.0
  %3031 = vmatpush2.xpose.msra.mxu0 0.0
  %3032 = vmatprep.subr.mxu0 0.0
  %3033 = vmatpush2.xpose.msra.mxu0 0.0
  %3034 = vmatprep.subr.mxu0 0.0
  %3035 = vmatpush2.xpose.msra.mxu0 0.0
  %3036 = vmatprep.subr.mxu0 0.0
  %3037 = vmatpush2.xpose.msra.mxu0 0.0
  %3038 = vmatprep.subr.mxu0 0.0
  %3039 = vmatpush2.xpose.msra.mxu0 0.0
  %3040 = vmatprep.subr.mxu0 0.0
  %3041 = vmatpush2.xpose.msra.mxu0 0.0
  %3042 = vmatprep.subr.mxu0 0.0
  %3043 = vmatpush2.xpose.msra.mxu0 0.0
  %3044 = vmatprep.subr.mxu0 0.0
  %3045 = vmatpush2.xpose.msra.mxu0 0.0
  %3046 = vmatprep.subr.mxu0 0.0
  %3047 = vmatpush2.xpose.msra.mxu0 0.0
  %3048 = vmatprep.subr.mxu0 0.0
  %3049 = vmatpush2.xpose.msra.mxu0 0.0
  %3050 = vmatprep.subr.mxu0 0.0
  %3051 = vmatpush2.xpose.msra.mxu0 0.0
  %3052 = vmatprep.subr.mxu0 0.0
  %3053 = vmatpush2.xpose.msra.mxu0 0.0
  %3054 = vmatprep.subr.mxu0 0.0
  %3055 = vmatpush2.xpose.msra.mxu0 0.0
  %3056 = vmatprep.mubr.f32.mxu0 0.0
  %3057 = vmatmul.mubr.f32.gmra.mxu0 %v2984
  %v3058 = vpop.f32.mrf.mxu0
  %v3059 = vadd.f32 0.0, %v3058
  %v3060 = vpop.f32.mrf.mxu0
  %3061 = vmatprep.mubr.f32.mxu0 0.0
  %3062 = vmatmul.mubr.f32.gmra.mxu0 %v2986
  %v3063 = vpop.f32.mrf.mxu0
  %v3064 = vadd.f32 0.0, %v3063
  %v3065 = vpop.f32.mrf.mxu0
  %3066 = vdwg.mxu0
  %v3067 = vmul.f32 %v3059, 0.35355338
  %v3068 = vmul.f32 %v3064, 0.35355338
  %v3069 = vadd.f32 %v3067, %v85
  %v3070 = vadd.f32 %v3068, %v86
  %v3071 = vsel %vm493, %v3069, -inf
  %3072 = vmax.xlane.f32.xlu0 %v3071
  %v3073 = vpop.xlane.xlu0 %3072
  %v3074 = vsel %vm493, %v3070, -inf
  %3075 = vmax.xlane.f32.xlu0 %v3074
  %v3076 = vpop.xlane.xlu0 %3075
  %v3077 = vsub.f32 %v3069, %v3073
  %v3078 = vsub.f32 %v3070, %v3076
  %v3079 = vmul.f32 %v3077, 1.442695
  %v3080 = vpow.pop %v3079
  %v3081 = vmul.f32 %v3078, 1.442695
  %v3082 = vpow.pop %v3081
  %v3083 = vsel %vm493, %v3080, 0.0
  %3084 = vadd.xlane.f32.xlu0 %v3083
  %v3085 = vpop.xlane.xlu0 %3084
  %v3086 = vsel %vm493, %v3082, 0.0
  %3087 = vadd.xlane.f32.xlu0 %v3086
  %v3088 = vpop.xlane.xlu0 %3087
  %v3089 = vrcp.pop %v3085
  %v3090 = vrcp.pop %v3088
  %v3091 = vmul.f32 %v3080, %v3089
  %v3092 = vmul.f32 %v3082, %v3090
  %3093 = vrot.lane.b32.xlu0 %v2114, 104
  %v3094 = vpop.permute.xlu0 %3093
  %3095 = vrot.lane.b32.xlu0 %v2119, 104
  %v3096 = vpop.permute.xlu0 %3095
  %v3100 = vsel %vm493, %v3091, 0
  %v3103 = vsel %vm493, %v3092, 0
  %3105 = vmatprep.subr.mxu0 0.0
  %3106 = vmatpush1.msra.mxu0 0.0
  %3107 = vmatprep.subr.mxu0 0.0
  %3108 = vmatpush1.msra.mxu0 0.0
  %3109 = vmatprep.subr.mxu0 0.0
  %3110 = vmatpush1.msra.mxu0 0.0
  %3111 = vmatprep.subr.mxu0 0.0
  %3112 = vmatpush1.msra.mxu0 0.0
  %3113 = vmatprep.subr.mxu0 0.0
  %3114 = vmatpush1.msra.mxu0 0.0
  %3115 = vmatprep.subr.mxu0 0.0
  %3116 = vmatpush1.msra.mxu0 0.0
  %3117 = vmatprep.subr.mxu0 0.0
  %3118 = vmatpush1.msra.mxu0 0.0
  %3119 = vmatprep.subr.mxu0 0.0
  %3120 = vmatpush1.msra.mxu0 0.0
  %3121 = vmatprep.subr.mxu0 0.0
  %3122 = vmatpush1.msra.mxu0 0.0
  %3123 = vmatprep.subr.mxu0 0.0
  %3124 = vmatpush1.msra.mxu0 0.0
  %3125 = vmatprep.subr.mxu0 0.0
  %3126 = vmatpush1.msra.mxu0 0.0
  %3127 = vmatprep.subr.mxu0 0.0
  %3128 = vmatpush1.msra.mxu0 0.0
  %3129 = vmatprep.subr.mxu0 0.0
  %3130 = vmatpush1.msra.mxu0 0.0
  %3131 = vmatprep.subr.mxu0 0.0
  %3132 = vmatpush1.msra.mxu0 0.0
  %3133 = vmatprep.subr.mxu0 0.0
  %3134 = vmatpush1.msra.mxu0 %v3096
  %3135 = vmatprep.subr.mxu0 0.0
  %3136 = vmatpush1.msra.mxu0 %v3094
  %3137 = vmatprep.subr.mxu0 0.0
  %3138 = vmatpush2.msra.mxu0 0.0
  %3139 = vmatprep.subr.mxu0 0.0
  %3140 = vmatpush2.msra.mxu0 0.0
  %3141 = vmatprep.subr.mxu0 0.0
  %3142 = vmatpush2.msra.mxu0 0.0
  %3143 = vmatprep.subr.mxu0 0.0
  %3144 = vmatpush2.msra.mxu0 0.0
  %3145 = vmatprep.subr.mxu0 0.0
  %3146 = vmatpush2.msra.mxu0 0.0
  %3147 = vmatprep.subr.mxu0 0.0
  %3148 = vmatpush2.msra.mxu0 0.0
  %3149 = vmatprep.subr.mxu0 0.0
  %3150 = vmatpush2.msra.mxu0 0.0
  %3151 = vmatprep.subr.mxu0 0.0
  %3152 = vmatpush2.msra.mxu0 0.0
  %3153 = vmatprep.subr.mxu0 0.0
  %3154 = vmatpush2.msra.mxu0 0.0
  %3155 = vmatprep.subr.mxu0 0.0
  %3156 = vmatpush2.msra.mxu0 0.0
  %3157 = vmatprep.subr.mxu0 0.0
  %3158 = vmatpush2.msra.mxu0 0.0
  %3159 = vmatprep.subr.mxu0 0.0
  %3160 = vmatpush2.msra.mxu0 0.0
  %3161 = vmatprep.subr.mxu0 0.0
  %3162 = vmatpush2.msra.mxu0 0.0
  %3163 = vmatprep.subr.mxu0 0.0
  %3164 = vmatpush2.msra.mxu0 0.0
  %3165 = vmatprep.subr.mxu0 0.0
  %3166 = vmatpush2.msra.mxu0 0.0
  %3167 = vmatprep.subr.mxu0 0.0
  %3168 = vmatpush2.msra.mxu0 0.0
  %3169 = vmatprep.mubr.f32.mxu0 0.0
  %3170 = vmatmul.mubr.f32.gmra.mxu0 %v3100
  %v3171 = vpop.f32.mrf.mxu0
  %v3172 = vadd.f32 0.0, %v3171
  %v3173 = vpop.f32.mrf.mxu0
  %3174 = vmatprep.mubr.f32.mxu0 0.0
  %3175 = vmatmul.mubr.f32.gmra.mxu0 %v3103
  %v3176 = vpop.f32.mrf.mxu0
  %v3177 = vadd.f32 0.0, %v3176
  %v3178 = vpop.f32.mrf.mxu0
  %3179 = vdwg.mxu0
  %v3181 = vsel %vm401, %v3172, 0
  %v3184 = vsel %vm401, %v3177, 0
  %3186 = vmatprep.subr.mxu0 0.0
  %3187 = vmatpush1.msra.mxu0 0.0
  %3188 = vmatprep.subr.mxu0 0.0
  %3189 = vmatpush1.msra.mxu0 0.0
  %3190 = vmatprep.subr.mxu0 0.0
  %3191 = vmatpush1.msra.mxu0 0.0
  %3192 = vmatprep.subr.mxu0 0.0
  %3193 = vmatpush1.msra.mxu0 0.0
  %3194 = vmatprep.subr.mxu0 0.0
  %3195 = vmatpush1.msra.mxu0 0.0
  %3196 = vmatprep.subr.mxu0 0.0
  %3197 = vmatpush1.msra.mxu0 0.0
  %3198 = vmatprep.subr.mxu0 0.0
  %3199 = vmatpush1.msra.mxu0 0.0
  %3200 = vmatprep.subr.mxu0 0.0
  %3201 = vmatpush1.msra.mxu0 0.0
  %3202 = vmatprep.subr.mxu0 0.0
  %3203 = vmatpush1.msra.mxu0 0.0
  %3204 = vmatprep.subr.mxu0 0.0
  %3205 = vmatpush1.msra.mxu0 0.0
  %3206 = vmatprep.subr.mxu0 0.0
  %3207 = vmatpush1.msra.mxu0 0.0
  %3208 = vmatprep.subr.mxu0 0.0
  %3209 = vmatpush1.msra.mxu0 0.0
  %3210 = vmatprep.subr.mxu0 0.0
  %3211 = vmatpush1.msra.mxu0 0.0
  %3212 = vmatprep.subr.mxu0 0.0
  %3213 = vmatpush1.msra.mxu0 0.0
  %3214 = vmatprep.subr.mxu0 0.0
  %3215 = vmatpush1.msra.mxu0 0.0
  %3216 = vmatprep.subr.mxu0 0.0
  %3217 = vmatpush1.msra.mxu0 %v2126
  %3218 = vmatprep.subr.mxu0 0.0
  %3219 = vmatpush2.msra.mxu0 0.0
  %3220 = vmatprep.subr.mxu0 0.0
  %3221 = vmatpush2.msra.mxu0 0.0
  %3222 = vmatprep.subr.mxu0 0.0
  %3223 = vmatpush2.msra.mxu0 0.0
  %3224 = vmatprep.subr.mxu0 0.0
  %3225 = vmatpush2.msra.mxu0 0.0
  %3226 = vmatprep.subr.mxu0 0.0
  %3227 = vmatpush2.msra.mxu0 0.0
  %3228 = vmatprep.subr.mxu0 0.0
  %3229 = vmatpush2.msra.mxu0 0.0
  %3230 = vmatprep.subr.mxu0 0.0
  %3231 = vmatpush2.msra.mxu0 0.0
  %3232 = vmatprep.subr.mxu0 0.0
  %3233 = vmatpush2.msra.mxu0 0.0
  %3234 = vmatprep.subr.mxu0 0.0
  %3235 = vmatpush2.msra.mxu0 0.0
  %3236 = vmatprep.subr.mxu0 0.0
  %3237 = vmatpush2.msra.mxu0 0.0
  %3238 = vmatprep.subr.mxu0 0.0
  %3239 = vmatpush2.msra.mxu0 0.0
  %3240 = vmatprep.subr.mxu0 0.0
  %3241 = vmatpush2.msra.mxu0 0.0
  %3242 = vmatprep.subr.mxu0 0.0
  %3243 = vmatpush2.msra.mxu0 0.0
  %3244 = vmatprep.subr.mxu0 0.0
  %3245 = vmatpush2.msra.mxu0 0.0
  %3246 = vmatprep.subr.mxu0 0.0
  %3247 = vmatpush2.msra.mxu0 0.0
  %3248 = vmatprep.subr.mxu0 0.0
  %3249 = vmatpush2.msra.mxu0 0.0
  %3250 = vmatprep.mubr.f32.mxu0 0.0
  %3251 = vmatmul.mubr.f32.gmra.mxu0 %v3181
  %v3252 = vpop.f32.mrf.mxu0
  %v3253 = vadd.f32 0.0, %v3252
  %v3254 = vpop.f32.mrf.mxu0
  %3255 = vmatprep.mubr.f32.mxu0 0.0
  %3256 = vmatmul.mubr.f32.gmra.mxu0 %v3184
  %v3257 = vpop.f32.mrf.mxu0
  %v3258 = vadd.f32 0.0, %v3257
  %v3259 = vpop.f32.mrf.mxu0
  %3260 = vdwg.mxu0
  %v3261 = vadd.f32 %v2974, %v3253
  %v3262 = vadd.f32 %v2975, %v3258
  %v3263 = vadd.f32 %v1804, %v3261
  %v3264 = vadd.f32 %v1805, %v3262
  %s3265 = scalar_lea.vmem %s11, 1
  %v3266 = vld [vmem:[%s3265] sm:$0x1]
  %v3268 = vlaneseq
  %v3269 = vshrl.u32 %v3268, 7
  %v3270 = vsub.s32 0, %v3269
  %v3271 = vrot.slane %v3266, %v3270
  %v3273 = vadd.f32 %v3263, %v3271
  %v3274 = vadd.f32 %v3264, %v3271
  %s3275 = scalar_lea.vmem %s12, 1
  %v3276 = vld [vmem:[%s3275] sm:$0x1]
  %s3277 = scalar_lea.vmem %s13, 1
  %v3278 = vld [vmem:[%s3277] sm:$0x1]
  %v3279 = vsel %vm89, %v3273, 0.0
  %3280 = vadd.xlane.f32.xlu0 %v3279
  %v3281 = vpop.xlane.xlu0 %3280
  %v3282 = vsel %vm89, %v3274, 0.0
  %3283 = vadd.xlane.f32.xlu0 %v3282
  %v3284 = vpop.xlane.xlu0 %3283
  %v3285 = vmul.f32 %v3281, %v96
  %v3286 = vmul.f32 %v3284, %v96
  %v3287 = vsub.f32 %v3273, %v3285
  %v3288 = vsub.f32 %v3274, %v3286
  %v3289 = vmul.f32 %v3287, %v3287
  %v3290 = vmul.f32 %v3288, %v3288
  %v3291 = vsel %vm89, %v3289, 0.0
  %3292 = vadd.xlane.f32.xlu0 %v3291
  %v3293 = vpop.xlane.xlu0 %3292
  %v3294 = vsel %vm89, %v3290, 0.0
  %3295 = vadd.xlane.f32.xlu0 %v3294
  %v3296 = vpop.xlane.xlu0 %3295
  %v3297 = vmul.f32 %v3293, %v96
  %v3298 = vmul.f32 %v3296, %v96
  %v3299 = vadd.f32 %v3297, 1e-05
  %v3300 = vadd.f32 %v3298, 1e-05
  %v3301 = vrsqrt.pop %v3299
  %v3302 = vrsqrt.pop %v3300
  %v3303 = vmul.f32 %v3287, %v3301
  %v3304 = vmul.f32 %v3288, %v3302
  %v3306 = vlaneseq
  %v3307 = vshrl.u32 %v3306, 7
  %v3308 = vsub.s32 0, %v3307
  %v3309 = vrot.slane %v3276, %v3308
  %v3311 = vmul.f32 %v3303, %v3309
  %v3312 = vmul.f32 %v3304, %v3309
  %v3314 = vlaneseq
  %v3315 = vshrl.u32 %v3314, 7
  %v3316 = vsub.s32 0, %v3315
  %v3317 = vrot.slane %v3278, %v3316
  %v3319 = vadd.f32 %v3311, %v3317
  %v3320 = vadd.f32 %v3312, %v3317
  %s3321 = scalar_lea.vmem %s14, 32
  %v3322 = vld [vmem:[%s3321] sm:$0xff]
  %v3323 = vld [vmem:[%s3321 + $0x8] sm:$0xff]
  %v3324 = vld [vmem:[%s3321 + $0x10] sm:$0xff]
  %v3325 = vld [vmem:[%s3321 + $0x18] sm:$0xff]
  %s3326 = scalar_lea.vmem %s15, 1
  %v3327 = vld [vmem:[%s3326] sm:$0x1]
  %v3329 = vlaneseq
  %v3330 = vshrl.u32 %v3329, 7
  %v3331 = vsub.s32 0, %v3330
  %v3332 = vrot.slane %v3327, %v3331
  %v3335 = vsel %vm89, %v3319, 0
  %v3338 = vsel %vm89, %v3320, 0
  %3340 = vmatprep.subr.mxu0 0.0
  %3341 = vmatpush1.msra.mxu0 0.0
  %3342 = vmatprep.subr.mxu0 0.0
  %3343 = vmatpush1.msra.mxu0 0.0
  %3344 = vmatprep.subr.mxu0 0.0
  %3345 = vmatpush1.msra.mxu0 0.0
  %3346 = vmatprep.subr.mxu0 0.0
  %3347 = vmatpush1.msra.mxu0 0.0
  %3348 = vmatprep.subr.mxu0 0.0
  %3349 = vmatpush1.msra.mxu0 0.0
  %3350 = vmatprep.subr.mxu0 0.0
  %3351 = vmatpush1.msra.mxu0 0.0
  %3352 = vmatprep.subr.mxu0 0.0
  %3353 = vmatpush1.msra.mxu0 0.0
  %3354 = vmatprep.subr.mxu0 0.0
  %3355 = vmatpush1.msra.mxu0 0.0
  %3356 = vmatprep.subr.mxu0 0.0
  %3357 = vmatpush1.msra.mxu0 0.0
  %3358 = vmatprep.subr.mxu0 0.0
  %3359 = vmatpush1.msra.mxu0 0.0
  %3360 = vmatprep.subr.mxu0 0.0
  %3361 = vmatpush1.msra.mxu0 0.0
  %3362 = vmatprep.subr.mxu0 0.0
  %3363 = vmatpush1.msra.mxu0 0.0
  %3364 = vmatprep.subr.mxu0 0.0
  %3365 = vmatpush1.msra.mxu0 %v3325
  %3366 = vmatprep.subr.mxu0 0.0
  %3367 = vmatpush1.msra.mxu0 %v3324
  %3368 = vmatprep.subr.mxu0 0.0
  %3369 = vmatpush1.msra.mxu0 %v3323
  %3370 = vmatprep.subr.mxu0 0.0
  %3371 = vmatpush1.msra.mxu0 %v3322
  %3372 = vmatprep.subr.mxu0 0.0
  %3373 = vmatpush2.msra.mxu0 0.0
  %3374 = vmatprep.subr.mxu0 0.0
  %3375 = vmatpush2.msra.mxu0 0.0
  %3376 = vmatprep.subr.mxu0 0.0
  %3377 = vmatpush2.msra.mxu0 0.0
  %3378 = vmatprep.subr.mxu0 0.0
  %3379 = vmatpush2.msra.mxu0 0.0
  %3380 = vmatprep.subr.mxu0 0.0
  %3381 = vmatpush2.msra.mxu0 0.0
  %3382 = vmatprep.subr.mxu0 0.0
  %3383 = vmatpush2.msra.mxu0 0.0
  %3384 = vmatprep.subr.mxu0 0.0
  %3385 = vmatpush2.msra.mxu0 0.0
  %3386 = vmatprep.subr.mxu0 0.0
  %3387 = vmatpush2.msra.mxu0 0.0
  %3388 = vmatprep.subr.mxu0 0.0
  %3389 = vmatpush2.msra.mxu0 0.0
  %3390 = vmatprep.subr.mxu0 0.0
  %3391 = vmatpush2.msra.mxu0 0.0
  %3392 = vmatprep.subr.mxu0 0.0
  %3393 = vmatpush2.msra.mxu0 0.0
  %3394 = vmatprep.subr.mxu0 0.0
  %3395 = vmatpush2.msra.mxu0 0.0
  %3396 = vmatprep.subr.mxu0 0.0
  %3397 = vmatpush2.msra.mxu0 0.0
  %3398 = vmatprep.subr.mxu0 0.0
  %3399 = vmatpush2.msra.mxu0 0.0
  %3400 = vmatprep.subr.mxu0 0.0
  %3401 = vmatpush2.msra.mxu0 0.0
  %3402 = vmatprep.subr.mxu0 0.0
  %3403 = vmatpush2.msra.mxu0 0.0
  %3404 = vmatprep.mubr.f32.mxu0 0.0
  %3405 = vmatmul.mubr.f32.gmra.mxu0 %v3335
  %v3406 = vpop.f32.mrf.mxu0
  %v3407 = vadd.f32 %v3332, %v3406
  %v3408 = vpop.f32.mrf.mxu0
  %3409 = vmatprep.mubr.f32.mxu0 0.0
  %3410 = vmatmul.mubr.f32.gmra.mxu0 %v3338
  %v3411 = vpop.f32.mrf.mxu0
  %v3412 = vadd.f32 %v3332, %v3411
  %v3413 = vpop.f32.mrf.mxu0
  %3414 = vdwg.mxu0
  %v3415 = vmul.f32 %v3407, 0.5
  %v3416 = vmul.f32 %v3412, 0.5
  %v3417 = vmul.f32 %v3407, 0.044715
  %v3418 = vmul.f32 %v3412, 0.044715
  %v3419 = vmul.f32 %v3417, %v3407
  %v3420 = vmul.f32 %v3418, %v3412
  %v3421 = vmul.f32 %v3419, %v3407
  %v3422 = vmul.f32 %v3420, %v3412
  %v3423 = vadd.f32 %v3407, %v3421
  %v3424 = vadd.f32 %v3412, %v3422
  %v3425 = vmul.f32 %v3423, 0.7978846
  %v3426 = vmul.f32 %v3424, 0.7978846
  %v3427 = vtanh.pop %v3425
  %v3428 = vtanh.pop %v3426
  %v3429 = vadd.f32 %v3427, 1.0
  %v3430 = vadd.f32 %v3428, 1.0
  %v3431 = vmul.f32 %v3415, %v3429
  %v3432 = vmul.f32 %v3416, %v3430
  %s3433 = scalar_lea.vmem %s16, 128
  %v3434 = vld [vmem:[%s3433] sm:$0xff]
  %v3435 = vld [vmem:[%s3433 + $0x8] sm:$0xff]
  %v3436 = vld [vmem:[%s3433 + $0x10] sm:$0xff]
  %v3437 = vld [vmem:[%s3433 + $0x18] sm:$0xff]
  %v3438 = vld [vmem:[%s3433 + $0x20] sm:$0xff]
  %v3439 = vld [vmem:[%s3433 + $0x28] sm:$0xff]
  %v3440 = vld [vmem:[%s3433 + $0x30] sm:$0xff]
  %v3441 = vld [vmem:[%s3433 + $0x38] sm:$0xff]
  %v3442 = vld [vmem:[%s3433 + $0x40] sm:$0xff]
  %v3443 = vld [vmem:[%s3433 + $0x48] sm:$0xff]
  %v3444 = vld [vmem:[%s3433 + $0x50] sm:$0xff]
  %v3445 = vld [vmem:[%s3433 + $0x58] sm:$0xff]
  %v3446 = vld [vmem:[%s3433 + $0x60] sm:$0xff]
  %v3447 = vld [vmem:[%s3433 + $0x68] sm:$0xff]
  %v3448 = vld [vmem:[%s3433 + $0x70] sm:$0xff]
  %v3449 = vld [vmem:[%s3433 + $0x78] sm:$0xff]
  %3450 = vmatprep.subr.mxu0 0.0
  %3451 = vmatpush1.msra.mxu0 %v3449
  %3452 = vmatprep.subr.mxu0 0.0
  %3453 = vmatpush1.msra.mxu0 %v3448
  %3454 = vmatprep.subr.mxu0 0.0
  %3455 = vmatpush1.msra.mxu0 %v3447
  %3456 = vmatprep.subr.mxu0 0.0
  %3457 = vmatpush1.msra.mxu0 %v3446
  %3458 = vmatprep.subr.mxu0 0.0
  %3459 = vmatpush1.msra.mxu0 %v3445
  %3460 = vmatprep.subr.mxu0 0.0
  %3461 = vmatpush1.msra.mxu0 %v3444
  %3462 = vmatprep.subr.mxu0 0.0
  %3463 = vmatpush1.msra.mxu0 %v3443
  %3464 = vmatprep.subr.mxu0 0.0
  %3465 = vmatpush1.msra.mxu0 %v3442
  %3466 = vmatprep.subr.mxu0 0.0
  %3467 = vmatpush1.msra.mxu0 %v3441
  %3468 = vmatprep.subr.mxu0 0.0
  %3469 = vmatpush1.msra.mxu0 %v3440
  %3470 = vmatprep.subr.mxu0 0.0
  %3471 = vmatpush1.msra.mxu0 %v3439
  %3472 = vmatprep.subr.mxu0 0.0
  %3473 = vmatpush1.msra.mxu0 %v3438
  %3474 = vmatprep.subr.mxu0 0.0
  %3475 = vmatpush1.msra.mxu0 %v3437
  %3476 = vmatprep.subr.mxu0 0.0
  %3477 = vmatpush1.msra.mxu0 %v3436
  %3478 = vmatprep.subr.mxu0 0.0
  %3479 = vmatpush1.msra.mxu0 %v3435
  %3480 = vmatprep.subr.mxu0 0.0
  %3481 = vmatpush1.msra.mxu0 %v3434
  %3482 = vmatprep.subr.mxu0 0.0
  %3483 = vmatpush2.msra.mxu0 0.0
  %3484 = vmatprep.subr.mxu0 0.0
  %3485 = vmatpush2.msra.mxu0 0.0
  %3486 = vmatprep.subr.mxu0 0.0
  %3487 = vmatpush2.msra.mxu0 0.0
  %3488 = vmatprep.subr.mxu0 0.0
  %3489 = vmatpush2.msra.mxu0 0.0
  %3490 = vmatprep.subr.mxu0 0.0
  %3491 = vmatpush2.msra.mxu0 0.0
  %3492 = vmatprep.subr.mxu0 0.0
  %3493 = vmatpush2.msra.mxu0 0.0
  %3494 = vmatprep.subr.mxu0 0.0
  %3495 = vmatpush2.msra.mxu0 0.0
  %3496 = vmatprep.subr.mxu0 0.0
  %3497 = vmatpush2.msra.mxu0 0.0
  %3498 = vmatprep.subr.mxu0 0.0
  %3499 = vmatpush2.msra.mxu0 0.0
  %3500 = vmatprep.subr.mxu0 0.0
  %3501 = vmatpush2.msra.mxu0 0.0
  %3502 = vmatprep.subr.mxu0 0.0
  %3503 = vmatpush2.msra.mxu0 0.0
  %3504 = vmatprep.subr.mxu0 0.0
  %3505 = vmatpush2.msra.mxu0 0.0
  %3506 = vmatprep.subr.mxu0 0.0
  %3507 = vmatpush2.msra.mxu0 0.0
  %3508 = vmatprep.subr.mxu0 0.0
  %3509 = vmatpush2.msra.mxu0 0.0
  %3510 = vmatprep.subr.mxu0 0.0
  %3511 = vmatpush2.msra.mxu0 0.0
  %3512 = vmatprep.subr.mxu0 0.0
  %3513 = vmatpush2.msra.mxu0 0.0
  %3514 = vmatprep.mubr.f32.mxu0 0.0
  %3515 = vmatmul.mubr.f32.gmra.mxu0 %v3431
  %v3516 = vpop.f32.mrf.mxu0
  %v3517 = vadd.f32 0.0, %v3516
  %v3518 = vpop.f32.mrf.mxu0
  %3519 = vmatprep.mubr.f32.mxu0 0.0
  %3520 = vmatmul.mubr.f32.gmra.mxu0 %v3432
  %v3521 = vpop.f32.mrf.mxu0
  %v3522 = vadd.f32 0.0, %v3521
  %v3523 = vpop.f32.mrf.mxu0
  %3524 = vdwg.mxu0
  %v3525 = vadd.f32 %v3273, %v3517
  %v3526 = vadd.f32 %v3274, %v3522
  %s3527 = scalar_lea.vmem %s17, 1
  %v3528 = vld [vmem:[%s3527] sm:$0x1]
  %v3530 = vlaneseq
  %v3531 = vshrl.u32 %v3530, 7
  %v3532 = vsub.s32 0, %v3531
  %v3533 = vrot.slane %v3528, %v3532
  %v3535 = vadd.f32 %v3525, %v3533
  %v3536 = vadd.f32 %v3526, %v3533
  %v3537 = vld [vmem:[%s18] sm:$0xff]
  %v3538 = vld [vmem:[%s18 + $0x8] sm:$0xff]
  %v3539 = vld [vmem:[%s18 + $0x10] sm:$0xff]
  %v3540 = vld [vmem:[%s18 + $0x18] sm:$0xff]
  %v3541 = vld [vmem:[%s20] sm:$0x1]
  %v3543 = vlaneseq
  %v3544 = vshrl.u32 %v3543, 7
  %v3545 = vsub.s32 0, %v3544
  %v3546 = vrot.slane %v3541, %v3545
  %v3549 = vsel %vm89, %v3535, 0
  %v3552 = vsel %vm89, %v3536, 0
  %3554 = vmatprep.subr.mxu0 0.0
  %3555 = vmatpush1.msra.mxu0 0.0
  %3556 = vmatprep.subr.mxu0 0.0
  %3557 = vmatpush1.msra.mxu0 0.0
  %3558 = vmatprep.subr.mxu0 0.0
  %3559 = vmatpush1.msra.mxu0 0.0
  %3560 = vmatprep.subr.mxu0 0.0
  %3561 = vmatpush1.msra.mxu0 0.0
  %3562 = vmatprep.subr.mxu0 0.0
  %3563 = vmatpush1.msra.mxu0 0.0
  %3564 = vmatprep.subr.mxu0 0.0
  %3565 = vmatpush1.msra.mxu0 0.0
  %3566 = vmatprep.subr.mxu0 0.0
  %3567 = vmatpush1.msra.mxu0 0.0
  %3568 = vmatprep.subr.mxu0 0.0
  %3569 = vmatpush1.msra.mxu0 0.0
  %3570 = vmatprep.subr.mxu0 0.0
  %3571 = vmatpush1.msra.mxu0 0.0
  %3572 = vmatprep.subr.mxu0 0.0
  %3573 = vmatpush1.msra.mxu0 0.0
  %3574 = vmatprep.subr.mxu0 0.0
  %3575 = vmatpush1.msra.mxu0 0.0
  %3576 = vmatprep.subr.mxu0 0.0
  %3577 = vmatpush1.msra.mxu0 0.0
  %3578 = vmatprep.subr.mxu0 0.0
  %3579 = vmatpush1.msra.mxu0 %v3540
  %3580 = vmatprep.subr.mxu0 0.0
  %3581 = vmatpush1.msra.mxu0 %v3539
  %3582 = vmatprep.subr.mxu0 0.0
  %3583 = vmatpush1.msra.mxu0 %v3538
  %3584 = vmatprep.subr.mxu0 0.0
  %3585 = vmatpush1.msra.mxu0 %v3537
  %3586 = vmatprep.subr.mxu0 0.0
  %3587 = vmatpush2.msra.mxu0 0.0
  %3588 = vmatprep.subr.mxu0 0.0
  %3589 = vmatpush2.msra.mxu0 0.0
  %3590 = vmatprep.subr.mxu0 0.0
  %3591 = vmatpush2.msra.mxu0 0.0
  %3592 = vmatprep.subr.mxu0 0.0
  %3593 = vmatpush2.msra.mxu0 0.0
  %3594 = vmatprep.subr.mxu0 0.0
  %3595 = vmatpush2.msra.mxu0 0.0
  %3596 = vmatprep.subr.mxu0 0.0
  %3597 = vmatpush2.msra.mxu0 0.0
  %3598 = vmatprep.subr.mxu0 0.0
  %3599 = vmatpush2.msra.mxu0 0.0
  %3600 = vmatprep.subr.mxu0 0.0
  %3601 = vmatpush2.msra.mxu0 0.0
  %3602 = vmatprep.subr.mxu0 0.0
  %3603 = vmatpush2.msra.mxu0 0.0
  %3604 = vmatprep.subr.mxu0 0.0
  %3605 = vmatpush2.msra.mxu0 0.0
  %3606 = vmatprep.subr.mxu0 0.0
  %3607 = vmatpush2.msra.mxu0 0.0
  %3608 = vmatprep.subr.mxu0 0.0
  %3609 = vmatpush2.msra.mxu0 0.0
  %3610 = vmatprep.subr.mxu0 0.0
  %3611 = vmatpush2.msra.mxu0 0.0
  %3612 = vmatprep.subr.mxu0 0.0
  %3613 = vmatpush2.msra.mxu0 0.0
  %3614 = vmatprep.subr.mxu0 0.0
  %3615 = vmatpush2.msra.mxu0 0.0
  %3616 = vmatprep.subr.mxu0 0.0
  %3617 = vmatpush2.msra.mxu0 0.0
  %3618 = vmatprep.mubr.f32.mxu0 0.0
  %3619 = vmatmul.mubr.f32.gmra.mxu0 %v3549
  %v3620 = vpop.f32.mrf.mxu0
  %v3621 = vadd.f32 %v3546, %v3620
  %v3622 = vpop.f32.mrf.mxu0
  %3623 = vmatprep.mubr.f32.mxu0 0.0
  %3624 = vmatmul.mubr.f32.gmra.mxu0 %v3552
  %v3625 = vpop.f32.mrf.mxu0
  %v3626 = vadd.f32 %v3546, %v3625
  %v3627 = vpop.f32.mrf.mxu0
  %3628 = vdwg.mxu0
  %s3629 = scalar_lea.vmem %s18, 32
  %v3630 = vld [vmem:[%s3629] sm:$0xff]
  %v3631 = vld [vmem:[%s3629 + $0x8] sm:$0xff]
  %v3632 = vld [vmem:[%s3629 + $0x10] sm:$0xff]
  %v3633 = vld [vmem:[%s3629 + $0x18] sm:$0xff]
  %v3634 = vld [vmem:[%s19] sm:$0xff]
  %v3635 = vld [vmem:[%s19 + $0x8] sm:$0xff]
  %v3636 = vld [vmem:[%s19 + $0x10] sm:$0xff]
  %v3637 = vld [vmem:[%s19 + $0x18] sm:$0xff]
  %s3638 = scalar_lea.vmem %s19, 32
  %v3639 = vld [vmem:[%s3638] sm:$0xff]
  %v3640 = vld [vmem:[%s3638 + $0x8] sm:$0xff]
  %v3641 = vld [vmem:[%s3638 + $0x10] sm:$0xff]
  %v3642 = vld [vmem:[%s3638 + $0x18] sm:$0xff]
  %s3643 = scalar_lea.vmem %s20, 1
  %v3644 = vld [vmem:[%s3643] sm:$0x1]
  %v3646 = vsel %vm89, 0.0, 0
  %3648 = vmatprep.subr.mxu0 0.0
  %3649 = vmatpush1.msra.mxu0 0.0
  %3650 = vmatprep.subr.mxu0 0.0
  %3651 = vmatpush1.msra.mxu0 0.0
  %3652 = vmatprep.subr.mxu0 0.0
  %3653 = vmatpush1.msra.mxu0 0.0
  %3654 = vmatprep.subr.mxu0 0.0
  %3655 = vmatpush1.msra.mxu0 0.0
  %3656 = vmatprep.subr.mxu0 0.0
  %3657 = vmatpush1.msra.mxu0 0.0
  %3658 = vmatprep.subr.mxu0 0.0
  %3659 = vmatpush1.msra.mxu0 0.0
  %3660 = vmatprep.subr.mxu0 0.0
  %3661 = vmatpush1.msra.mxu0 0.0
  %3662 = vmatprep.subr.mxu0 0.0
  %3663 = vmatpush1.msra.mxu0 0.0
  %3664 = vmatprep.subr.mxu0 0.0
  %3665 = vmatpush1.msra.mxu0 0.0
  %3666 = vmatprep.subr.mxu0 0.0
  %3667 = vmatpush1.msra.mxu0 0.0
  %3668 = vmatprep.subr.mxu0 0.0
  %3669 = vmatpush1.msra.mxu0 0.0
  %3670 = vmatprep.subr.mxu0 0.0
  %3671 = vmatpush1.msra.mxu0 0.0
  %3672 = vmatprep.subr.mxu0 0.0
  %3673 = vmatpush1.msra.mxu0 %v3637
  %3674 = vmatprep.subr.mxu0 0.0
  %3675 = vmatpush1.msra.mxu0 %v3636
  %3676 = vmatprep.subr.mxu0 0.0
  %3677 = vmatpush1.msra.mxu0 %v3635
  %3678 = vmatprep.subr.mxu0 0.0
  %3679 = vmatpush1.msra.mxu0 %v3634
  %3680 = vmatprep.subr.mxu0 0.0
  %3681 = vmatpush2.msra.mxu0 0.0
  %3682 = vmatprep.subr.mxu0 0.0
  %3683 = vmatpush2.msra.mxu0 0.0
  %3684 = vmatprep.subr.mxu0 0.0
  %3685 = vmatpush2.msra.mxu0 0.0
  %3686 = vmatprep.subr.mxu0 0.0
  %3687 = vmatpush2.msra.mxu0 0.0
  %3688 = vmatprep.subr.mxu0 0.0
  %3689 = vmatpush2.msra.mxu0 0.0
  %3690 = vmatprep.subr.mxu0 0.0
  %3691 = vmatpush2.msra.mxu0 0.0
  %3692 = vmatprep.subr.mxu0 0.0
  %3693 = vmatpush2.msra.mxu0 0.0
  %3694 = vmatprep.subr.mxu0 0.0
  %3695 = vmatpush2.msra.mxu0 0.0
  %3696 = vmatprep.subr.mxu0 0.0
  %3697 = vmatpush2.msra.mxu0 0.0
  %3698 = vmatprep.subr.mxu0 0.0
  %3699 = vmatpush2.msra.mxu0 0.0
  %3700 = vmatprep.subr.mxu0 0.0
  %3701 = vmatpush2.msra.mxu0 0.0
  %3702 = vmatprep.subr.mxu0 0.0
  %3703 = vmatpush2.msra.mxu0 0.0
  %3704 = vmatprep.subr.mxu0 0.0
  %3705 = vmatpush2.msra.mxu0 0.0
  %3706 = vmatprep.subr.mxu0 0.0
  %3707 = vmatpush2.msra.mxu0 0.0
  %3708 = vmatprep.subr.mxu0 0.0
  %3709 = vmatpush2.msra.mxu0 0.0
  %3710 = vmatprep.subr.mxu0 0.0
  %3711 = vmatpush2.msra.mxu0 0.0
  %3712 = vmatprep.mubr.f32.mxu0 0.0
  %3713 = vmatmul.mubr.f32.gmra.mxu0 %v3646
  %v3714 = vpop.f32.mrf.mxu0
  %v3715 = vadd.f32 0.0, %v3714
  %v3716 = vpop.f32.mrf.mxu0
  %3717 = vdwg.mxu0
  %v3718 = vadd.f32 %v3621, %v3715
  %v3719 = vxor.u32 %v3718, 2147483648
  %v3720 = vmul.f32 %v3719, 1.442695
  %v3721 = vpow.pop %v3720
  %v3722 = vadd.f32 %v3721, 1.0
  %v3723 = vrcp.pop %v3722
  %v3724 = vmul.f32 1.0, %v3723
  %v3725 = vtanh.pop %v3718
  %v3726 = vmul.f32 %v3724, 0.0
  %3728 = vrot.lane.b32.xlu0 %v3725, 64
  %v3729 = vpop.permute.xlu0 %3728
  %v3731 = vmul.f32 %v3724, %v3729
  %3733 = vrot.lane.b32.xlu0 %v3731, 32
  %v3734 = vpop.permute.xlu0 %3733
  %v3736 = vadd.f32 %v3726, %v3734
  %v3737 = vtanh.pop %v3736
  %3739 = vrot.lane.b32.xlu0 %v3737, 64
  %v3740 = vpop.permute.xlu0 %3739
  %v3742 = vmul.f32 %v3724, %v3740
  %v3744 = vlaneseq
  %v3745 = vshrl.u32 %v3744, 7
  %v3746 = vsub.s32 0, %v3745
  %v3747 = vrot.slane %v3644, %v3746
  %3750 = vrot.lane.b32.xlu0 %v3742, 32
  %v3751 = vpop.permute.xlu0 %3750
  %v3752 = vsel %vm89, %v3751, 0
  %3754 = vmatprep.subr.mxu0 0.0
  %3755 = vmatpush1.msra.mxu0 0.0
  %3756 = vmatprep.subr.mxu0 0.0
  %3757 = vmatpush1.msra.mxu0 0.0
  %3758 = vmatprep.subr.mxu0 0.0
  %3759 = vmatpush1.msra.mxu0 0.0
  %3760 = vmatprep.subr.mxu0 0.0
  %3761 = vmatpush1.msra.mxu0 0.0
  %3762 = vmatprep.subr.mxu0 0.0
  %3763 = vmatpush1.msra.mxu0 0.0
  %3764 = vmatprep.subr.mxu0 0.0
  %3765 = vmatpush1.msra.mxu0 0.0
  %3766 = vmatprep.subr.mxu0 0.0
  %3767 = vmatpush1.msra.mxu0 0.0
  %3768 = vmatprep.subr.mxu0 0.0
  %3769 = vmatpush1.msra.mxu0 0.0
  %3770 = vmatprep.subr.mxu0 0.0
  %3771 = vmatpush1.msra.mxu0 0.0
  %3772 = vmatprep.subr.mxu0 0.0
  %3773 = vmatpush1.msra.mxu0 0.0
  %3774 = vmatprep.subr.mxu0 0.0
  %3775 = vmatpush1.msra.mxu0 0.0
  %3776 = vmatprep.subr.mxu0 0.0
  %3777 = vmatpush1.msra.mxu0 0.0
  %3778 = vmatprep.subr.mxu0 0.0
  %3779 = vmatpush1.msra.mxu0 %v3633
  %3780 = vmatprep.subr.mxu0 0.0
  %3781 = vmatpush1.msra.mxu0 %v3632
  %3782 = vmatprep.subr.mxu0 0.0
  %3783 = vmatpush1.msra.mxu0 %v3631
  %3784 = vmatprep.subr.mxu0 0.0
  %3785 = vmatpush1.msra.mxu0 %v3630
  %3786 = vmatprep.subr.mxu0 0.0
  %3787 = vmatpush2.msra.mxu0 0.0
  %3788 = vmatprep.subr.mxu0 0.0
  %3789 = vmatpush2.msra.mxu0 0.0
  %3790 = vmatprep.subr.mxu0 0.0
  %3791 = vmatpush2.msra.mxu0 0.0
  %3792 = vmatprep.subr.mxu0 0.0
  %3793 = vmatpush2.msra.mxu0 0.0
  %3794 = vmatprep.subr.mxu0 0.0
  %3795 = vmatpush2.msra.mxu0 0.0
  %3796 = vmatprep.subr.mxu0 0.0
  %3797 = vmatpush2.msra.mxu0 0.0
  %3798 = vmatprep.subr.mxu0 0.0
  %3799 = vmatpush2.msra.mxu0 0.0
  %3800 = vmatprep.subr.mxu0 0.0
  %3801 = vmatpush2.msra.mxu0 0.0
  %3802 = vmatprep.subr.mxu0 0.0
  %3803 = vmatpush2.msra.mxu0 0.0
  %3804 = vmatprep.subr.mxu0 0.0
  %3805 = vmatpush2.msra.mxu0 0.0
  %3806 = vmatprep.subr.mxu0 0.0
  %3807 = vmatpush2.msra.mxu0 0.0
  %3808 = vmatprep.subr.mxu0 0.0
  %3809 = vmatpush2.msra.mxu0 0.0
  %3810 = vmatprep.subr.mxu0 0.0
  %3811 = vmatpush2.msra.mxu0 0.0
  %3812 = vmatprep.subr.mxu0 0.0
  %3813 = vmatpush2.msra.mxu0 0.0
  %3814 = vmatprep.subr.mxu0 0.0
  %3815 = vmatpush2.msra.mxu0 0.0
  %3816 = vmatprep.subr.mxu0 0.0
  %3817 = vmatpush2.msra.mxu0 0.0
  %3818 = vmatprep.mubr.f32.mxu0 0.0
  %3819 = vmatmul.mubr.f32.gmra.mxu0 %v3752
  %v3820 = vpop.f32.mrf.mxu0
  %v3821 = vadd.f32 %v3747, %v3820
  %v3822 = vpop.f32.mrf.mxu0
  %3823 = vdwg.mxu0
  %3824 = vmatprep.subr.mxu0 0.0
  %3825 = vmatpush1.msra.mxu0 0.0
  %3826 = vmatprep.subr.mxu0 0.0
  %3827 = vmatpush1.msra.mxu0 0.0
  %3828 = vmatprep.subr.mxu0 0.0
  %3829 = vmatpush1.msra.mxu0 0.0
  %3830 = vmatprep.subr.mxu0 0.0
  %3831 = vmatpush1.msra.mxu0 0.0
  %3832 = vmatprep.subr.mxu0 0.0
  %3833 = vmatpush1.msra.mxu0 0.0
  %3834 = vmatprep.subr.mxu0 0.0
  %3835 = vmatpush1.msra.mxu0 0.0
  %3836 = vmatprep.subr.mxu0 0.0
  %3837 = vmatpush1.msra.mxu0 0.0
  %3838 = vmatprep.subr.mxu0 0.0
  %3839 = vmatpush1.msra.mxu0 0.0
  %3840 = vmatprep.subr.mxu0 0.0
  %3841 = vmatpush1.msra.mxu0 0.0
  %3842 = vmatprep.subr.mxu0 0.0
  %3843 = vmatpush1.msra.mxu0 0.0
  %3844 = vmatprep.subr.mxu0 0.0
  %3845 = vmatpush1.msra.mxu0 0.0
  %3846 = vmatprep.subr.mxu0 0.0
  %3847 = vmatpush1.msra.mxu0 0.0
  %3848 = vmatprep.subr.mxu0 0.0
  %3849 = vmatpush1.msra.mxu0 %v3642
  %3850 = vmatprep.subr.mxu0 0.0
  %3851 = vmatpush1.msra.mxu0 %v3641
  %3852 = vmatprep.subr.mxu0 0.0
  %3853 = vmatpush1.msra.mxu0 %v3640
  %3854 = vmatprep.subr.mxu0 0.0
  %3855 = vmatpush1.msra.mxu0 %v3639
  %3856 = vmatprep.subr.mxu0 0.0
  %3857 = vmatpush2.msra.mxu0 0.0
  %3858 = vmatprep.subr.mxu0 0.0
  %3859 = vmatpush2.msra.mxu0 0.0
  %3860 = vmatprep.subr.mxu0 0.0
  %3861 = vmatpush2.msra.mxu0 0.0
  %3862 = vmatprep.subr.mxu0 0.0
  %3863 = vmatpush2.msra.mxu0 0.0
  %3864 = vmatprep.subr.mxu0 0.0
  %3865 = vmatpush2.msra.mxu0 0.0
  %3866 = vmatprep.subr.mxu0 0.0
  %3867 = vmatpush2.msra.mxu0 0.0
  %3868 = vmatprep.subr.mxu0 0.0
  %3869 = vmatpush2.msra.mxu0 0.0
  %3870 = vmatprep.subr.mxu0 0.0
  %3871 = vmatpush2.msra.mxu0 0.0
  %3872 = vmatprep.subr.mxu0 0.0
  %3873 = vmatpush2.msra.mxu0 0.0
  %3874 = vmatprep.subr.mxu0 0.0
  %3875 = vmatpush2.msra.mxu0 0.0
  %3876 = vmatprep.subr.mxu0 0.0
  %3877 = vmatpush2.msra.mxu0 0.0
  %3878 = vmatprep.subr.mxu0 0.0
  %3879 = vmatpush2.msra.mxu0 0.0
  %3880 = vmatprep.subr.mxu0 0.0
  %3881 = vmatpush2.msra.mxu0 0.0
  %3882 = vmatprep.subr.mxu0 0.0
  %3883 = vmatpush2.msra.mxu0 0.0
  %3884 = vmatprep.subr.mxu0 0.0
  %3885 = vmatpush2.msra.mxu0 0.0
  %3886 = vmatprep.subr.mxu0 0.0
  %3887 = vmatpush2.msra.mxu0 0.0
  %3888 = vmatprep.mubr.f32.mxu0 0.0
  %3889 = vmatmul.mubr.f32.gmra.mxu0 %v3646
  %v3890 = vpop.f32.mrf.mxu0
  %v3891 = vadd.f32 0.0, %v3890
  %v3892 = vpop.f32.mrf.mxu0
  %3893 = vdwg.mxu0
  %v3894 = vadd.f32 %v3821, %v3891
  %v3895 = vxor.u32 %v3894, 2147483648
  %v3896 = vmul.f32 %v3895, 1.442695
  %v3897 = vpow.pop %v3896
  %v3898 = vadd.f32 %v3897, 1.0
  %v3899 = vrcp.pop %v3898
  %v3900 = vmul.f32 1.0, %v3899
  %v3901 = vtanh.pop %v3894
  %v3902 = vmul.f32 %v3900, 0.0
  %3904 = vrot.lane.b32.xlu0 %v3901, 64
  %v3905 = vpop.permute.xlu0 %3904
  %v3907 = vmul.f32 %v3900, %v3905
  %3909 = vrot.lane.b32.xlu0 %v3907, 32
  %v3910 = vpop.permute.xlu0 %3909
  %v3912 = vadd.f32 %v3902, %v3910
  %v3913 = vtanh.pop %v3912
  %3915 = vrot.lane.b32.xlu0 %v3913, 64
  %v3916 = vpop.permute.xlu0 %3915
  %v3918 = vmul.f32 %v3900, %v3916
  %3920 = vrot.lane.b32.xlu0 %v3918, 32
  %v3921 = vpop.permute.xlu0 %3920
  %vm3923 = vcmask 254976
  %3924 = vst.msk [vmem:[#allocation2] sm:$0x3] %vm3923, %v3921
  %3925 = vmatprep.subr.mxu0 0.0
  %3926 = vmatpush1.msra.mxu0 0.0
  %3927 = vmatprep.subr.mxu0 0.0
  %3928 = vmatpush1.msra.mxu0 0.0
  %3929 = vmatprep.subr.mxu0 0.0
  %3930 = vmatpush1.msra.mxu0 0.0
  %3931 = vmatprep.subr.mxu0 0.0
  %3932 = vmatpush1.msra.mxu0 0.0
  %3933 = vmatprep.subr.mxu0 0.0
  %3934 = vmatpush1.msra.mxu0 0.0
  %3935 = vmatprep.subr.mxu0 0.0
  %3936 = vmatpush1.msra.mxu0 0.0
  %3937 = vmatprep.subr.mxu0 0.0
  %3938 = vmatpush1.msra.mxu0 0.0
  %3939 = vmatprep.subr.mxu0 0.0
  %3940 = vmatpush1.msra.mxu0 0.0
  %3941 = vmatprep.subr.mxu0 0.0
  %3942 = vmatpush1.msra.mxu0 0.0
  %3943 = vmatprep.subr.mxu0 0.0
  %3944 = vmatpush1.msra.mxu0 0.0
  %3945 = vmatprep.subr.mxu0 0.0
  %3946 = vmatpush1.msra.mxu0 0.0
  %3947 = vmatprep.subr.mxu0 0.0
  %3948 = vmatpush1.msra.mxu0 0.0
  %3949 = vmatprep.subr.mxu0 0.0
  %3950 = vmatpush1.msra.mxu0 %v3637
  %3951 = vmatprep.subr.mxu0 0.0
  %3952 = vmatpush1.msra.mxu0 %v3636
  %3953 = vmatprep.subr.mxu0 0.0
  %3954 = vmatpush1.msra.mxu0 %v3635
  %3955 = vmatprep.subr.mxu0 0.0
  %3956 = vmatpush1.msra.mxu0 %v3634
  %3957 = vmatprep.subr.mxu0 0.0
  %3958 = vmatpush2.msra.mxu0 0.0
  %3959 = vmatprep.subr.mxu0 0.0
  %3960 = vmatpush2.msra.mxu0 0.0
  %3961 = vmatprep.subr.mxu0 0.0
  %3962 = vmatpush2.msra.mxu0 0.0
  %3963 = vmatprep.subr.mxu0 0.0
  %3964 = vmatpush2.msra.mxu0 0.0
  %3965 = vmatprep.subr.mxu0 0.0
  %3966 = vmatpush2.msra.mxu0 0.0
  %3967 = vmatprep.subr.mxu0 0.0
  %3968 = vmatpush2.msra.mxu0 0.0
  %3969 = vmatprep.subr.mxu0 0.0
  %3970 = vmatpush2.msra.mxu0 0.0
  %3971 = vmatprep.subr.mxu0 0.0
  %3972 = vmatpush2.msra.mxu0 0.0
  %3973 = vmatprep.subr.mxu0 0.0
  %3974 = vmatpush2.msra.mxu0 0.0
  %3975 = vmatprep.subr.mxu0 0.0
  %3976 = vmatpush2.msra.mxu0 0.0
  %3977 = vmatprep.subr.mxu0 0.0
  %3978 = vmatpush2.msra.mxu0 0.0
  %3979 = vmatprep.subr.mxu0 0.0
  %3980 = vmatpush2.msra.mxu0 0.0
  %3981 = vmatprep.subr.mxu0 0.0
  %3982 = vmatpush2.msra.mxu0 0.0
  %3983 = vmatprep.subr.mxu0 0.0
  %3984 = vmatpush2.msra.mxu0 0.0
  %3985 = vmatprep.subr.mxu0 0.0
  %3986 = vmatpush2.msra.mxu0 0.0
  %3987 = vmatprep.subr.mxu0 0.0
  %3988 = vmatpush2.msra.mxu0 0.0
  %3989 = vmatprep.mubr.f32.mxu0 0.0
  %3990 = vmatmul.mubr.f32.gmra.mxu0 %v3752
  %v3991 = vpop.f32.mrf.mxu0
  %v3992 = vadd.f32 0.0, %v3991
  %v3993 = vpop.f32.mrf.mxu0
  %3994 = vdwg.mxu0
  %v3996 = vrot.slane %v3992, 6
  %v3998 = vadd.f32 %v3621, %v3996
  %v3999 = vxor.u32 %v3998, 2147483648
  %v4000 = vmul.f32 %v3999, 1.442695
  %v4001 = vpow.pop %v4000
  %v4002 = vadd.f32 %v4001, 1.0
  %v4003 = vrcp.pop %v4002
  %v4004 = vmul.f32 1.0, %v4003
  %v4005 = vtanh.pop %v3998
  %v4007 = vrot.slane %v3736, 6
  %v4009 = vmul.f32 %v4004, %v4007
  %4011 = vrot.lane.b32.xlu0 %v4005, 64
  %v4012 = vpop.permute.xlu0 %4011
  %v4014 = vmul.f32 %v4004, %v4012
  %4016 = vrot.lane.b32.xlu0 %v4014, 32
  %v4017 = vpop.permute.xlu0 %4016
  %v4019 = vadd.f32 %v4009, %v4017
  %v4020 = vtanh.pop %v4019
  %4022 = vrot.lane.b32.xlu0 %v4020, 64
  %v4023 = vpop.permute.xlu0 %4022
  %v4025 = vmul.f32 %v4004, %v4023
  %v4027 = vrot.slane %v4025, 2
  %4028 = vrot.lane.b32.xlu0 %v4027, 32
  %v4029 = vpop.permute.xlu0 %4028
  %v4030 = vsel %vm89, %v4029, 0
  %4032 = vmatprep.subr.mxu0 0.0
  %4033 = vmatpush1.msra.mxu0 0.0
  %4034 = vmatprep.subr.mxu0 0.0
  %4035 = vmatpush1.msra.mxu0 0.0
  %4036 = vmatprep.subr.mxu0 0.0
  %4037 = vmatpush1.msra.mxu0 0.0
  %4038 = vmatprep.subr.mxu0 0.0
  %4039 = vmatpush1.msra.mxu0 0.0
  %4040 = vmatprep.subr.mxu0 0.0
  %4041 = vmatpush1.msra.mxu0 0.0
  %4042 = vmatprep.subr.mxu0 0.0
  %4043 = vmatpush1.msra.mxu0 0.0
  %4044 = vmatprep.subr.mxu0 0.0
  %4045 = vmatpush1.msra.mxu0 0.0
  %4046 = vmatprep.subr.mxu0 0.0
  %4047 = vmatpush1.msra.mxu0 0.0
  %4048 = vmatprep.subr.mxu0 0.0
  %4049 = vmatpush1.msra.mxu0 0.0
  %4050 = vmatprep.subr.mxu0 0.0
  %4051 = vmatpush1.msra.mxu0 0.0
  %4052 = vmatprep.subr.mxu0 0.0
  %4053 = vmatpush1.msra.mxu0 0.0
  %4054 = vmatprep.subr.mxu0 0.0
  %4055 = vmatpush1.msra.mxu0 0.0
  %4056 = vmatprep.subr.mxu0 0.0
  %4057 = vmatpush1.msra.mxu0 %v3633
  %4058 = vmatprep.subr.mxu0 0.0
  %4059 = vmatpush1.msra.mxu0 %v3632
  %4060 = vmatprep.subr.mxu0 0.0
  %4061 = vmatpush1.msra.mxu0 %v3631
  %4062 = vmatprep.subr.mxu0 0.0
  %4063 = vmatpush1.msra.mxu0 %v3630
  %4064 = vmatprep.subr.mxu0 0.0
  %4065 = vmatpush2.msra.mxu0 0.0
  %4066 = vmatprep.subr.mxu0 0.0
  %4067 = vmatpush2.msra.mxu0 0.0
  %4068 = vmatprep.subr.mxu0 0.0
  %4069 = vmatpush2.msra.mxu0 0.0
  %4070 = vmatprep.subr.mxu0 0.0
  %4071 = vmatpush2.msra.mxu0 0.0
  %4072 = vmatprep.subr.mxu0 0.0
  %4073 = vmatpush2.msra.mxu0 0.0
  %4074 = vmatprep.subr.mxu0 0.0
  %4075 = vmatpush2.msra.mxu0 0.0
  %4076 = vmatprep.subr.mxu0 0.0
  %4077 = vmatpush2.msra.mxu0 0.0
  %4078 = vmatprep.subr.mxu0 0.0
  %4079 = vmatpush2.msra.mxu0 0.0
  %4080 = vmatprep.subr.mxu0 0.0
  %4081 = vmatpush2.msra.mxu0 0.0
  %4082 = vmatprep.subr.mxu0 0.0
  %4083 = vmatpush2.msra.mxu0 0.0
  %4084 = vmatprep.subr.mxu0 0.0
  %4085 = vmatpush2.msra.mxu0 0.0
  %4086 = vmatprep.subr.mxu0 0.0
  %4087 = vmatpush2.msra.mxu0 0.0
  %4088 = vmatprep.subr.mxu0 0.0
  %4089 = vmatpush2.msra.mxu0 0.0
  %4090 = vmatprep.subr.mxu0 0.0
  %4091 = vmatpush2.msra.mxu0 0.0
  %4092 = vmatprep.subr.mxu0 0.0
  %4093 = vmatpush2.msra.mxu0 0.0
  %4094 = vmatprep.subr.mxu0 0.0
  %4095 = vmatpush2.msra.mxu0 0.0
  %4096 = vmatprep.mubr.f32.mxu0 0.0
  %4097 = vmatmul.mubr.f32.gmra.mxu0 %v4030
  %v4098 = vpop.f32.mrf.mxu0
  %v4099 = vadd.f32 %v3747, %v4098
  %v4100 = vpop.f32.mrf.mxu0
  %4101 = vdwg.mxu0
  %v4102 = vsel %vm89, %v3921, 0
  %4104 = vmatprep.subr.mxu0 0.0
  %4105 = vmatpush1.msra.mxu0 0.0
  %4106 = vmatprep.subr.mxu0 0.0
  %4107 = vmatpush1.msra.mxu0 0.0
  %4108 = vmatprep.subr.mxu0 0.0
  %4109 = vmatpush1.msra.mxu0 0.0
  %4110 = vmatprep.subr.mxu0 0.0
  %4111 = vmatpush1.msra.mxu0 0.0
  %4112 = vmatprep.subr.mxu0 0.0
  %4113 = vmatpush1.msra.mxu0 0.0
  %4114 = vmatprep.subr.mxu0 0.0
  %4115 = vmatpush1.msra.mxu0 0.0
  %4116 = vmatprep.subr.mxu0 0.0
  %4117 = vmatpush1.msra.mxu0 0.0
  %4118 = vmatprep.subr.mxu0 0.0
  %4119 = vmatpush1.msra.mxu0 0.0
  %4120 = vmatprep.subr.mxu0 0.0
  %4121 = vmatpush1.msra.mxu0 0.0
  %4122 = vmatprep.subr.mxu0 0.0
  %4123 = vmatpush1.msra.mxu0 0.0
  %4124 = vmatprep.subr.mxu0 0.0
  %4125 = vmatpush1.msra.mxu0 0.0
  %4126 = vmatprep.subr.mxu0 0.0
  %4127 = vmatpush1.msra.mxu0 0.0
  %4128 = vmatprep.subr.mxu0 0.0
  %4129 = vmatpush1.msra.mxu0 %v3642
  %4130 = vmatprep.subr.mxu0 0.0
  %4131 = vmatpush1.msra.mxu0 %v3641
  %4132 = vmatprep.subr.mxu0 0.0
  %4133 = vmatpush1.msra.mxu0 %v3640
  %4134 = vmatprep.subr.mxu0 0.0
  %4135 = vmatpush1.msra.mxu0 %v3639
  %4136 = vmatprep.subr.mxu0 0.0
  %4137 = vmatpush2.msra.mxu0 0.0
  %4138 = vmatprep.subr.mxu0 0.0
  %4139 = vmatpush2.msra.mxu0 0.0
  %4140 = vmatprep.subr.mxu0 0.0
  %4141 = vmatpush2.msra.mxu0 0.0
  %4142 = vmatprep.subr.mxu0 0.0
  %4143 = vmatpush2.msra.mxu0 0.0
  %4144 = vmatprep.subr.mxu0 0.0
  %4145 = vmatpush2.msra.mxu0 0.0
  %4146 = vmatprep.subr.mxu0 0.0
  %4147 = vmatpush2.msra.mxu0 0.0
  %4148 = vmatprep.subr.mxu0 0.0
  %4149 = vmatpush2.msra.mxu0 0.0
  %4150 = vmatprep.subr.mxu0 0.0
  %4151 = vmatpush2.msra.mxu0 0.0
  %4152 = vmatprep.subr.mxu0 0.0
  %4153 = vmatpush2.msra.mxu0 0.0
  %4154 = vmatprep.subr.mxu0 0.0
  %4155 = vmatpush2.msra.mxu0 0.0
  %4156 = vmatprep.subr.mxu0 0.0
  %4157 = vmatpush2.msra.mxu0 0.0
  %4158 = vmatprep.subr.mxu0 0.0
  %4159 = vmatpush2.msra.mxu0 0.0
  %4160 = vmatprep.subr.mxu0 0.0
  %4161 = vmatpush2.msra.mxu0 0.0
  %4162 = vmatprep.subr.mxu0 0.0
  %4163 = vmatpush2.msra.mxu0 0.0
  %4164 = vmatprep.subr.mxu0 0.0
  %4165 = vmatpush2.msra.mxu0 0.0
  %4166 = vmatprep.subr.mxu0 0.0
  %4167 = vmatpush2.msra.mxu0 0.0
  %4168 = vmatprep.mubr.f32.mxu0 0.0
  %4169 = vmatmul.mubr.f32.gmra.mxu0 %v4102
  %v4170 = vpop.f32.mrf.mxu0
  %v4171 = vadd.f32 0.0, %v4170
  %v4172 = vpop.f32.mrf.mxu0
  %4173 = vdwg.mxu0
  %v4174 = vadd.f32 %v4099, %v4171
  %v4175 = vxor.u32 %v4174, 2147483648
  %v4176 = vmul.f32 %v4175, 1.442695
  %v4177 = vpow.pop %v4176
  %v4178 = vadd.f32 %v4177, 1.0
  %v4179 = vrcp.pop %v4178
  %v4180 = vmul.f32 1.0, %v4179
  %v4181 = vtanh.pop %v4174
  %v4182 = vmul.f32 %v4180, %v3912
  %4184 = vrot.lane.b32.xlu0 %v4181, 64
  %v4185 = vpop.permute.xlu0 %4184
  %v4187 = vmul.f32 %v4180, %v4185
  %4189 = vrot.lane.b32.xlu0 %v4187, 32
  %v4190 = vpop.permute.xlu0 %4189
  %v4192 = vadd.f32 %v4182, %v4190
  %v4193 = vtanh.pop %v4192
  %4195 = vrot.lane.b32.xlu0 %v4193, 64
  %v4196 = vpop.permute.xlu0 %4195
  %v4198 = vmul.f32 %v4180, %v4196
  %4200 = vrot.lane.b32.xlu0 %v4198, 32
  %v4201 = vpop.permute.xlu0 %4200
  %4203 = vst.msk [vmem:[#allocation2 + $0x2] sm:$0x3] %vm3923, %v4201
  %4204 = vmatprep.subr.mxu0 0.0
  %4205 = vmatpush1.msra.mxu0 0.0
  %4206 = vmatprep.subr.mxu0 0.0
  %4207 = vmatpush1.msra.mxu0 0.0
  %4208 = vmatprep.subr.mxu0 0.0
  %4209 = vmatpush1.msra.mxu0 0.0
  %4210 = vmatprep.subr.mxu0 0.0
  %4211 = vmatpush1.msra.mxu0 0.0
  %4212 = vmatprep.subr.mxu0 0.0
  %4213 = vmatpush1.msra.mxu0 0.0
  %4214 = vmatprep.subr.mxu0 0.0
  %4215 = vmatpush1.msra.mxu0 0.0
  %4216 = vmatprep.subr.mxu0 0.0
  %4217 = vmatpush1.msra.mxu0 0.0
  %4218 = vmatprep.subr.mxu0 0.0
  %4219 = vmatpush1.msra.mxu0 0.0
  %4220 = vmatprep.subr.mxu0 0.0
  %4221 = vmatpush1.msra.mxu0 0.0
  %4222 = vmatprep.subr.mxu0 0.0
  %4223 = vmatpush1.msra.mxu0 0.0
  %4224 = vmatprep.subr.mxu0 0.0
  %4225 = vmatpush1.msra.mxu0 0.0
  %4226 = vmatprep.subr.mxu0 0.0
  %4227 = vmatpush1.msra.mxu0 0.0
  %4228 = vmatprep.subr.mxu0 0.0
  %4229 = vmatpush1.msra.mxu0 %v3637
  %4230 = vmatprep.subr.mxu0 0.0
  %4231 = vmatpush1.msra.mxu0 %v3636
  %4232 = vmatprep.subr.mxu0 0.0
  %4233 = vmatpush1.msra.mxu0 %v3635
  %4234 = vmatprep.subr.mxu0 0.0
  %4235 = vmatpush1.msra.mxu0 %v3634
  %4236 = vmatprep.subr.mxu0 0.0
  %4237 = vmatpush2.msra.mxu0 0.0
  %4238 = vmatprep.subr.mxu0 0.0
  %4239 = vmatpush2.msra.mxu0 0.0
  %4240 = vmatprep.subr.mxu0 0.0
  %4241 = vmatpush2.msra.mxu0 0.0
  %4242 = vmatprep.subr.mxu0 0.0
  %4243 = vmatpush2.msra.mxu0 0.0
  %4244 = vmatprep.subr.mxu0 0.0
  %4245 = vmatpush2.msra.mxu0 0.0
  %4246 = vmatprep.subr.mxu0 0.0
  %4247 = vmatpush2.msra.mxu0 0.0
  %4248 = vmatprep.subr.mxu0 0.0
  %4249 = vmatpush2.msra.mxu0 0.0
  %4250 = vmatprep.subr.mxu0 0.0
  %4251 = vmatpush2.msra.mxu0 0.0
  %4252 = vmatprep.subr.mxu0 0.0
  %4253 = vmatpush2.msra.mxu0 0.0
  %4254 = vmatprep.subr.mxu0 0.0
  %4255 = vmatpush2.msra.mxu0 0.0
  %4256 = vmatprep.subr.mxu0 0.0
  %4257 = vmatpush2.msra.mxu0 0.0
  %4258 = vmatprep.subr.mxu0 0.0
  %4259 = vmatpush2.msra.mxu0 0.0
  %4260 = vmatprep.subr.mxu0 0.0
  %4261 = vmatpush2.msra.mxu0 0.0
  %4262 = vmatprep.subr.mxu0 0.0
  %4263 = vmatpush2.msra.mxu0 0.0
  %4264 = vmatprep.subr.mxu0 0.0
  %4265 = vmatpush2.msra.mxu0 0.0
  %4266 = vmatprep.subr.mxu0 0.0
  %4267 = vmatpush2.msra.mxu0 0.0
  %4268 = vmatprep.mubr.f32.mxu0 0.0
  %4269 = vmatmul.mubr.f32.gmra.mxu0 %v4030
  %v4270 = vpop.f32.mrf.mxu0
  %v4271 = vadd.f32 0.0, %v4270
  %v4272 = vpop.f32.mrf.mxu0
  %4273 = vdwg.mxu0
  %v4275 = vrot.slane %v4271, 4
  %v4277 = vadd.f32 %v3621, %v4275
  %v4278 = vxor.u32 %v4277, 2147483648
  %v4279 = vmul.f32 %v4278, 1.442695
  %v4280 = vpow.pop %v4279
  %v4281 = vadd.f32 %v4280, 1.0
  %v4282 = vrcp.pop %v4281
  %v4283 = vmul.f32 1.0, %v4282
  %v4284 = vtanh.pop %v4277
  %v4286 = vrot.slane %v4019, 6
  %v4288 = vmul.f32 %v4283, %v4286
  %4290 = vrot.lane.b32.xlu0 %v4284, 64
  %v4291 = vpop.permute.xlu0 %4290
  %v4293 = vmul.f32 %v4283, %v4291
  %4295 = vrot.lane.b32.xlu0 %v4293, 32
  %v4296 = vpop.permute.xlu0 %4295
  %v4298 = vadd.f32 %v4288, %v4296
  %v4299 = vtanh.pop %v4298
  %4301 = vrot.lane.b32.xlu0 %v4299, 64
  %v4302 = vpop.permute.xlu0 %4301
  %v4304 = vmul.f32 %v4283, %v4302
  %v4306 = vrot.slane %v4304, 4
  %4307 = vrot.lane.b32.xlu0 %v4306, 32
  %v4308 = vpop.permute.xlu0 %4307
  %v4309 = vsel %vm89, %v4308, 0
  %4311 = vmatprep.subr.mxu0 0.0
  %4312 = vmatpush1.msra.mxu0 0.0
  %4313 = vmatprep.subr.mxu0 0.0
  %4314 = vmatpush1.msra.mxu0 0.0
  %4315 = vmatprep.subr.mxu0 0.0
  %4316 = vmatpush1.msra.mxu0 0.0
  %4317 = vmatprep.subr.mxu0 0.0
  %4318 = vmatpush1.msra.mxu0 0.0
  %4319 = vmatprep.subr.mxu0 0.0
  %4320 = vmatpush1.msra.mxu0 0.0
  %4321 = vmatprep.subr.mxu0 0.0
  %4322 = vmatpush1.msra.mxu0 0.0
  %4323 = vmatprep.subr.mxu0 0.0
  %4324 = vmatpush1.msra.mxu0 0.0
  %4325 = vmatprep.subr.mxu0 0.0
  %4326 = vmatpush1.msra.mxu0 0.0
  %4327 = vmatprep.subr.mxu0 0.0
  %4328 = vmatpush1.msra.mxu0 0.0
  %4329 = vmatprep.subr.mxu0 0.0
  %4330 = vmatpush1.msra.mxu0 0.0
  %4331 = vmatprep.subr.mxu0 0.0
  %4332 = vmatpush1.msra.mxu0 0.0
  %4333 = vmatprep.subr.mxu0 0.0
  %4334 = vmatpush1.msra.mxu0 0.0
  %4335 = vmatprep.subr.mxu0 0.0
  %4336 = vmatpush1.msra.mxu0 %v3633
  %4337 = vmatprep.subr.mxu0 0.0
  %4338 = vmatpush1.msra.mxu0 %v3632
  %4339 = vmatprep.subr.mxu0 0.0
  %4340 = vmatpush1.msra.mxu0 %v3631
  %4341 = vmatprep.subr.mxu0 0.0
  %4342 = vmatpush1.msra.mxu0 %v3630
  %4343 = vmatprep.subr.mxu0 0.0
  %4344 = vmatpush2.msra.mxu0 0.0
  %4345 = vmatprep.subr.mxu0 0.0
  %4346 = vmatpush2.msra.mxu0 0.0
  %4347 = vmatprep.subr.mxu0 0.0
  %4348 = vmatpush2.msra.mxu0 0.0
  %4349 = vmatprep.subr.mxu0 0.0
  %4350 = vmatpush2.msra.mxu0 0.0
  %4351 = vmatprep.subr.mxu0 0.0
  %4352 = vmatpush2.msra.mxu0 0.0
  %4353 = vmatprep.subr.mxu0 0.0
  %4354 = vmatpush2.msra.mxu0 0.0
  %4355 = vmatprep.subr.mxu0 0.0
  %4356 = vmatpush2.msra.mxu0 0.0
  %4357 = vmatprep.subr.mxu0 0.0
  %4358 = vmatpush2.msra.mxu0 0.0
  %4359 = vmatprep.subr.mxu0 0.0
  %4360 = vmatpush2.msra.mxu0 0.0
  %4361 = vmatprep.subr.mxu0 0.0
  %4362 = vmatpush2.msra.mxu0 0.0
  %4363 = vmatprep.subr.mxu0 0.0
  %4364 = vmatpush2.msra.mxu0 0.0
  %4365 = vmatprep.subr.mxu0 0.0
  %4366 = vmatpush2.msra.mxu0 0.0
  %4367 = vmatprep.subr.mxu0 0.0
  %4368 = vmatpush2.msra.mxu0 0.0
  %4369 = vmatprep.subr.mxu0 0.0
  %4370 = vmatpush2.msra.mxu0 0.0
  %4371 = vmatprep.subr.mxu0 0.0
  %4372 = vmatpush2.msra.mxu0 0.0
  %4373 = vmatprep.subr.mxu0 0.0
  %4374 = vmatpush2.msra.mxu0 0.0
  %4375 = vmatprep.mubr.f32.mxu0 0.0
  %4376 = vmatmul.mubr.f32.gmra.mxu0 %v4309
  %v4377 = vpop.f32.mrf.mxu0
  %v4378 = vadd.f32 %v3747, %v4377
  %v4379 = vpop.f32.mrf.mxu0
  %4380 = vdwg.mxu0
  %v4381 = vsel %vm89, %v4201, 0
  %4383 = vmatprep.subr.mxu0 0.0
  %4384 = vmatpush1.msra.mxu0 0.0
  %4385 = vmatprep.subr.mxu0 0.0
  %4386 = vmatpush1.msra.mxu0 0.0
  %4387 = vmatprep.subr.mxu0 0.0
  %4388 = vmatpush1.msra.mxu0 0.0
  %4389 = vmatprep.subr.mxu0 0.0
  %4390 = vmatpush1.msra.mxu0 0.0
  %4391 = vmatprep.subr.mxu0 0.0
  %4392 = vmatpush1.msra.mxu0 0.0
  %4393 = vmatprep.subr.mxu0 0.0
  %4394 = vmatpush1.msra.mxu0 0.0
  %4395 = vmatprep.subr.mxu0 0.0
  %4396 = vmatpush1.msra.mxu0 0.0
  %4397 = vmatprep.subr.mxu0 0.0
  %4398 = vmatpush1.msra.mxu0 0.0
  %4399 = vmatprep.subr.mxu0 0.0
  %4400 = vmatpush1.msra.mxu0 0.0
  %4401 = vmatprep.subr.mxu0 0.0
  %4402 = vmatpush1.msra.mxu0 0.0
  %4403 = vmatprep.subr.mxu0 0.0
  %4404 = vmatpush1.msra.mxu0 0.0
  %4405 = vmatprep.subr.mxu0 0.0
  %4406 = vmatpush1.msra.mxu0 0.0
  %4407 = vmatprep.subr.mxu0 0.0
  %4408 = vmatpush1.msra.mxu0 %v3642
  %4409 = vmatprep.subr.mxu0 0.0
  %4410 = vmatpush1.msra.mxu0 %v3641
  %4411 = vmatprep.subr.mxu0 0.0
  %4412 = vmatpush1.msra.mxu0 %v3640
  %4413 = vmatprep.subr.mxu0 0.0
  %4414 = vmatpush1.msra.mxu0 %v3639
  %4415 = vmatprep.subr.mxu0 0.0
  %4416 = vmatpush2.msra.mxu0 0.0
  %4417 = vmatprep.subr.mxu0 0.0
  %4418 = vmatpush2.msra.mxu0 0.0
  %4419 = vmatprep.subr.mxu0 0.0
  %4420 = vmatpush2.msra.mxu0 0.0
  %4421 = vmatprep.subr.mxu0 0.0
  %4422 = vmatpush2.msra.mxu0 0.0
  %4423 = vmatprep.subr.mxu0 0.0
  %4424 = vmatpush2.msra.mxu0 0.0
  %4425 = vmatprep.subr.mxu0 0.0
  %4426 = vmatpush2.msra.mxu0 0.0
  %4427 = vmatprep.subr.mxu0 0.0
  %4428 = vmatpush2.msra.mxu0 0.0
  %4429 = vmatprep.subr.mxu0 0.0
  %4430 = vmatpush2.msra.mxu0 0.0
  %4431 = vmatprep.subr.mxu0 0.0
  %4432 = vmatpush2.msra.mxu0 0.0
  %4433 = vmatprep.subr.mxu0 0.0
  %4434 = vmatpush2.msra.mxu0 0.0
  %4435 = vmatprep.subr.mxu0 0.0
  %4436 = vmatpush2.msra.mxu0 0.0
  %4437 = vmatprep.subr.mxu0 0.0
  %4438 = vmatpush2.msra.mxu0 0.0
  %4439 = vmatprep.subr.mxu0 0.0
  %4440 = vmatpush2.msra.mxu0 0.0
  %4441 = vmatprep.subr.mxu0 0.0
  %4442 = vmatpush2.msra.mxu0 0.0
  %4443 = vmatprep.subr.mxu0 0.0
  %4444 = vmatpush2.msra.mxu0 0.0
  %4445 = vmatprep.subr.mxu0 0.0
  %4446 = vmatpush2.msra.mxu0 0.0
  %4447 = vmatprep.mubr.f32.mxu0 0.0
  %4448 = vmatmul.mubr.f32.gmra.mxu0 %v4381
  %v4449 = vpop.f32.mrf.mxu0
  %v4450 = vadd.f32 0.0, %v4449
  %v4451 = vpop.f32.mrf.mxu0
  %4452 = vdwg.mxu0
  %v4453 = vadd.f32 %v4378, %v4450
  %v4454 = vxor.u32 %v4453, 2147483648
  %v4455 = vmul.f32 %v4454, 1.442695
  %v4456 = vpow.pop %v4455
  %v4457 = vadd.f32 %v4456, 1.0
  %v4458 = vrcp.pop %v4457
  %v4459 = vmul.f32 1.0, %v4458
  %v4460 = vtanh.pop %v4453
  %v4461 = vmul.f32 %v4459, %v4192
  %4463 = vrot.lane.b32.xlu0 %v4460, 64
  %v4464 = vpop.permute.xlu0 %4463
  %v4466 = vmul.f32 %v4459, %v4464
  %4468 = vrot.lane.b32.xlu0 %v4466, 32
  %v4469 = vpop.permute.xlu0 %4468
  %v4471 = vadd.f32 %v4461, %v4469
  %v4472 = vtanh.pop %v4471
  %4474 = vrot.lane.b32.xlu0 %v4472, 64
  %v4475 = vpop.permute.xlu0 %4474
  %v4477 = vmul.f32 %v4459, %v4475
  %4479 = vrot.lane.b32.xlu0 %v4477, 32
  %v4480 = vpop.permute.xlu0 %4479
  %4482 = vst.msk [vmem:[#allocation2 + $0x4] sm:$0x3] %vm3923, %v4480
  %4483 = vmatprep.subr.mxu0 0.0
  %4484 = vmatpush1.msra.mxu0 0.0
  %4485 = vmatprep.subr.mxu0 0.0
  %4486 = vmatpush1.msra.mxu0 0.0
  %4487 = vmatprep.subr.mxu0 0.0
  %4488 = vmatpush1.msra.mxu0 0.0
  %4489 = vmatprep.subr.mxu0 0.0
  %4490 = vmatpush1.msra.mxu0 0.0
  %4491 = vmatprep.subr.mxu0 0.0
  %4492 = vmatpush1.msra.mxu0 0.0
  %4493 = vmatprep.subr.mxu0 0.0
  %4494 = vmatpush1.msra.mxu0 0.0
  %4495 = vmatprep.subr.mxu0 0.0
  %4496 = vmatpush1.msra.mxu0 0.0
  %4497 = vmatprep.subr.mxu0 0.0
  %4498 = vmatpush1.msra.mxu0 0.0
  %4499 = vmatprep.subr.mxu0 0.0
  %4500 = vmatpush1.msra.mxu0 0.0
  %4501 = vmatprep.subr.mxu0 0.0
  %4502 = vmatpush1.msra.mxu0 0.0
  %4503 = vmatprep.subr.mxu0 0.0
  %4504 = vmatpush1.msra.mxu0 0.0
  %4505 = vmatprep.subr.mxu0 0.0
  %4506 = vmatpush1.msra.mxu0 0.0
  %4507 = vmatprep.subr.mxu0 0.0
  %4508 = vmatpush1.msra.mxu0 %v3637
  %4509 = vmatprep.subr.mxu0 0.0
  %4510 = vmatpush1.msra.mxu0 %v3636
  %4511 = vmatprep.subr.mxu0 0.0
  %4512 = vmatpush1.msra.mxu0 %v3635
  %4513 = vmatprep.subr.mxu0 0.0
  %4514 = vmatpush1.msra.mxu0 %v3634
  %4515 = vmatprep.subr.mxu0 0.0
  %4516 = vmatpush2.msra.mxu0 0.0
  %4517 = vmatprep.subr.mxu0 0.0
  %4518 = vmatpush2.msra.mxu0 0.0
  %4519 = vmatprep.subr.mxu0 0.0
  %4520 = vmatpush2.msra.mxu0 0.0
  %4521 = vmatprep.subr.mxu0 0.0
  %4522 = vmatpush2.msra.mxu0 0.0
  %4523 = vmatprep.subr.mxu0 0.0
  %4524 = vmatpush2.msra.mxu0 0.0
  %4525 = vmatprep.subr.mxu0 0.0
  %4526 = vmatpush2.msra.mxu0 0.0
  %4527 = vmatprep.subr.mxu0 0.0
  %4528 = vmatpush2.msra.mxu0 0.0
  %4529 = vmatprep.subr.mxu0 0.0
  %4530 = vmatpush2.msra.mxu0 0.0
  %4531 = vmatprep.subr.mxu0 0.0
  %4532 = vmatpush2.msra.mxu0 0.0
  %4533 = vmatprep.subr.mxu0 0.0
  %4534 = vmatpush2.msra.mxu0 0.0
  %4535 = vmatprep.subr.mxu0 0.0
  %4536 = vmatpush2.msra.mxu0 0.0
  %4537 = vmatprep.subr.mxu0 0.0
  %4538 = vmatpush2.msra.mxu0 0.0
  %4539 = vmatprep.subr.mxu0 0.0
  %4540 = vmatpush2.msra.mxu0 0.0
  %4541 = vmatprep.subr.mxu0 0.0
  %4542 = vmatpush2.msra.mxu0 0.0
  %4543 = vmatprep.subr.mxu0 0.0
  %4544 = vmatpush2.msra.mxu0 0.0
  %4545 = vmatprep.subr.mxu0 0.0
  %4546 = vmatpush2.msra.mxu0 0.0
  %4547 = vmatprep.mubr.f32.mxu0 0.0
  %4548 = vmatmul.mubr.f32.gmra.mxu0 %v4309
  %v4549 = vpop.f32.mrf.mxu0
  %v4550 = vadd.f32 0.0, %v4549
  %v4551 = vpop.f32.mrf.mxu0
  %4552 = vdwg.mxu0
  %v4554 = vrot.slane %v4550, 2
  %v4556 = vadd.f32 %v3621, %v4554
  %v4557 = vxor.u32 %v4556, 2147483648
  %v4558 = vmul.f32 %v4557, 1.442695
  %v4559 = vpow.pop %v4558
  %v4560 = vadd.f32 %v4559, 1.0
  %v4561 = vrcp.pop %v4560
  %v4562 = vmul.f32 1.0, %v4561
  %v4563 = vtanh.pop %v4556
  %v4565 = vrot.slane %v4298, 6
  %v4567 = vmul.f32 %v4562, %v4565
  %4569 = vrot.lane.b32.xlu0 %v4563, 64
  %v4570 = vpop.permute.xlu0 %4569
  %v4572 = vmul.f32 %v4562, %v4570
  %4574 = vrot.lane.b32.xlu0 %v4572, 32
  %v4575 = vpop.permute.xlu0 %4574
  %v4577 = vadd.f32 %v4567, %v4575
  %v4578 = vtanh.pop %v4577
  %4580 = vrot.lane.b32.xlu0 %v4578, 64
  %v4581 = vpop.permute.xlu0 %4580
  %v4583 = vmul.f32 %v4562, %v4581
  %v4585 = vrot.slane %v4583, 6
  %4586 = vrot.lane.b32.xlu0 %v4585, 32
  %v4587 = vpop.permute.xlu0 %4586
  %v4588 = vsel %vm89, %v4587, 0
  %4590 = vmatprep.subr.mxu0 0.0
  %4591 = vmatpush1.msra.mxu0 0.0
  %4592 = vmatprep.subr.mxu0 0.0
  %4593 = vmatpush1.msra.mxu0 0.0
  %4594 = vmatprep.subr.mxu0 0.0
  %4595 = vmatpush1.msra.mxu0 0.0
  %4596 = vmatprep.subr.mxu0 0.0
  %4597 = vmatpush1.msra.mxu0 0.0
  %4598 = vmatprep.subr.mxu0 0.0
  %4599 = vmatpush1.msra.mxu0 0.0
  %4600 = vmatprep.subr.mxu0 0.0
  %4601 = vmatpush1.msra.mxu0 0.0
  %4602 = vmatprep.subr.mxu0 0.0
  %4603 = vmatpush1.msra.mxu0 0.0
  %4604 = vmatprep.subr.mxu0 0.0
  %4605 = vmatpush1.msra.mxu0 0.0
  %4606 = vmatprep.subr.mxu0 0.0
  %4607 = vmatpush1.msra.mxu0 0.0
  %4608 = vmatprep.subr.mxu0 0.0
  %4609 = vmatpush1.msra.mxu0 0.0
  %4610 = vmatprep.subr.mxu0 0.0
  %4611 = vmatpush1.msra.mxu0 0.0
  %4612 = vmatprep.subr.mxu0 0.0
  %4613 = vmatpush1.msra.mxu0 0.0
  %4614 = vmatprep.subr.mxu0 0.0
  %4615 = vmatpush1.msra.mxu0 %v3633
  %4616 = vmatprep.subr.mxu0 0.0
  %4617 = vmatpush1.msra.mxu0 %v3632
  %4618 = vmatprep.subr.mxu0 0.0
  %4619 = vmatpush1.msra.mxu0 %v3631
  %4620 = vmatprep.subr.mxu0 0.0
  %4621 = vmatpush1.msra.mxu0 %v3630
  %4622 = vmatprep.subr.mxu0 0.0
  %4623 = vmatpush2.msra.mxu0 0.0
  %4624 = vmatprep.subr.mxu0 0.0
  %4625 = vmatpush2.msra.mxu0 0.0
  %4626 = vmatprep.subr.mxu0 0.0
  %4627 = vmatpush2.msra.mxu0 0.0
  %4628 = vmatprep.subr.mxu0 0.0
  %4629 = vmatpush2.msra.mxu0 0.0
  %4630 = vmatprep.subr.mxu0 0.0
  %4631 = vmatpush2.msra.mxu0 0.0
  %4632 = vmatprep.subr.mxu0 0.0
  %4633 = vmatpush2.msra.mxu0 0.0
  %4634 = vmatprep.subr.mxu0 0.0
  %4635 = vmatpush2.msra.mxu0 0.0
  %4636 = vmatprep.subr.mxu0 0.0
  %4637 = vmatpush2.msra.mxu0 0.0
  %4638 = vmatprep.subr.mxu0 0.0
  %4639 = vmatpush2.msra.mxu0 0.0
  %4640 = vmatprep.subr.mxu0 0.0
  %4641 = vmatpush2.msra.mxu0 0.0
  %4642 = vmatprep.subr.mxu0 0.0
  %4643 = vmatpush2.msra.mxu0 0.0
  %4644 = vmatprep.subr.mxu0 0.0
  %4645 = vmatpush2.msra.mxu0 0.0
  %4646 = vmatprep.subr.mxu0 0.0
  %4647 = vmatpush2.msra.mxu0 0.0
  %4648 = vmatprep.subr.mxu0 0.0
  %4649 = vmatpush2.msra.mxu0 0.0
  %4650 = vmatprep.subr.mxu0 0.0
  %4651 = vmatpush2.msra.mxu0 0.0
  %4652 = vmatprep.subr.mxu0 0.0
  %4653 = vmatpush2.msra.mxu0 0.0
  %4654 = vmatprep.mubr.f32.mxu0 0.0
  %4655 = vmatmul.mubr.f32.gmra.mxu0 %v4588
  %v4656 = vpop.f32.mrf.mxu0
  %v4657 = vadd.f32 %v3747, %v4656
  %v4658 = vpop.f32.mrf.mxu0
  %4659 = vdwg.mxu0
  %v4660 = vsel %vm89, %v4480, 0
  %4662 = vmatprep.subr.mxu0 0.0
  %4663 = vmatpush1.msra.mxu0 0.0
  %4664 = vmatprep.subr.mxu0 0.0
  %4665 = vmatpush1.msra.mxu0 0.0
  %4666 = vmatprep.subr.mxu0 0.0
  %4667 = vmatpush1.msra.mxu0 0.0
  %4668 = vmatprep.subr.mxu0 0.0
  %4669 = vmatpush1.msra.mxu0 0.0
  %4670 = vmatprep.subr.mxu0 0.0
  %4671 = vmatpush1.msra.mxu0 0.0
  %4672 = vmatprep.subr.mxu0 0.0
  %4673 = vmatpush1.msra.mxu0 0.0
  %4674 = vmatprep.subr.mxu0 0.0
  %4675 = vmatpush1.msra.mxu0 0.0
  %4676 = vmatprep.subr.mxu0 0.0
  %4677 = vmatpush1.msra.mxu0 0.0
  %4678 = vmatprep.subr.mxu0 0.0
  %4679 = vmatpush1.msra.mxu0 0.0
  %4680 = vmatprep.subr.mxu0 0.0
  %4681 = vmatpush1.msra.mxu0 0.0
  %4682 = vmatprep.subr.mxu0 0.0
  %4683 = vmatpush1.msra.mxu0 0.0
  %4684 = vmatprep.subr.mxu0 0.0
  %4685 = vmatpush1.msra.mxu0 0.0
  %4686 = vmatprep.subr.mxu0 0.0
  %4687 = vmatpush1.msra.mxu0 %v3642
  %4688 = vmatprep.subr.mxu0 0.0
  %4689 = vmatpush1.msra.mxu0 %v3641
  %4690 = vmatprep.subr.mxu0 0.0
  %4691 = vmatpush1.msra.mxu0 %v3640
  %4692 = vmatprep.subr.mxu0 0.0
  %4693 = vmatpush1.msra.mxu0 %v3639
  %4694 = vmatprep.subr.mxu0 0.0
  %4695 = vmatpush2.msra.mxu0 0.0
  %4696 = vmatprep.subr.mxu0 0.0
  %4697 = vmatpush2.msra.mxu0 0.0
  %4698 = vmatprep.subr.mxu0 0.0
  %4699 = vmatpush2.msra.mxu0 0.0
  %4700 = vmatprep.subr.mxu0 0.0
  %4701 = vmatpush2.msra.mxu0 0.0
  %4702 = vmatprep.subr.mxu0 0.0
  %4703 = vmatpush2.msra.mxu0 0.0
  %4704 = vmatprep.subr.mxu0 0.0
  %4705 = vmatpush2.msra.mxu0 0.0
  %4706 = vmatprep.subr.mxu0 0.0
  %4707 = vmatpush2.msra.mxu0 0.0
  %4708 = vmatprep.subr.mxu0 0.0
  %4709 = vmatpush2.msra.mxu0 0.0
  %4710 = vmatprep.subr.mxu0 0.0
  %4711 = vmatpush2.msra.mxu0 0.0
  %4712 = vmatprep.subr.mxu0 0.0
  %4713 = vmatpush2.msra.mxu0 0.0
  %4714 = vmatprep.subr.mxu0 0.0
  %4715 = vmatpush2.msra.mxu0 0.0
  %4716 = vmatprep.subr.mxu0 0.0
  %4717 = vmatpush2.msra.mxu0 0.0
  %4718 = vmatprep.subr.mxu0 0.0
  %4719 = vmatpush2.msra.mxu0 0.0
  %4720 = vmatprep.subr.mxu0 0.0
  %4721 = vmatpush2.msra.mxu0 0.0
  %4722 = vmatprep.subr.mxu0 0.0
  %4723 = vmatpush2.msra.mxu0 0.0
  %4724 = vmatprep.subr.mxu0 0.0
  %4725 = vmatpush2.msra.mxu0 0.0
  %4726 = vmatprep.mubr.f32.mxu0 0.0
  %4727 = vmatmul.mubr.f32.gmra.mxu0 %v4660
  %v4728 = vpop.f32.mrf.mxu0
  %v4729 = vadd.f32 0.0, %v4728
  %v4730 = vpop.f32.mrf.mxu0
  %4731 = vdwg.mxu0
  %v4732 = vadd.f32 %v4657, %v4729
  %v4733 = vxor.u32 %v4732, 2147483648
  %v4734 = vmul.f32 %v4733, 1.442695
  %v4735 = vpow.pop %v4734
  %v4736 = vadd.f32 %v4735, 1.0
  %v4737 = vrcp.pop %v4736
  %v4738 = vmul.f32 1.0, %v4737
  %v4739 = vtanh.pop %v4732
  %v4740 = vmul.f32 %v4738, %v4471
  %4742 = vrot.lane.b32.xlu0 %v4739, 64
  %v4743 = vpop.permute.xlu0 %4742
  %v4745 = vmul.f32 %v4738, %v4743
  %4747 = vrot.lane.b32.xlu0 %v4745, 32
  %v4748 = vpop.permute.xlu0 %4747
  %v4750 = vadd.f32 %v4740, %v4748
  %v4751 = vtanh.pop %v4750
  %4753 = vrot.lane.b32.xlu0 %v4751, 64
  %v4754 = vpop.permute.xlu0 %4753
  %v4756 = vmul.f32 %v4738, %v4754
  %4758 = vrot.lane.b32.xlu0 %v4756, 32
  %v4759 = vpop.permute.xlu0 %4758
  %4761 = vst.msk [vmem:[#allocation2 + $0x6] sm:$0x3] %vm3923, %v4759
  %4762 = vmatprep.subr.mxu0 0.0
  %4763 = vmatpush1.msra.mxu0 0.0
  %4764 = vmatprep.subr.mxu0 0.0
  %4765 = vmatpush1.msra.mxu0 0.0
  %4766 = vmatprep.subr.mxu0 0.0
  %4767 = vmatpush1.msra.mxu0 0.0
  %4768 = vmatprep.subr.mxu0 0.0
  %4769 = vmatpush1.msra.mxu0 0.0
  %4770 = vmatprep.subr.mxu0 0.0
  %4771 = vmatpush1.msra.mxu0 0.0
  %4772 = vmatprep.subr.mxu0 0.0
  %4773 = vmatpush1.msra.mxu0 0.0
  %4774 = vmatprep.subr.mxu0 0.0
  %4775 = vmatpush1.msra.mxu0 0.0
  %4776 = vmatprep.subr.mxu0 0.0
  %4777 = vmatpush1.msra.mxu0 0.0
  %4778 = vmatprep.subr.mxu0 0.0
  %4779 = vmatpush1.msra.mxu0 0.0
  %4780 = vmatprep.subr.mxu0 0.0
  %4781 = vmatpush1.msra.mxu0 0.0
  %4782 = vmatprep.subr.mxu0 0.0
  %4783 = vmatpush1.msra.mxu0 0.0
  %4784 = vmatprep.subr.mxu0 0.0
  %4785 = vmatpush1.msra.mxu0 0.0
  %4786 = vmatprep.subr.mxu0 0.0
  %4787 = vmatpush1.msra.mxu0 %v3637
  %4788 = vmatprep.subr.mxu0 0.0
  %4789 = vmatpush1.msra.mxu0 %v3636
  %4790 = vmatprep.subr.mxu0 0.0
  %4791 = vmatpush1.msra.mxu0 %v3635
  %4792 = vmatprep.subr.mxu0 0.0
  %4793 = vmatpush1.msra.mxu0 %v3634
  %4794 = vmatprep.subr.mxu0 0.0
  %4795 = vmatpush2.msra.mxu0 0.0
  %4796 = vmatprep.subr.mxu0 0.0
  %4797 = vmatpush2.msra.mxu0 0.0
  %4798 = vmatprep.subr.mxu0 0.0
  %4799 = vmatpush2.msra.mxu0 0.0
  %4800 = vmatprep.subr.mxu0 0.0
  %4801 = vmatpush2.msra.mxu0 0.0
  %4802 = vmatprep.subr.mxu0 0.0
  %4803 = vmatpush2.msra.mxu0 0.0
  %4804 = vmatprep.subr.mxu0 0.0
  %4805 = vmatpush2.msra.mxu0 0.0
  %4806 = vmatprep.subr.mxu0 0.0
  %4807 = vmatpush2.msra.mxu0 0.0
  %4808 = vmatprep.subr.mxu0 0.0
  %4809 = vmatpush2.msra.mxu0 0.0
  %4810 = vmatprep.subr.mxu0 0.0
  %4811 = vmatpush2.msra.mxu0 0.0
  %4812 = vmatprep.subr.mxu0 0.0
  %4813 = vmatpush2.msra.mxu0 0.0
  %4814 = vmatprep.subr.mxu0 0.0
  %4815 = vmatpush2.msra.mxu0 0.0
  %4816 = vmatprep.subr.mxu0 0.0
  %4817 = vmatpush2.msra.mxu0 0.0
  %4818 = vmatprep.subr.mxu0 0.0
  %4819 = vmatpush2.msra.mxu0 0.0
  %4820 = vmatprep.subr.mxu0 0.0
  %4821 = vmatpush2.msra.mxu0 0.0
  %4822 = vmatprep.subr.mxu0 0.0
  %4823 = vmatpush2.msra.mxu0 0.0
  %4824 = vmatprep.subr.mxu0 0.0
  %4825 = vmatpush2.msra.mxu0 0.0
  %4826 = vmatprep.mubr.f32.mxu0 0.0
  %4827 = vmatmul.mubr.f32.gmra.mxu0 %v4588
  %v4828 = vpop.f32.mrf.mxu0
  %v4829 = vadd.f32 0.0, %v4828
  %v4830 = vpop.f32.mrf.mxu0
  %4831 = vdwg.mxu0
  %v4832 = vadd.f32 %v3626, %v4829
  %v4833 = vxor.u32 %v4832, 2147483648
  %v4834 = vmul.f32 %v4833, 1.442695
  %v4835 = vpow.pop %v4834
  %v4836 = vadd.f32 %v4835, 1.0
  %v4837 = vrcp.pop %v4836
  %v4838 = vmul.f32 1.0, %v4837
  %v4839 = vtanh.pop %v4832
  %v4841 = vrot.slane %v4577, 6
  %v4843 = vmul.f32 %v4838, %v4841
  %4845 = vrot.lane.b32.xlu0 %v4839, 64
  %v4846 = vpop.permute.xlu0 %4845
  %v4848 = vmul.f32 %v4838, %v4846
  %4850 = vrot.lane.b32.xlu0 %v4848, 32
  %v4851 = vpop.permute.xlu0 %4850
  %v4853 = vadd.f32 %v4843, %v4851
  %v4854 = vtanh.pop %v4853
  %4856 = vrot.lane.b32.xlu0 %v4854, 64
  %v4857 = vpop.permute.xlu0 %4856
  %v4859 = vmul.f32 %v4838, %v4857
  %4861 = vrot.lane.b32.xlu0 %v4859, 32
  %v4862 = vpop.permute.xlu0 %4861
  %v4863 = vsel %vm89, %v4862, 0
  %4865 = vmatprep.subr.mxu0 0.0
  %4866 = vmatpush1.msra.mxu0 0.0
  %4867 = vmatprep.subr.mxu0 0.0
  %4868 = vmatpush1.msra.mxu0 0.0
  %4869 = vmatprep.subr.mxu0 0.0
  %4870 = vmatpush1.msra.mxu0 0.0
  %4871 = vmatprep.subr.mxu0 0.0
  %4872 = vmatpush1.msra.mxu0 0.0
  %4873 = vmatprep.subr.mxu0 0.0
  %4874 = vmatpush1.msra.mxu0 0.0
  %4875 = vmatprep.subr.mxu0 0.0
  %4876 = vmatpush1.msra.mxu0 0.0
  %4877 = vmatprep.subr.mxu0 0.0
  %4878 = vmatpush1.msra.mxu0 0.0
  %4879 = vmatprep.subr.mxu0 0.0
  %4880 = vmatpush1.msra.mxu0 0.0
  %4881 = vmatprep.subr.mxu0 0.0
  %4882 = vmatpush1.msra.mxu0 0.0
  %4883 = vmatprep.subr.mxu0 0.0
  %4884 = vmatpush1.msra.mxu0 0.0
  %4885 = vmatprep.subr.mxu0 0.0
  %4886 = vmatpush1.msra.mxu0 0.0
  %4887 = vmatprep.subr.mxu0 0.0
  %4888 = vmatpush1.msra.mxu0 0.0
  %4889 = vmatprep.subr.mxu0 0.0
  %4890 = vmatpush1.msra.mxu0 %v3633
  %4891 = vmatprep.subr.mxu0 0.0
  %4892 = vmatpush1.msra.mxu0 %v3632
  %4893 = vmatprep.subr.mxu0 0.0
  %4894 = vmatpush1.msra.mxu0 %v3631
  %4895 = vmatprep.subr.mxu0 0.0
  %4896 = vmatpush1.msra.mxu0 %v3630
  %4897 = vmatprep.subr.mxu0 0.0
  %4898 = vmatpush2.msra.mxu0 0.0
  %4899 = vmatprep.subr.mxu0 0.0
  %4900 = vmatpush2.msra.mxu0 0.0
  %4901 = vmatprep.subr.mxu0 0.0
  %4902 = vmatpush2.msra.mxu0 0.0
  %4903 = vmatprep.subr.mxu0 0.0
  %4904 = vmatpush2.msra.mxu0 0.0
  %4905 = vmatprep.subr.mxu0 0.0
  %4906 = vmatpush2.msra.mxu0 0.0
  %4907 = vmatprep.subr.mxu0 0.0
  %4908 = vmatpush2.msra.mxu0 0.0
  %4909 = vmatprep.subr.mxu0 0.0
  %4910 = vmatpush2.msra.mxu0 0.0
  %4911 = vmatprep.subr.mxu0 0.0
  %4912 = vmatpush2.msra.mxu0 0.0
  %4913 = vmatprep.subr.mxu0 0.0
  %4914 = vmatpush2.msra.mxu0 0.0
  %4915 = vmatprep.subr.mxu0 0.0
  %4916 = vmatpush2.msra.mxu0 0.0
  %4917 = vmatprep.subr.mxu0 0.0
  %4918 = vmatpush2.msra.mxu0 0.0
  %4919 = vmatprep.subr.mxu0 0.0
  %4920 = vmatpush2.msra.mxu0 0.0
  %4921 = vmatprep.subr.mxu0 0.0
  %4922 = vmatpush2.msra.mxu0 0.0
  %4923 = vmatprep.subr.mxu0 0.0
  %4924 = vmatpush2.msra.mxu0 0.0
  %4925 = vmatprep.subr.mxu0 0.0
  %4926 = vmatpush2.msra.mxu0 0.0
  %4927 = vmatprep.subr.mxu0 0.0
  %4928 = vmatpush2.msra.mxu0 0.0
  %4929 = vmatprep.mubr.f32.mxu0 0.0
  %4930 = vmatmul.mubr.f32.gmra.mxu0 %v4863
  %v4931 = vpop.f32.mrf.mxu0
  %v4932 = vadd.f32 %v3747, %v4931
  %v4933 = vpop.f32.mrf.mxu0
  %4934 = vdwg.mxu0
  %v4935 = vsel %vm89, %v4759, 0
  %4937 = vmatprep.subr.mxu0 0.0
  %4938 = vmatpush1.msra.mxu0 0.0
  %4939 = vmatprep.subr.mxu0 0.0
  %4940 = vmatpush1.msra.mxu0 0.0
  %4941 = vmatprep.subr.mxu0 0.0
  %4942 = vmatpush1.msra.mxu0 0.0
  %4943 = vmatprep.subr.mxu0 0.0
  %4944 = vmatpush1.msra.mxu0 0.0
  %4945 = vmatprep.subr.mxu0 0.0
  %4946 = vmatpush1.msra.mxu0 0.0
  %4947 = vmatprep.subr.mxu0 0.0
  %4948 = vmatpush1.msra.mxu0 0.0
  %4949 = vmatprep.subr.mxu0 0.0
  %4950 = vmatpush1.msra.mxu0 0.0
  %4951 = vmatprep.subr.mxu0 0.0
  %4952 = vmatpush1.msra.mxu0 0.0
  %4953 = vmatprep.subr.mxu0 0.0
  %4954 = vmatpush1.msra.mxu0 0.0
  %4955 = vmatprep.subr.mxu0 0.0
  %4956 = vmatpush1.msra.mxu0 0.0
  %4957 = vmatprep.subr.mxu0 0.0
  %4958 = vmatpush1.msra.mxu0 0.0
  %4959 = vmatprep.subr.mxu0 0.0
  %4960 = vmatpush1.msra.mxu0 0.0
  %4961 = vmatprep.subr.mxu0 0.0
  %4962 = vmatpush1.msra.mxu0 %v3642
  %4963 = vmatprep.subr.mxu0 0.0
  %4964 = vmatpush1.msra.mxu0 %v3641
  %4965 = vmatprep.subr.mxu0 0.0
  %4966 = vmatpush1.msra.mxu0 %v3640
  %4967 = vmatprep.subr.mxu0 0.0
  %4968 = vmatpush1.msra.mxu0 %v3639
  %4969 = vmatprep.subr.mxu0 0.0
  %4970 = vmatpush2.msra.mxu0 0.0
  %4971 = vmatprep.subr.mxu0 0.0
  %4972 = vmatpush2.msra.mxu0 0.0
  %4973 = vmatprep.subr.mxu0 0.0
  %4974 = vmatpush2.msra.mxu0 0.0
  %4975 = vmatprep.subr.mxu0 0.0
  %4976 = vmatpush2.msra.mxu0 0.0
  %4977 = vmatprep.subr.mxu0 0.0
  %4978 = vmatpush2.msra.mxu0 0.0
  %4979 = vmatprep.subr.mxu0 0.0
  %4980 = vmatpush2.msra.mxu0 0.0
  %4981 = vmatprep.subr.mxu0 0.0
  %4982 = vmatpush2.msra.mxu0 0.0
  %4983 = vmatprep.subr.mxu0 0.0
  %4984 = vmatpush2.msra.mxu0 0.0
  %4985 = vmatprep.subr.mxu0 0.0
  %4986 = vmatpush2.msra.mxu0 0.0
  %4987 = vmatprep.subr.mxu0 0.0
  %4988 = vmatpush2.msra.mxu0 0.0
  %4989 = vmatprep.subr.mxu0 0.0
  %4990 = vmatpush2.msra.mxu0 0.0
  %4991 = vmatprep.subr.mxu0 0.0
  %4992 = vmatpush2.msra.mxu0 0.0
  %4993 = vmatprep.subr.mxu0 0.0
  %4994 = vmatpush2.msra.mxu0 0.0
  %4995 = vmatprep.subr.mxu0 0.0
  %4996 = vmatpush2.msra.mxu0 0.0
  %4997 = vmatprep.subr.mxu0 0.0
  %4998 = vmatpush2.msra.mxu0 0.0
  %4999 = vmatprep.subr.mxu0 0.0
  %5000 = vmatpush2.msra.mxu0 0.0
  %5001 = vmatprep.mubr.f32.mxu0 0.0
  %5002 = vmatmul.mubr.f32.gmra.mxu0 %v4935
  %v5003 = vpop.f32.mrf.mxu0
  %v5004 = vadd.f32 0.0, %v5003
  %v5005 = vpop.f32.mrf.mxu0
  %5006 = vdwg.mxu0
  %v5007 = vadd.f32 %v4932, %v5004
  %v5008 = vxor.u32 %v5007, 2147483648
  %v5009 = vmul.f32 %v5008, 1.442695
  %v5010 = vpow.pop %v5009
  %v5011 = vadd.f32 %v5010, 1.0
  %v5012 = vrcp.pop %v5011
  %v5013 = vmul.f32 1.0, %v5012
  %v5014 = vtanh.pop %v5007
  %v5015 = vmul.f32 %v5013, %v4750
  %5017 = vrot.lane.b32.xlu0 %v5014, 64
  %v5018 = vpop.permute.xlu0 %5017
  %v5020 = vmul.f32 %v5013, %v5018
  %5022 = vrot.lane.b32.xlu0 %v5020, 32
  %v5023 = vpop.permute.xlu0 %5022
  %v5025 = vadd.f32 %v5015, %v5023
  %v5026 = vtanh.pop %v5025
  %5028 = vrot.lane.b32.xlu0 %v5026, 64
  %v5029 = vpop.permute.xlu0 %5028
  %v5031 = vmul.f32 %v5013, %v5029
  %5033 = vrot.lane.b32.xlu0 %v5031, 32
  %v5034 = vpop.permute.xlu0 %5033
  %5036 = vst.msk [vmem:[#allocation2 + $0x8] sm:$0x3] %vm3923, %v5034
  %5037 = vmatprep.subr.mxu0 0.0
  %5038 = vmatpush1.msra.mxu0 0.0
  %5039 = vmatprep.subr.mxu0 0.0
  %5040 = vmatpush1.msra.mxu0 0.0
  %5041 = vmatprep.subr.mxu0 0.0
  %5042 = vmatpush1.msra.mxu0 0.0
  %5043 = vmatprep.subr.mxu0 0.0
  %5044 = vmatpush1.msra.mxu0 0.0
  %5045 = vmatprep.subr.mxu0 0.0
  %5046 = vmatpush1.msra.mxu0 0.0
  %5047 = vmatprep.subr.mxu0 0.0
  %5048 = vmatpush1.msra.mxu0 0.0
  %5049 = vmatprep.subr.mxu0 0.0
  %5050 = vmatpush1.msra.mxu0 0.0
  %5051 = vmatprep.subr.mxu0 0.0
  %5052 = vmatpush1.msra.mxu0 0.0
  %5053 = vmatprep.subr.mxu0 0.0
  %5054 = vmatpush1.msra.mxu0 0.0
  %5055 = vmatprep.subr.mxu0 0.0
  %5056 = vmatpush1.msra.mxu0 0.0
  %5057 = vmatprep.subr.mxu0 0.0
  %5058 = vmatpush1.msra.mxu0 0.0
  %5059 = vmatprep.subr.mxu0 0.0
  %5060 = vmatpush1.msra.mxu0 0.0
  %5061 = vmatprep.subr.mxu0 0.0
  %5062 = vmatpush1.msra.mxu0 %v3637
  %5063 = vmatprep.subr.mxu0 0.0
  %5064 = vmatpush1.msra.mxu0 %v3636
  %5065 = vmatprep.subr.mxu0 0.0
  %5066 = vmatpush1.msra.mxu0 %v3635
  %5067 = vmatprep.subr.mxu0 0.0
  %5068 = vmatpush1.msra.mxu0 %v3634
  %5069 = vmatprep.subr.mxu0 0.0
  %5070 = vmatpush2.msra.mxu0 0.0
  %5071 = vmatprep.subr.mxu0 0.0
  %5072 = vmatpush2.msra.mxu0 0.0
  %5073 = vmatprep.subr.mxu0 0.0
  %5074 = vmatpush2.msra.mxu0 0.0
  %5075 = vmatprep.subr.mxu0 0.0
  %5076 = vmatpush2.msra.mxu0 0.0
  %5077 = vmatprep.subr.mxu0 0.0
  %5078 = vmatpush2.msra.mxu0 0.0
  %5079 = vmatprep.subr.mxu0 0.0
  %5080 = vmatpush2.msra.mxu0 0.0
  %5081 = vmatprep.subr.mxu0 0.0
  %5082 = vmatpush2.msra.mxu0 0.0
  %5083 = vmatprep.subr.mxu0 0.0
  %5084 = vmatpush2.msra.mxu0 0.0
  %5085 = vmatprep.subr.mxu0 0.0
  %5086 = vmatpush2.msra.mxu0 0.0
  %5087 = vmatprep.subr.mxu0 0.0
  %5088 = vmatpush2.msra.mxu0 0.0
  %5089 = vmatprep.subr.mxu0 0.0
  %5090 = vmatpush2.msra.mxu0 0.0
  %5091 = vmatprep.subr.mxu0 0.0
  %5092 = vmatpush2.msra.mxu0 0.0
  %5093 = vmatprep.subr.mxu0 0.0
  %5094 = vmatpush2.msra.mxu0 0.0
  %5095 = vmatprep.subr.mxu0 0.0
  %5096 = vmatpush2.msra.mxu0 0.0
  %5097 = vmatprep.subr.mxu0 0.0
  %5098 = vmatpush2.msra.mxu0 0.0
  %5099 = vmatprep.subr.mxu0 0.0
  %5100 = vmatpush2.msra.mxu0 0.0
  %5101 = vmatprep.mubr.f32.mxu0 0.0
  %5102 = vmatmul.mubr.f32.gmra.mxu0 %v4863
  %v5103 = vpop.f32.mrf.mxu0
  %v5104 = vadd.f32 0.0, %v5103
  %v5105 = vpop.f32.mrf.mxu0
  %5106 = vdwg.mxu0
  %v5108 = vrot.slane %v5104, 6
  %v5110 = vadd.f32 %v3626, %v5108
  %v5111 = vxor.u32 %v5110, 2147483648
  %v5112 = vmul.f32 %v5111, 1.442695
  %v5113 = vpow.pop %v5112
  %v5114 = vadd.f32 %v5113, 1.0
  %v5115 = vrcp.pop %v5114
  %v5116 = vmul.f32 1.0, %v5115
  %v5117 = vtanh.pop %v5110
  %v5119 = vrot.slane %v4853, 6
  %v5121 = vmul.f32 %v5116, %v5119
  %5123 = vrot.lane.b32.xlu0 %v5117, 64
  %v5124 = vpop.permute.xlu0 %5123
  %v5126 = vmul.f32 %v5116, %v5124
  %5128 = vrot.lane.b32.xlu0 %v5126, 32
  %v5129 = vpop.permute.xlu0 %5128
  %v5131 = vadd.f32 %v5121, %v5129
  %v5132 = vtanh.pop %v5131
  %5134 = vrot.lane.b32.xlu0 %v5132, 64
  %v5135 = vpop.permute.xlu0 %5134
  %v5137 = vmul.f32 %v5116, %v5135
  %v5139 = vrot.slane %v5137, 2
  %5140 = vrot.lane.b32.xlu0 %v5139, 32
  %v5141 = vpop.permute.xlu0 %5140
  %v5142 = vsel %vm89, %v5141, 0
  %5144 = vmatprep.subr.mxu0 0.0
  %5145 = vmatpush1.msra.mxu0 0.0
  %5146 = vmatprep.subr.mxu0 0.0
  %5147 = vmatpush1.msra.mxu0 0.0
  %5148 = vmatprep.subr.mxu0 0.0
  %5149 = vmatpush1.msra.mxu0 0.0
  %5150 = vmatprep.subr.mxu0 0.0
  %5151 = vmatpush1.msra.mxu0 0.0
  %5152 = vmatprep.subr.mxu0 0.0
  %5153 = vmatpush1.msra.mxu0 0.0
  %5154 = vmatprep.subr.mxu0 0.0
  %5155 = vmatpush1.msra.mxu0 0.0
  %5156 = vmatprep.subr.mxu0 0.0
  %5157 = vmatpush1.msra.mxu0 0.0
  %5158 = vmatprep.subr.mxu0 0.0
  %5159 = vmatpush1.msra.mxu0 0.0
  %5160 = vmatprep.subr.mxu0 0.0
  %5161 = vmatpush1.msra.mxu0 0.0
  %5162 = vmatprep.subr.mxu0 0.0
  %5163 = vmatpush1.msra.mxu0 0.0
  %5164 = vmatprep.subr.mxu0 0.0
  %5165 = vmatpush1.msra.mxu0 0.0
  %5166 = vmatprep.subr.mxu0 0.0
  %5167 = vmatpush1.msra.mxu0 0.0
  %5168 = vmatprep.subr.mxu0 0.0
  %5169 = vmatpush1.msra.mxu0 %v3633
  %5170 = vmatprep.subr.mxu0 0.0
  %5171 = vmatpush1.msra.mxu0 %v3632
  %5172 = vmatprep.subr.mxu0 0.0
  %5173 = vmatpush1.msra.mxu0 %v3631
  %5174 = vmatprep.subr.mxu0 0.0
  %5175 = vmatpush1.msra.mxu0 %v3630
  %5176 = vmatprep.subr.mxu0 0.0
  %5177 = vmatpush2.msra.mxu0 0.0
  %5178 = vmatprep.subr.mxu0 0.0
  %5179 = vmatpush2.msra.mxu0 0.0
  %5180 = vmatprep.subr.mxu0 0.0
  %5181 = vmatpush2.msra.mxu0 0.0
  %5182 = vmatprep.subr.mxu0 0.0
  %5183 = vmatpush2.msra.mxu0 0.0
  %5184 = vmatprep.subr.mxu0 0.0
  %5185 = vmatpush2.msra.mxu0 0.0
  %5186 = vmatprep.subr.mxu0 0.0
  %5187 = vmatpush2.msra.mxu0 0.0
  %5188 = vmatprep.subr.mxu0 0.0
  %5189 = vmatpush2.msra.mxu0 0.0
  %5190 = vmatprep.subr.mxu0 0.0
  %5191 = vmatpush2.msra.mxu0 0.0
  %5192 = vmatprep.subr.mxu0 0.0
  %5193 = vmatpush2.msra.mxu0 0.0
  %5194 = vmatprep.subr.mxu0 0.0
  %5195 = vmatpush2.msra.mxu0 0.0
  %5196 = vmatprep.subr.mxu0 0.0
  %5197 = vmatpush2.msra.mxu0 0.0
  %5198 = vmatprep.subr.mxu0 0.0
  %5199 = vmatpush2.msra.mxu0 0.0
  %5200 = vmatprep.subr.mxu0 0.0
  %5201 = vmatpush2.msra.mxu0 0.0
  %5202 = vmatprep.subr.mxu0 0.0
  %5203 = vmatpush2.msra.mxu0 0.0
  %5204 = vmatprep.subr.mxu0 0.0
  %5205 = vmatpush2.msra.mxu0 0.0
  %5206 = vmatprep.subr.mxu0 0.0
  %5207 = vmatpush2.msra.mxu0 0.0
  %5208 = vmatprep.mubr.f32.mxu0 0.0
  %5209 = vmatmul.mubr.f32.gmra.mxu0 %v5142
  %v5210 = vpop.f32.mrf.mxu0
  %v5211 = vadd.f32 %v3747, %v5210
  %v5212 = vpop.f32.mrf.mxu0
  %5213 = vdwg.mxu0
  %v5214 = vsel %vm89, %v5034, 0
  %5216 = vmatprep.subr.mxu0 0.0
  %5217 = vmatpush1.msra.mxu0 0.0
  %5218 = vmatprep.subr.mxu0 0.0
  %5219 = vmatpush1.msra.mxu0 0.0
  %5220 = vmatprep.subr.mxu0 0.0
  %5221 = vmatpush1.msra.mxu0 0.0
  %5222 = vmatprep.subr.mxu0 0.0
  %5223 = vmatpush1.msra.mxu0 0.0
  %5224 = vmatprep.subr.mxu0 0.0
  %5225 = vmatpush1.msra.mxu0 0.0
  %5226 = vmatprep.subr.mxu0 0.0
  %5227 = vmatpush1.msra.mxu0 0.0
  %5228 = vmatprep.subr.mxu0 0.0
  %5229 = vmatpush1.msra.mxu0 0.0
  %5230 = vmatprep.subr.mxu0 0.0
  %5231 = vmatpush1.msra.mxu0 0.0
  %5232 = vmatprep.subr.mxu0 0.0
  %5233 = vmatpush1.msra.mxu0 0.0
  %5234 = vmatprep.subr.mxu0 0.0
  %5235 = vmatpush1.msra.mxu0 0.0
  %5236 = vmatprep.subr.mxu0 0.0
  %5237 = vmatpush1.msra.mxu0 0.0
  %5238 = vmatprep.subr.mxu0 0.0
  %5239 = vmatpush1.msra.mxu0 0.0
  %5240 = vmatprep.subr.mxu0 0.0
  %5241 = vmatpush1.msra.mxu0 %v3642
  %5242 = vmatprep.subr.mxu0 0.0
  %5243 = vmatpush1.msra.mxu0 %v3641
  %5244 = vmatprep.subr.mxu0 0.0
  %5245 = vmatpush1.msra.mxu0 %v3640
  %5246 = vmatprep.subr.mxu0 0.0
  %5247 = vmatpush1.msra.mxu0 %v3639
  %5248 = vmatprep.subr.mxu0 0.0
  %5249 = vmatpush2.msra.mxu0 0.0
  %5250 = vmatprep.subr.mxu0 0.0
  %5251 = vmatpush2.msra.mxu0 0.0
  %5252 = vmatprep.subr.mxu0 0.0
  %5253 = vmatpush2.msra.mxu0 0.0
  %5254 = vmatprep.subr.mxu0 0.0
  %5255 = vmatpush2.msra.mxu0 0.0
  %5256 = vmatprep.subr.mxu0 0.0
  %5257 = vmatpush2.msra.mxu0 0.0
  %5258 = vmatprep.subr.mxu0 0.0
  %5259 = vmatpush2.msra.mxu0 0.0
  %5260 = vmatprep.subr.mxu0 0.0
  %5261 = vmatpush2.msra.mxu0 0.0
  %5262 = vmatprep.subr.mxu0 0.0
  %5263 = vmatpush2.msra.mxu0 0.0
  %5264 = vmatprep.subr.mxu0 0.0
  %5265 = vmatpush2.msra.mxu0 0.0
  %5266 = vmatprep.subr.mxu0 0.0
  %5267 = vmatpush2.msra.mxu0 0.0
  %5268 = vmatprep.subr.mxu0 0.0
  %5269 = vmatpush2.msra.mxu0 0.0
  %5270 = vmatprep.subr.mxu0 0.0
  %5271 = vmatpush2.msra.mxu0 0.0
  %5272 = vmatprep.subr.mxu0 0.0
  %5273 = vmatpush2.msra.mxu0 0.0
  %5274 = vmatprep.subr.mxu0 0.0
  %5275 = vmatpush2.msra.mxu0 0.0
  %5276 = vmatprep.subr.mxu0 0.0
  %5277 = vmatpush2.msra.mxu0 0.0
  %5278 = vmatprep.subr.mxu0 0.0
  %5279 = vmatpush2.msra.mxu0 0.0
  %5280 = vmatprep.mubr.f32.mxu0 0.0
  %5281 = vmatmul.mubr.f32.gmra.mxu0 %v5214
  %v5282 = vpop.f32.mrf.mxu0
  %v5283 = vadd.f32 0.0, %v5282
  %v5284 = vpop.f32.mrf.mxu0
  %5285 = vdwg.mxu0
  %v5286 = vadd.f32 %v5211, %v5283
  %v5287 = vxor.u32 %v5286, 2147483648
  %v5288 = vmul.f32 %v5287, 1.442695
  %v5289 = vpow.pop %v5288
  %v5290 = vadd.f32 %v5289, 1.0
  %v5291 = vrcp.pop %v5290
  %v5292 = vmul.f32 1.0, %v5291
  %v5293 = vtanh.pop %v5286
  %v5294 = vmul.f32 %v5292, %v5025
  %5296 = vrot.lane.b32.xlu0 %v5293, 64
  %v5297 = vpop.permute.xlu0 %5296
  %v5299 = vmul.f32 %v5292, %v5297
  %5301 = vrot.lane.b32.xlu0 %v5299, 32
  %v5302 = vpop.permute.xlu0 %5301
  %v5304 = vadd.f32 %v5294, %v5302
  %v5305 = vtanh.pop %v5304
  %5307 = vrot.lane.b32.xlu0 %v5305, 64
  %v5308 = vpop.permute.xlu0 %5307
  %v5310 = vmul.f32 %v5292, %v5308
  %5312 = vrot.lane.b32.xlu0 %v5310, 32
  %v5313 = vpop.permute.xlu0 %5312
  %5315 = vst.msk [vmem:[#allocation2 + $0xa] sm:$0x3] %vm3923, %v5313
  %5316 = vmatprep.subr.mxu0 0.0
  %5317 = vmatpush1.msra.mxu0 0.0
  %5318 = vmatprep.subr.mxu0 0.0
  %5319 = vmatpush1.msra.mxu0 0.0
  %5320 = vmatprep.subr.mxu0 0.0
  %5321 = vmatpush1.msra.mxu0 0.0
  %5322 = vmatprep.subr.mxu0 0.0
  %5323 = vmatpush1.msra.mxu0 0.0
  %5324 = vmatprep.subr.mxu0 0.0
  %5325 = vmatpush1.msra.mxu0 0.0
  %5326 = vmatprep.subr.mxu0 0.0
  %5327 = vmatpush1.msra.mxu0 0.0
  %5328 = vmatprep.subr.mxu0 0.0
  %5329 = vmatpush1.msra.mxu0 0.0
  %5330 = vmatprep.subr.mxu0 0.0
  %5331 = vmatpush1.msra.mxu0 0.0
  %5332 = vmatprep.subr.mxu0 0.0
  %5333 = vmatpush1.msra.mxu0 0.0
  %5334 = vmatprep.subr.mxu0 0.0
  %5335 = vmatpush1.msra.mxu0 0.0
  %5336 = vmatprep.subr.mxu0 0.0
  %5337 = vmatpush1.msra.mxu0 0.0
  %5338 = vmatprep.subr.mxu0 0.0
  %5339 = vmatpush1.msra.mxu0 0.0
  %5340 = vmatprep.subr.mxu0 0.0
  %5341 = vmatpush1.msra.mxu0 %v3637
  %5342 = vmatprep.subr.mxu0 0.0
  %5343 = vmatpush1.msra.mxu0 %v3636
  %5344 = vmatprep.subr.mxu0 0.0
  %5345 = vmatpush1.msra.mxu0 %v3635
  %5346 = vmatprep.subr.mxu0 0.0
  %5347 = vmatpush1.msra.mxu0 %v3634
  %5348 = vmatprep.subr.mxu0 0.0
  %5349 = vmatpush2.msra.mxu0 0.0
  %5350 = vmatprep.subr.mxu0 0.0
  %5351 = vmatpush2.msra.mxu0 0.0
  %5352 = vmatprep.subr.mxu0 0.0
  %5353 = vmatpush2.msra.mxu0 0.0
  %5354 = vmatprep.subr.mxu0 0.0
  %5355 = vmatpush2.msra.mxu0 0.0
  %5356 = vmatprep.subr.mxu0 0.0
  %5357 = vmatpush2.msra.mxu0 0.0
  %5358 = vmatprep.subr.mxu0 0.0
  %5359 = vmatpush2.msra.mxu0 0.0
  %5360 = vmatprep.subr.mxu0 0.0
  %5361 = vmatpush2.msra.mxu0 0.0
  %5362 = vmatprep.subr.mxu0 0.0
  %5363 = vmatpush2.msra.mxu0 0.0
  %5364 = vmatprep.subr.mxu0 0.0
  %5365 = vmatpush2.msra.mxu0 0.0
  %5366 = vmatprep.subr.mxu0 0.0
  %5367 = vmatpush2.msra.mxu0 0.0
  %5368 = vmatprep.subr.mxu0 0.0
  %5369 = vmatpush2.msra.mxu0 0.0
  %5370 = vmatprep.subr.mxu0 0.0
  %5371 = vmatpush2.msra.mxu0 0.0
  %5372 = vmatprep.subr.mxu0 0.0
  %5373 = vmatpush2.msra.mxu0 0.0
  %5374 = vmatprep.subr.mxu0 0.0
  %5375 = vmatpush2.msra.mxu0 0.0
  %5376 = vmatprep.subr.mxu0 0.0
  %5377 = vmatpush2.msra.mxu0 0.0
  %5378 = vmatprep.subr.mxu0 0.0
  %5379 = vmatpush2.msra.mxu0 0.0
  %5380 = vmatprep.mubr.f32.mxu0 0.0
  %5381 = vmatmul.mubr.f32.gmra.mxu0 %v5142
  %v5382 = vpop.f32.mrf.mxu0
  %v5383 = vadd.f32 0.0, %v5382
  %v5384 = vpop.f32.mrf.mxu0
  %5385 = vdwg.mxu0
  %v5387 = vrot.slane %v5383, 4
  %v5389 = vadd.f32 %v3626, %v5387
  %v5390 = vxor.u32 %v5389, 2147483648
  %v5391 = vmul.f32 %v5390, 1.442695
  %v5392 = vpow.pop %v5391
  %v5393 = vadd.f32 %v5392, 1.0
  %v5394 = vrcp.pop %v5393
  %v5395 = vmul.f32 1.0, %v5394
  %v5396 = vtanh.pop %v5389
  %v5398 = vrot.slane %v5131, 6
  %v5400 = vmul.f32 %v5395, %v5398
  %5402 = vrot.lane.b32.xlu0 %v5396, 64
  %v5403 = vpop.permute.xlu0 %5402
  %v5405 = vmul.f32 %v5395, %v5403
  %5407 = vrot.lane.b32.xlu0 %v5405, 32
  %v5408 = vpop.permute.xlu0 %5407
  %v5410 = vadd.f32 %v5400, %v5408
  %v5411 = vtanh.pop %v5410
  %5413 = vrot.lane.b32.xlu0 %v5411, 64
  %v5414 = vpop.permute.xlu0 %5413
  %v5416 = vmul.f32 %v5395, %v5414
  %v5418 = vrot.slane %v5416, 4
  %5419 = vrot.lane.b32.xlu0 %v5418, 32
  %v5420 = vpop.permute.xlu0 %5419
  %v5421 = vsel %vm89, %v5420, 0
  %5423 = vmatprep.subr.mxu0 0.0
  %5424 = vmatpush1.msra.mxu0 0.0
  %5425 = vmatprep.subr.mxu0 0.0
  %5426 = vmatpush1.msra.mxu0 0.0
  %5427 = vmatprep.subr.mxu0 0.0
  %5428 = vmatpush1.msra.mxu0 0.0
  %5429 = vmatprep.subr.mxu0 0.0
  %5430 = vmatpush1.msra.mxu0 0.0
  %5431 = vmatprep.subr.mxu0 0.0
  %5432 = vmatpush1.msra.mxu0 0.0
  %5433 = vmatprep.subr.mxu0 0.0
  %5434 = vmatpush1.msra.mxu0 0.0
  %5435 = vmatprep.subr.mxu0 0.0
  %5436 = vmatpush1.msra.mxu0 0.0
  %5437 = vmatprep.subr.mxu0 0.0
  %5438 = vmatpush1.msra.mxu0 0.0
  %5439 = vmatprep.subr.mxu0 0.0
  %5440 = vmatpush1.msra.mxu0 0.0
  %5441 = vmatprep.subr.mxu0 0.0
  %5442 = vmatpush1.msra.mxu0 0.0
  %5443 = vmatprep.subr.mxu0 0.0
  %5444 = vmatpush1.msra.mxu0 0.0
  %5445 = vmatprep.subr.mxu0 0.0
  %5446 = vmatpush1.msra.mxu0 0.0
  %5447 = vmatprep.subr.mxu0 0.0
  %5448 = vmatpush1.msra.mxu0 %v3633
  %5449 = vmatprep.subr.mxu0 0.0
  %5450 = vmatpush1.msra.mxu0 %v3632
  %5451 = vmatprep.subr.mxu0 0.0
  %5452 = vmatpush1.msra.mxu0 %v3631
  %5453 = vmatprep.subr.mxu0 0.0
  %5454 = vmatpush1.msra.mxu0 %v3630
  %5455 = vmatprep.subr.mxu0 0.0
  %5456 = vmatpush2.msra.mxu0 0.0
  %5457 = vmatprep.subr.mxu0 0.0
  %5458 = vmatpush2.msra.mxu0 0.0
  %5459 = vmatprep.subr.mxu0 0.0
  %5460 = vmatpush2.msra.mxu0 0.0
  %5461 = vmatprep.subr.mxu0 0.0
  %5462 = vmatpush2.msra.mxu0 0.0
  %5463 = vmatprep.subr.mxu0 0.0
  %5464 = vmatpush2.msra.mxu0 0.0
  %5465 = vmatprep.subr.mxu0 0.0
  %5466 = vmatpush2.msra.mxu0 0.0
  %5467 = vmatprep.subr.mxu0 0.0
  %5468 = vmatpush2.msra.mxu0 0.0
  %5469 = vmatprep.subr.mxu0 0.0
  %5470 = vmatpush2.msra.mxu0 0.0
  %5471 = vmatprep.subr.mxu0 0.0
  %5472 = vmatpush2.msra.mxu0 0.0
  %5473 = vmatprep.subr.mxu0 0.0
  %5474 = vmatpush2.msra.mxu0 0.0
  %5475 = vmatprep.subr.mxu0 0.0
  %5476 = vmatpush2.msra.mxu0 0.0
  %5477 = vmatprep.subr.mxu0 0.0
  %5478 = vmatpush2.msra.mxu0 0.0
  %5479 = vmatprep.subr.mxu0 0.0
  %5480 = vmatpush2.msra.mxu0 0.0
  %5481 = vmatprep.subr.mxu0 0.0
  %5482 = vmatpush2.msra.mxu0 0.0
  %5483 = vmatprep.subr.mxu0 0.0
  %5484 = vmatpush2.msra.mxu0 0.0
  %5485 = vmatprep.subr.mxu0 0.0
  %5486 = vmatpush2.msra.mxu0 0.0
  %5487 = vmatprep.mubr.f32.mxu0 0.0
  %5488 = vmatmul.mubr.f32.gmra.mxu0 %v5421
  %v5489 = vpop.f32.mrf.mxu0
  %v5490 = vadd.f32 %v3747, %v5489
  %v5491 = vpop.f32.mrf.mxu0
  %5492 = vdwg.mxu0
  %v5493 = vsel %vm89, %v5313, 0
  %5495 = vmatprep.subr.mxu0 0.0
  %5496 = vmatpush1.msra.mxu0 0.0
  %5497 = vmatprep.subr.mxu0 0.0
  %5498 = vmatpush1.msra.mxu0 0.0
  %5499 = vmatprep.subr.mxu0 0.0
  %5500 = vmatpush1.msra.mxu0 0.0
  %5501 = vmatprep.subr.mxu0 0.0
  %5502 = vmatpush1.msra.mxu0 0.0
  %5503 = vmatprep.subr.mxu0 0.0
  %5504 = vmatpush1.msra.mxu0 0.0
  %5505 = vmatprep.subr.mxu0 0.0
  %5506 = vmatpush1.msra.mxu0 0.0
  %5507 = vmatprep.subr.mxu0 0.0
  %5508 = vmatpush1.msra.mxu0 0.0
  %5509 = vmatprep.subr.mxu0 0.0
  %5510 = vmatpush1.msra.mxu0 0.0
  %5511 = vmatprep.subr.mxu0 0.0
  %5512 = vmatpush1.msra.mxu0 0.0
  %5513 = vmatprep.subr.mxu0 0.0
  %5514 = vmatpush1.msra.mxu0 0.0
  %5515 = vmatprep.subr.mxu0 0.0
  %5516 = vmatpush1.msra.mxu0 0.0
  %5517 = vmatprep.subr.mxu0 0.0
  %5518 = vmatpush1.msra.mxu0 0.0
  %5519 = vmatprep.subr.mxu0 0.0
  %5520 = vmatpush1.msra.mxu0 %v3642
  %5521 = vmatprep.subr.mxu0 0.0
  %5522 = vmatpush1.msra.mxu0 %v3641
  %5523 = vmatprep.subr.mxu0 0.0
  %5524 = vmatpush1.msra.mxu0 %v3640
  %5525 = vmatprep.subr.mxu0 0.0
  %5526 = vmatpush1.msra.mxu0 %v3639
  %5527 = vmatprep.subr.mxu0 0.0
  %5528 = vmatpush2.msra.mxu0 0.0
  %5529 = vmatprep.subr.mxu0 0.0
  %5530 = vmatpush2.msra.mxu0 0.0
  %5531 = vmatprep.subr.mxu0 0.0
  %5532 = vmatpush2.msra.mxu0 0.0
  %5533 = vmatprep.subr.mxu0 0.0
  %5534 = vmatpush2.msra.mxu0 0.0
  %5535 = vmatprep.subr.mxu0 0.0
  %5536 = vmatpush2.msra.mxu0 0.0
  %5537 = vmatprep.subr.mxu0 0.0
  %5538 = vmatpush2.msra.mxu0 0.0
  %5539 = vmatprep.subr.mxu0 0.0
  %5540 = vmatpush2.msra.mxu0 0.0
  %5541 = vmatprep.subr.mxu0 0.0
  %5542 = vmatpush2.msra.mxu0 0.0
  %5543 = vmatprep.subr.mxu0 0.0
  %5544 = vmatpush2.msra.mxu0 0.0
  %5545 = vmatprep.subr.mxu0 0.0
  %5546 = vmatpush2.msra.mxu0 0.0
  %5547 = vmatprep.subr.mxu0 0.0
  %5548 = vmatpush2.msra.mxu0 0.0
  %5549 = vmatprep.subr.mxu0 0.0
  %5550 = vmatpush2.msra.mxu0 0.0
  %5551 = vmatprep.subr.mxu0 0.0
  %5552 = vmatpush2.msra.mxu0 0.0
  %5553 = vmatprep.subr.mxu0 0.0
  %5554 = vmatpush2.msra.mxu0 0.0
  %5555 = vmatprep.subr.mxu0 0.0
  %5556 = vmatpush2.msra.mxu0 0.0
  %5557 = vmatprep.subr.mxu0 0.0
  %5558 = vmatpush2.msra.mxu0 0.0
  %5559 = vmatprep.mubr.f32.mxu0 0.0
  %5560 = vmatmul.mubr.f32.gmra.mxu0 %v5493
  %v5561 = vpop.f32.mrf.mxu0
  %v5562 = vadd.f32 0.0, %v5561
  %v5563 = vpop.f32.mrf.mxu0
  %5564 = vdwg.mxu0
  %v5565 = vadd.f32 %v5490, %v5562
  %v5566 = vxor.u32 %v5565, 2147483648
  %v5567 = vmul.f32 %v5566, 1.442695
  %v5568 = vpow.pop %v5567
  %v5569 = vadd.f32 %v5568, 1.0
  %v5570 = vrcp.pop %v5569
  %v5571 = vmul.f32 1.0, %v5570
  %v5572 = vtanh.pop %v5565
  %v5573 = vmul.f32 %v5571, %v5304
  %5575 = vrot.lane.b32.xlu0 %v5572, 64
  %v5576 = vpop.permute.xlu0 %5575
  %v5578 = vmul.f32 %v5571, %v5576
  %5580 = vrot.lane.b32.xlu0 %v5578, 32
  %v5581 = vpop.permute.xlu0 %5580
  %v5583 = vadd.f32 %v5573, %v5581
  %v5584 = vtanh.pop %v5583
  %5586 = vrot.lane.b32.xlu0 %v5584, 64
  %v5587 = vpop.permute.xlu0 %5586
  %v5589 = vmul.f32 %v5571, %v5587
  %5591 = vrot.lane.b32.xlu0 %v5589, 32
  %v5592 = vpop.permute.xlu0 %5591
  %5594 = vst.msk [vmem:[#allocation2 + $0xc] sm:$0x3] %vm3923, %v5592
  %5595 = vmatprep.subr.mxu0 0.0
  %5596 = vmatpush1.msra.mxu0 0.0
  %5597 = vmatprep.subr.mxu0 0.0
  %5598 = vmatpush1.msra.mxu0 0.0
  %5599 = vmatprep.subr.mxu0 0.0
  %5600 = vmatpush1.msra.mxu0 0.0
  %5601 = vmatprep.subr.mxu0 0.0
  %5602 = vmatpush1.msra.mxu0 0.0
  %5603 = vmatprep.subr.mxu0 0.0
  %5604 = vmatpush1.msra.mxu0 0.0
  %5605 = vmatprep.subr.mxu0 0.0
  %5606 = vmatpush1.msra.mxu0 0.0
  %5607 = vmatprep.subr.mxu0 0.0
  %5608 = vmatpush1.msra.mxu0 0.0
  %5609 = vmatprep.subr.mxu0 0.0
  %5610 = vmatpush1.msra.mxu0 0.0
  %5611 = vmatprep.subr.mxu0 0.0
  %5612 = vmatpush1.msra.mxu0 0.0
  %5613 = vmatprep.subr.mxu0 0.0
  %5614 = vmatpush1.msra.mxu0 0.0
  %5615 = vmatprep.subr.mxu0 0.0
  %5616 = vmatpush1.msra.mxu0 0.0
  %5617 = vmatprep.subr.mxu0 0.0
  %5618 = vmatpush1.msra.mxu0 0.0
  %5619 = vmatprep.subr.mxu0 0.0
  %5620 = vmatpush1.msra.mxu0 %v3637
  %5621 = vmatprep.subr.mxu0 0.0
  %5622 = vmatpush1.msra.mxu0 %v3636
  %5623 = vmatprep.subr.mxu0 0.0
  %5624 = vmatpush1.msra.mxu0 %v3635
  %5625 = vmatprep.subr.mxu0 0.0
  %5626 = vmatpush1.msra.mxu0 %v3634
  %5627 = vmatprep.subr.mxu0 0.0
  %5628 = vmatpush2.msra.mxu0 0.0
  %5629 = vmatprep.subr.mxu0 0.0
  %5630 = vmatpush2.msra.mxu0 0.0
  %5631 = vmatprep.subr.mxu0 0.0
  %5632 = vmatpush2.msra.mxu0 0.0
  %5633 = vmatprep.subr.mxu0 0.0
  %5634 = vmatpush2.msra.mxu0 0.0
  %5635 = vmatprep.subr.mxu0 0.0
  %5636 = vmatpush2.msra.mxu0 0.0
  %5637 = vmatprep.subr.mxu0 0.0
  %5638 = vmatpush2.msra.mxu0 0.0
  %5639 = vmatprep.subr.mxu0 0.0
  %5640 = vmatpush2.msra.mxu0 0.0
  %5641 = vmatprep.subr.mxu0 0.0
  %5642 = vmatpush2.msra.mxu0 0.0
  %5643 = vmatprep.subr.mxu0 0.0
  %5644 = vmatpush2.msra.mxu0 0.0
  %5645 = vmatprep.subr.mxu0 0.0
  %5646 = vmatpush2.msra.mxu0 0.0
  %5647 = vmatprep.subr.mxu0 0.0
  %5648 = vmatpush2.msra.mxu0 0.0
  %5649 = vmatprep.subr.mxu0 0.0
  %5650 = vmatpush2.msra.mxu0 0.0
  %5651 = vmatprep.subr.mxu0 0.0
  %5652 = vmatpush2.msra.mxu0 0.0
  %5653 = vmatprep.subr.mxu0 0.0
  %5654 = vmatpush2.msra.mxu0 0.0
  %5655 = vmatprep.subr.mxu0 0.0
  %5656 = vmatpush2.msra.mxu0 0.0
  %5657 = vmatprep.subr.mxu0 0.0
  %5658 = vmatpush2.msra.mxu0 0.0
  %5659 = vmatprep.mubr.f32.mxu0 0.0
  %5660 = vmatmul.mubr.f32.gmra.mxu0 %v5421
  %v5661 = vpop.f32.mrf.mxu0
  %v5662 = vadd.f32 0.0, %v5661
  %v5663 = vpop.f32.mrf.mxu0
  %5664 = vdwg.mxu0
  %v5666 = vrot.slane %v5662, 2
  %v5668 = vadd.f32 %v3626, %v5666
  %v5669 = vxor.u32 %v5668, 2147483648
  %v5670 = vmul.f32 %v5669, 1.442695
  %v5671 = vpow.pop %v5670
  %v5672 = vadd.f32 %v5671, 1.0
  %v5673 = vrcp.pop %v5672
  %v5674 = vmul.f32 1.0, %v5673
  %v5675 = vtanh.pop %v5668
  %v5677 = vrot.slane %v5410, 6
  %v5679 = vmul.f32 %v5674, %v5677
  %5681 = vrot.lane.b32.xlu0 %v5675, 64
  %v5682 = vpop.permute.xlu0 %5681
  %v5684 = vmul.f32 %v5674, %v5682
  %5686 = vrot.lane.b32.xlu0 %v5684, 32
  %v5687 = vpop.permute.xlu0 %5686
  %v5689 = vadd.f32 %v5679, %v5687
  %v5690 = vtanh.pop %v5689
  %5692 = vrot.lane.b32.xlu0 %v5690, 64
  %v5693 = vpop.permute.xlu0 %5692
  %v5695 = vmul.f32 %v5674, %v5693
  %v5697 = vrot.slane %v5695, 6
  %5698 = vrot.lane.b32.xlu0 %v5697, 32
  %v5699 = vpop.permute.xlu0 %5698
  %v5700 = vsel %vm89, %v5699, 0
  %5702 = vmatprep.subr.mxu0 0.0
  %5703 = vmatpush1.msra.mxu0 0.0
  %5704 = vmatprep.subr.mxu0 0.0
  %5705 = vmatpush1.msra.mxu0 0.0
  %5706 = vmatprep.subr.mxu0 0.0
  %5707 = vmatpush1.msra.mxu0 0.0
  %5708 = vmatprep.subr.mxu0 0.0
  %5709 = vmatpush1.msra.mxu0 0.0
  %5710 = vmatprep.subr.mxu0 0.0
  %5711 = vmatpush1.msra.mxu0 0.0
  %5712 = vmatprep.subr.mxu0 0.0
  %5713 = vmatpush1.msra.mxu0 0.0
  %5714 = vmatprep.subr.mxu0 0.0
  %5715 = vmatpush1.msra.mxu0 0.0
  %5716 = vmatprep.subr.mxu0 0.0
  %5717 = vmatpush1.msra.mxu0 0.0
  %5718 = vmatprep.subr.mxu0 0.0
  %5719 = vmatpush1.msra.mxu0 0.0
  %5720 = vmatprep.subr.mxu0 0.0
  %5721 = vmatpush1.msra.mxu0 0.0
  %5722 = vmatprep.subr.mxu0 0.0
  %5723 = vmatpush1.msra.mxu0 0.0
  %5724 = vmatprep.subr.mxu0 0.0
  %5725 = vmatpush1.msra.mxu0 0.0
  %5726 = vmatprep.subr.mxu0 0.0
  %5727 = vmatpush1.msra.mxu0 %v3633
  %5728 = vmatprep.subr.mxu0 0.0
  %5729 = vmatpush1.msra.mxu0 %v3632
  %5730 = vmatprep.subr.mxu0 0.0
  %5731 = vmatpush1.msra.mxu0 %v3631
  %5732 = vmatprep.subr.mxu0 0.0
  %5733 = vmatpush1.msra.mxu0 %v3630
  %5734 = vmatprep.subr.mxu0 0.0
  %5735 = vmatpush2.msra.mxu0 0.0
  %5736 = vmatprep.subr.mxu0 0.0
  %5737 = vmatpush2.msra.mxu0 0.0
  %5738 = vmatprep.subr.mxu0 0.0
  %5739 = vmatpush2.msra.mxu0 0.0
  %5740 = vmatprep.subr.mxu0 0.0
  %5741 = vmatpush2.msra.mxu0 0.0
  %5742 = vmatprep.subr.mxu0 0.0
  %5743 = vmatpush2.msra.mxu0 0.0
  %5744 = vmatprep.subr.mxu0 0.0
  %5745 = vmatpush2.msra.mxu0 0.0
  %5746 = vmatprep.subr.mxu0 0.0
  %5747 = vmatpush2.msra.mxu0 0.0
  %5748 = vmatprep.subr.mxu0 0.0
  %5749 = vmatpush2.msra.mxu0 0.0
  %5750 = vmatprep.subr.mxu0 0.0
  %5751 = vmatpush2.msra.mxu0 0.0
  %5752 = vmatprep.subr.mxu0 0.0
  %5753 = vmatpush2.msra.mxu0 0.0
  %5754 = vmatprep.subr.mxu0 0.0
  %5755 = vmatpush2.msra.mxu0 0.0
  %5756 = vmatprep.subr.mxu0 0.0
  %5757 = vmatpush2.msra.mxu0 0.0
  %5758 = vmatprep.subr.mxu0 0.0
  %5759 = vmatpush2.msra.mxu0 0.0
  %5760 = vmatprep.subr.mxu0 0.0
  %5761 = vmatpush2.msra.mxu0 0.0
  %5762 = vmatprep.subr.mxu0 0.0
  %5763 = vmatpush2.msra.mxu0 0.0
  %5764 = vmatprep.subr.mxu0 0.0
  %5765 = vmatpush2.msra.mxu0 0.0
  %5766 = vmatprep.mubr.f32.mxu0 0.0
  %5767 = vmatmul.mubr.f32.gmra.mxu0 %v5700
  %v5768 = vpop.f32.mrf.mxu0
  %v5769 = vadd.f32 %v3747, %v5768
  %v5770 = vpop.f32.mrf.mxu0
  %5771 = vdwg.mxu0
  %v5772 = vsel %vm89, %v5592, 0
  %5774 = vmatprep.subr.mxu0 0.0
  %5775 = vmatpush1.msra.mxu0 0.0
  %5776 = vmatprep.subr.mxu0 0.0
  %5777 = vmatpush1.msra.mxu0 0.0
  %5778 = vmatprep.subr.mxu0 0.0
  %5779 = vmatpush1.msra.mxu0 0.0
  %5780 = vmatprep.subr.mxu0 0.0
  %5781 = vmatpush1.msra.mxu0 0.0
  %5782 = vmatprep.subr.mxu0 0.0
  %5783 = vmatpush1.msra.mxu0 0.0
  %5784 = vmatprep.subr.mxu0 0.0
  %5785 = vmatpush1.msra.mxu0 0.0
  %5786 = vmatprep.subr.mxu0 0.0
  %5787 = vmatpush1.msra.mxu0 0.0
  %5788 = vmatprep.subr.mxu0 0.0
  %5789 = vmatpush1.msra.mxu0 0.0
  %5790 = vmatprep.subr.mxu0 0.0
  %5791 = vmatpush1.msra.mxu0 0.0
  %5792 = vmatprep.subr.mxu0 0.0
  %5793 = vmatpush1.msra.mxu0 0.0
  %5794 = vmatprep.subr.mxu0 0.0
  %5795 = vmatpush1.msra.mxu0 0.0
  %5796 = vmatprep.subr.mxu0 0.0
  %5797 = vmatpush1.msra.mxu0 0.0
  %5798 = vmatprep.subr.mxu0 0.0
  %5799 = vmatpush1.msra.mxu0 %v3642
  %5800 = vmatprep.subr.mxu0 0.0
  %5801 = vmatpush1.msra.mxu0 %v3641
  %5802 = vmatprep.subr.mxu0 0.0
  %5803 = vmatpush1.msra.mxu0 %v3640
  %5804 = vmatprep.subr.mxu0 0.0
  %5805 = vmatpush1.msra.mxu0 %v3639
  %5806 = vmatprep.subr.mxu0 0.0
  %5807 = vmatpush2.msra.mxu0 0.0
  %5808 = vmatprep.subr.mxu0 0.0
  %5809 = vmatpush2.msra.mxu0 0.0
  %5810 = vmatprep.subr.mxu0 0.0
  %5811 = vmatpush2.msra.mxu0 0.0
  %5812 = vmatprep.subr.mxu0 0.0
  %5813 = vmatpush2.msra.mxu0 0.0
  %5814 = vmatprep.subr.mxu0 0.0
  %5815 = vmatpush2.msra.mxu0 0.0
  %5816 = vmatprep.subr.mxu0 0.0
  %5817 = vmatpush2.msra.mxu0 0.0
  %5818 = vmatprep.subr.mxu0 0.0
  %5819 = vmatpush2.msra.mxu0 0.0
  %5820 = vmatprep.subr.mxu0 0.0
  %5821 = vmatpush2.msra.mxu0 0.0
  %5822 = vmatprep.subr.mxu0 0.0
  %5823 = vmatpush2.msra.mxu0 0.0
  %5824 = vmatprep.subr.mxu0 0.0
  %5825 = vmatpush2.msra.mxu0 0.0
  %5826 = vmatprep.subr.mxu0 0.0
  %5827 = vmatpush2.msra.mxu0 0.0
  %5828 = vmatprep.subr.mxu0 0.0
  %5829 = vmatpush2.msra.mxu0 0.0
  %5830 = vmatprep.subr.mxu0 0.0
  %5831 = vmatpush2.msra.mxu0 0.0
  %5832 = vmatprep.subr.mxu0 0.0
  %5833 = vmatpush2.msra.mxu0 0.0
  %5834 = vmatprep.subr.mxu0 0.0
  %5835 = vmatpush2.msra.mxu0 0.0
  %5836 = vmatprep.subr.mxu0 0.0
  %5837 = vmatpush2.msra.mxu0 0.0
  %5838 = vmatprep.mubr.f32.mxu0 0.0
  %5839 = vmatmul.mubr.f32.gmra.mxu0 %v5772
  %v5840 = vpop.f32.mrf.mxu0
  %v5841 = vadd.f32 0.0, %v5840
  %v5842 = vpop.f32.mrf.mxu0
  %5843 = vdwg.mxu0
  %v5844 = vadd.f32 %v5769, %v5841
  %v5845 = vxor.u32 %v5844, 2147483648
  %v5846 = vmul.f32 %v5845, 1.442695
  %v5847 = vpow.pop %v5846
  %v5848 = vadd.f32 %v5847, 1.0
  %v5849 = vrcp.pop %v5848
  %v5850 = vmul.f32 1.0, %v5849
  %v5851 = vtanh.pop %v5844
  %v5852 = vmul.f32 %v5850, %v5583
  %5854 = vrot.lane.b32.xlu0 %v5851, 64
  %v5855 = vpop.permute.xlu0 %5854
  %v5857 = vmul.f32 %v5850, %v5855
  %5859 = vrot.lane.b32.xlu0 %v5857, 32
  %v5860 = vpop.permute.xlu0 %5859
  %v5862 = vadd.f32 %v5852, %v5860
  %v5863 = vtanh.pop %v5862
  %5865 = vrot.lane.b32.xlu0 %v5863, 64
  %v5866 = vpop.permute.xlu0 %5865
  %v5868 = vmul.f32 %v5850, %v5866
  %5870 = vrot.lane.b32.xlu0 %v5868, 32
  %v5871 = vpop.permute.xlu0 %5870
  %5873 = vst.msk [vmem:[#allocation2 + $0xe] sm:$0x3] %vm3923, %v5871
  %5874 = vrot.lane.b32.xlu0 %v5695, 32
  %v5875 = vpop.permute.xlu0 %5874
  %vm5877 = vcmask 261126
  %5878 = vst.msk [vmem:[%s26 - $0x6] sm:$0xc0] %vm5877, %v5875
  %5880 = vrot.lane.b32.xlu0 %v5689, 96
  %v5881 = vpop.permute.xlu0 %5880
  %5883 = vst.msk [vmem:[%s27 - $0x6] sm:$0xc0] %vm5877, %v5881
  %s5884 = scalar_lea.vmem %s26, 2
  %5885 = vst.msk [vmem:[%s5884] sm:$0x3] %vm3923, %v5871
  %5887 = vrot.lane.b32.xlu0 %v5862, 96
  %v5888 = vpop.permute.xlu0 %5887
  %s5890 = scalar_lea.vmem %s27, 2
  %5891 = vst.msk [vmem:[%s5890] sm:$0x3] %vm3923, %v5888
  %v5892 = vld [vmem:[#allocation2] sm:$0xff]
  %v5893 = vld [vmem:[#allocation2 + $0x8] sm:$0xff]
  %v5894 = vld [vmem:[%s21] sm:$0x1]
  %v5895 = vld [vmem:[%s22] sm:$0x1]
  %v5896 = vsel %vm89, %v5892, 0.0
  %5897 = vadd.xlane.f32.xlu0 %v5896
  %v5898 = vpop.xlane.xlu0 %5897
  %v5899 = vsel %vm89, %v5893, 0.0
  %5900 = vadd.xlane.f32.xlu0 %v5899
  %v5901 = vpop.xlane.xlu0 %5900
  %v5902 = vmul.f32 %v5898, %v96
  %v5903 = vmul.f32 %v5901, %v96
  %v5904 = vsub.f32 %v5892, %v5902
  %v5905 = vsub.f32 %v5893, %v5903
  %v5906 = vmul.f32 %v5904, %v5904
  %v5907 = vmul.f32 %v5905, %v5905
  %v5908 = vsel %vm89, %v5906, 0.0
  %5909 = vadd.xlane.f32.xlu0 %v5908
  %v5910 = vpop.xlane.xlu0 %5909
  %v5911 = vsel %vm89, %v5907, 0.0
  %5912 = vadd.xlane.f32.xlu0 %v5911
  %v5913 = vpop.xlane.xlu0 %5912
  %v5914 = vmul.f32 %v5910, %v96
  %v5915 = vmul.f32 %v5913, %v96
  %v5916 = vadd.f32 %v5914, 1e-05
  %v5917 = vadd.f32 %v5915, 1e-05
  %v5918 = vrsqrt.pop %v5916
  %v5919 = vrsqrt.pop %v5917
  %v5920 = vmul.f32 %v5904, %v5918
  %v5921 = vmul.f32 %v5905, %v5919
  %v5923 = vlaneseq
  %v5924 = vshrl.u32 %v5923, 7
  %v5925 = vsub.s32 0, %v5924
  %v5926 = vrot.slane %v5894, %v5925
  %v5928 = vmul.f32 %v5920, %v5926
  %v5929 = vmul.f32 %v5921, %v5926
  %v5931 = vlaneseq
  %v5932 = vshrl.u32 %v5931, 7
  %v5933 = vsub.s32 0, %v5932
  %v5934 = vrot.slane %v5895, %v5933
  %v5936 = vadd.f32 %v5928, %v5934
  %v5937 = vadd.f32 %v5929, %v5934
  %v5938 = vld [vmem:[%s23] sm:$0xff]
  %v5939 = vld [vmem:[%s23 + $0x8] sm:$0xff]
  %v5940 = vld [vmem:[%s23 + $0x10] sm:$0xff]
  %v5941 = vld [vmem:[%s23 + $0x18] sm:$0xff]
  %v5942 = vld [vmem:[%s24] sm:$0x1]
  %v5944 = vlaneseq
  %v5945 = vshrl.u32 %v5944, 7
  %v5946 = vsub.s32 0, %v5945
  %v5947 = vrot.slane %v5942, %v5946
  %v5950 = vsel %vm89, %v5936, 0
  %v5953 = vsel %vm89, %v5937, 0
  %5955 = vmatprep.subr.mxu0 0.0
  %5956 = vmatpush1.msra.mxu0 0.0
  %5957 = vmatprep.subr.mxu0 0.0
  %5958 = vmatpush1.msra.mxu0 0.0
  %5959 = vmatprep.subr.mxu0 0.0
  %5960 = vmatpush1.msra.mxu0 0.0
  %5961 = vmatprep.subr.mxu0 0.0
  %5962 = vmatpush1.msra.mxu0 0.0
  %5963 = vmatprep.subr.mxu0 0.0
  %5964 = vmatpush1.msra.mxu0 0.0
  %5965 = vmatprep.subr.mxu0 0.0
  %5966 = vmatpush1.msra.mxu0 0.0
  %5967 = vmatprep.subr.mxu0 0.0
  %5968 = vmatpush1.msra.mxu0 0.0
  %5969 = vmatprep.subr.mxu0 0.0
  %5970 = vmatpush1.msra.mxu0 0.0
  %5971 = vmatprep.subr.mxu0 0.0
  %5972 = vmatpush1.msra.mxu0 0.0
  %5973 = vmatprep.subr.mxu0 0.0
  %5974 = vmatpush1.msra.mxu0 0.0
  %5975 = vmatprep.subr.mxu0 0.0
  %5976 = vmatpush1.msra.mxu0 0.0
  %5977 = vmatprep.subr.mxu0 0.0
  %5978 = vmatpush1.msra.mxu0 0.0
  %5979 = vmatprep.subr.mxu0 0.0
  %5980 = vmatpush1.msra.mxu0 %v5941
  %5981 = vmatprep.subr.mxu0 0.0
  %5982 = vmatpush1.msra.mxu0 %v5940
  %5983 = vmatprep.subr.mxu0 0.0
  %5984 = vmatpush1.msra.mxu0 %v5939
  %5985 = vmatprep.subr.mxu0 0.0
  %5986 = vmatpush1.msra.mxu0 %v5938
  %5987 = vmatprep.subr.mxu0 0.0
  %5988 = vmatpush2.msra.mxu0 0.0
  %5989 = vmatprep.subr.mxu0 0.0
  %5990 = vmatpush2.msra.mxu0 0.0
  %5991 = vmatprep.subr.mxu0 0.0
  %5992 = vmatpush2.msra.mxu0 0.0
  %5993 = vmatprep.subr.mxu0 0.0
  %5994 = vmatpush2.msra.mxu0 0.0
  %5995 = vmatprep.subr.mxu0 0.0
  %5996 = vmatpush2.msra.mxu0 0.0
  %5997 = vmatprep.subr.mxu0 0.0
  %5998 = vmatpush2.msra.mxu0 0.0
  %5999 = vmatprep.subr.mxu0 0.0
  %6000 = vmatpush2.msra.mxu0 0.0
  %6001 = vmatprep.subr.mxu0 0.0
  %6002 = vmatpush2.msra.mxu0 0.0
  %6003 = vmatprep.subr.mxu0 0.0
  %6004 = vmatpush2.msra.mxu0 0.0
  %6005 = vmatprep.subr.mxu0 0.0
  %6006 = vmatpush2.msra.mxu0 0.0
  %6007 = vmatprep.subr.mxu0 0.0
  %6008 = vmatpush2.msra.mxu0 0.0
  %6009 = vmatprep.subr.mxu0 0.0
  %6010 = vmatpush2.msra.mxu0 0.0
  %6011 = vmatprep.subr.mxu0 0.0
  %6012 = vmatpush2.msra.mxu0 0.0
  %6013 = vmatprep.subr.mxu0 0.0
  %6014 = vmatpush2.msra.mxu0 0.0
  %6015 = vmatprep.subr.mxu0 0.0
  %6016 = vmatpush2.msra.mxu0 0.0
  %6017 = vmatprep.subr.mxu0 0.0
  %6018 = vmatpush2.msra.mxu0 0.0
  %6019 = vmatprep.mubr.f32.mxu0 0.0
  %6020 = vmatmul.mubr.f32.gmra.mxu0 %v5950
  %v6021 = vpop.f32.mrf.mxu0
  %v6022 = vadd.f32 %v5947, %v6021
  %v6023 = vpop.f32.mrf.mxu0
  %6024 = vmatprep.mubr.f32.mxu0 0.0
  %6025 = vmatmul.mubr.f32.gmra.mxu0 %v5953
  %v6026 = vpop.f32.mrf.mxu0
  %v6027 = vadd.f32 %v5947, %v6026
  %v6028 = vpop.f32.mrf.mxu0
  %6029 = vdwg.mxu0
  %vm6030 = vcmask 523264
  %6031 = vst.msk [vmem:[%s25] sm:$0xff] %vm6030, %v6022
  %6032 = vst.msk [vmem:[%s25 + $0x8] sm:$0xff] %vm6030, %v6027
  // Predicated region
  $region102: #{openarc_forward.1} parent=0 // pred_check
    _
  $region103: #{openarc_forward.1} parent=0 // pred_check_branch
    %6034 = sbr.rel (0) target = $region105
  $region104: #{openarc_forward.1} parent=0 // pred_region
    _
  $region105: #{openarc_forward.1} parent=0 // pred_fallthru
    _
  // Predicated region
  $region106: #{openarc_forward.1} parent=0 // pred_check
    _
  $region107: #{openarc_forward.1} parent=0 // pred_check_branch
    %6036 = sbr.rel (0) target = $region109
  $region108: #{openarc_forward.1} parent=0 // pred_region
    _
  $region109: #{openarc_forward.1} parent=0 // pred_fallthru
    _
  // Predicated region
  $region110: #{openarc_forward.1} parent=0 // pred_check
    _
  $region111: #{openarc_forward.1} parent=0 // pred_check_branch
    %6038 = sbr.rel (0) target = $region113
  $region112: #{openarc_forward.1} parent=0 // pred_region
    _
  $region113: #{openarc_forward.1} parent=0 // pred_fallthru
    _
  // Predicated region
  $region114: #{openarc_forward.1} parent=0 // pred_check
    _
  $region115: #{openarc_forward.1} parent=0 // pred_check_branch
    %6040 = sbr.rel (0) target = $region117
  $region116: #{openarc_forward.1} parent=0 // pred_region
    _
  $region117: #{openarc_forward.1} parent=0 // pred_fallthru
    _
  // Predicated region
  $region118: #{openarc_forward.1} parent=0 // pred_check
    _
  $region119: #{openarc_forward.1} parent=0 // pred_check_branch
    %6042 = sbr.rel (0) target = $region121
  $region120: #{openarc_forward.1} parent=0 // pred_region
    _
  $region121: #{openarc_forward.1} parent=0 // pred_fallthru
    _
  // Predicated region
  $region122: #{openarc_forward.1} parent=0 // pred_check
    _
  $region123: #{openarc_forward.1} parent=0 // pred_check_branch
    %6044 = sbr.rel (0) target = $region125
  $region124: #{openarc_forward.1} parent=0 // pred_region
    _
  $region125: #{openarc_forward.1} parent=0 // pred_fallthru
    _

</llo_original>
